<compile_context>
chip_gen: v5e
topology: v5e:2x2
jax: 0.10.0
libtpu: 0.0.40
codegen_flags: <defaults>
</compile_context>

<pallas_src>
import math

import jax
import jax.numpy as jnp
from jax import lax
from jax.experimental import pallas as pl
from jax.experimental.pallas import tpu as pltpu

SCALING_FACTOR = 0.18215          # vae.config.scaling_factor (SD-2)
NUM_TRAIN_TIMESTEPS = 1000        # noise_scheduler.config.num_train_timesteps
LATENT_CH = 4                     # VAE latent channels
ENC_CH = 8                        # synthetic VAE encoder width
MODEL_CH = 32                     # small stand-in for UNet block channels
OUT_CH = 16                       # stand-in for unet out_channels=1280 (scaled down)
TEXT_SEQ = 8                      # stand-in for tokenizer max_length=77
TEXT_DIM = 32                     # stand-in for CLIP hidden size 1024
TIME_DIM = 32


# ---------------------------- in-kernel helpers ----------------------------

def _conv3x3(x, w_ref, bias_row, buf_ref, H, W, *, silu=False):
    """3x3 stride-1 SAME conv on a row-major (H*W, Cin) slab, VMEM-resident.

    x        : (H*W, Cin) f32 value
    w_ref    : (9*Cin, Cout) bf16 weight ref, rows ordered (ki, kj, cin)
    bias_row : (1, Cout) f32
    buf_ref  : bf16 VMEM scratch with >= H*W + 2*W + 2 rows and >= Cin cols

    One im2col lane-concat + ONE matmul (K = 9*Cin) instead of 9 tap matmuls.
    """
    HW, Cin = H * W, x.shape[1]
    P = W + 1                                       # flat offset of (0,0) in buf
    bf16 = jnp.bfloat16

    # Zero only the two halo bands (top/bottom W+1 rows); the interior is fully
    # overwritten below.  Vertically out-of-image taps then read zeros, so no
    # row mask is needed in the tap gather.
    buf_ref[0:P, :Cin] = jnp.zeros((P, Cin), bf16)
    buf_ref[P + HW:P + HW + P, :Cin] = jnp.zeros((P, Cin), bf16)
    buf_ref[P:P + HW, :Cin] = x.astype(bf16)        # single f32->bf16 cast per conv

    # Column-edge masks, computed once per conv, reused by 3 taps each.
    col = lax.broadcasted_iota(jnp.int32, (HW, Cin), 0) % W
    not_left = col != 0
    not_right = col != (W - 1)
    zero = jnp.zeros((HW, Cin), bf16)

    cols = []
    for ki in range(3):
        for kj in range(3):
            s = (ki - 1) * W + (kj - 1)
            sh = buf_ref[P + s:P + s + HW, :Cin]    # static shifted VMEM slice
            if kj == 0:
                sh = jnp.where(not_left, sh, zero)
            elif kj == 2:
                sh = jnp.where(not_right, sh, zero)
            cols.append(sh)
    patch = jnp.concatenate(cols, axis=1)           # (HW, 9*Cin) bf16 im2col slab
    acc = jnp.dot(patch, w_ref[...], preferred_element_type=jnp.float32)
    acc = acc + bias_row
    if silu:
        acc = acc * jax.nn.sigmoid(acc)
    return acc


def _downsample2(h, tmp_ref, Hin, Win):
    """Even-position (stride-2, pad-1 conv grid) subsample of a (Hin*Win, C)
    row-major slab, done with strided VMEM reads (no selection matrices)."""
    Ho, Wo = Hin // 2, Win // 2
    HWin = Hin * Win
    tmp_ref[0:HWin, :] = h
    rows = [tmp_ref[pl.ds(2 * i * Win, Wo, stride=2), :] for i in range(Ho)]
    return jnp.concatenate(rows, axis=0)            # (Ho*Wo, C)


def _make_kernel(H, W):
    """Full fused forward (VAE encoder + quant + UNet) for one batch element."""
    Hm, Wm = H // 2, W // 2            # after encoder conv1 (stride 2)
    Hl, Wl = H // 4, W // 4            # latent spatial

    def kernel(img_ref, tproj_ref, k_ref, v_ref,
               ew1_ref, ew2_ref, qw_ref, eb_ref,
               cinw_ref, rw1_ref, rw2_ref, wq_ref, wo_ref, ub_ref,
               ow_ref, ob_ref,
               o_ref,
               bufA, bufB, subA):
        f32, bf16 = jnp.float32, jnp.bfloat16

        # ------- VAE encoder -> quant_conv -> chunk[0] -> * scaling_factor -------
        img = img_ref[0]                                               # (H*W, 3) f32
        h = _conv3x3(img, ew1_ref, eb_ref[0:1, :], bufA, H, W, silu=True)
        h = _downsample2(h, subA, H, W)                                # stride-2 positions
        h = _conv3x3(h, ew2_ref, eb_ref[1:2, :], bufA, Hm, Wm)
        h = _downsample2(h, subA, Hm, Wm)                              # (Hl*Wl, ENC_CH)
        moments = jnp.dot(h.astype(bf16), qw_ref[...],
                          preferred_element_type=f32) + eb_ref[2:3, :]
        lat = moments[:, :LATENT_CH] * SCALING_FACTOR                  # chunk(moments,2)[0] * sf

        # -------------------------------- UNet --------------------------------
        # conv_in + time-conditioned resnet block (tproj precomputed in wrapper)
        hu = _conv3x3(lat, cinw_ref, ub_ref[0:1, :], bufB, Hl, Wl)
        res = hu * jax.nn.sigmoid(hu)
        res = _conv3x3(res, rw1_ref, ub_ref[1:2, :], bufB, Hl, Wl)
        res = res + tproj_ref[...]
        res = res * jax.nn.sigmoid(res)
        res = _conv3x3(res, rw2_ref, ub_ref[2:3, :], bufB, Hl, Wl)
        hu = hu + res

        # cross-attention against the shared empty text encoding
        # (Wq/bq pre-scaled by 1/sqrt(D); K/V precomputed in the wrapper).
        q = jnp.dot(hu.astype(bf16), wq_ref[...],
                    preferred_element_type=f32) + ub_ref[3:4, :]
        scores = lax.dot_general(q.astype(bf16), k_ref[...],
                                 (((1,), (1,)), ((), ())),
                                 preferred_element_type=f32)           # (Hl*Wl, TEXT_SEQ)
        m = jnp.max(scores, axis=-1, keepdims=True)
        p = jnp.exp(scores - m)
        p = p * pl.reciprocal(jnp.sum(p, axis=-1, keepdims=True), approx=True)
        attn = jnp.dot(p.astype(bf16), v_ref[...], preferred_element_type=f32)
        hu = hu + jnp.dot(attn.astype(bf16), wo_ref[...],
                          preferred_element_type=f32) + ub_ref[4:5, :]

        # conv_out, then the / scaling_factor from E2E.forward
        out = _conv3x3(hu, ow_ref, ob_ref[...], bufB, Hl, Wl)
        o_ref[0] = (out * (1.0 / SCALING_FACTOR)).astype(o_ref.dtype)

    return kernel


# ---------------------------- wrapper-side glue ----------------------------

def timestep_embedding(timesteps, dim):
    half = dim // 2
    freqs = jnp.exp(-math.log(10000.0) * jnp.arange(half, dtype=jnp.float32) / half)
    args = timesteps.astype(jnp.float32)[:, None] * freqs[None, :]
    return jnp.concatenate([jnp.sin(args), jnp.cos(args)], axis=-1)


def _pack_params(p):
    """Pack / bf16-cast the logical params into the kernel's layout."""
    bf16 = jnp.bfloat16
    scale = 1.0 / math.sqrt(MODEL_CH)          # attention scale folded into Wq/bq

    def convw(w):                              # (3,3,cin,cout) -> (9*cin, cout), tap-major rows
        return w.reshape(-1, w.shape[-1]).astype(bf16)

    return {
        "ew1": convw(p["enc_w1"]),                                            # (27, 8)
        "ew2": convw(p["enc_w2"]),                                            # (72, 8)
        "qw": p["quant_w"].reshape(ENC_CH, 2 * LATENT_CH).astype(bf16),       # (8, 8)
        "eb": jnp.stack([p["enc_b1"], p["enc_b2"], p["quant_b"]]),            # (3, 8) f32
        "cinw": convw(p["conv_in_w"]),                                        # (36, 32)
        "rw1": convw(p["res_w1"]),                                            # (288, 32)
        "rw2": convw(p["res_w2"]),                                            # (288, 32)
        "wq": (p["attn_wq"] * scale).astype(bf16),                            # (32, 32)
        "wo": p["attn_wo"].astype(bf16),                                      # (32, 32)
        "ub": jnp.stack([p["conv_in_b"], p["res_b1"], p["res_b2"],
                         p["attn_bq"] * scale, p["attn_bo"]]),                # (5, 32) f32
        "ow": convw(p["conv_out_w"]),                                         # (288, 16)
        "ob": p["conv_out_b"].reshape(1, OUT_CH),                             # (1, 16) f32
    }


def _precompute_cond(p):
    """Batch-invariant conditioning hoisted out of the kernel (perf review #6):
    timestep-embedding MLP -> tproj, and K/V from the shared empty encoding."""
    timesteps = jnp.full((1,), NUM_TRAIN_TIMESTEPS - 1, dtype=jnp.int32)
    t = timestep_embedding(timesteps, TIME_DIM)                    # (1, TIME_DIM)
    t = jax.nn.silu(t @ p["time_w1"] + p["time_b1"])
    t = t @ p["time_w2"] + p["time_b2"]
    tproj = jax.nn.silu(t) @ p["res_temb_w"] + p["res_temb_b"]     # (1, MODEL_CH) f32
    enc = p["empty_encoding"][0]                                   # (TEXT_SEQ, TEXT_DIM)
    k = (enc @ p["attn_wk"] + p["attn_bk"]).astype(jnp.bfloat16)   # (TEXT_SEQ, MODEL_CH)
    v = (enc @ p["attn_wv"] + p["attn_bv"]).astype(jnp.bfloat16)
    return tproj, k, v


def e2e_forward(params, images_nchw):
    B, _, H, W = images_nchw.shape
    Hl, Wl = H // 4, W // 4
    pk = _pack_params(params)
    tproj, k, v = _precompute_cond(params)

    # NCHW -> row-major [rows, channels]; native 3 channels, no host-side padding.
    imgs = jnp.transpose(images_nchw, (0, 2, 3, 1)).reshape(B, H * W, 3)

    kernel = _make_kernel(H, W)

    def full(arr):
        n = arr.ndim
        return pl.BlockSpec(arr.shape, lambda b, _n=n: (0,) * _n)

    consts = (tproj, k, v, pk["ew1"], pk["ew2"], pk["qw"], pk["eb"],
              pk["cinw"], pk["rw1"], pk["rw2"], pk["wq"], pk["wo"], pk["ub"],
              pk["ow"], pk["ob"])

    out = pl.pallas_call(
        kernel,
        out_shape=jax.ShapeDtypeStruct((B, Hl * Wl, OUT_CH), jnp.float32),
        grid=(B,),
        in_specs=[pl.BlockSpec((1, H * W, 3), lambda b: (b, 0, 0))]
                 + [full(c) for c in consts],
        out_specs=pl.BlockSpec((1, Hl * Wl, OUT_CH), lambda b: (b, 0, 0)),
        scratch_shapes=[
            pltpu.VMEM((H * W + 2 * W + 2, ENC_CH), jnp.bfloat16),       # encoder conv pad buffer
            pltpu.VMEM((Hl * Wl + 2 * Wl + 2, MODEL_CH), jnp.bfloat16),  # UNet conv pad buffer
            pltpu.VMEM((H * W, ENC_CH), jnp.float32),                    # stride-2 subsample staging
        ],
        compiler_params=pltpu.CompilerParams(dimension_semantics=("parallel",)),
    )(imgs, *consts)

    out = out.reshape(B, Hl, Wl, OUT_CH)
    return jnp.transpose(out, (0, 3, 1, 2))                    # back to NCHW


# ---------------------------- deterministic parameter init ----------------------------

def init_params(key):
    keys = jax.random.split(key, 16)

    def w(k, shape, scale=0.05):
        return scale * jax.random.normal(k, shape, dtype=jnp.float32)

    p = {}
    # synthetic VAE encoder + quant_conv
    p["enc_w1"] = w(keys[0], (3, 3, 3, ENC_CH));       p["enc_b1"] = jnp.zeros((ENC_CH,), jnp.float32)
    p["enc_w2"] = w(keys[1], (3, 3, ENC_CH, ENC_CH));  p["enc_b2"] = jnp.zeros((ENC_CH,), jnp.float32)
    p["quant_w"] = w(keys[2], (1, 1, ENC_CH, 2 * LATENT_CH))
    p["quant_b"] = jnp.zeros((2 * LATENT_CH,), jnp.float32)
    # synthetic UNet
    p["conv_in_w"] = w(keys[3], (3, 3, LATENT_CH, MODEL_CH))
    p["conv_in_b"] = jnp.zeros((MODEL_CH,), jnp.float32)
    p["time_w1"] = w(keys[4], (TIME_DIM, TIME_DIM)); p["time_b1"] = jnp.zeros((TIME_DIM,), jnp.float32)
    p["time_w2"] = w(keys[5], (TIME_DIM, TIME_DIM)); p["time_b2"] = jnp.zeros((TIME_DIM,), jnp.float32)
    p["res_w1"] = w(keys[6], (3, 3, MODEL_CH, MODEL_CH)); p["res_b1"] = jnp.zeros((MODEL_CH,), jnp.float32)
    p["res_temb_w"] = w(keys[7], (TIME_DIM, MODEL_CH));   p["res_temb_b"] = jnp.zeros((MODEL_CH,), jnp.float32)
    p["res_w2"] = w(keys[8], (3, 3, MODEL_CH, MODEL_CH)); p["res_b2"] = jnp.zeros((MODEL_CH,), jnp.float32)
    for i, n in enumerate(["q", "k", "v", "o"]):
        p[f"attn_w{n}"] = w(keys[9 + i], (MODEL_CH, MODEL_CH))
        p[f"attn_b{n}"] = jnp.zeros((MODEL_CH,), jnp.float32)
    # conv_out: xavier_uniform_(gain=0.01), zero bias — mirrors the reference __init__
    fan_in, fan_out = MODEL_CH * 9, OUT_CH * 9
    limit = 0.01 * math.sqrt(6.0 / (fan_in + fan_out))
    p["conv_out_w"] = jax.random.uniform(keys[13], (3, 3, MODEL_CH, OUT_CH),
                                         minval=-limit, maxval=limit, dtype=jnp.float32)
    p["conv_out_b"] = jnp.zeros((OUT_CH,), jnp.float32)
    # stand-in for self.empty_encoding = text_encoder(tokenizer(['']))[0]
    p["empty_encoding"] = w(keys[14], (1, TEXT_SEQ, TEXT_DIM), scale=0.2)
    return p


if __name__ == "__main__":
    key = jax.random.PRNGKey(0)
    pkey, xkey = jax.random.split(key)
    params = init_params(pkey)
    images = jax.random.normal(xkey, (2, 3, 16, 16), dtype=jnp.float32)  # NCHW, like torch
    out = jax.jit(e2e_forward)(params, images)
    out = jax.block_until_ready(out)
    assert out.shape == (2, OUT_CH, 4, 4), out.shape
    assert bool(jnp.all(jnp.isfinite(out)))
    print("KERNEL_OK")
</pallas_src>

<mosaic_0001>
module attributes {stable_mosaic.version = 11 : i64} {
  func.func @kernel(%arg0: i32, %arg1: memref<1x256x3xf32, #tpu.memory_space<vmem>>, %arg2: memref<1x32xf32, #tpu.memory_space<vmem>>, %arg3: memref<8x32xbf16, #tpu.memory_space<vmem>>, %arg4: memref<8x32xbf16, #tpu.memory_space<vmem>>, %arg5: memref<27x8xbf16, #tpu.memory_space<vmem>>, %arg6: memref<72x8xbf16, #tpu.memory_space<vmem>>, %arg7: memref<8x8xbf16, #tpu.memory_space<vmem>>, %arg8: memref<3x8xf32, #tpu.memory_space<vmem>>, %arg9: memref<36x32xbf16, #tpu.memory_space<vmem>>, %arg10: memref<288x32xbf16, #tpu.memory_space<vmem>>, %arg11: memref<288x32xbf16, #tpu.memory_space<vmem>>, %arg12: memref<32x32xbf16, #tpu.memory_space<vmem>>, %arg13: memref<32x32xbf16, #tpu.memory_space<vmem>>, %arg14: memref<5x32xf32, #tpu.memory_space<vmem>>, %arg15: memref<288x16xbf16, #tpu.memory_space<vmem>>, %arg16: memref<1x16xf32, #tpu.memory_space<vmem>>, %arg17: memref<1x16x16xf32, #tpu.memory_space<vmem>>, %arg18: memref<290x8xbf16, #tpu.memory_space<vmem>>, %arg19: memref<26x32xbf16, #tpu.memory_space<vmem>>, %arg20: memref<256x8xf32, #tpu.memory_space<vmem>>) attributes {dimension_semantics = [#tpu.dimension_semantics<parallel>], iteration_bounds = array<i64: 2>, scalar_prefetch = 0 : i64, scratch_operands = 3 : i64, tpu.core_type = #tpu.core_type<tc>, window_params = [{transform_indices = @transform_0, window_bounds = array<i64: 1, 256, 3>}, {pipeline_mode = #tpu.pipeline_mode<synchronous>, transform_indices = @transform_1, window_bounds = array<i64: 1, 32>}, {pipeline_mode = #tpu.pipeline_mode<synchronous>, transform_indices = @transform_2, window_bounds = array<i64: 8, 32>}, {pipeline_mode = #tpu.pipeline_mode<synchronous>, transform_indices = @transform_3, window_bounds = array<i64: 8, 32>}, {pipeline_mode = #tpu.pipeline_mode<synchronous>, transform_indices = @transform_4, window_bounds = array<i64: 27, 8>}, {pipeline_mode = #tpu.pipeline_mode<synchronous>, transform_indices = @transform_5, window_bounds = array<i64: 72, 8>}, {pipeline_mode = #tpu.pipeline_mode<synchronous>, transform_indices = @transform_6, window_bounds = array<i64: 8, 8>}, {pipeline_mode = #tpu.pipeline_mode<synchronous>, transform_indices = @transform_7, window_bounds = array<i64: 3, 8>}, {pipeline_mode = #tpu.pipeline_mode<synchronous>, transform_indices = @transform_8, window_bounds = array<i64: 36, 32>}, {pipeline_mode = #tpu.pipeline_mode<synchronous>, transform_indices = @transform_9, window_bounds = array<i64: 288, 32>}, {pipeline_mode = #tpu.pipeline_mode<synchronous>, transform_indices = @transform_10, window_bounds = array<i64: 288, 32>}, {pipeline_mode = #tpu.pipeline_mode<synchronous>, transform_indices = @transform_11, window_bounds = array<i64: 32, 32>}, {pipeline_mode = #tpu.pipeline_mode<synchronous>, transform_indices = @transform_12, window_bounds = array<i64: 32, 32>}, {pipeline_mode = #tpu.pipeline_mode<synchronous>, transform_indices = @transform_13, window_bounds = array<i64: 5, 32>}, {pipeline_mode = #tpu.pipeline_mode<synchronous>, transform_indices = @transform_14, window_bounds = array<i64: 288, 16>}, {pipeline_mode = #tpu.pipeline_mode<synchronous>, transform_indices = @transform_15, window_bounds = array<i64: 1, 16>}, {transform_indices = @transform_16, window_bounds = array<i64: 1, 16, 16>}]} {
    %c0 = arith.constant 0 : index
    %c0_0 = arith.constant 0 : index
    %c0_1 = arith.constant 0 : index
    %0 = vector.load %arg1[%c0, %c0_0, %c0_1] : memref<1x256x3xf32, #tpu.memory_space<vmem>>, vector<1x256x3xf32>
    %1 = vector.shape_cast %0 : vector<1x256x3xf32> to vector<256x3xf32>
    %c0_2 = arith.constant 0 : index
    %c0_3 = arith.constant 0 : index
    %2 = vector.load %arg8[%c0_2, %c0_3] : memref<3x8xf32, #tpu.memory_space<vmem>>, vector<1x8xf32>
    %cst = arith.constant 0.000000e+00 : bf16
    %3 = vector.broadcast %cst : bf16 to vector<17x3xbf16>
    %c0_4 = arith.constant 0 : index
    %c0_5 = arith.constant 0 : index
    %4 = vector.load %arg18[%c0_4, %c0_5] : memref<290x8xbf16, #tpu.memory_space<vmem>>, vector<17x3xbf16>
    tpu.vector_store %arg18[%c0_4, %c0_5], %3 {strides = array<i32>} : memref<290x8xbf16, #tpu.memory_space<vmem>>, vector<17x3xbf16>,
    %cst_6 = arith.constant 0.000000e+00 : bf16
    %5 = vector.broadcast %cst_6 : bf16 to vector<17x3xbf16>
    %c273 = arith.constant 273 : index
    %c0_7 = arith.constant 0 : index
    %6 = vector.load %arg18[%c273, %c0_7] : memref<290x8xbf16, #tpu.memory_space<vmem>>, vector<17x3xbf16>
    tpu.vector_store %arg18[%c273, %c0_7], %5 {strides = array<i32>} : memref<290x8xbf16, #tpu.memory_space<vmem>>, vector<17x3xbf16>,
    %7 = arith.truncf %1 : vector<256x3xf32> to vector<256x3xbf16>
    %c17 = arith.constant 17 : index
    %c0_8 = arith.constant 0 : index
    %8 = vector.load %arg18[%c17, %c0_8] : memref<290x8xbf16, #tpu.memory_space<vmem>>, vector<256x3xbf16>
    tpu.vector_store %arg18[%c17, %c0_8], %7 {strides = array<i32>} : memref<290x8xbf16, #tpu.memory_space<vmem>>, vector<256x3xbf16>,
    %9 = tpu.iota {dimensions = array<i32: 0>} : vector<256x3xi32>
    %c16_i32 = arith.constant 16 : i32
    %c0_i32 = arith.constant 0 : i32
    %10 = arith.cmpi eq, %c16_i32, %c0_i32 : i32
    %c1_i32 = arith.constant 1 : i32
    %11 = arith.select %10, %c1_i32, %c16_i32 : i32
    %12 = vector.broadcast %11 : i32 to vector<256x3xi32>
    %13 = arith.remsi %9, %12 : vector<256x3xi32>
    %c0_i32_9 = arith.constant 0 : i32
    %14 = vector.broadcast %c0_i32_9 : i32 to vector<256x3xi32>
    %15 = arith.cmpi ne, %13, %14 : vector<256x3xi32>
    %c0_i32_10 = arith.constant 0 : i32
    %16 = vector.broadcast %c0_i32_10 : i32 to vector<256x3xi32>
    %17 = arith.cmpi slt, %13, %16 : vector<256x3xi32>
    %c0_i32_11 = arith.constant 0 : i32
    %18 = arith.cmpi slt, %11, %c0_i32_11 : i32
    %19 = vector.broadcast %18 : i1 to vector<256x3xi1>
    %20 = vector.broadcast %19 : vector<256x3xi1> to vector<256x3xi1>
    %21 = arith.xori %17, %20 : vector<256x3xi1>
    %22 = arith.andi %21, %15 : vector<256x3xi1>
    %23 = vector.broadcast %11 : i32 to vector<256x3xi32>
    %24 = arith.addi %13, %23 : vector<256x3xi32>
    %25 = arith.select %22, %24, %13 : vector<256x3xi1>, vector<256x3xi32>
    %c0_i32_12 = arith.constant 0 : i32
    %26 = vector.broadcast %c0_i32_12 : i32 to vector<256x3xi32>
    %27 = arith.cmpi ne, %25, %26 : vector<256x3xi32>
    %c15_i32 = arith.constant 15 : i32
    %28 = vector.broadcast %c15_i32 : i32 to vector<256x3xi32>
    %29 = arith.cmpi ne, %25, %28 : vector<256x3xi32>
    %cst_13 = arith.constant 0.000000e+00 : bf16
    %30 = vector.broadcast %cst_13 : bf16 to vector<256x3xbf16>
    %c0_14 = arith.constant 0 : index
    %c0_15 = arith.constant 0 : index
    %31 = vector.load %arg18[%c0_14, %c0_15] : memref<290x8xbf16, #tpu.memory_space<vmem>>, vector<256x3xbf16>
    %32 = arith.select %27, %31, %30 : vector<256x3xi1>, vector<256x3xbf16>
    %c1 = arith.constant 1 : index
    %c0_16 = arith.constant 0 : index
    %33 = vector.load %arg18[%c1, %c0_16] : memref<290x8xbf16, #tpu.memory_space<vmem>>, vector<256x3xbf16>
    %c2 = arith.constant 2 : index
    %c0_17 = arith.constant 0 : index
    %34 = vector.load %arg18[%c2, %c0_17] : memref<290x8xbf16, #tpu.memory_space<vmem>>, vector<256x3xbf16>
    %35 = arith.select %29, %34, %30 : vector<256x3xi1>, vector<256x3xbf16>
    %c16 = arith.constant 16 : index
    %c0_18 = arith.constant 0 : index
    %36 = vector.load %arg18[%c16, %c0_18] : memref<290x8xbf16, #tpu.memory_space<vmem>>, vector<256x3xbf16>
    %37 = arith.select %27, %36, %30 : vector<256x3xi1>, vector<256x3xbf16>
    %c17_19 = arith.constant 17 : index
    %c0_20 = arith.constant 0 : index
    %38 = vector.load %arg18[%c17_19, %c0_20] : memref<290x8xbf16, #tpu.memory_space<vmem>>, vector<256x3xbf16>
    %c18 = arith.constant 18 : index
    %c0_21 = arith.constant 0 : index
    %39 = vector.load %arg18[%c18, %c0_21] : memref<290x8xbf16, #tpu.memory_space<vmem>>, vector<256x3xbf16>
    %40 = arith.select %29, %39, %30 : vector<256x3xi1>, vector<256x3xbf16>
    %c32 = arith.constant 32 : index
    %c0_22 = arith.constant 0 : index
    %41 = vector.load %arg18[%c32, %c0_22] : memref<290x8xbf16, #tpu.memory_space<vmem>>, vector<256x3xbf16>
    %42 = arith.select %27, %41, %30 : vector<256x3xi1>, vector<256x3xbf16>
    %c33 = arith.constant 33 : index
    %c0_23 = arith.constant 0 : index
    %43 = vector.load %arg18[%c33, %c0_23] : memref<290x8xbf16, #tpu.memory_space<vmem>>, vector<256x3xbf16>
    %c34 = arith.constant 34 : index
    %c0_24 = arith.constant 0 : index
    %44 = vector.load %arg18[%c34, %c0_24] : memref<290x8xbf16, #tpu.memory_space<vmem>>, vector<256x3xbf16>
    %45 = arith.select %29, %44, %30 : vector<256x3xi1>, vector<256x3xbf16>
    %46 = tpu.concatenate %32, %33, %35, %37, %38, %40, %42, %43, %45 in 1 : vector<256x3xbf16>, vector<256x3xbf16>, vector<256x3xbf16>, vector<256x3xbf16>, vector<256x3xbf16>, vector<256x3xbf16>, vector<256x3xbf16>, vector<256x3xbf16>, vector<256x3xbf16> -> vector<256x27xbf16>
    %c0_25 = arith.constant 0 : index
    %c0_26 = arith.constant 0 : index
    %47 = vector.load %arg5[%c0_25, %c0_26] : memref<27x8xbf16, #tpu.memory_space<vmem>>, vector<27x8xbf16>
    %cst_27 = arith.constant dense<0.000000e+00> : vector<256x8xf32>
    %48 = tpu.matmul %46, %47, %cst_27 {dimension_numbers = #tpu.dot_dimension_numbers<[1], [0], [0], [1], [0, 0, 1, 1], [], []>} : vector<256x27xbf16>, vector<27x8xbf16>, vector<256x8xf32> -> vector<256x8xf32>
    %49 = vector.broadcast %2 : vector<1x8xf32> to vector<256x8xf32>
    %50 = arith.addf %48, %49 : vector<256x8xf32>
    %51 = arith.negf %50 : vector<256x8xf32>
    %52 = math.exp %51 : vector<256x8xf32>
    %cst_28 = arith.constant 1.000000e+00 : f32
    %53 = vector.broadcast %cst_28 : f32 to vector<256x8xf32>
    %54 = arith.addf %53, %52 : vector<256x8xf32>
    %55 = arith.divf %53, %54 : vector<256x8xf32>
    %56 = arith.mulf %50, %55 : vector<256x8xf32>
    %c0_29 = arith.constant 0 : index
    %c0_30 = arith.constant 0 : index
    %57 = vector.load %arg20[%c0_29, %c0_30] : memref<256x8xf32, #tpu.memory_space<vmem>>, vector<256x8xf32>
    tpu.vector_store %arg20[%c0_29, %c0_30], %56 {strides = array<i32>} : memref<256x8xf32, #tpu.memory_space<vmem>>, vector<256x8xf32>,
    %c0_31 = arith.constant 0 : index
    %c0_32 = arith.constant 0 : index
    %58 = tpu.strided_load %arg20[%c0_31, %c0_32] {strides = array<i32: 2, 1>} : memref<256x8xf32, #tpu.memory_space<vmem>>, vector<8x8xf32>
    %c32_33 = arith.constant 32 : index
    %c0_34 = arith.constant 0 : index
    %59 = tpu.strided_load %arg20[%c32_33, %c0_34] {strides = array<i32: 2, 1>} : memref<256x8xf32, #tpu.memory_space<vmem>>, vector<8x8xf32>
    %c64 = arith.constant 64 : index
    %c0_35 = arith.constant 0 : index
    %60 = tpu.strided_load %arg20[%c64, %c0_35] {strides = array<i32: 2, 1>} : memref<256x8xf32, #tpu.memory_space<vmem>>, vector<8x8xf32>
    %c96 = arith.constant 96 : index
    %c0_36 = arith.constant 0 : index
    %61 = tpu.strided_load %arg20[%c96, %c0_36] {strides = array<i32: 2, 1>} : memref<256x8xf32, #tpu.memory_space<vmem>>, vector<8x8xf32>
    %c128 = arith.constant 128 : index
    %c0_37 = arith.constant 0 : index
    %62 = tpu.strided_load %arg20[%c128, %c0_37] {strides = array<i32: 2, 1>} : memref<256x8xf32, #tpu.memory_space<vmem>>, vector<8x8xf32>
    %c160 = arith.constant 160 : index
    %c0_38 = arith.constant 0 : index
    %63 = tpu.strided_load %arg20[%c160, %c0_38] {strides = array<i32: 2, 1>} : memref<256x8xf32, #tpu.memory_space<vmem>>, vector<8x8xf32>
    %c192 = arith.constant 192 : index
    %c0_39 = arith.constant 0 : index
    %64 = tpu.strided_load %arg20[%c192, %c0_39] {strides = array<i32: 2, 1>} : memref<256x8xf32, #tpu.memory_space<vmem>>, vector<8x8xf32>
    %c224 = arith.constant 224 : index
    %c0_40 = arith.constant 0 : index
    %65 = tpu.strided_load %arg20[%c224, %c0_40] {strides = array<i32: 2, 1>} : memref<256x8xf32, #tpu.memory_space<vmem>>, vector<8x8xf32>
    %66 = tpu.concatenate %58, %59, %60, %61, %62, %63, %64, %65 in 0 : vector<8x8xf32>, vector<8x8xf32>, vector<8x8xf32>, vector<8x8xf32>, vector<8x8xf32>, vector<8x8xf32>, vector<8x8xf32>, vector<8x8xf32> -> vector<64x8xf32>
    %c1_41 = arith.constant 1 : index
    %c0_42 = arith.constant 0 : index
    %67 = vector.load %arg8[%c1_41, %c0_42] : memref<3x8xf32, #tpu.memory_space<vmem>>, vector<1x8xf32>
    %cst_43 = arith.constant 0.000000e+00 : bf16
    %68 = vector.broadcast %cst_43 : bf16 to vector<9x8xbf16>
    %c0_44 = arith.constant 0 : index
    %c0_45 = arith.constant 0 : index
    %69 = vector.load %arg18[%c0_44, %c0_45] : memref<290x8xbf16, #tpu.memory_space<vmem>>, vector<9x8xbf16>
    tpu.vector_store %arg18[%c0_44, %c0_45], %68 {strides = array<i32>} : memref<290x8xbf16, #tpu.memory_space<vmem>>, vector<9x8xbf16>,
    %cst_46 = arith.constant 0.000000e+00 : bf16
    %70 = vector.broadcast %cst_46 : bf16 to vector<9x8xbf16>
    %c73 = arith.constant 73 : index
    %c0_47 = arith.constant 0 : index
    %71 = vector.load %arg18[%c73, %c0_47] : memref<290x8xbf16, #tpu.memory_space<vmem>>, vector<9x8xbf16>
    tpu.vector_store %arg18[%c73, %c0_47], %70 {strides = array<i32>} : memref<290x8xbf16, #tpu.memory_space<vmem>>, vector<9x8xbf16>,
    %72 = arith.truncf %66 : vector<64x8xf32> to vector<64x8xbf16>
    %c9 = arith.constant 9 : index
    %c0_48 = arith.constant 0 : index
    %73 = vector.load %arg18[%c9, %c0_48] : memref<290x8xbf16, #tpu.memory_space<vmem>>, vector<64x8xbf16>
    tpu.vector_store %arg18[%c9, %c0_48], %72 {strides = array<i32>} : memref<290x8xbf16, #tpu.memory_space<vmem>>, vector<64x8xbf16>,
    %74 = tpu.iota {dimensions = array<i32: 0>} : vector<64x8xi32>
    %c8_i32 = arith.constant 8 : i32
    %c0_i32_49 = arith.constant 0 : i32
    %75 = arith.cmpi eq, %c8_i32, %c0_i32_49 : i32
    %c1_i32_50 = arith.constant 1 : i32
    %76 = arith.select %75, %c1_i32_50, %c8_i32 : i32
    %77 = vector.broadcast %76 : i32 to vector<64x8xi32>
    %78 = arith.remsi %74, %77 : vector<64x8xi32>
    %c0_i32_51 = arith.constant 0 : i32
    %79 = vector.broadcast %c0_i32_51 : i32 to vector<64x8xi32>
    %80 = arith.cmpi ne, %78, %79 : vector<64x8xi32>
    %c0_i32_52 = arith.constant 0 : i32
    %81 = vector.broadcast %c0_i32_52 : i32 to vector<64x8xi32>
    %82 = arith.cmpi slt, %78, %81 : vector<64x8xi32>
    %c0_i32_53 = arith.constant 0 : i32
    %83 = arith.cmpi slt, %76, %c0_i32_53 : i32
    %84 = vector.broadcast %83 : i1 to vector<64x8xi1>
    %85 = vector.broadcast %84 : vector<64x8xi1> to vector<64x8xi1>
    %86 = arith.xori %82, %85 : vector<64x8xi1>
    %87 = arith.andi %86, %80 : vector<64x8xi1>
    %88 = vector.broadcast %76 : i32 to vector<64x8xi32>
    %89 = arith.addi %78, %88 : vector<64x8xi32>
    %90 = arith.select %87, %89, %78 : vector<64x8xi1>, vector<64x8xi32>
    %c0_i32_54 = arith.constant 0 : i32
    %91 = vector.broadcast %c0_i32_54 : i32 to vector<64x8xi32>
    %92 = arith.cmpi ne, %90, %91 : vector<64x8xi32>
    %c7_i32 = arith.constant 7 : i32
    %93 = vector.broadcast %c7_i32 : i32 to vector<64x8xi32>
    %94 = arith.cmpi ne, %90, %93 : vector<64x8xi32>
    %cst_55 = arith.constant 0.000000e+00 : bf16
    %95 = vector.broadcast %cst_55 : bf16 to vector<64x8xbf16>
    %c0_56 = arith.constant 0 : index
    %c0_57 = arith.constant 0 : index
    %96 = vector.load %arg18[%c0_56, %c0_57] : memref<290x8xbf16, #tpu.memory_space<vmem>>, vector<64x8xbf16>
    %97 = arith.select %92, %96, %95 : vector<64x8xi1>, vector<64x8xbf16>
    %c1_58 = arith.constant 1 : index
    %c0_59 = arith.constant 0 : index
    %98 = vector.load %arg18[%c1_58, %c0_59] : memref<290x8xbf16, #tpu.memory_space<vmem>>, vector<64x8xbf16>
    %c2_60 = arith.constant 2 : index
    %c0_61 = arith.constant 0 : index
    %99 = vector.load %arg18[%c2_60, %c0_61] : memref<290x8xbf16, #tpu.memory_space<vmem>>, vector<64x8xbf16>
    %100 = arith.select %94, %99, %95 : vector<64x8xi1>, vector<64x8xbf16>
    %c8 = arith.constant 8 : index
    %c0_62 = arith.constant 0 : index
    %101 = vector.load %arg18[%c8, %c0_62] : memref<290x8xbf16, #tpu.memory_space<vmem>>, vector<64x8xbf16>
    %102 = arith.select %92, %101, %95 : vector<64x8xi1>, vector<64x8xbf16>
    %c9_63 = arith.constant 9 : index
    %c0_64 = arith.constant 0 : index
    %103 = vector.load %arg18[%c9_63, %c0_64] : memref<290x8xbf16, #tpu.memory_space<vmem>>, vector<64x8xbf16>
    %c10 = arith.constant 10 : index
    %c0_65 = arith.constant 0 : index
    %104 = vector.load %arg18[%c10, %c0_65] : memref<290x8xbf16, #tpu.memory_space<vmem>>, vector<64x8xbf16>
    %105 = arith.select %94, %104, %95 : vector<64x8xi1>, vector<64x8xbf16>
    %c16_66 = arith.constant 16 : index
    %c0_67 = arith.constant 0 : index
    %106 = vector.load %arg18[%c16_66, %c0_67] : memref<290x8xbf16, #tpu.memory_space<vmem>>, vector<64x8xbf16>
    %107 = arith.select %92, %106, %95 : vector<64x8xi1>, vector<64x8xbf16>
    %c17_68 = arith.constant 17 : index
    %c0_69 = arith.constant 0 : index
    %108 = vector.load %arg18[%c17_68, %c0_69] : memref<290x8xbf16, #tpu.memory_space<vmem>>, vector<64x8xbf16>
    %c18_70 = arith.constant 18 : index
    %c0_71 = arith.constant 0 : index
    %109 = vector.load %arg18[%c18_70, %c0_71] : memref<290x8xbf16, #tpu.memory_space<vmem>>, vector<64x8xbf16>
    %110 = arith.select %94, %109, %95 : vector<64x8xi1>, vector<64x8xbf16>
    %111 = tpu.concatenate %97, %98, %100, %102, %103, %105, %107, %108, %110 in 1 : vector<64x8xbf16>, vector<64x8xbf16>, vector<64x8xbf16>, vector<64x8xbf16>, vector<64x8xbf16>, vector<64x8xbf16>, vector<64x8xbf16>, vector<64x8xbf16>, vector<64x8xbf16> -> vector<64x72xbf16>
    %c0_72 = arith.constant 0 : index
    %c0_73 = arith.constant 0 : index
    %112 = vector.load %arg6[%c0_72, %c0_73] : memref<72x8xbf16, #tpu.memory_space<vmem>>, vector<72x8xbf16>
    %cst_74 = arith.constant dense<0.000000e+00> : vector<64x8xf32>
    %113 = tpu.matmul %111, %112, %cst_74 {dimension_numbers = #tpu.dot_dimension_numbers<[1], [0], [0], [1], [0, 0, 1, 1], [], []>} : vector<64x72xbf16>, vector<72x8xbf16>, vector<64x8xf32> -> vector<64x8xf32>
    %114 = vector.broadcast %67 : vector<1x8xf32> to vector<64x8xf32>
    %115 = arith.addf %113, %114 : vector<64x8xf32>
    %c0_75 = arith.constant 0 : index
    %c0_76 = arith.constant 0 : index
    %116 = vector.load %arg20[%c0_75, %c0_76] : memref<256x8xf32, #tpu.memory_space<vmem>>, vector<64x8xf32>
    tpu.vector_store %arg20[%c0_75, %c0_76], %115 {strides = array<i32>} : memref<256x8xf32, #tpu.memory_space<vmem>>, vector<64x8xf32>,
    %c0_77 = arith.constant 0 : index
    %c0_78 = arith.constant 0 : index
    %117 = tpu.strided_load %arg20[%c0_77, %c0_78] {strides = array<i32: 2, 1>} : memref<256x8xf32, #tpu.memory_space<vmem>>, vector<4x8xf32>
    %c16_79 = arith.constant 16 : index
    %c0_80 = arith.constant 0 : index
    %118 = tpu.strided_load %arg20[%c16_79, %c0_80] {strides = array<i32: 2, 1>} : memref<256x8xf32, #tpu.memory_space<vmem>>, vector<4x8xf32>
    %c32_81 = arith.constant 32 : index
    %c0_82 = arith.constant 0 : index
    %119 = tpu.strided_load %arg20[%c32_81, %c0_82] {strides = array<i32: 2, 1>} : memref<256x8xf32, #tpu.memory_space<vmem>>, vector<4x8xf32>
    %c48 = arith.constant 48 : index
    %c0_83 = arith.constant 0 : index
    %120 = tpu.strided_load %arg20[%c48, %c0_83] {strides = array<i32: 2, 1>} : memref<256x8xf32, #tpu.memory_space<vmem>>, vector<4x8xf32>
    %121 = tpu.concatenate %117, %118, %119, %120 in 0 : vector<4x8xf32>, vector<4x8xf32>, vector<4x8xf32>, vector<4x8xf32> -> vector<16x8xf32>
    %122 = arith.truncf %121 : vector<16x8xf32> to vector<16x8xbf16>
    %c0_84 = arith.constant 0 : index
    %c0_85 = arith.constant 0 : index
    %123 = vector.load %arg7[%c0_84, %c0_85] : memref<8x8xbf16, #tpu.memory_space<vmem>>, vector<8x8xbf16>
    %cst_86 = arith.constant dense<0.000000e+00> : vector<16x8xf32>
    %124 = tpu.matmul %122, %123, %cst_86 {dimension_numbers = #tpu.dot_dimension_numbers<[1], [0], [0], [1], [0, 0, 1, 1], [], []>} : vector<16x8xbf16>, vector<8x8xbf16>, vector<16x8xf32> -> vector<16x8xf32>
    %c2_87 = arith.constant 2 : index
    %c0_88 = arith.constant 0 : index
    %125 = vector.load %arg8[%c2_87, %c0_88] : memref<3x8xf32, #tpu.memory_space<vmem>>, vector<1x8xf32>
    %126 = vector.broadcast %125 : vector<1x8xf32> to vector<16x8xf32>
    %127 = arith.addf %124, %126 : vector<16x8xf32>
    %128 = vector.extract_strided_slice %127 {offsets = [0, 0], sizes = [16, 4], strides = [1, 1]} : vector<16x8xf32> to vector<16x4xf32>
    %cst_89 = arith.constant 1.821500e-01 : f32
    %129 = vector.broadcast %cst_89 : f32 to vector<16x4xf32>
    %130 = arith.mulf %128, %129 : vector<16x4xf32>
    %c0_90 = arith.constant 0 : index
    %c0_91 = arith.constant 0 : index
    %131 = vector.load %arg14[%c0_90, %c0_91] : memref<5x32xf32, #tpu.memory_space<vmem>>, vector<1x32xf32>
    %cst_92 = arith.constant 0.000000e+00 : bf16
    %132 = vector.broadcast %cst_92 : bf16 to vector<5x4xbf16>
    %c0_93 = arith.constant 0 : index
    %c0_94 = arith.constant 0 : index
    %133 = vector.load %arg19[%c0_93, %c0_94] : memref<26x32xbf16, #tpu.memory_space<vmem>>, vector<5x4xbf16>
    tpu.vector_store %arg19[%c0_93, %c0_94], %132 {strides = array<i32>} : memref<26x32xbf16, #tpu.memory_space<vmem>>, vector<5x4xbf16>,
    %cst_95 = arith.constant 0.000000e+00 : bf16
    %134 = vector.broadcast %cst_95 : bf16 to vector<5x4xbf16>
    %c21 = arith.constant 21 : index
    %c0_96 = arith.constant 0 : index
    %135 = vector.load %arg19[%c21, %c0_96] : memref<26x32xbf16, #tpu.memory_space<vmem>>, vector<5x4xbf16>
    tpu.vector_store %arg19[%c21, %c0_96], %134 {strides = array<i32>} : memref<26x32xbf16, #tpu.memory_space<vmem>>, vector<5x4xbf16>,
    %136 = arith.truncf %130 : vector<16x4xf32> to vector<16x4xbf16>
    %c5 = arith.constant 5 : index
    %c0_97 = arith.constant 0 : index
    %137 = vector.load %arg19[%c5, %c0_97] : memref<26x32xbf16, #tpu.memory_space<vmem>>, vector<16x4xbf16>
    tpu.vector_store %arg19[%c5, %c0_97], %136 {strides = array<i32>} : memref<26x32xbf16, #tpu.memory_space<vmem>>, vector<16x4xbf16>,
    %138 = tpu.iota {dimensions = array<i32: 0>} : vector<16x4xi32>
    %c4_i32 = arith.constant 4 : i32
    %c0_i32_98 = arith.constant 0 : i32
    %139 = arith.cmpi eq, %c4_i32, %c0_i32_98 : i32
    %c1_i32_99 = arith.constant 1 : i32
    %140 = arith.select %139, %c1_i32_99, %c4_i32 : i32
    %141 = vector.broadcast %140 : i32 to vector<16x4xi32>
    %142 = arith.remsi %138, %141 : vector<16x4xi32>
    %c0_i32_100 = arith.constant 0 : i32
    %143 = vector.broadcast %c0_i32_100 : i32 to vector<16x4xi32>
    %144 = arith.cmpi ne, %142, %143 : vector<16x4xi32>
    %c0_i32_101 = arith.constant 0 : i32
    %145 = vector.broadcast %c0_i32_101 : i32 to vector<16x4xi32>
    %146 = arith.cmpi slt, %142, %145 : vector<16x4xi32>
    %c0_i32_102 = arith.constant 0 : i32
    %147 = arith.cmpi slt, %140, %c0_i32_102 : i32
    %148 = vector.broadcast %147 : i1 to vector<16x4xi1>
    %149 = vector.broadcast %148 : vector<16x4xi1> to vector<16x4xi1>
    %150 = arith.xori %146, %149 : vector<16x4xi1>
    %151 = arith.andi %150, %144 : vector<16x4xi1>
    %152 = vector.broadcast %140 : i32 to vector<16x4xi32>
    %153 = arith.addi %142, %152 : vector<16x4xi32>
    %154 = arith.select %151, %153, %142 : vector<16x4xi1>, vector<16x4xi32>
    %c0_i32_103 = arith.constant 0 : i32
    %155 = vector.broadcast %c0_i32_103 : i32 to vector<16x4xi32>
    %156 = arith.cmpi ne, %154, %155 : vector<16x4xi32>
    %c3_i32 = arith.constant 3 : i32
    %157 = vector.broadcast %c3_i32 : i32 to vector<16x4xi32>
    %158 = arith.cmpi ne, %154, %157 : vector<16x4xi32>
    %cst_104 = arith.constant 0.000000e+00 : bf16
    %159 = vector.broadcast %cst_104 : bf16 to vector<16x4xbf16>
    %c0_105 = arith.constant 0 : index
    %c0_106 = arith.constant 0 : index
    %160 = vector.load %arg19[%c0_105, %c0_106] : memref<26x32xbf16, #tpu.memory_space<vmem>>, vector<16x4xbf16>
    %161 = arith.select %156, %160, %159 : vector<16x4xi1>, vector<16x4xbf16>
    %c1_107 = arith.constant 1 : index
    %c0_108 = arith.constant 0 : index
    %162 = vector.load %arg19[%c1_107, %c0_108] : memref<26x32xbf16, #tpu.memory_space<vmem>>, vector<16x4xbf16>
    %c2_109 = arith.constant 2 : index
    %c0_110 = arith.constant 0 : index
    %163 = vector.load %arg19[%c2_109, %c0_110] : memref<26x32xbf16, #tpu.memory_space<vmem>>, vector<16x4xbf16>
    %164 = arith.select %158, %163, %159 : vector<16x4xi1>, vector<16x4xbf16>
    %c4 = arith.constant 4 : index
    %c0_111 = arith.constant 0 : index
    %165 = vector.load %arg19[%c4, %c0_111] : memref<26x32xbf16, #tpu.memory_space<vmem>>, vector<16x4xbf16>
    %166 = arith.select %156, %165, %159 : vector<16x4xi1>, vector<16x4xbf16>
    %c5_112 = arith.constant 5 : index
    %c0_113 = arith.constant 0 : index
    %167 = vector.load %arg19[%c5_112, %c0_113] : memref<26x32xbf16, #tpu.memory_space<vmem>>, vector<16x4xbf16>
    %c6 = arith.constant 6 : index
    %c0_114 = arith.constant 0 : index
    %168 = vector.load %arg19[%c6, %c0_114] : memref<26x32xbf16, #tpu.memory_space<vmem>>, vector<16x4xbf16>
    %169 = arith.select %158, %168, %159 : vector<16x4xi1>, vector<16x4xbf16>
    %c8_115 = arith.constant 8 : index
    %c0_116 = arith.constant 0 : index
    %170 = vector.load %arg19[%c8_115, %c0_116] : memref<26x32xbf16, #tpu.memory_space<vmem>>, vector<16x4xbf16>
    %171 = arith.select %156, %170, %159 : vector<16x4xi1>, vector<16x4xbf16>
    %c9_117 = arith.constant 9 : index
    %c0_118 = arith.constant 0 : index
    %172 = vector.load %arg19[%c9_117, %c0_118] : memref<26x32xbf16, #tpu.memory_space<vmem>>, vector<16x4xbf16>
    %c10_119 = arith.constant 10 : index
    %c0_120 = arith.constant 0 : index
    %173 = vector.load %arg19[%c10_119, %c0_120] : memref<26x32xbf16, #tpu.memory_space<vmem>>, vector<16x4xbf16>
    %174 = arith.select %158, %173, %159 : vector<16x4xi1>, vector<16x4xbf16>
    %175 = tpu.concatenate %161, %162, %164, %166, %167, %169, %171, %172, %174 in 1 : vector<16x4xbf16>, vector<16x4xbf16>, vector<16x4xbf16>, vector<16x4xbf16>, vector<16x4xbf16>, vector<16x4xbf16>, vector<16x4xbf16>, vector<16x4xbf16>, vector<16x4xbf16> -> vector<16x36xbf16>
    %c0_121 = arith.constant 0 : index
    %c0_122 = arith.constant 0 : index
    %176 = vector.load %arg9[%c0_121, %c0_122] : memref<36x32xbf16, #tpu.memory_space<vmem>>, vector<36x32xbf16>
    %cst_123 = arith.constant dense<0.000000e+00> : vector<16x32xf32>
    %177 = tpu.matmul %175, %176, %cst_123 {dimension_numbers = #tpu.dot_dimension_numbers<[1], [0], [0], [1], [0, 0, 1, 1], [], []>} : vector<16x36xbf16>, vector<36x32xbf16>, vector<16x32xf32> -> vector<16x32xf32>
    %178 = vector.broadcast %131 : vector<1x32xf32> to vector<16x32xf32>
    %179 = arith.addf %177, %178 : vector<16x32xf32>
    %180 = arith.negf %179 : vector<16x32xf32>
    %181 = math.exp %180 : vector<16x32xf32>
    %cst_124 = arith.constant 1.000000e+00 : f32
    %182 = vector.broadcast %cst_124 : f32 to vector<16x32xf32>
    %183 = arith.addf %182, %181 : vector<16x32xf32>
    %184 = arith.divf %182, %183 : vector<16x32xf32>
    %185 = arith.mulf %179, %184 : vector<16x32xf32>
    %c1_125 = arith.constant 1 : index
    %c0_126 = arith.constant 0 : index
    %186 = vector.load %arg14[%c1_125, %c0_126] : memref<5x32xf32, #tpu.memory_space<vmem>>, vector<1x32xf32>
    %cst_127 = arith.constant 0.000000e+00 : bf16
    %187 = vector.broadcast %cst_127 : bf16 to vector<5x32xbf16>
    %c0_128 = arith.constant 0 : index
    %c0_129 = arith.constant 0 : index
    %188 = vector.load %arg19[%c0_128, %c0_129] : memref<26x32xbf16, #tpu.memory_space<vmem>>, vector<5x32xbf16>
    tpu.vector_store %arg19[%c0_128, %c0_129], %187 {strides = array<i32>} : memref<26x32xbf16, #tpu.memory_space<vmem>>, vector<5x32xbf16>,
    %cst_130 = arith.constant 0.000000e+00 : bf16
    %189 = vector.broadcast %cst_130 : bf16 to vector<5x32xbf16>
    %c21_131 = arith.constant 21 : index
    %c0_132 = arith.constant 0 : index
    %190 = vector.load %arg19[%c21_131, %c0_132] : memref<26x32xbf16, #tpu.memory_space<vmem>>, vector<5x32xbf16>
    tpu.vector_store %arg19[%c21_131, %c0_132], %189 {strides = array<i32>} : memref<26x32xbf16, #tpu.memory_space<vmem>>, vector<5x32xbf16>,
    %191 = arith.truncf %185 : vector<16x32xf32> to vector<16x32xbf16>
    %c5_133 = arith.constant 5 : index
    %c0_134 = arith.constant 0 : index
    %192 = vector.load %arg19[%c5_133, %c0_134] : memref<26x32xbf16, #tpu.memory_space<vmem>>, vector<16x32xbf16>
    tpu.vector_store %arg19[%c5_133, %c0_134], %191 {strides = array<i32>} : memref<26x32xbf16, #tpu.memory_space<vmem>>, vector<16x32xbf16>,
    %193 = tpu.iota {dimensions = array<i32: 0>} : vector<16x32xi32>
    %c4_i32_135 = arith.constant 4 : i32
    %c0_i32_136 = arith.constant 0 : i32
    %194 = arith.cmpi eq, %c4_i32_135, %c0_i32_136 : i32
    %c1_i32_137 = arith.constant 1 : i32
    %195 = arith.select %194, %c1_i32_137, %c4_i32_135 : i32
    %196 = vector.broadcast %195 : i32 to vector<16x32xi32>
    %197 = arith.remsi %193, %196 : vector<16x32xi32>
    %c0_i32_138 = arith.constant 0 : i32
    %198 = vector.broadcast %c0_i32_138 : i32 to vector<16x32xi32>
    %199 = arith.cmpi ne, %197, %198 : vector<16x32xi32>
    %c0_i32_139 = arith.constant 0 : i32
    %200 = vector.broadcast %c0_i32_139 : i32 to vector<16x32xi32>
    %201 = arith.cmpi slt, %197, %200 : vector<16x32xi32>
    %c0_i32_140 = arith.constant 0 : i32
    %202 = arith.cmpi slt, %195, %c0_i32_140 : i32
    %203 = vector.broadcast %202 : i1 to vector<16x32xi1>
    %204 = vector.broadcast %203 : vector<16x32xi1> to vector<16x32xi1>
    %205 = arith.xori %201, %204 : vector<16x32xi1>
    %206 = arith.andi %205, %199 : vector<16x32xi1>
    %207 = vector.broadcast %195 : i32 to vector<16x32xi32>
    %208 = arith.addi %197, %207 : vector<16x32xi32>
    %209 = arith.select %206, %208, %197 : vector<16x32xi1>, vector<16x32xi32>
    %c0_i32_141 = arith.constant 0 : i32
    %210 = vector.broadcast %c0_i32_141 : i32 to vector<16x32xi32>
    %211 = arith.cmpi ne, %209, %210 : vector<16x32xi32>
    %c3_i32_142 = arith.constant 3 : i32
    %212 = vector.broadcast %c3_i32_142 : i32 to vector<16x32xi32>
    %213 = arith.cmpi ne, %209, %212 : vector<16x32xi32>
    %cst_143 = arith.constant 0.000000e+00 : bf16
    %214 = vector.broadcast %cst_143 : bf16 to vector<16x32xbf16>
    %c0_144 = arith.constant 0 : index
    %c0_145 = arith.constant 0 : index
    %215 = vector.load %arg19[%c0_144, %c0_145] : memref<26x32xbf16, #tpu.memory_space<vmem>>, vector<16x32xbf16>
    %216 = arith.select %211, %215, %214 : vector<16x32xi1>, vector<16x32xbf16>
    %c1_146 = arith.constant 1 : index
    %c0_147 = arith.constant 0 : index
    %217 = vector.load %arg19[%c1_146, %c0_147] : memref<26x32xbf16, #tpu.memory_space<vmem>>, vector<16x32xbf16>
    %c2_148 = arith.constant 2 : index
    %c0_149 = arith.constant 0 : index
    %218 = vector.load %arg19[%c2_148, %c0_149] : memref<26x32xbf16, #tpu.memory_space<vmem>>, vector<16x32xbf16>
    %219 = arith.select %213, %218, %214 : vector<16x32xi1>, vector<16x32xbf16>
    %c4_150 = arith.constant 4 : index
    %c0_151 = arith.constant 0 : index
    %220 = vector.load %arg19[%c4_150, %c0_151] : memref<26x32xbf16, #tpu.memory_space<vmem>>, vector<16x32xbf16>
    %221 = arith.select %211, %220, %214 : vector<16x32xi1>, vector<16x32xbf16>
    %c5_152 = arith.constant 5 : index
    %c0_153 = arith.constant 0 : index
    %222 = vector.load %arg19[%c5_152, %c0_153] : memref<26x32xbf16, #tpu.memory_space<vmem>>, vector<16x32xbf16>
    %c6_154 = arith.constant 6 : index
    %c0_155 = arith.constant 0 : index
    %223 = vector.load %arg19[%c6_154, %c0_155] : memref<26x32xbf16, #tpu.memory_space<vmem>>, vector<16x32xbf16>
    %224 = arith.select %213, %223, %214 : vector<16x32xi1>, vector<16x32xbf16>
    %c8_156 = arith.constant 8 : index
    %c0_157 = arith.constant 0 : index
    %225 = vector.load %arg19[%c8_156, %c0_157] : memref<26x32xbf16, #tpu.memory_space<vmem>>, vector<16x32xbf16>
    %226 = arith.select %211, %225, %214 : vector<16x32xi1>, vector<16x32xbf16>
    %c9_158 = arith.constant 9 : index
    %c0_159 = arith.constant 0 : index
    %227 = vector.load %arg19[%c9_158, %c0_159] : memref<26x32xbf16, #tpu.memory_space<vmem>>, vector<16x32xbf16>
    %c10_160 = arith.constant 10 : index
    %c0_161 = arith.constant 0 : index
    %228 = vector.load %arg19[%c10_160, %c0_161] : memref<26x32xbf16, #tpu.memory_space<vmem>>, vector<16x32xbf16>
    %229 = arith.select %213, %228, %214 : vector<16x32xi1>, vector<16x32xbf16>
    %230 = tpu.concatenate %216, %217, %219, %221, %222, %224, %226, %227, %229 in 1 : vector<16x32xbf16>, vector<16x32xbf16>, vector<16x32xbf16>, vector<16x32xbf16>, vector<16x32xbf16>, vector<16x32xbf16>, vector<16x32xbf16>, vector<16x32xbf16>, vector<16x32xbf16> -> vector<16x288xbf16>
    %c0_162 = arith.constant 0 : index
    %c0_163 = arith.constant 0 : index
    %231 = vector.load %arg10[%c0_162, %c0_163] : memref<288x32xbf16, #tpu.memory_space<vmem>>, vector<288x32xbf16>
    %cst_164 = arith.constant dense<0.000000e+00> : vector<16x32xf32>
    %232 = tpu.matmul %230, %231, %cst_164 {dimension_numbers = #tpu.dot_dimension_numbers<[1], [0], [0], [1], [0, 0, 1, 1], [], []>} : vector<16x288xbf16>, vector<288x32xbf16>, vector<16x32xf32> -> vector<16x32xf32>
    %233 = vector.broadcast %186 : vector<1x32xf32> to vector<16x32xf32>
    %234 = arith.addf %232, %233 : vector<16x32xf32>
    %c0_165 = arith.constant 0 : index
    %c0_166 = arith.constant 0 : index
    %235 = vector.load %arg2[%c0_165, %c0_166] : memref<1x32xf32, #tpu.memory_space<vmem>>, vector<1x32xf32>
    %236 = vector.broadcast %235 : vector<1x32xf32> to vector<16x32xf32>
    %237 = arith.addf %234, %236 : vector<16x32xf32>
    %238 = arith.negf %237 : vector<16x32xf32>
    %239 = math.exp %238 : vector<16x32xf32>
    %cst_167 = arith.constant 1.000000e+00 : f32
    %240 = vector.broadcast %cst_167 : f32 to vector<16x32xf32>
    %241 = arith.addf %240, %239 : vector<16x32xf32>
    %242 = arith.divf %240, %241 : vector<16x32xf32>
    %243 = arith.mulf %237, %242 : vector<16x32xf32>
    %c2_168 = arith.constant 2 : index
    %c0_169 = arith.constant 0 : index
    %244 = vector.load %arg14[%c2_168, %c0_169] : memref<5x32xf32, #tpu.memory_space<vmem>>, vector<1x32xf32>
    %cst_170 = arith.constant 0.000000e+00 : bf16
    %245 = vector.broadcast %cst_170 : bf16 to vector<5x32xbf16>
    %c0_171 = arith.constant 0 : index
    %c0_172 = arith.constant 0 : index
    %246 = vector.load %arg19[%c0_171, %c0_172] : memref<26x32xbf16, #tpu.memory_space<vmem>>, vector<5x32xbf16>
    tpu.vector_store %arg19[%c0_171, %c0_172], %245 {strides = array<i32>} : memref<26x32xbf16, #tpu.memory_space<vmem>>, vector<5x32xbf16>,
    %cst_173 = arith.constant 0.000000e+00 : bf16
    %247 = vector.broadcast %cst_173 : bf16 to vector<5x32xbf16>
    %c21_174 = arith.constant 21 : index
    %c0_175 = arith.constant 0 : index
    %248 = vector.load %arg19[%c21_174, %c0_175] : memref<26x32xbf16, #tpu.memory_space<vmem>>, vector<5x32xbf16>
    tpu.vector_store %arg19[%c21_174, %c0_175], %247 {strides = array<i32>} : memref<26x32xbf16, #tpu.memory_space<vmem>>, vector<5x32xbf16>,
    %249 = arith.truncf %243 : vector<16x32xf32> to vector<16x32xbf16>
    %c5_176 = arith.constant 5 : index
    %c0_177 = arith.constant 0 : index
    %250 = vector.load %arg19[%c5_176, %c0_177] : memref<26x32xbf16, #tpu.memory_space<vmem>>, vector<16x32xbf16>
    tpu.vector_store %arg19[%c5_176, %c0_177], %249 {strides = array<i32>} : memref<26x32xbf16, #tpu.memory_space<vmem>>, vector<16x32xbf16>,
    %251 = tpu.iota {dimensions = array<i32: 0>} : vector<16x32xi32>
    %c4_i32_178 = arith.constant 4 : i32
    %c0_i32_179 = arith.constant 0 : i32
    %252 = arith.cmpi eq, %c4_i32_178, %c0_i32_179 : i32
    %c1_i32_180 = arith.constant 1 : i32
    %253 = arith.select %252, %c1_i32_180, %c4_i32_178 : i32
    %254 = vector.broadcast %253 : i32 to vector<16x32xi32>
    %255 = arith.remsi %251, %254 : vector<16x32xi32>
    %c0_i32_181 = arith.constant 0 : i32
    %256 = vector.broadcast %c0_i32_181 : i32 to vector<16x32xi32>
    %257 = arith.cmpi ne, %255, %256 : vector<16x32xi32>
    %c0_i32_182 = arith.constant 0 : i32
    %258 = vector.broadcast %c0_i32_182 : i32 to vector<16x32xi32>
    %259 = arith.cmpi slt, %255, %258 : vector<16x32xi32>
    %c0_i32_183 = arith.constant 0 : i32
    %260 = arith.cmpi slt, %253, %c0_i32_183 : i32
    %261 = vector.broadcast %260 : i1 to vector<16x32xi1>
    %262 = vector.broadcast %261 : vector<16x32xi1> to vector<16x32xi1>
    %263 = arith.xori %259, %262 : vector<16x32xi1>
    %264 = arith.andi %263, %257 : vector<16x32xi1>
    %265 = vector.broadcast %253 : i32 to vector<16x32xi32>
    %266 = arith.addi %255, %265 : vector<16x32xi32>
    %267 = arith.select %264, %266, %255 : vector<16x32xi1>, vector<16x32xi32>
    %c0_i32_184 = arith.constant 0 : i32
    %268 = vector.broadcast %c0_i32_184 : i32 to vector<16x32xi32>
    %269 = arith.cmpi ne, %267, %268 : vector<16x32xi32>
    %c3_i32_185 = arith.constant 3 : i32
    %270 = vector.broadcast %c3_i32_185 : i32 to vector<16x32xi32>
    %271 = arith.cmpi ne, %267, %270 : vector<16x32xi32>
    %cst_186 = arith.constant 0.000000e+00 : bf16
    %272 = vector.broadcast %cst_186 : bf16 to vector<16x32xbf16>
    %c0_187 = arith.constant 0 : index
    %c0_188 = arith.constant 0 : index
    %273 = vector.load %arg19[%c0_187, %c0_188] : memref<26x32xbf16, #tpu.memory_space<vmem>>, vector<16x32xbf16>
    %274 = arith.select %269, %273, %272 : vector<16x32xi1>, vector<16x32xbf16>
    %c1_189 = arith.constant 1 : index
    %c0_190 = arith.constant 0 : index
    %275 = vector.load %arg19[%c1_189, %c0_190] : memref<26x32xbf16, #tpu.memory_space<vmem>>, vector<16x32xbf16>
    %c2_191 = arith.constant 2 : index
    %c0_192 = arith.constant 0 : index
    %276 = vector.load %arg19[%c2_191, %c0_192] : memref<26x32xbf16, #tpu.memory_space<vmem>>, vector<16x32xbf16>
    %277 = arith.select %271, %276, %272 : vector<16x32xi1>, vector<16x32xbf16>
    %c4_193 = arith.constant 4 : index
    %c0_194 = arith.constant 0 : index
    %278 = vector.load %arg19[%c4_193, %c0_194] : memref<26x32xbf16, #tpu.memory_space<vmem>>, vector<16x32xbf16>
    %279 = arith.select %269, %278, %272 : vector<16x32xi1>, vector<16x32xbf16>
    %c5_195 = arith.constant 5 : index
    %c0_196 = arith.constant 0 : index
    %280 = vector.load %arg19[%c5_195, %c0_196] : memref<26x32xbf16, #tpu.memory_space<vmem>>, vector<16x32xbf16>
    %c6_197 = arith.constant 6 : index
    %c0_198 = arith.constant 0 : index
    %281 = vector.load %arg19[%c6_197, %c0_198] : memref<26x32xbf16, #tpu.memory_space<vmem>>, vector<16x32xbf16>
    %282 = arith.select %271, %281, %272 : vector<16x32xi1>, vector<16x32xbf16>
    %c8_199 = arith.constant 8 : index
    %c0_200 = arith.constant 0 : index
    %283 = vector.load %arg19[%c8_199, %c0_200] : memref<26x32xbf16, #tpu.memory_space<vmem>>, vector<16x32xbf16>
    %284 = arith.select %269, %283, %272 : vector<16x32xi1>, vector<16x32xbf16>
    %c9_201 = arith.constant 9 : index
    %c0_202 = arith.constant 0 : index
    %285 = vector.load %arg19[%c9_201, %c0_202] : memref<26x32xbf16, #tpu.memory_space<vmem>>, vector<16x32xbf16>
    %c10_203 = arith.constant 10 : index
    %c0_204 = arith.constant 0 : index
    %286 = vector.load %arg19[%c10_203, %c0_204] : memref<26x32xbf16, #tpu.memory_space<vmem>>, vector<16x32xbf16>
    %287 = arith.select %271, %286, %272 : vector<16x32xi1>, vector<16x32xbf16>
    %288 = tpu.concatenate %274, %275, %277, %279, %280, %282, %284, %285, %287 in 1 : vector<16x32xbf16>, vector<16x32xbf16>, vector<16x32xbf16>, vector<16x32xbf16>, vector<16x32xbf16>, vector<16x32xbf16>, vector<16x32xbf16>, vector<16x32xbf16>, vector<16x32xbf16> -> vector<16x288xbf16>
    %c0_205 = arith.constant 0 : index
    %c0_206 = arith.constant 0 : index
    %289 = vector.load %arg11[%c0_205, %c0_206] : memref<288x32xbf16, #tpu.memory_space<vmem>>, vector<288x32xbf16>
    %cst_207 = arith.constant dense<0.000000e+00> : vector<16x32xf32>
    %290 = tpu.matmul %288, %289, %cst_207 {dimension_numbers = #tpu.dot_dimension_numbers<[1], [0], [0], [1], [0, 0, 1, 1], [], []>} : vector<16x288xbf16>, vector<288x32xbf16>, vector<16x32xf32> -> vector<16x32xf32>
    %291 = vector.broadcast %244 : vector<1x32xf32> to vector<16x32xf32>
    %292 = arith.addf %290, %291 : vector<16x32xf32>
    %293 = arith.addf %179, %292 : vector<16x32xf32>
    %294 = arith.truncf %293 : vector<16x32xf32> to vector<16x32xbf16>
    %c0_208 = arith.constant 0 : index
    %c0_209 = arith.constant 0 : index
    %295 = vector.load %arg12[%c0_208, %c0_209] : memref<32x32xbf16, #tpu.memory_space<vmem>>, vector<32x32xbf16>
    %cst_210 = arith.constant dense<0.000000e+00> : vector<16x32xf32>
    %296 = tpu.matmul %294, %295, %cst_210 {dimension_numbers = #tpu.dot_dimension_numbers<[1], [0], [0], [1], [0, 0, 1, 1], [], []>} : vector<16x32xbf16>, vector<32x32xbf16>, vector<16x32xf32> -> vector<16x32xf32>
    %c3 = arith.constant 3 : index
    %c0_211 = arith.constant 0 : index
    %297 = vector.load %arg14[%c3, %c0_211] : memref<5x32xf32, #tpu.memory_space<vmem>>, vector<1x32xf32>
    %298 = vector.broadcast %297 : vector<1x32xf32> to vector<16x32xf32>
    %299 = arith.addf %296, %298 : vector<16x32xf32>
    %300 = arith.truncf %299 : vector<16x32xf32> to vector<16x32xbf16>
    %c0_212 = arith.constant 0 : index
    %c0_213 = arith.constant 0 : index
    %301 = vector.load %arg3[%c0_212, %c0_213] : memref<8x32xbf16, #tpu.memory_space<vmem>>, vector<8x32xbf16>
    %cst_214 = arith.constant dense<0.000000e+00> : vector<16x8xf32>
    %302 = tpu.matmul %300, %301, %cst_214 {dimension_numbers = #tpu.dot_dimension_numbers<[1], [1], [0], [0], [0, 0, 1, 0], [], []>} : vector<16x32xbf16>, vector<8x32xbf16>, vector<16x8xf32> -> vector<16x8xf32>
    %cst_215 = arith.constant dense<0xFF800000> : vector<16xf32>
    %303 = vector.multi_reduction <maximumf>, %302, %cst_215 [1] : vector<16x8xf32> to vector<16xf32>
    %304 = vector.shape_cast %303 : vector<16xf32> to vector<16x1xf32>
    %305 = vector.broadcast %304 : vector<16x1xf32> to vector<16x8xf32>
    %306 = arith.subf %302, %305 : vector<16x8xf32>
    %307 = math.exp %306 : vector<16x8xf32>
    %cst_216 = arith.constant dense<0.000000e+00> : vector<16xf32>
    %308 = vector.multi_reduction <add>, %307, %cst_216 [1] : vector<16x8xf32> to vector<16xf32>
    %309 = vector.shape_cast %308 : vector<16xf32> to vector<16x1xf32>
    %310 = tpu.reciprocal %309 {approx = true} : vector<16x1xf32> -> vector<16x1xf32>
    %311 = vector.broadcast %310 : vector<16x1xf32> to vector<16x8xf32>
    %312 = arith.mulf %307, %311 : vector<16x8xf32>
    %313 = arith.truncf %312 : vector<16x8xf32> to vector<16x8xbf16>
    %c0_217 = arith.constant 0 : index
    %c0_218 = arith.constant 0 : index
    %314 = vector.load %arg4[%c0_217, %c0_218] : memref<8x32xbf16, #tpu.memory_space<vmem>>, vector<8x32xbf16>
    %cst_219 = arith.constant dense<0.000000e+00> : vector<16x32xf32>
    %315 = tpu.matmul %313, %314, %cst_219 {dimension_numbers = #tpu.dot_dimension_numbers<[1], [0], [0], [1], [0, 0, 1, 1], [], []>} : vector<16x8xbf16>, vector<8x32xbf16>, vector<16x32xf32> -> vector<16x32xf32>
    %316 = arith.truncf %315 : vector<16x32xf32> to vector<16x32xbf16>
    %c0_220 = arith.constant 0 : index
    %c0_221 = arith.constant 0 : index
    %317 = vector.load %arg13[%c0_220, %c0_221] : memref<32x32xbf16, #tpu.memory_space<vmem>>, vector<32x32xbf16>
    %cst_222 = arith.constant dense<0.000000e+00> : vector<16x32xf32>
    %318 = tpu.matmul %316, %317, %cst_222 {dimension_numbers = #tpu.dot_dimension_numbers<[1], [0], [0], [1], [0, 0, 1, 1], [], []>} : vector<16x32xbf16>, vector<32x32xbf16>, vector<16x32xf32> -> vector<16x32xf32>
    %319 = arith.addf %293, %318 : vector<16x32xf32>
    %c4_223 = arith.constant 4 : index
    %c0_224 = arith.constant 0 : index
    %320 = vector.load %arg14[%c4_223, %c0_224] : memref<5x32xf32, #tpu.memory_space<vmem>>, vector<1x32xf32>
    %321 = vector.broadcast %320 : vector<1x32xf32> to vector<16x32xf32>
    %322 = arith.addf %319, %321 : vector<16x32xf32>
    %c0_225 = arith.constant 0 : index
    %c0_226 = arith.constant 0 : index
    %323 = vector.load %arg16[%c0_225, %c0_226] : memref<1x16xf32, #tpu.memory_space<vmem>>, vector<1x16xf32>
    %cst_227 = arith.constant 0.000000e+00 : bf16
    %324 = vector.broadcast %cst_227 : bf16 to vector<5x32xbf16>
    %c0_228 = arith.constant 0 : index
    %c0_229 = arith.constant 0 : index
    %325 = vector.load %arg19[%c0_228, %c0_229] : memref<26x32xbf16, #tpu.memory_space<vmem>>, vector<5x32xbf16>
    tpu.vector_store %arg19[%c0_228, %c0_229], %324 {strides = array<i32>} : memref<26x32xbf16, #tpu.memory_space<vmem>>, vector<5x32xbf16>,
    %cst_230 = arith.constant 0.000000e+00 : bf16
    %326 = vector.broadcast %cst_230 : bf16 to vector<5x32xbf16>
    %c21_231 = arith.constant 21 : index
    %c0_232 = arith.constant 0 : index
    %327 = vector.load %arg19[%c21_231, %c0_232] : memref<26x32xbf16, #tpu.memory_space<vmem>>, vector<5x32xbf16>
    tpu.vector_store %arg19[%c21_231, %c0_232], %326 {strides = array<i32>} : memref<26x32xbf16, #tpu.memory_space<vmem>>, vector<5x32xbf16>,
    %328 = arith.truncf %322 : vector<16x32xf32> to vector<16x32xbf16>
    %c5_233 = arith.constant 5 : index
    %c0_234 = arith.constant 0 : index
    %329 = vector.load %arg19[%c5_233, %c0_234] : memref<26x32xbf16, #tpu.memory_space<vmem>>, vector<16x32xbf16>
    tpu.vector_store %arg19[%c5_233, %c0_234], %328 {strides = array<i32>} : memref<26x32xbf16, #tpu.memory_space<vmem>>, vector<16x32xbf16>,
    %330 = tpu.iota {dimensions = array<i32: 0>} : vector<16x32xi32>
    %c4_i32_235 = arith.constant 4 : i32
    %c0_i32_236 = arith.constant 0 : i32
    %331 = arith.cmpi eq, %c4_i32_235, %c0_i32_236 : i32
    %c1_i32_237 = arith.constant 1 : i32
    %332 = arith.select %331, %c1_i32_237, %c4_i32_235 : i32
    %333 = vector.broadcast %332 : i32 to vector<16x32xi32>
    %334 = arith.remsi %330, %333 : vector<16x32xi32>
    %c0_i32_238 = arith.constant 0 : i32
    %335 = vector.broadcast %c0_i32_238 : i32 to vector<16x32xi32>
    %336 = arith.cmpi ne, %334, %335 : vector<16x32xi32>
    %c0_i32_239 = arith.constant 0 : i32
    %337 = vector.broadcast %c0_i32_239 : i32 to vector<16x32xi32>
    %338 = arith.cmpi slt, %334, %337 : vector<16x32xi32>
    %c0_i32_240 = arith.constant 0 : i32
    %339 = arith.cmpi slt, %332, %c0_i32_240 : i32
    %340 = vector.broadcast %339 : i1 to vector<16x32xi1>
    %341 = vector.broadcast %340 : vector<16x32xi1> to vector<16x32xi1>
    %342 = arith.xori %338, %341 : vector<16x32xi1>
    %343 = arith.andi %342, %336 : vector<16x32xi1>
    %344 = vector.broadcast %332 : i32 to vector<16x32xi32>
    %345 = arith.addi %334, %344 : vector<16x32xi32>
    %346 = arith.select %343, %345, %334 : vector<16x32xi1>, vector<16x32xi32>
    %c0_i32_241 = arith.constant 0 : i32
    %347 = vector.broadcast %c0_i32_241 : i32 to vector<16x32xi32>
    %348 = arith.cmpi ne, %346, %347 : vector<16x32xi32>
    %c3_i32_242 = arith.constant 3 : i32
    %349 = vector.broadcast %c3_i32_242 : i32 to vector<16x32xi32>
    %350 = arith.cmpi ne, %346, %349 : vector<16x32xi32>
    %cst_243 = arith.constant 0.000000e+00 : bf16
    %351 = vector.broadcast %cst_243 : bf16 to vector<16x32xbf16>
    %c0_244 = arith.constant 0 : index
    %c0_245 = arith.constant 0 : index
    %352 = vector.load %arg19[%c0_244, %c0_245] : memref<26x32xbf16, #tpu.memory_space<vmem>>, vector<16x32xbf16>
    %353 = arith.select %348, %352, %351 : vector<16x32xi1>, vector<16x32xbf16>
    %c1_246 = arith.constant 1 : index
    %c0_247 = arith.constant 0 : index
    %354 = vector.load %arg19[%c1_246, %c0_247] : memref<26x32xbf16, #tpu.memory_space<vmem>>, vector<16x32xbf16>
    %c2_248 = arith.constant 2 : index
    %c0_249 = arith.constant 0 : index
    %355 = vector.load %arg19[%c2_248, %c0_249] : memref<26x32xbf16, #tpu.memory_space<vmem>>, vector<16x32xbf16>
    %356 = arith.select %350, %355, %351 : vector<16x32xi1>, vector<16x32xbf16>
    %c4_250 = arith.constant 4 : index
    %c0_251 = arith.constant 0 : index
    %357 = vector.load %arg19[%c4_250, %c0_251] : memref<26x32xbf16, #tpu.memory_space<vmem>>, vector<16x32xbf16>
    %358 = arith.select %348, %357, %351 : vector<16x32xi1>, vector<16x32xbf16>
    %c5_252 = arith.constant 5 : index
    %c0_253 = arith.constant 0 : index
    %359 = vector.load %arg19[%c5_252, %c0_253] : memref<26x32xbf16, #tpu.memory_space<vmem>>, vector<16x32xbf16>
    %c6_254 = arith.constant 6 : index
    %c0_255 = arith.constant 0 : index
    %360 = vector.load %arg19[%c6_254, %c0_255] : memref<26x32xbf16, #tpu.memory_space<vmem>>, vector<16x32xbf16>
    %361 = arith.select %350, %360, %351 : vector<16x32xi1>, vector<16x32xbf16>
    %c8_256 = arith.constant 8 : index
    %c0_257 = arith.constant 0 : index
    %362 = vector.load %arg19[%c8_256, %c0_257] : memref<26x32xbf16, #tpu.memory_space<vmem>>, vector<16x32xbf16>
    %363 = arith.select %348, %362, %351 : vector<16x32xi1>, vector<16x32xbf16>
    %c9_258 = arith.constant 9 : index
    %c0_259 = arith.constant 0 : index
    %364 = vector.load %arg19[%c9_258, %c0_259] : memref<26x32xbf16, #tpu.memory_space<vmem>>, vector<16x32xbf16>
    %c10_260 = arith.constant 10 : index
    %c0_261 = arith.constant 0 : index
    %365 = vector.load %arg19[%c10_260, %c0_261] : memref<26x32xbf16, #tpu.memory_space<vmem>>, vector<16x32xbf16>
    %366 = arith.select %350, %365, %351 : vector<16x32xi1>, vector<16x32xbf16>
    %367 = tpu.concatenate %353, %354, %356, %358, %359, %361, %363, %364, %366 in 1 : vector<16x32xbf16>, vector<16x32xbf16>, vector<16x32xbf16>, vector<16x32xbf16>, vector<16x32xbf16>, vector<16x32xbf16>, vector<16x32xbf16>, vector<16x32xbf16>, vector<16x32xbf16> -> vector<16x288xbf16>
    %c0_262 = arith.constant 0 : index
    %c0_263 = arith.constant 0 : index
    %368 = vector.load %arg15[%c0_262, %c0_263] : memref<288x16xbf16, #tpu.memory_space<vmem>>, vector<288x16xbf16>
    %cst_264 = arith.constant dense<0.000000e+00> : vector<16x16xf32>
    %369 = tpu.matmul %367, %368, %cst_264 {dimension_numbers = #tpu.dot_dimension_numbers<[1], [0], [0], [1], [0, 0, 1, 1], [], []>} : vector<16x288xbf16>, vector<288x16xbf16>, vector<16x16xf32> -> vector<16x16xf32>
    %370 = vector.broadcast %323 : vector<1x16xf32> to vector<16x16xf32>
    %371 = arith.addf %369, %370 : vector<16x16xf32>
    %cst_265 = arith.constant 5.4899807 : f32
    %372 = vector.broadcast %cst_265 : f32 to vector<16x16xf32>
    %373 = arith.mulf %371, %372 : vector<16x16xf32>
    %c0_266 = arith.constant 0 : index
    %c0_267 = arith.constant 0 : index
    %c0_268 = arith.constant 0 : index
    %374 = vector.load %arg17[%c0_266, %c0_267, %c0_268] : memref<1x16x16xf32, #tpu.memory_space<vmem>>, vector<1x16x16xf32>
    %375 = vector.shape_cast %374 : vector<1x16x16xf32> to vector<16x16xf32>
    %376 = vector.shape_cast %373 : vector<16x16xf32> to vector<1x16x16xf32>
    tpu.vector_store %arg17[%c0_266, %c0_267, %c0_268], %376 {strides = array<i32>} : memref<1x16x16xf32, #tpu.memory_space<vmem>>, vector<1x16x16xf32>,
    return
  }
  func.func @transform_0(%arg0: i32) -> (i32, i32, i32) {
    %c0_i32 = arith.constant 0 : i32
    %c0_i32_0 = arith.constant 0 : i32
    %c0_i32_1 = arith.constant 0 : i32
    return %arg0, %c0_i32, %c0_i32_0 : i32, i32, i32
  }
  func.func @transform_1(%arg0: i32) -> (i32, i32) {
    %c0_i32 = arith.constant 0 : i32
    %c0_i32_0 = arith.constant 0 : i32
    %c0_i32_1 = arith.constant 0 : i32
    return %c0_i32, %c0_i32_0 : i32, i32
  }
  func.func @transform_2(%arg0: i32) -> (i32, i32) {
    %c0_i32 = arith.constant 0 : i32
    %c0_i32_0 = arith.constant 0 : i32
    %c0_i32_1 = arith.constant 0 : i32
    return %c0_i32, %c0_i32_0 : i32, i32
  }
  func.func @transform_3(%arg0: i32) -> (i32, i32) {
    %c0_i32 = arith.constant 0 : i32
    %c0_i32_0 = arith.constant 0 : i32
    %c0_i32_1 = arith.constant 0 : i32
    return %c0_i32, %c0_i32_0 : i32, i32
  }
  func.func @transform_4(%arg0: i32) -> (i32, i32) {
    %c0_i32 = arith.constant 0 : i32
    %c0_i32_0 = arith.constant 0 : i32
    %c0_i32_1 = arith.constant 0 : i32
    return %c0_i32, %c0_i32_0 : i32, i32
  }
  func.func @transform_5(%arg0: i32) -> (i32, i32) {
    %c0_i32 = arith.constant 0 : i32
    %c0_i32_0 = arith.constant 0 : i32
    %c0_i32_1 = arith.constant 0 : i32
    return %c0_i32, %c0_i32_0 : i32, i32
  }
  func.func @transform_6(%arg0: i32) -> (i32, i32) {
    %c0_i32 = arith.constant 0 : i32
    %c0_i32_0 = arith.constant 0 : i32
    %c0_i32_1 = arith.constant 0 : i32
    return %c0_i32, %c0_i32_0 : i32, i32
  }
  func.func @transform_7(%arg0: i32) -> (i32, i32) {
    %c0_i32 = arith.constant 0 : i32
    %c0_i32_0 = arith.constant 0 : i32
    %c0_i32_1 = arith.constant 0 : i32
    return %c0_i32, %c0_i32_0 : i32, i32
  }
  func.func @transform_8(%arg0: i32) -> (i32, i32) {
    %c0_i32 = arith.constant 0 : i32
    %c0_i32_0 = arith.constant 0 : i32
    %c0_i32_1 = arith.constant 0 : i32
    return %c0_i32, %c0_i32_0 : i32, i32
  }
  func.func @transform_9(%arg0: i32) -> (i32, i32) {
    %c0_i32 = arith.constant 0 : i32
    %c0_i32_0 = arith.constant 0 : i32
    %c0_i32_1 = arith.constant 0 : i32
    return %c0_i32, %c0_i32_0 : i32, i32
  }
  func.func @transform_10(%arg0: i32) -> (i32, i32) {
    %c0_i32 = arith.constant 0 : i32
    %c0_i32_0 = arith.constant 0 : i32
    %c0_i32_1 = arith.constant 0 : i32
    return %c0_i32, %c0_i32_0 : i32, i32
  }
  func.func @transform_11(%arg0: i32) -> (i32, i32) {
    %c0_i32 = arith.constant 0 : i32
    %c0_i32_0 = arith.constant 0 : i32
    %c0_i32_1 = arith.constant 0 : i32
    return %c0_i32, %c0_i32_0 : i32, i32
  }
  func.func @transform_12(%arg0: i32) -> (i32, i32) {
    %c0_i32 = arith.constant 0 : i32
    %c0_i32_0 = arith.constant 0 : i32
    %c0_i32_1 = arith.constant 0 : i32
    return %c0_i32, %c0_i32_0 : i32, i32
  }
  func.func @transform_13(%arg0: i32) -> (i32, i32) {
    %c0_i32 = arith.constant 0 : i32
    %c0_i32_0 = arith.constant 0 : i32
    %c0_i32_1 = arith.constant 0 : i32
    return %c0_i32, %c0_i32_0 : i32, i32
  }
  func.func @transform_14(%arg0: i32) -> (i32, i32) {
    %c0_i32 = arith.constant 0 : i32
    %c0_i32_0 = arith.constant 0 : i32
    %c0_i32_1 = arith.constant 0 : i32
    return %c0_i32, %c0_i32_0 : i32, i32
  }
  func.func @transform_15(%arg0: i32) -> (i32, i32) {
    %c0_i32 = arith.constant 0 : i32
    %c0_i32_0 = arith.constant 0 : i32
    %c0_i32_1 = arith.constant 0 : i32
    return %c0_i32, %c0_i32_0 : i32, i32
  }
  func.func @transform_16(%arg0: i32) -> (i32, i32, i32) {
    %c0_i32 = arith.constant 0 : i32
    %c0_i32_0 = arith.constant 0 : i32
    %c0_i32_1 = arith.constant 0 : i32
    return %arg0, %c0_i32, %c0_i32_0 : i32, i32, i32
  }
}

</mosaic_0001>

<llo_original>
// kernel: e2e_forward.1
$region0: #{e2e_forward.1}
  #allocation0 [shape = 'u32[]', space=smem, size = 0x4, offset = 0x4, fixed_abs, tag = 'smem constant byte address 0x4 - core index']
  #allocation1 [shape = 'u32[72,128]{1,0:T(1,128)}', space=vmem, size = 0x9000, scoped, tag = 'internal scratch']
  #allocation2 [shape = 'bf16[290,8]{1,0:T(8,128)(2,1)}', space=vmem, size = 0x12800, scoped, tag = 'scratch operand']
  #allocation3 [shape = 'bf16[26,32]{1,0:T(8,128)(2,1)}', space=vmem, size = 0x2000, scoped, tag = 'scratch operand']
  #allocation4 [shape = 'f32[256,8]{1,0:T(8,128)}', space=vmem, size = 0x20000, scoped, tag = 'scratch operand']
  %s0 = inlined_call_operand.vmem [shape: f32[2,256,3], index: 0, kind: input, shape index: {}]
  %s1 = inlined_call_operand.vmem [shape: f32[1,32], index: 1, kind: input, shape index: {}]
  %s2 = inlined_call_operand.vmem [shape: bf16[8,32], index: 2, kind: input, shape index: {}]
  %s3 = inlined_call_operand.vmem [shape: bf16[8,32], index: 3, kind: input, shape index: {}]
  %s4 = inlined_call_operand.vmem [shape: bf16[27,8], index: 4, kind: input, shape index: {}]
  %s5 = inlined_call_operand.vmem [shape: bf16[72,8], index: 5, kind: input, shape index: {}]
  %s6 = inlined_call_operand.vmem [shape: bf16[8,8], index: 6, kind: input, shape index: {}]
  %s7 = inlined_call_operand.vmem [shape: f32[3,8], index: 7, kind: input, shape index: {}]
  %s8 = inlined_call_operand.vmem [shape: bf16[36,32], index: 8, kind: input, shape index: {}]
  %s9 = inlined_call_operand.vmem [shape: bf16[288,32], index: 9, kind: input, shape index: {}]
  %s10 = inlined_call_operand.vmem [shape: bf16[288,32], index: 10, kind: input, shape index: {}]
  %s11 = inlined_call_operand.vmem [shape: bf16[32,32], index: 11, kind: input, shape index: {}]
  %s12 = inlined_call_operand.vmem [shape: bf16[32,32], index: 12, kind: input, shape index: {}]
  %s13 = inlined_call_operand.vmem [shape: f32[5,32], index: 13, kind: input, shape index: {}]
  %s14 = inlined_call_operand.vmem [shape: bf16[288,16], index: 14, kind: input, shape index: {}]
  %s15 = inlined_call_operand.vmem [shape: f32[1,16], index: 15, kind: input, shape index: {}]
  %s16 = inlined_call_operand.hbm [shape: f32[2,16,16], index: 16, kind: output, shape index: {}]
  %s17 = sld [smem:[#allocation0]]
  $region97: #{e2e_forward.1} parent=0
    _
  %s19 = ssub.s32 1, %s17
  %s20 = scalar_select 0, %s19, %s17
  $region1: #{e2e_forward.1} parent=0
    #allocation5 [shape = 'u8[16384]{0}', space=vmem, size = 0x4000, scoped, tag = 'output window, operand 0']
    #allocation6 [shape = 's32[2]{0}', space=sflag, size = 0x8, scoped, tag = 'scoped memory for e2e_forward.1']
    %21 = vsyncpa [#allocation6], 0
    %s22 = scalar_lea.sflag [#allocation6], 1
    %23 = vsyncpa %s22, 0
    loop: start=0, step=1, limit=4
    $region2: #{e2e_forward.1} parent=1 // loop_pre_header
      _
    $region3: #{e2e_forward.1} parent=1 // loop_header
      %s25 = sphi 0, %s29
      %p26 = scmp.ge.s32.totalorder %s25, 4
      %s35 = sphi 0, %s37
      %s38 = sphi 0, %s35
      %s39 = sphi 0, %s38
      %s55 = sphi 0, %s39
      %s59 = sphi 0, %s59
      %s61 = sphi 0, %s59
      %s62 = sphi 0, %s61
      %s76 = sphi 0, %s62
      %s80 = sphi 0, %s80
      %s82 = sphi 0, %s80
      %s83 = sphi 0, %s82
      %s97 = sphi 0, %s83
      %s101 = sphi 0, %s101
      %s103 = sphi 0, %s101
      %s104 = sphi 0, %s103
      %s118 = sphi 0, %s104
      %s122 = sphi 0, %s122
      %s124 = sphi 0, %s122
      %s125 = sphi 0, %s124
      %s139 = sphi 0, %s125
      %s143 = sphi 0, %s143
      %s145 = sphi 0, %s143
      %s146 = sphi 0, %s145
      %s160 = sphi 0, %s146
      %s164 = sphi 0, %s164
      %s166 = sphi 0, %s164
      %s167 = sphi 0, %s166
      %s181 = sphi 0, %s167
      %s185 = sphi 0, %s185
      %s187 = sphi 0, %s185
      %s188 = sphi 0, %s187
      %s202 = sphi 0, %s188
      %s206 = sphi 0, %s206
      %s208 = sphi 0, %s206
      %s209 = sphi 0, %s208
      %s223 = sphi 0, %s209
      %s227 = sphi 0, %s227
      %s229 = sphi 0, %s227
      %s230 = sphi 0, %s229
      %s244 = sphi 0, %s230
      %s248 = sphi 0, %s248
      %s250 = sphi 0, %s248
      %s251 = sphi 0, %s250
      %s265 = sphi 0, %s251
      %s269 = sphi 0, %s269
      %s271 = sphi 0, %s269
      %s272 = sphi 0, %s271
      %s286 = sphi 0, %s272
      %s290 = sphi 0, %s290
      %s292 = sphi 0, %s290
      %s293 = sphi 0, %s292
      %s307 = sphi 0, %s293
      %s311 = sphi 0, %s311
      %s313 = sphi 0, %s311
      %s314 = sphi 0, %s313
      %s328 = sphi 0, %s314
      %s332 = sphi 0, %s332
      %s334 = sphi 0, %s332
      %s335 = sphi 0, %s334
      %s349 = sphi 0, %s335
      %s353 = sphi 0, %s353
      %s355 = sphi 0, %s353
      %s356 = sphi 0, %s355
      %s370 = sphi 0, %s356
      %s376 = sphi 0, %s378
      %s379 = sphi 0, %s376
      %s380 = sphi 0, %s379
      %s396 = sphi 0, %s380
    $region4: #{e2e_forward.1} parent=1 // loop_header_branch
      %28 = sbr.rel (%p26) target = $region8
    $region5: #{e2e_forward.1} parent=1 // loop_body
      %s30 = ssub.s32 %s25, 1
      %s31 = ssub.s32 %s25, 2
      %s32 = sadd.s32 %s25, 1
      %s33 = ssub.s32 %s25, %s32
      %p34 = scmp.eq.s32.totalorder %s33, 0
      %s36 = sadd.s32 %s35, 1
      %s37 = scalar_select %p34, %s35, %s36
      %p40 = pneg %p34
      %p41 = scmp.eq.s32.totalorder %s25, 1
      %p42 = por %p40, %p41
      %p43 = scmp.ne.s32.totalorder %s35, %s38
      %p44 = scmp.eq.s32.totalorder %s25, 0
      %p45 = por %p43, %p44
      %p46 = scmp.ne.s32.totalorder %s35, %s38
      %p47 = scmp.eq.s32.totalorder %s30, 1
      %p48 = por %p46, %p47
      %p49 = scmp.ne.s32.totalorder %s38, %s39
      %p50 = scmp.eq.s32.totalorder %s30, 0
      %p51 = por %p49, %p50
      %p52 = scmp.ne.s32.totalorder %s38, %s39
      %p53 = scmp.eq.s32.totalorder %s31, 1
      %p54 = por %p52, %p53
      %p56 = scmp.ne.s32.totalorder %s39, %s55
      %p57 = scmp.eq.s32.totalorder %s31, 0
      %p58 = por %p56, %p57
      %s60 = sadd.s32 %s59, 1
      %p63 = scmp.eq.s32.totalorder %s25, 1
      %p64 = scmp.ne.s32.totalorder %s59, %s61
      %p65 = scmp.eq.s32.totalorder %s25, 0
      %p66 = por %p64, %p65
      %p67 = scmp.ne.s32.totalorder %s59, %s61
      %p68 = scmp.eq.s32.totalorder %s30, 1
      %p69 = por %p67, %p68
      %p70 = scmp.ne.s32.totalorder %s61, %s62
      %p71 = scmp.eq.s32.totalorder %s30, 0
      %p72 = por %p70, %p71
      %p73 = scmp.ne.s32.totalorder %s61, %s62
      %p74 = scmp.eq.s32.totalorder %s31, 1
      %p75 = por %p73, %p74
      %p77 = scmp.ne.s32.totalorder %s62, %s76
      %p78 = scmp.eq.s32.totalorder %s31, 0
      %p79 = por %p77, %p78
      %s81 = sadd.s32 %s80, 1
      %p84 = scmp.eq.s32.totalorder %s25, 1
      %p85 = scmp.ne.s32.totalorder %s80, %s82
      %p86 = scmp.eq.s32.totalorder %s25, 0
      %p87 = por %p85, %p86
      %p88 = scmp.ne.s32.totalorder %s80, %s82
      %p89 = scmp.eq.s32.totalorder %s30, 1
      %p90 = por %p88, %p89
      %p91 = scmp.ne.s32.totalorder %s82, %s83
      %p92 = scmp.eq.s32.totalorder %s30, 0
      %p93 = por %p91, %p92
      %p94 = scmp.ne.s32.totalorder %s82, %s83
      %p95 = scmp.eq.s32.totalorder %s31, 1
      %p96 = por %p94, %p95
      %p98 = scmp.ne.s32.totalorder %s83, %s97
      %p99 = scmp.eq.s32.totalorder %s31, 0
      %p100 = por %p98, %p99
      %s102 = sadd.s32 %s101, 1
      %p105 = scmp.eq.s32.totalorder %s25, 1
      %p106 = scmp.ne.s32.totalorder %s101, %s103
      %p107 = scmp.eq.s32.totalorder %s25, 0
      %p108 = por %p106, %p107
      %p109 = scmp.ne.s32.totalorder %s101, %s103
      %p110 = scmp.eq.s32.totalorder %s30, 1
      %p111 = por %p109, %p110
      %p112 = scmp.ne.s32.totalorder %s103, %s104
      %p113 = scmp.eq.s32.totalorder %s30, 0
      %p114 = por %p112, %p113
      %p115 = scmp.ne.s32.totalorder %s103, %s104
      %p116 = scmp.eq.s32.totalorder %s31, 1
      %p117 = por %p115, %p116
      %p119 = scmp.ne.s32.totalorder %s104, %s118
      %p120 = scmp.eq.s32.totalorder %s31, 0
      %p121 = por %p119, %p120
      %s123 = sadd.s32 %s122, 1
      %p126 = scmp.eq.s32.totalorder %s25, 1
      %p127 = scmp.ne.s32.totalorder %s122, %s124
      %p128 = scmp.eq.s32.totalorder %s25, 0
      %p129 = por %p127, %p128
      %p130 = scmp.ne.s32.totalorder %s122, %s124
      %p131 = scmp.eq.s32.totalorder %s30, 1
      %p132 = por %p130, %p131
      %p133 = scmp.ne.s32.totalorder %s124, %s125
      %p134 = scmp.eq.s32.totalorder %s30, 0
      %p135 = por %p133, %p134
      %p136 = scmp.ne.s32.totalorder %s124, %s125
      %p137 = scmp.eq.s32.totalorder %s31, 1
      %p138 = por %p136, %p137
      %p140 = scmp.ne.s32.totalorder %s125, %s139
      %p141 = scmp.eq.s32.totalorder %s31, 0
      %p142 = por %p140, %p141
      %s144 = sadd.s32 %s143, 1
      %p147 = scmp.eq.s32.totalorder %s25, 1
      %p148 = scmp.ne.s32.totalorder %s143, %s145
      %p149 = scmp.eq.s32.totalorder %s25, 0
      %p150 = por %p148, %p149
      %p151 = scmp.ne.s32.totalorder %s143, %s145
      %p152 = scmp.eq.s32.totalorder %s30, 1
      %p153 = por %p151, %p152
      %p154 = scmp.ne.s32.totalorder %s145, %s146
      %p155 = scmp.eq.s32.totalorder %s30, 0
      %p156 = por %p154, %p155
      %p157 = scmp.ne.s32.totalorder %s145, %s146
      %p158 = scmp.eq.s32.totalorder %s31, 1
      %p159 = por %p157, %p158
      %p161 = scmp.ne.s32.totalorder %s146, %s160
      %p162 = scmp.eq.s32.totalorder %s31, 0
      %p163 = por %p161, %p162
      %s165 = sadd.s32 %s164, 1
      %p168 = scmp.eq.s32.totalorder %s25, 1
      %p169 = scmp.ne.s32.totalorder %s164, %s166
      %p170 = scmp.eq.s32.totalorder %s25, 0
      %p171 = por %p169, %p170
      %p172 = scmp.ne.s32.totalorder %s164, %s166
      %p173 = scmp.eq.s32.totalorder %s30, 1
      %p174 = por %p172, %p173
      %p175 = scmp.ne.s32.totalorder %s166, %s167
      %p176 = scmp.eq.s32.totalorder %s30, 0
      %p177 = por %p175, %p176
      %p178 = scmp.ne.s32.totalorder %s166, %s167
      %p179 = scmp.eq.s32.totalorder %s31, 1
      %p180 = por %p178, %p179
      %p182 = scmp.ne.s32.totalorder %s167, %s181
      %p183 = scmp.eq.s32.totalorder %s31, 0
      %p184 = por %p182, %p183
      %s186 = sadd.s32 %s185, 1
      %p189 = scmp.eq.s32.totalorder %s25, 1
      %p190 = scmp.ne.s32.totalorder %s185, %s187
      %p191 = scmp.eq.s32.totalorder %s25, 0
      %p192 = por %p190, %p191
      %p193 = scmp.ne.s32.totalorder %s185, %s187
      %p194 = scmp.eq.s32.totalorder %s30, 1
      %p195 = por %p193, %p194
      %p196 = scmp.ne.s32.totalorder %s187, %s188
      %p197 = scmp.eq.s32.totalorder %s30, 0
      %p198 = por %p196, %p197
      %p199 = scmp.ne.s32.totalorder %s187, %s188
      %p200 = scmp.eq.s32.totalorder %s31, 1
      %p201 = por %p199, %p200
      %p203 = scmp.ne.s32.totalorder %s188, %s202
      %p204 = scmp.eq.s32.totalorder %s31, 0
      %p205 = por %p203, %p204
      %s207 = sadd.s32 %s206, 1
      %p210 = scmp.eq.s32.totalorder %s25, 1
      %p211 = scmp.ne.s32.totalorder %s206, %s208
      %p212 = scmp.eq.s32.totalorder %s25, 0
      %p213 = por %p211, %p212
      %p214 = scmp.ne.s32.totalorder %s206, %s208
      %p215 = scmp.eq.s32.totalorder %s30, 1
      %p216 = por %p214, %p215
      %p217 = scmp.ne.s32.totalorder %s208, %s209
      %p218 = scmp.eq.s32.totalorder %s30, 0
      %p219 = por %p217, %p218
      %p220 = scmp.ne.s32.totalorder %s208, %s209
      %p221 = scmp.eq.s32.totalorder %s31, 1
      %p222 = por %p220, %p221
      %p224 = scmp.ne.s32.totalorder %s209, %s223
      %p225 = scmp.eq.s32.totalorder %s31, 0
      %p226 = por %p224, %p225
      %s228 = sadd.s32 %s227, 1
      %p231 = scmp.eq.s32.totalorder %s25, 1
      %p232 = scmp.ne.s32.totalorder %s227, %s229
      %p233 = scmp.eq.s32.totalorder %s25, 0
      %p234 = por %p232, %p233
      %p235 = scmp.ne.s32.totalorder %s227, %s229
      %p236 = scmp.eq.s32.totalorder %s30, 1
      %p237 = por %p235, %p236
      %p238 = scmp.ne.s32.totalorder %s229, %s230
      %p239 = scmp.eq.s32.totalorder %s30, 0
      %p240 = por %p238, %p239
      %p241 = scmp.ne.s32.totalorder %s229, %s230
      %p242 = scmp.eq.s32.totalorder %s31, 1
      %p243 = por %p241, %p242
      %p245 = scmp.ne.s32.totalorder %s230, %s244
      %p246 = scmp.eq.s32.totalorder %s31, 0
      %p247 = por %p245, %p246
      %s249 = sadd.s32 %s248, 1
      %p252 = scmp.eq.s32.totalorder %s25, 1
      %p253 = scmp.ne.s32.totalorder %s248, %s250
      %p254 = scmp.eq.s32.totalorder %s25, 0
      %p255 = por %p253, %p254
      %p256 = scmp.ne.s32.totalorder %s248, %s250
      %p257 = scmp.eq.s32.totalorder %s30, 1
      %p258 = por %p256, %p257
      %p259 = scmp.ne.s32.totalorder %s250, %s251
      %p260 = scmp.eq.s32.totalorder %s30, 0
      %p261 = por %p259, %p260
      %p262 = scmp.ne.s32.totalorder %s250, %s251
      %p263 = scmp.eq.s32.totalorder %s31, 1
      %p264 = por %p262, %p263
      %p266 = scmp.ne.s32.totalorder %s251, %s265
      %p267 = scmp.eq.s32.totalorder %s31, 0
      %p268 = por %p266, %p267
      %s270 = sadd.s32 %s269, 1
      %p273 = scmp.eq.s32.totalorder %s25, 1
      %p274 = scmp.ne.s32.totalorder %s269, %s271
      %p275 = scmp.eq.s32.totalorder %s25, 0
      %p276 = por %p274, %p275
      %p277 = scmp.ne.s32.totalorder %s269, %s271
      %p278 = scmp.eq.s32.totalorder %s30, 1
      %p279 = por %p277, %p278
      %p280 = scmp.ne.s32.totalorder %s271, %s272
      %p281 = scmp.eq.s32.totalorder %s30, 0
      %p282 = por %p280, %p281
      %p283 = scmp.ne.s32.totalorder %s271, %s272
      %p284 = scmp.eq.s32.totalorder %s31, 1
      %p285 = por %p283, %p284
      %p287 = scmp.ne.s32.totalorder %s272, %s286
      %p288 = scmp.eq.s32.totalorder %s31, 0
      %p289 = por %p287, %p288
      %s291 = sadd.s32 %s290, 1
      %p294 = scmp.eq.s32.totalorder %s25, 1
      %p295 = scmp.ne.s32.totalorder %s290, %s292
      %p296 = scmp.eq.s32.totalorder %s25, 0
      %p297 = por %p295, %p296
      %p298 = scmp.ne.s32.totalorder %s290, %s292
      %p299 = scmp.eq.s32.totalorder %s30, 1
      %p300 = por %p298, %p299
      %p301 = scmp.ne.s32.totalorder %s292, %s293
      %p302 = scmp.eq.s32.totalorder %s30, 0
      %p303 = por %p301, %p302
      %p304 = scmp.ne.s32.totalorder %s292, %s293
      %p305 = scmp.eq.s32.totalorder %s31, 1
      %p306 = por %p304, %p305
      %p308 = scmp.ne.s32.totalorder %s293, %s307
      %p309 = scmp.eq.s32.totalorder %s31, 0
      %p310 = por %p308, %p309
      %s312 = sadd.s32 %s311, 1
      %p315 = scmp.eq.s32.totalorder %s25, 1
      %p316 = scmp.ne.s32.totalorder %s311, %s313
      %p317 = scmp.eq.s32.totalorder %s25, 0
      %p318 = por %p316, %p317
      %p319 = scmp.ne.s32.totalorder %s311, %s313
      %p320 = scmp.eq.s32.totalorder %s30, 1
      %p321 = por %p319, %p320
      %p322 = scmp.ne.s32.totalorder %s313, %s314
      %p323 = scmp.eq.s32.totalorder %s30, 0
      %p324 = por %p322, %p323
      %p325 = scmp.ne.s32.totalorder %s313, %s314
      %p326 = scmp.eq.s32.totalorder %s31, 1
      %p327 = por %p325, %p326
      %p329 = scmp.ne.s32.totalorder %s314, %s328
      %p330 = scmp.eq.s32.totalorder %s31, 0
      %p331 = por %p329, %p330
      %s333 = sadd.s32 %s332, 1
      %p336 = scmp.eq.s32.totalorder %s25, 1
      %p337 = scmp.ne.s32.totalorder %s332, %s334
      %p338 = scmp.eq.s32.totalorder %s25, 0
      %p339 = por %p337, %p338
      %p340 = scmp.ne.s32.totalorder %s332, %s334
      %p341 = scmp.eq.s32.totalorder %s30, 1
      %p342 = por %p340, %p341
      %p343 = scmp.ne.s32.totalorder %s334, %s335
      %p344 = scmp.eq.s32.totalorder %s30, 0
      %p345 = por %p343, %p344
      %p346 = scmp.ne.s32.totalorder %s334, %s335
      %p347 = scmp.eq.s32.totalorder %s31, 1
      %p348 = por %p346, %p347
      %p350 = scmp.ne.s32.totalorder %s335, %s349
      %p351 = scmp.eq.s32.totalorder %s31, 0
      %p352 = por %p350, %p351
      %s354 = sadd.s32 %s353, 1
      %p357 = scmp.eq.s32.totalorder %s25, 1
      %p358 = scmp.ne.s32.totalorder %s353, %s355
      %p359 = scmp.eq.s32.totalorder %s25, 0
      %p360 = por %p358, %p359
      %p361 = scmp.ne.s32.totalorder %s353, %s355
      %p362 = scmp.eq.s32.totalorder %s30, 1
      %p363 = por %p361, %p362
      %p364 = scmp.ne.s32.totalorder %s355, %s356
      %p365 = scmp.eq.s32.totalorder %s30, 0
      %p366 = por %p364, %p365
      %p367 = scmp.ne.s32.totalorder %s355, %s356
      %p368 = scmp.eq.s32.totalorder %s31, 1
      %p369 = por %p367, %p368
      %p371 = scmp.ne.s32.totalorder %s356, %s370
      %p372 = scmp.eq.s32.totalorder %s31, 0
      %p373 = por %p371, %p372
      %s374 = ssub.s32 %s25, %s32
      %p375 = scmp.eq.s32.totalorder %s374, 0
      %s377 = sadd.s32 %s376, 1
      %s378 = scalar_select %p375, %s376, %s377
      %p381 = pneg %p375
      %p382 = scmp.eq.s32.totalorder %s25, 1
      %p383 = por %p381, %p382
      %p384 = scmp.ne.s32.totalorder %s376, %s379
      %p385 = scmp.eq.s32.totalorder %s25, 0
      %p386 = por %p384, %p385
      %p387 = scmp.ne.s32.totalorder %s376, %s379
      %p388 = scmp.eq.s32.totalorder %s30, 1
      %p389 = por %p387, %p388
      %p390 = scmp.ne.s32.totalorder %s379, %s380
      %p391 = scmp.eq.s32.totalorder %s30, 0
      %p392 = por %p390, %p391
      %p393 = scmp.ne.s32.totalorder %s379, %s380
      %p394 = scmp.eq.s32.totalorder %s31, 1
      %p395 = por %p393, %p394
      %p397 = scmp.ne.s32.totalorder %s380, %s396
      %p398 = scmp.eq.s32.totalorder %s31, 0
      %p399 = por %p397, %p398
      %p400 = scmp.le.s32.totalorder 1, %s25
      %p401 = scmp.lt.s32.totalorder %s25, 3
      %p402 = pnand %p400, %p401
      %p403 = pneg %p402
      // Predicated region
      $region9: #{e2e_forward.1} parent=5 // pred_check
        _
      $region10: #{e2e_forward.1} parent=5 // pred_check_branch
        %405 = sbr.rel (%p402) target = $region12
      $region11: #{e2e_forward.1} parent=5 // pred_region
        %s406 = ssub.s32 %s25, 1
        // Predicated region
        $region13: #{e2e_forward.1} parent=11 // pred_check
          %p407 = pneg %p72
        $region14: #{e2e_forward.1} parent=11 // pred_check_branch
          %409 = sbr.rel (%p407) target = $region16
        $region15: #{e2e_forward.1} parent=11 // pred_region
          _
        $region16: #{e2e_forward.1} parent=11 // pred_fallthru
          _
        // Predicated region
        $region17: #{e2e_forward.1} parent=11 // pred_check
          %p410 = pneg %p93
        $region18: #{e2e_forward.1} parent=11 // pred_check_branch
          %412 = sbr.rel (%p410) target = $region20
        $region19: #{e2e_forward.1} parent=11 // pred_region
          _
        $region20: #{e2e_forward.1} parent=11 // pred_fallthru
          _
        // Predicated region
        $region21: #{e2e_forward.1} parent=11 // pred_check
          %p413 = pneg %p114
        $region22: #{e2e_forward.1} parent=11 // pred_check_branch
          %415 = sbr.rel (%p413) target = $region24
        $region23: #{e2e_forward.1} parent=11 // pred_region
          _
        $region24: #{e2e_forward.1} parent=11 // pred_fallthru
          _
        // Predicated region
        $region25: #{e2e_forward.1} parent=11 // pred_check
          %p416 = pneg %p135
        $region26: #{e2e_forward.1} parent=11 // pred_check_branch
          %418 = sbr.rel (%p416) target = $region28
        $region27: #{e2e_forward.1} parent=11 // pred_region
          _
        $region28: #{e2e_forward.1} parent=11 // pred_fallthru
          _
        // Predicated region
        $region29: #{e2e_forward.1} parent=11 // pred_check
          %p419 = pneg %p156
        $region30: #{e2e_forward.1} parent=11 // pred_check_branch
          %421 = sbr.rel (%p419) target = $region32
        $region31: #{e2e_forward.1} parent=11 // pred_region
          _
        $region32: #{e2e_forward.1} parent=11 // pred_fallthru
          _
        // Predicated region
        $region33: #{e2e_forward.1} parent=11 // pred_check
          %p422 = pneg %p177
        $region34: #{e2e_forward.1} parent=11 // pred_check_branch
          %424 = sbr.rel (%p422) target = $region36
        $region35: #{e2e_forward.1} parent=11 // pred_region
          _
        $region36: #{e2e_forward.1} parent=11 // pred_fallthru
          _
        // Predicated region
        $region37: #{e2e_forward.1} parent=11 // pred_check
          %p425 = pneg %p198
        $region38: #{e2e_forward.1} parent=11 // pred_check_branch
          %427 = sbr.rel (%p425) target = $region40
        $region39: #{e2e_forward.1} parent=11 // pred_region
          _
        $region40: #{e2e_forward.1} parent=11 // pred_fallthru
          _
        // Predicated region
        $region41: #{e2e_forward.1} parent=11 // pred_check
          %p428 = pneg %p219
        $region42: #{e2e_forward.1} parent=11 // pred_check_branch
          %430 = sbr.rel (%p428) target = $region44
        $region43: #{e2e_forward.1} parent=11 // pred_region
          _
        $region44: #{e2e_forward.1} parent=11 // pred_fallthru
          _
        // Predicated region
        $region45: #{e2e_forward.1} parent=11 // pred_check
          %p431 = pneg %p240
        $region46: #{e2e_forward.1} parent=11 // pred_check_branch
          %433 = sbr.rel (%p431) target = $region48
        $region47: #{e2e_forward.1} parent=11 // pred_region
          _
        $region48: #{e2e_forward.1} parent=11 // pred_fallthru
          _
        // Predicated region
        $region49: #{e2e_forward.1} parent=11 // pred_check
          %p434 = pneg %p261
        $region50: #{e2e_forward.1} parent=11 // pred_check_branch
          %436 = sbr.rel (%p434) target = $region52
        $region51: #{e2e_forward.1} parent=11 // pred_region
          _
        $region52: #{e2e_forward.1} parent=11 // pred_fallthru
          _
        // Predicated region
        $region53: #{e2e_forward.1} parent=11 // pred_check
          %p437 = pneg %p282
        $region54: #{e2e_forward.1} parent=11 // pred_check_branch
          %439 = sbr.rel (%p437) target = $region56
        $region55: #{e2e_forward.1} parent=11 // pred_region
          _
        $region56: #{e2e_forward.1} parent=11 // pred_fallthru
          _
        // Predicated region
        $region57: #{e2e_forward.1} parent=11 // pred_check
          %p440 = pneg %p303
        $region58: #{e2e_forward.1} parent=11 // pred_check_branch
          %442 = sbr.rel (%p440) target = $region60
        $region59: #{e2e_forward.1} parent=11 // pred_region
          _
        $region60: #{e2e_forward.1} parent=11 // pred_fallthru
          _
        // Predicated region
        $region61: #{e2e_forward.1} parent=11 // pred_check
          %p443 = pneg %p324
        $region62: #{e2e_forward.1} parent=11 // pred_check_branch
          %445 = sbr.rel (%p443) target = $region64
        $region63: #{e2e_forward.1} parent=11 // pred_region
          _
        $region64: #{e2e_forward.1} parent=11 // pred_fallthru
          _
        // Predicated region
        $region65: #{e2e_forward.1} parent=11 // pred_check
          %p446 = pneg %p345
        $region66: #{e2e_forward.1} parent=11 // pred_check_branch
          %448 = sbr.rel (%p446) target = $region68
        $region67: #{e2e_forward.1} parent=11 // pred_region
          _
        $region68: #{e2e_forward.1} parent=11 // pred_fallthru
          _
        // Predicated region
        $region69: #{e2e_forward.1} parent=11 // pred_check
          %p449 = pneg %p366
        $region70: #{e2e_forward.1} parent=11 // pred_check_branch
          %451 = sbr.rel (%p449) target = $region72
        $region71: #{e2e_forward.1} parent=11 // pred_region
          _
        $region72: #{e2e_forward.1} parent=11 // pred_fallthru
          _
      $region12: #{e2e_forward.1} parent=5 // pred_fallthru
        _
      %p452 = scmp.lt.s32.totalorder %s25, 2
      // Predicated region
      $region73: #{e2e_forward.1} parent=5 // pred_check
        %p453 = pneg %p452
      $region74: #{e2e_forward.1} parent=5 // pred_check_branch
        %455 = sbr.rel (%p453) target = $region76
      $region75: #{e2e_forward.1} parent=5 // pred_region
        // Predicated region
        $region77: #{e2e_forward.1} parent=75 // pred_check
          %p456 = pneg %p45
        $region78: #{e2e_forward.1} parent=75 // pred_check_branch
          %458 = sbr.rel (%p456) target = $region80
        $region79: #{e2e_forward.1} parent=75 // pred_region
          %p459 = scmp.lt.s32.totalorder %s25, 1
          %s460 = scalar_select %p459, %s25, 1
          %s461 = smul.addr %s460, 32
          %s462 = smul.addr %s461, 8
          %s463 = scalar_lea.vmem %s0, %s462
        $region80: #{e2e_forward.1} parent=75 // pred_fallthru
          _
      $region76: #{e2e_forward.1} parent=5 // pred_fallthru
        _
      %p464 = scmp.le.s32.totalorder 1, %s25
      %p465 = scmp.lt.s32.totalorder %s25, 3
      %p466 = pnand %p464, %p465
      %p467 = pneg %p466
      // Predicated region
      $region81: #{e2e_forward.1} parent=5 // pred_check
        _
      $region82: #{e2e_forward.1} parent=5 // pred_check_branch
        %469 = sbr.rel (%p466) target = $region84
      $region83: #{e2e_forward.1} parent=5 // pred_region
        %s470 = ssub.s32 %s25, 1
        %p471 = scmp.lt.s32.totalorder %s30, 1
        %s472 = scalar_select %p471, %s30, 1
        %s473 = smul.addr %s472, 32
        %s474 = smul.addr %s473, 8
        %s475 = scalar_lea.vmem %s0, %s474
        %p476 = pneg %p51
        %p477 = pneg %p48
        %p478 = pneg %p72
        %p479 = pneg %p69
        %p480 = pneg %p93
        %p481 = pneg %p90
        %p482 = pneg %p114
        %p483 = pneg %p111
        %p484 = pneg %p135
        %p485 = pneg %p132
        %p486 = pneg %p156
        %p487 = pneg %p153
        %p488 = pneg %p177
        %p489 = pneg %p174
        %p490 = pneg %p198
        %p491 = pneg %p195
        %p492 = pneg %p219
        %p493 = pneg %p216
        %p494 = pneg %p240
        %p495 = pneg %p237
        %p496 = pneg %p261
        %p497 = pneg %p258
        %p498 = pneg %p282
        %p499 = pneg %p279
        %p500 = pneg %p303
        %p501 = pneg %p300
        %p502 = pneg %p324
        %p503 = pneg %p321
        %p504 = pneg %p345
        %p505 = pneg %p342
        %p506 = pneg %p366
        %p507 = pneg %p363
        %p508 = pneg %p392
        %p509 = pneg %p389
        %s510 = sand.u32 %s379, 1
        %s511 = scalar_lea.sflag [#allocation6], %s510
        %s512 = sand.u32 %s379, 1
        %s513 = smul.addr %s512, 16
        %s514 = scalar_lea.vmem [#allocation5], %s513
        %p515 = scmp.lt.s32.totalorder %s30, 1
        %s516 = scalar_select %p515, %s30, 1
        %s517 = smul.addr %s516, 32
        %s518 = smul.addr %s517, 8
        %s519 = scalar_lea.vmem %s0, %s518
        %v523 = vld [vmem:[%s519] sm:$0xff]
        %v524 = vld [vmem:[%s519 + $0x8] sm:$0xff]
        %v525 = vld [vmem:[%s519 + $0x10] sm:$0xff]
        %v526 = vld [vmem:[%s519 + $0x18] sm:$0xff]
        %v527 = vld [vmem:[%s519 + $0x20] sm:$0xff]
        %v528 = vld [vmem:[%s519 + $0x28] sm:$0xff]
        %v529 = vld [vmem:[%s519 + $0x30] sm:$0xff]
        %v530 = vld [vmem:[%s519 + $0x38] sm:$0xff]
        %v531 = vld [vmem:[%s519 + $0x40] sm:$0xff]
        %v532 = vld [vmem:[%s519 + $0x48] sm:$0xff]
        %v533 = vld [vmem:[%s519 + $0x50] sm:$0xff]
        %v534 = vld [vmem:[%s519 + $0x58] sm:$0xff]
        %v535 = vld [vmem:[%s519 + $0x60] sm:$0xff]
        %v536 = vld [vmem:[%s519 + $0x68] sm:$0xff]
        %v537 = vld [vmem:[%s519 + $0x70] sm:$0xff]
        %v538 = vld [vmem:[%s519 + $0x78] sm:$0xff]
        %v539 = vld [vmem:[%s519 + $0x80] sm:$0xff]
        %v540 = vld [vmem:[%s519 + $0x88] sm:$0xff]
        %v541 = vld [vmem:[%s519 + $0x90] sm:$0xff]
        %v542 = vld [vmem:[%s519 + $0x98] sm:$0xff]
        %v543 = vld [vmem:[%s519 + $0xa0] sm:$0xff]
        %v544 = vld [vmem:[%s519 + $0xa8] sm:$0xff]
        %v545 = vld [vmem:[%s519 + $0xb0] sm:$0xff]
        %v546 = vld [vmem:[%s519 + $0xb8] sm:$0xff]
        %v547 = vld [vmem:[%s519 + $0xc0] sm:$0xff]
        %v548 = vld [vmem:[%s519 + $0xc8] sm:$0xff]
        %v549 = vld [vmem:[%s519 + $0xd0] sm:$0xff]
        %v550 = vld [vmem:[%s519 + $0xd8] sm:$0xff]
        %v551 = vld [vmem:[%s519 + $0xe0] sm:$0xff]
        %v552 = vld [vmem:[%s519 + $0xe8] sm:$0xff]
        %v553 = vld [vmem:[%s519 + $0xf0] sm:$0xff]
        %v554 = vld [vmem:[%s519 + $0xf8] sm:$0xff]
        %v555 = vld [vmem:[%s7] sm:$0x1]
        %vm556 = vcmask 19456
        %557 = vst.msk [vmem:[#allocation2] sm:$0xf] %vm556, 0
        %558 = vst.msk [vmem:[#allocation2 + $0x4] sm:$0xf] %vm556, 0
        %vm559 = vcmask 16384
        %vm560 = vsmask.f32 256
        %vm561 = vmand %vm559, %vm560
        %v562 = vld [vmem:[#allocation2 + $0x8] sm:$0x1]
        %v563 = vsel %vm561, 0, %v562
        %564 = vst [vmem:[#allocation2 + $0x8] sm:$0x1] %v563
        %vm565 = vcmask 19456
        %vm566 = vsmask.f32 7938
        %vm567 = vmand %vm565, %vm566
        %v568 = vld [vmem:[#allocation2 + $0x88] sm:$0xf]
        %v569 = vsel %vm567, 0, %v568
        %570 = vst [vmem:[#allocation2 + $0x88] sm:$0xf] %v569
        %571 = vst.msk [vmem:[#allocation2 + $0x8c] sm:$0xf] %vm556, 0
        %vm572 = vcmask 16384
        %573 = vst.msk [vmem:[#allocation2 + $0x90] sm:$0x1] %vm572, 0
        %v574 = vpack.c.bf16 %v523, %v523
        %v575 = vpack.c.bf16 %v524, %v524
        %v576 = vpack.c.bf16 %v525, %v525
        %v577 = vpack.c.bf16 %v526, %v526
        %v578 = vpack.c.bf16 %v527, %v527
        %v579 = vpack.c.bf16 %v528, %v528
        %v580 = vpack.c.bf16 %v529, %v529
        %v581 = vpack.c.bf16 %v530, %v530
        %v582 = vpack.c.bf16 %v531, %v531
        %v583 = vpack.c.bf16 %v532, %v532
        %v584 = vpack.c.bf16 %v533, %v533
        %v585 = vpack.c.bf16 %v534, %v534
        %v586 = vpack.c.bf16 %v535, %v535
        %v587 = vpack.c.bf16 %v536, %v536
        %v588 = vpack.c.bf16 %v537, %v537
        %v589 = vpack.c.bf16 %v538, %v538
        %v590 = vpack.c.bf16 %v539, %v539
        %v591 = vpack.c.bf16 %v540, %v540
        %v592 = vpack.c.bf16 %v541, %v541
        %v593 = vpack.c.bf16 %v542, %v542
        %v594 = vpack.c.bf16 %v543, %v543
        %v595 = vpack.c.bf16 %v544, %v544
        %v596 = vpack.c.bf16 %v545, %v545
        %v597 = vpack.c.bf16 %v546, %v546
        %v598 = vpack.c.bf16 %v547, %v547
        %v599 = vpack.c.bf16 %v548, %v548
        %v600 = vpack.c.bf16 %v549, %v549
        %v601 = vpack.c.bf16 %v550, %v550
        %v602 = vpack.c.bf16 %v551, %v551
        %v603 = vpack.c.bf16 %v552, %v552
        %v604 = vpack.c.bf16 %v553, %v553
        %v605 = vpack.c.bf16 %v554, %v554
        %vm606 = vsmask.f32 4368
        %vm607 = vmor %vm560, %vm606
        %v609 = vshrl.u32 %v574, 16
        %v611 = vrot.slane %v609, 7
        %v612 = vshll.u32 %v574, 16
        %v614 = vor.u32 %v611, %v612
        %v615 = vrot.slane %v611, 4
        %v617 = vshrl.u32 %v575, 16
        %v619 = vrot.slane %v617, 7
        %v620 = vshll.u32 %v575, 16
        %v622 = vor.u32 %v619, %v620
        %v623 = vsel %vm607, %v615, %v622
        %v624 = vrot.slane %v619, 4
        %v626 = vshrl.u32 %v576, 16
        %v628 = vrot.slane %v626, 7
        %v629 = vshll.u32 %v576, 16
        %v631 = vor.u32 %v628, %v629
        %v632 = vsel %vm607, %v624, %v631
        %v633 = vrot.slane %v628, 4
        %v635 = vshrl.u32 %v577, 16
        %v637 = vrot.slane %v635, 7
        %v638 = vshll.u32 %v577, 16
        %v640 = vor.u32 %v637, %v638
        %v641 = vsel %vm607, %v633, %v640
        %v642 = vrot.slane %v637, 4
        %v644 = vshrl.u32 %v578, 16
        %v646 = vrot.slane %v644, 7
        %v647 = vshll.u32 %v578, 16
        %v649 = vor.u32 %v646, %v647
        %v650 = vsel %vm607, %v642, %v649
        %v651 = vrot.slane %v646, 4
        %v653 = vshrl.u32 %v579, 16
        %v655 = vrot.slane %v653, 7
        %v656 = vshll.u32 %v579, 16
        %v658 = vor.u32 %v655, %v656
        %v659 = vsel %vm607, %v651, %v658
        %v660 = vrot.slane %v655, 4
        %v662 = vshrl.u32 %v580, 16
        %v664 = vrot.slane %v662, 7
        %v665 = vshll.u32 %v580, 16
        %v667 = vor.u32 %v664, %v665
        %v668 = vsel %vm607, %v660, %v667
        %v669 = vrot.slane %v664, 4
        %v671 = vshrl.u32 %v581, 16
        %v673 = vrot.slane %v671, 7
        %v674 = vshll.u32 %v581, 16
        %v676 = vor.u32 %v673, %v674
        %v677 = vsel %vm607, %v669, %v676
        %v678 = vrot.slane %v673, 4
        %v680 = vshrl.u32 %v582, 16
        %v682 = vrot.slane %v680, 7
        %v683 = vshll.u32 %v582, 16
        %v685 = vor.u32 %v682, %v683
        %v686 = vsel %vm607, %v678, %v685
        %v687 = vrot.slane %v682, 4
        %v689 = vshrl.u32 %v583, 16
        %v691 = vrot.slane %v689, 7
        %v692 = vshll.u32 %v583, 16
        %v694 = vor.u32 %v691, %v692
        %v695 = vsel %vm607, %v687, %v694
        %v696 = vrot.slane %v691, 4
        %v698 = vshrl.u32 %v584, 16
        %v700 = vrot.slane %v698, 7
        %v701 = vshll.u32 %v584, 16
        %v703 = vor.u32 %v700, %v701
        %v704 = vsel %vm607, %v696, %v703
        %v705 = vrot.slane %v700, 4
        %v707 = vshrl.u32 %v585, 16
        %v709 = vrot.slane %v707, 7
        %v710 = vshll.u32 %v585, 16
        %v712 = vor.u32 %v709, %v710
        %v713 = vsel %vm607, %v705, %v712
        %v714 = vrot.slane %v709, 4
        %v716 = vshrl.u32 %v586, 16
        %v718 = vrot.slane %v716, 7
        %v719 = vshll.u32 %v586, 16
        %v721 = vor.u32 %v718, %v719
        %v722 = vsel %vm607, %v714, %v721
        %v723 = vrot.slane %v718, 4
        %v725 = vshrl.u32 %v587, 16
        %v727 = vrot.slane %v725, 7
        %v728 = vshll.u32 %v587, 16
        %v730 = vor.u32 %v727, %v728
        %v731 = vsel %vm607, %v723, %v730
        %v732 = vrot.slane %v727, 4
        %v734 = vshrl.u32 %v588, 16
        %v736 = vrot.slane %v734, 7
        %v737 = vshll.u32 %v588, 16
        %v739 = vor.u32 %v736, %v737
        %v740 = vsel %vm607, %v732, %v739
        %v741 = vrot.slane %v736, 4
        %v743 = vshrl.u32 %v589, 16
        %v745 = vrot.slane %v743, 7
        %v746 = vshll.u32 %v589, 16
        %v748 = vor.u32 %v745, %v746
        %v749 = vsel %vm607, %v741, %v748
        %v750 = vrot.slane %v745, 4
        %v752 = vshrl.u32 %v590, 16
        %v754 = vrot.slane %v752, 7
        %v755 = vshll.u32 %v590, 16
        %v757 = vor.u32 %v754, %v755
        %v758 = vsel %vm607, %v750, %v757
        %v759 = vrot.slane %v754, 4
        %v761 = vshrl.u32 %v591, 16
        %v763 = vrot.slane %v761, 7
        %v764 = vshll.u32 %v591, 16
        %v766 = vor.u32 %v763, %v764
        %v767 = vsel %vm607, %v759, %v766
        %v768 = vrot.slane %v763, 4
        %v770 = vshrl.u32 %v592, 16
        %v772 = vrot.slane %v770, 7
        %v773 = vshll.u32 %v592, 16
        %v775 = vor.u32 %v772, %v773
        %v776 = vsel %vm607, %v768, %v775
        %v777 = vrot.slane %v772, 4
        %v779 = vshrl.u32 %v593, 16
        %v781 = vrot.slane %v779, 7
        %v782 = vshll.u32 %v593, 16
        %v784 = vor.u32 %v781, %v782
        %v785 = vsel %vm607, %v777, %v784
        %v786 = vrot.slane %v781, 4
        %v788 = vshrl.u32 %v594, 16
        %v790 = vrot.slane %v788, 7
        %v791 = vshll.u32 %v594, 16
        %v793 = vor.u32 %v790, %v791
        %v794 = vsel %vm607, %v786, %v793
        %v795 = vrot.slane %v790, 4
        %v797 = vshrl.u32 %v595, 16
        %v799 = vrot.slane %v797, 7
        %v800 = vshll.u32 %v595, 16
        %v802 = vor.u32 %v799, %v800
        %v803 = vsel %vm607, %v795, %v802
        %v804 = vrot.slane %v799, 4
        %v806 = vshrl.u32 %v596, 16
        %v808 = vrot.slane %v806, 7
        %v809 = vshll.u32 %v596, 16
        %v811 = vor.u32 %v808, %v809
        %v812 = vsel %vm607, %v804, %v811
        %v813 = vrot.slane %v808, 4
        %v815 = vshrl.u32 %v597, 16
        %v817 = vrot.slane %v815, 7
        %v818 = vshll.u32 %v597, 16
        %v820 = vor.u32 %v817, %v818
        %v821 = vsel %vm607, %v813, %v820
        %v822 = vrot.slane %v817, 4
        %v824 = vshrl.u32 %v598, 16
        %v826 = vrot.slane %v824, 7
        %v827 = vshll.u32 %v598, 16
        %v829 = vor.u32 %v826, %v827
        %v830 = vsel %vm607, %v822, %v829
        %v831 = vrot.slane %v826, 4
        %v833 = vshrl.u32 %v599, 16
        %v835 = vrot.slane %v833, 7
        %v836 = vshll.u32 %v599, 16
        %v838 = vor.u32 %v835, %v836
        %v839 = vsel %vm607, %v831, %v838
        %v840 = vrot.slane %v835, 4
        %v842 = vshrl.u32 %v600, 16
        %v844 = vrot.slane %v842, 7
        %v845 = vshll.u32 %v600, 16
        %v847 = vor.u32 %v844, %v845
        %v848 = vsel %vm607, %v840, %v847
        %v849 = vrot.slane %v844, 4
        %v851 = vshrl.u32 %v601, 16
        %v853 = vrot.slane %v851, 7
        %v854 = vshll.u32 %v601, 16
        %v856 = vor.u32 %v853, %v854
        %v857 = vsel %vm607, %v849, %v856
        %v858 = vrot.slane %v853, 4
        %v860 = vshrl.u32 %v602, 16
        %v862 = vrot.slane %v860, 7
        %v863 = vshll.u32 %v602, 16
        %v865 = vor.u32 %v862, %v863
        %v866 = vsel %vm607, %v858, %v865
        %v867 = vrot.slane %v862, 4
        %v869 = vshrl.u32 %v603, 16
        %v871 = vrot.slane %v869, 7
        %v872 = vshll.u32 %v603, 16
        %v874 = vor.u32 %v871, %v872
        %v875 = vsel %vm607, %v867, %v874
        %v876 = vrot.slane %v871, 4
        %v878 = vshrl.u32 %v604, 16
        %v880 = vrot.slane %v878, 7
        %v881 = vshll.u32 %v604, 16
        %v883 = vor.u32 %v880, %v881
        %v884 = vsel %vm607, %v876, %v883
        %v885 = vrot.slane %v880, 4
        %v887 = vshrl.u32 %v605, 16
        %v889 = vrot.slane %v887, 7
        %v890 = vshll.u32 %v605, 16
        %v892 = vor.u32 %v889, %v890
        %v893 = vsel %vm607, %v885, %v892
        %v894 = vrot.slane %v889, 4
        %v928 = vld [vmem:[#allocation2 + $0x8] sm:$0xf]
        %v929 = vsel %vm567, %v614, %v928
        %930 = vst [vmem:[#allocation2 + $0x8] sm:$0xf] %v929
        %931 = vst.msk [vmem:[#allocation2 + $0xc] sm:$0xf] %vm556, %v623
        %932 = vst.msk [vmem:[#allocation2 + $0x10] sm:$0xf] %vm556, %v632
        %933 = vst.msk [vmem:[#allocation2 + $0x14] sm:$0xf] %vm556, %v641
        %934 = vst.msk [vmem:[#allocation2 + $0x18] sm:$0xf] %vm556, %v650
        %935 = vst.msk [vmem:[#allocation2 + $0x1c] sm:$0xf] %vm556, %v659
        %936 = vst.msk [vmem:[#allocation2 + $0x20] sm:$0xf] %vm556, %v668
        %937 = vst.msk [vmem:[#allocation2 + $0x24] sm:$0xf] %vm556, %v677
        %938 = vst.msk [vmem:[#allocation2 + $0x28] sm:$0xf] %vm556, %v686
        %939 = vst.msk [vmem:[#allocation2 + $0x2c] sm:$0xf] %vm556, %v695
        %940 = vst.msk [vmem:[#allocation2 + $0x30] sm:$0xf] %vm556, %v704
        %941 = vst.msk [vmem:[#allocation2 + $0x34] sm:$0xf] %vm556, %v713
        %942 = vst.msk [vmem:[#allocation2 + $0x38] sm:$0xf] %vm556, %v722
        %943 = vst.msk [vmem:[#allocation2 + $0x3c] sm:$0xf] %vm556, %v731
        %944 = vst.msk [vmem:[#allocation2 + $0x40] sm:$0xf] %vm556, %v740
        %945 = vst.msk [vmem:[#allocation2 + $0x44] sm:$0xf] %vm556, %v749
        %946 = vst.msk [vmem:[#allocation2 + $0x48] sm:$0xf] %vm556, %v758
        %947 = vst.msk [vmem:[#allocation2 + $0x4c] sm:$0xf] %vm556, %v767
        %948 = vst.msk [vmem:[#allocation2 + $0x50] sm:$0xf] %vm556, %v776
        %949 = vst.msk [vmem:[#allocation2 + $0x54] sm:$0xf] %vm556, %v785
        %950 = vst.msk [vmem:[#allocation2 + $0x58] sm:$0xf] %vm556, %v794
        %951 = vst.msk [vmem:[#allocation2 + $0x5c] sm:$0xf] %vm556, %v803
        %952 = vst.msk [vmem:[#allocation2 + $0x60] sm:$0xf] %vm556, %v812
        %953 = vst.msk [vmem:[#allocation2 + $0x64] sm:$0xf] %vm556, %v821
        %954 = vst.msk [vmem:[#allocation2 + $0x68] sm:$0xf] %vm556, %v830
        %955 = vst.msk [vmem:[#allocation2 + $0x6c] sm:$0xf] %vm556, %v839
        %956 = vst.msk [vmem:[#allocation2 + $0x70] sm:$0xf] %vm556, %v848
        %957 = vst.msk [vmem:[#allocation2 + $0x74] sm:$0xf] %vm556, %v857
        %958 = vst.msk [vmem:[#allocation2 + $0x78] sm:$0xf] %vm556, %v866
        %959 = vst.msk [vmem:[#allocation2 + $0x7c] sm:$0xf] %vm556, %v875
        %960 = vst.msk [vmem:[#allocation2 + $0x80] sm:$0xf] %vm556, %v884
        %961 = vst.msk [vmem:[#allocation2 + $0x84] sm:$0xf] %vm556, %v893
        %v962 = vld [vmem:[#allocation2 + $0x88] sm:$0x1]
        %v963 = vsel %vm561, %v894, %v962
        %964 = vst [vmem:[#allocation2 + $0x88] sm:$0x1] %v963
        %v965 = vlaneseq
        %v966 = vshrl.u32 %v965, 7
        %v967 = vadd.s32 %v966, 8
        %v968 = vadd.s32 %v966, 16
        %v969 = vadd.s32 %v966, 24
        %v970 = vadd.s32 %v966, 32
        %v971 = vadd.s32 %v966, 40
        %v972 = vadd.s32 %v966, 48
        %v973 = vadd.s32 %v966, 56
        %v974 = vadd.s32 %v966, 64
        %v975 = vadd.s32 %v966, 72
        %v976 = vadd.s32 %v966, 80
        %v977 = vadd.s32 %v966, 88
        %v978 = vadd.s32 %v966, 96
        %v979 = vadd.s32 %v966, 104
        %v980 = vadd.s32 %v966, 112
        %v981 = vadd.s32 %v966, 120
        %v982 = vadd.s32 %v966, 128
        %v983 = vadd.s32 %v966, 136
        %v984 = vadd.s32 %v966, 144
        %v985 = vadd.s32 %v966, 152
        %v986 = vadd.s32 %v966, 160
        %v987 = vadd.s32 %v966, 168
        %v988 = vadd.s32 %v966, 176
        %v989 = vadd.s32 %v966, 184
        %v990 = vadd.s32 %v966, 192
        %v991 = vadd.s32 %v966, 200
        %v992 = vadd.s32 %v966, 208
        %v993 = vadd.s32 %v966, 216
        %v994 = vadd.s32 %v966, 224
        %v995 = vadd.s32 %v966, 232
        %v996 = vadd.s32 %v966, 240
        %v997 = vadd.s32 %v966, 248
        %vm998 = vcmp.lt.s32.totalorder %v966, 0
        %v999 = vsub.s32 0, %v966
        %v1000 = vsel %vm998, %v999, %v966
        %v1001 = vshrl.u32 %v1000, 4
        %v1002 = vand.u32 %v1000, 15
        %v1003 = vsub.s32 0, %v1002
        %v1004 = vsel %vm998, %v1003, %v1002
        %vm1005 = vcmp.lt.s32.totalorder %v967, 0
        %v1006 = vsub.s32 0, %v967
        %v1007 = vsel %vm1005, %v1006, %v967
        %v1008 = vshrl.u32 %v1007, 4
        %v1009 = vand.u32 %v1007, 15
        %v1010 = vsub.s32 0, %v1009
        %v1011 = vsel %vm1005, %v1010, %v1009
        %vm1012 = vcmp.lt.s32.totalorder %v968, 0
        %v1013 = vsub.s32 0, %v968
        %v1014 = vsel %vm1012, %v1013, %v968
        %v1015 = vshrl.u32 %v1014, 4
        %v1016 = vand.u32 %v1014, 15
        %v1017 = vsub.s32 0, %v1016
        %v1018 = vsel %vm1012, %v1017, %v1016
        %vm1019 = vcmp.lt.s32.totalorder %v969, 0
        %v1020 = vsub.s32 0, %v969
        %v1021 = vsel %vm1019, %v1020, %v969
        %v1022 = vshrl.u32 %v1021, 4
        %v1023 = vand.u32 %v1021, 15
        %v1024 = vsub.s32 0, %v1023
        %v1025 = vsel %vm1019, %v1024, %v1023
        %vm1026 = vcmp.lt.s32.totalorder %v970, 0
        %v1027 = vsub.s32 0, %v970
        %v1028 = vsel %vm1026, %v1027, %v970
        %v1029 = vshrl.u32 %v1028, 4
        %v1030 = vand.u32 %v1028, 15
        %v1031 = vsub.s32 0, %v1030
        %v1032 = vsel %vm1026, %v1031, %v1030
        %vm1033 = vcmp.lt.s32.totalorder %v971, 0
        %v1034 = vsub.s32 0, %v971
        %v1035 = vsel %vm1033, %v1034, %v971
        %v1036 = vshrl.u32 %v1035, 4
        %v1037 = vand.u32 %v1035, 15
        %v1038 = vsub.s32 0, %v1037
        %v1039 = vsel %vm1033, %v1038, %v1037
        %vm1040 = vcmp.lt.s32.totalorder %v972, 0
        %v1041 = vsub.s32 0, %v972
        %v1042 = vsel %vm1040, %v1041, %v972
        %v1043 = vshrl.u32 %v1042, 4
        %v1044 = vand.u32 %v1042, 15
        %v1045 = vsub.s32 0, %v1044
        %v1046 = vsel %vm1040, %v1045, %v1044
        %vm1047 = vcmp.lt.s32.totalorder %v973, 0
        %v1048 = vsub.s32 0, %v973
        %v1049 = vsel %vm1047, %v1048, %v973
        %v1050 = vshrl.u32 %v1049, 4
        %v1051 = vand.u32 %v1049, 15
        %v1052 = vsub.s32 0, %v1051
        %v1053 = vsel %vm1047, %v1052, %v1051
        %vm1054 = vcmp.lt.s32.totalorder %v974, 0
        %v1055 = vsub.s32 0, %v974
        %v1056 = vsel %vm1054, %v1055, %v974
        %v1057 = vshrl.u32 %v1056, 4
        %v1058 = vand.u32 %v1056, 15
        %v1059 = vsub.s32 0, %v1058
        %v1060 = vsel %vm1054, %v1059, %v1058
        %vm1061 = vcmp.lt.s32.totalorder %v975, 0
        %v1062 = vsub.s32 0, %v975
        %v1063 = vsel %vm1061, %v1062, %v975
        %v1064 = vshrl.u32 %v1063, 4
        %v1065 = vand.u32 %v1063, 15
        %v1066 = vsub.s32 0, %v1065
        %v1067 = vsel %vm1061, %v1066, %v1065
        %vm1068 = vcmp.lt.s32.totalorder %v976, 0
        %v1069 = vsub.s32 0, %v976
        %v1070 = vsel %vm1068, %v1069, %v976
        %v1071 = vshrl.u32 %v1070, 4
        %v1072 = vand.u32 %v1070, 15
        %v1073 = vsub.s32 0, %v1072
        %v1074 = vsel %vm1068, %v1073, %v1072
        %vm1075 = vcmp.lt.s32.totalorder %v977, 0
        %v1076 = vsub.s32 0, %v977
        %v1077 = vsel %vm1075, %v1076, %v977
        %v1078 = vshrl.u32 %v1077, 4
        %v1079 = vand.u32 %v1077, 15
        %v1080 = vsub.s32 0, %v1079
        %v1081 = vsel %vm1075, %v1080, %v1079
        %vm1082 = vcmp.lt.s32.totalorder %v978, 0
        %v1083 = vsub.s32 0, %v978
        %v1084 = vsel %vm1082, %v1083, %v978
        %v1085 = vshrl.u32 %v1084, 4
        %v1086 = vand.u32 %v1084, 15
        %v1087 = vsub.s32 0, %v1086
        %v1088 = vsel %vm1082, %v1087, %v1086
        %vm1089 = vcmp.lt.s32.totalorder %v979, 0
        %v1090 = vsub.s32 0, %v979
        %v1091 = vsel %vm1089, %v1090, %v979
        %v1092 = vshrl.u32 %v1091, 4
        %v1093 = vand.u32 %v1091, 15
        %v1094 = vsub.s32 0, %v1093
        %v1095 = vsel %vm1089, %v1094, %v1093
        %vm1096 = vcmp.lt.s32.totalorder %v980, 0
        %v1097 = vsub.s32 0, %v980
        %v1098 = vsel %vm1096, %v1097, %v980
        %v1099 = vshrl.u32 %v1098, 4
        %v1100 = vand.u32 %v1098, 15
        %v1101 = vsub.s32 0, %v1100
        %v1102 = vsel %vm1096, %v1101, %v1100
        %vm1103 = vcmp.lt.s32.totalorder %v981, 0
        %v1104 = vsub.s32 0, %v981
        %v1105 = vsel %vm1103, %v1104, %v981
        %v1106 = vshrl.u32 %v1105, 4
        %v1107 = vand.u32 %v1105, 15
        %v1108 = vsub.s32 0, %v1107
        %v1109 = vsel %vm1103, %v1108, %v1107
        %vm1110 = vcmp.lt.s32.totalorder %v982, 0
        %v1111 = vsub.s32 0, %v982
        %v1112 = vsel %vm1110, %v1111, %v982
        %v1113 = vshrl.u32 %v1112, 4
        %v1114 = vand.u32 %v1112, 15
        %v1115 = vsub.s32 0, %v1114
        %v1116 = vsel %vm1110, %v1115, %v1114
        %vm1117 = vcmp.lt.s32.totalorder %v983, 0
        %v1118 = vsub.s32 0, %v983
        %v1119 = vsel %vm1117, %v1118, %v983
        %v1120 = vshrl.u32 %v1119, 4
        %v1121 = vand.u32 %v1119, 15
        %v1122 = vsub.s32 0, %v1121
        %v1123 = vsel %vm1117, %v1122, %v1121
        %vm1124 = vcmp.lt.s32.totalorder %v984, 0
        %v1125 = vsub.s32 0, %v984
        %v1126 = vsel %vm1124, %v1125, %v984
        %v1127 = vshrl.u32 %v1126, 4
        %v1128 = vand.u32 %v1126, 15
        %v1129 = vsub.s32 0, %v1128
        %v1130 = vsel %vm1124, %v1129, %v1128
        %vm1131 = vcmp.lt.s32.totalorder %v985, 0
        %v1132 = vsub.s32 0, %v985
        %v1133 = vsel %vm1131, %v1132, %v985
        %v1134 = vshrl.u32 %v1133, 4
        %v1135 = vand.u32 %v1133, 15
        %v1136 = vsub.s32 0, %v1135
        %v1137 = vsel %vm1131, %v1136, %v1135
        %vm1138 = vcmp.lt.s32.totalorder %v986, 0
        %v1139 = vsub.s32 0, %v986
        %v1140 = vsel %vm1138, %v1139, %v986
        %v1141 = vshrl.u32 %v1140, 4
        %v1142 = vand.u32 %v1140, 15
        %v1143 = vsub.s32 0, %v1142
        %v1144 = vsel %vm1138, %v1143, %v1142
        %vm1145 = vcmp.lt.s32.totalorder %v987, 0
        %v1146 = vsub.s32 0, %v987
        %v1147 = vsel %vm1145, %v1146, %v987
        %v1148 = vshrl.u32 %v1147, 4
        %v1149 = vand.u32 %v1147, 15
        %v1150 = vsub.s32 0, %v1149
        %v1151 = vsel %vm1145, %v1150, %v1149
        %vm1152 = vcmp.lt.s32.totalorder %v988, 0
        %v1153 = vsub.s32 0, %v988
        %v1154 = vsel %vm1152, %v1153, %v988
        %v1155 = vshrl.u32 %v1154, 4
        %v1156 = vand.u32 %v1154, 15
        %v1157 = vsub.s32 0, %v1156
        %v1158 = vsel %vm1152, %v1157, %v1156
        %vm1159 = vcmp.lt.s32.totalorder %v989, 0
        %v1160 = vsub.s32 0, %v989
        %v1161 = vsel %vm1159, %v1160, %v989
        %v1162 = vshrl.u32 %v1161, 4
        %v1163 = vand.u32 %v1161, 15
        %v1164 = vsub.s32 0, %v1163
        %v1165 = vsel %vm1159, %v1164, %v1163
        %vm1166 = vcmp.lt.s32.totalorder %v990, 0
        %v1167 = vsub.s32 0, %v990
        %v1168 = vsel %vm1166, %v1167, %v990
        %v1169 = vshrl.u32 %v1168, 4
        %v1170 = vand.u32 %v1168, 15
        %v1171 = vsub.s32 0, %v1170
        %v1172 = vsel %vm1166, %v1171, %v1170
        %vm1173 = vcmp.lt.s32.totalorder %v991, 0
        %v1174 = vsub.s32 0, %v991
        %v1175 = vsel %vm1173, %v1174, %v991
        %v1176 = vshrl.u32 %v1175, 4
        %v1177 = vand.u32 %v1175, 15
        %v1178 = vsub.s32 0, %v1177
        %v1179 = vsel %vm1173, %v1178, %v1177
        %vm1180 = vcmp.lt.s32.totalorder %v992, 0
        %v1181 = vsub.s32 0, %v992
        %v1182 = vsel %vm1180, %v1181, %v992
        %v1183 = vshrl.u32 %v1182, 4
        %v1184 = vand.u32 %v1182, 15
        %v1185 = vsub.s32 0, %v1184
        %v1186 = vsel %vm1180, %v1185, %v1184
        %vm1187 = vcmp.lt.s32.totalorder %v993, 0
        %v1188 = vsub.s32 0, %v993
        %v1189 = vsel %vm1187, %v1188, %v993
        %v1190 = vshrl.u32 %v1189, 4
        %v1191 = vand.u32 %v1189, 15
        %v1192 = vsub.s32 0, %v1191
        %v1193 = vsel %vm1187, %v1192, %v1191
        %vm1194 = vcmp.lt.s32.totalorder %v994, 0
        %v1195 = vsub.s32 0, %v994
        %v1196 = vsel %vm1194, %v1195, %v994
        %v1197 = vshrl.u32 %v1196, 4
        %v1198 = vand.u32 %v1196, 15
        %v1199 = vsub.s32 0, %v1198
        %v1200 = vsel %vm1194, %v1199, %v1198
        %vm1201 = vcmp.lt.s32.totalorder %v995, 0
        %v1202 = vsub.s32 0, %v995
        %v1203 = vsel %vm1201, %v1202, %v995
        %v1204 = vshrl.u32 %v1203, 4
        %v1205 = vand.u32 %v1203, 15
        %v1206 = vsub.s32 0, %v1205
        %v1207 = vsel %vm1201, %v1206, %v1205
        %vm1208 = vcmp.lt.s32.totalorder %v996, 0
        %v1209 = vsub.s32 0, %v996
        %v1210 = vsel %vm1208, %v1209, %v996
        %v1211 = vshrl.u32 %v1210, 4
        %v1212 = vand.u32 %v1210, 15
        %v1213 = vsub.s32 0, %v1212
        %v1214 = vsel %vm1208, %v1213, %v1212
        %vm1215 = vcmp.lt.s32.totalorder %v997, 0
        %v1216 = vsub.s32 0, %v997
        %v1217 = vsel %vm1215, %v1216, %v997
        %v1218 = vshrl.u32 %v1217, 4
        %v1219 = vand.u32 %v1217, 15
        %v1220 = vsub.s32 0, %v1219
        %v1221 = vsel %vm1215, %v1220, %v1219
        %vm1222 = vcmp.ne.s32.totalorder %v1004, 0
        %vm1223 = vcmp.ne.s32.totalorder %v1011, 0
        %vm1224 = vcmp.ne.s32.totalorder %v1018, 0
        %vm1225 = vcmp.ne.s32.totalorder %v1025, 0
        %vm1226 = vcmp.ne.s32.totalorder %v1032, 0
        %vm1227 = vcmp.ne.s32.totalorder %v1039, 0
        %vm1228 = vcmp.ne.s32.totalorder %v1046, 0
        %vm1229 = vcmp.ne.s32.totalorder %v1053, 0
        %vm1230 = vcmp.ne.s32.totalorder %v1060, 0
        %vm1231 = vcmp.ne.s32.totalorder %v1067, 0
        %vm1232 = vcmp.ne.s32.totalorder %v1074, 0
        %vm1233 = vcmp.ne.s32.totalorder %v1081, 0
        %vm1234 = vcmp.ne.s32.totalorder %v1088, 0
        %vm1235 = vcmp.ne.s32.totalorder %v1095, 0
        %vm1236 = vcmp.ne.s32.totalorder %v1102, 0
        %vm1237 = vcmp.ne.s32.totalorder %v1109, 0
        %vm1238 = vcmp.ne.s32.totalorder %v1116, 0
        %vm1239 = vcmp.ne.s32.totalorder %v1123, 0
        %vm1240 = vcmp.ne.s32.totalorder %v1130, 0
        %vm1241 = vcmp.ne.s32.totalorder %v1137, 0
        %vm1242 = vcmp.ne.s32.totalorder %v1144, 0
        %vm1243 = vcmp.ne.s32.totalorder %v1151, 0
        %vm1244 = vcmp.ne.s32.totalorder %v1158, 0
        %vm1245 = vcmp.ne.s32.totalorder %v1165, 0
        %vm1246 = vcmp.ne.s32.totalorder %v1172, 0
        %vm1247 = vcmp.ne.s32.totalorder %v1179, 0
        %vm1248 = vcmp.ne.s32.totalorder %v1186, 0
        %vm1249 = vcmp.ne.s32.totalorder %v1193, 0
        %vm1250 = vcmp.ne.s32.totalorder %v1200, 0
        %vm1251 = vcmp.ne.s32.totalorder %v1207, 0
        %vm1252 = vcmp.ne.s32.totalorder %v1214, 0
        %vm1253 = vcmp.ne.s32.totalorder %v1221, 0
        %vm1254 = vcmp.lt.s32.totalorder %v1004, 0
        %vm1255 = vcmp.lt.s32.totalorder %v1011, 0
        %vm1256 = vcmp.lt.s32.totalorder %v1018, 0
        %vm1257 = vcmp.lt.s32.totalorder %v1025, 0
        %vm1258 = vcmp.lt.s32.totalorder %v1032, 0
        %vm1259 = vcmp.lt.s32.totalorder %v1039, 0
        %vm1260 = vcmp.lt.s32.totalorder %v1046, 0
        %vm1261 = vcmp.lt.s32.totalorder %v1053, 0
        %vm1262 = vcmp.lt.s32.totalorder %v1060, 0
        %vm1263 = vcmp.lt.s32.totalorder %v1067, 0
        %vm1264 = vcmp.lt.s32.totalorder %v1074, 0
        %vm1265 = vcmp.lt.s32.totalorder %v1081, 0
        %vm1266 = vcmp.lt.s32.totalorder %v1088, 0
        %vm1267 = vcmp.lt.s32.totalorder %v1095, 0
        %vm1268 = vcmp.lt.s32.totalorder %v1102, 0
        %vm1269 = vcmp.lt.s32.totalorder %v1109, 0
        %vm1270 = vcmp.lt.s32.totalorder %v1116, 0
        %vm1271 = vcmp.lt.s32.totalorder %v1123, 0
        %vm1272 = vcmp.lt.s32.totalorder %v1130, 0
        %vm1273 = vcmp.lt.s32.totalorder %v1137, 0
        %vm1274 = vcmp.lt.s32.totalorder %v1144, 0
        %vm1275 = vcmp.lt.s32.totalorder %v1151, 0
        %vm1276 = vcmp.lt.s32.totalorder %v1158, 0
        %vm1277 = vcmp.lt.s32.totalorder %v1165, 0
        %vm1278 = vcmp.lt.s32.totalorder %v1172, 0
        %vm1279 = vcmp.lt.s32.totalorder %v1179, 0
        %vm1280 = vcmp.lt.s32.totalorder %v1186, 0
        %vm1281 = vcmp.lt.s32.totalorder %v1193, 0
        %vm1282 = vcmp.lt.s32.totalorder %v1200, 0
        %vm1283 = vcmp.lt.s32.totalorder %v1207, 0
        %vm1284 = vcmp.lt.s32.totalorder %v1214, 0
        %vm1285 = vcmp.lt.s32.totalorder %v1221, 0
        %vm1286 = vmand %vm1254, %vm1222
        %vm1287 = vmand %vm1255, %vm1223
        %vm1288 = vmand %vm1256, %vm1224
        %vm1289 = vmand %vm1257, %vm1225
        %vm1290 = vmand %vm1258, %vm1226
        %vm1291 = vmand %vm1259, %vm1227
        %vm1292 = vmand %vm1260, %vm1228
        %vm1293 = vmand %vm1261, %vm1229
        %vm1294 = vmand %vm1262, %vm1230
        %vm1295 = vmand %vm1263, %vm1231
        %vm1296 = vmand %vm1264, %vm1232
        %vm1297 = vmand %vm1265, %vm1233
        %vm1298 = vmand %vm1266, %vm1234
        %vm1299 = vmand %vm1267, %vm1235
        %vm1300 = vmand %vm1268, %vm1236
        %vm1301 = vmand %vm1269, %vm1237
        %vm1302 = vmand %vm1270, %vm1238
        %vm1303 = vmand %vm1271, %vm1239
        %vm1304 = vmand %vm1272, %vm1240
        %vm1305 = vmand %vm1273, %vm1241
        %vm1306 = vmand %vm1274, %vm1242
        %vm1307 = vmand %vm1275, %vm1243
        %vm1308 = vmand %vm1276, %vm1244
        %vm1309 = vmand %vm1277, %vm1245
        %vm1310 = vmand %vm1278, %vm1246
        %vm1311 = vmand %vm1279, %vm1247
        %vm1312 = vmand %vm1280, %vm1248
        %vm1313 = vmand %vm1281, %vm1249
        %vm1314 = vmand %vm1282, %vm1250
        %vm1315 = vmand %vm1283, %vm1251
        %vm1316 = vmand %vm1284, %vm1252
        %vm1317 = vmand %vm1285, %vm1253
        %v1318 = vadd.s32 %v1004, 16
        %v1319 = vadd.s32 %v1011, 16
        %v1320 = vadd.s32 %v1018, 16
        %v1321 = vadd.s32 %v1025, 16
        %v1322 = vadd.s32 %v1032, 16
        %v1323 = vadd.s32 %v1039, 16
        %v1324 = vadd.s32 %v1046, 16
        %v1325 = vadd.s32 %v1053, 16
        %v1326 = vadd.s32 %v1060, 16
        %v1327 = vadd.s32 %v1067, 16
        %v1328 = vadd.s32 %v1074, 16
        %v1329 = vadd.s32 %v1081, 16
        %v1330 = vadd.s32 %v1088, 16
        %v1331 = vadd.s32 %v1095, 16
        %v1332 = vadd.s32 %v1102, 16
        %v1333 = vadd.s32 %v1109, 16
        %v1334 = vadd.s32 %v1116, 16
        %v1335 = vadd.s32 %v1123, 16
        %v1336 = vadd.s32 %v1130, 16
        %v1337 = vadd.s32 %v1137, 16
        %v1338 = vadd.s32 %v1144, 16
        %v1339 = vadd.s32 %v1151, 16
        %v1340 = vadd.s32 %v1158, 16
        %v1341 = vadd.s32 %v1165, 16
        %v1342 = vadd.s32 %v1172, 16
        %v1343 = vadd.s32 %v1179, 16
        %v1344 = vadd.s32 %v1186, 16
        %v1345 = vadd.s32 %v1193, 16
        %v1346 = vadd.s32 %v1200, 16
        %v1347 = vadd.s32 %v1207, 16
        %v1348 = vadd.s32 %v1214, 16
        %v1349 = vadd.s32 %v1221, 16
        %v1350 = vsel %vm1286, %v1318, %v1004
        %v1351 = vsel %vm1287, %v1319, %v1011
        %v1352 = vsel %vm1288, %v1320, %v1018
        %v1353 = vsel %vm1289, %v1321, %v1025
        %v1354 = vsel %vm1290, %v1322, %v1032
        %v1355 = vsel %vm1291, %v1323, %v1039
        %v1356 = vsel %vm1292, %v1324, %v1046
        %v1357 = vsel %vm1293, %v1325, %v1053
        %v1358 = vsel %vm1294, %v1326, %v1060
        %v1359 = vsel %vm1295, %v1327, %v1067
        %v1360 = vsel %vm1296, %v1328, %v1074
        %v1361 = vsel %vm1297, %v1329, %v1081
        %v1362 = vsel %vm1298, %v1330, %v1088
        %v1363 = vsel %vm1299, %v1331, %v1095
        %v1364 = vsel %vm1300, %v1332, %v1102
        %v1365 = vsel %vm1301, %v1333, %v1109
        %v1366 = vsel %vm1302, %v1334, %v1116
        %v1367 = vsel %vm1303, %v1335, %v1123
        %v1368 = vsel %vm1304, %v1336, %v1130
        %v1369 = vsel %vm1305, %v1337, %v1137
        %v1370 = vsel %vm1306, %v1338, %v1144
        %v1371 = vsel %vm1307, %v1339, %v1151
        %v1372 = vsel %vm1308, %v1340, %v1158
        %v1373 = vsel %vm1309, %v1341, %v1165
        %v1374 = vsel %vm1310, %v1342, %v1172
        %v1375 = vsel %vm1311, %v1343, %v1179
        %v1376 = vsel %vm1312, %v1344, %v1186
        %v1377 = vsel %vm1313, %v1345, %v1193
        %v1378 = vsel %vm1314, %v1346, %v1200
        %v1379 = vsel %vm1315, %v1347, %v1207
        %v1380 = vsel %vm1316, %v1348, %v1214
        %v1381 = vsel %vm1317, %v1349, %v1221
        %vm1382 = vcmp.ne.s32.totalorder %v1350, 0
        %vm1383 = vcmp.ne.s32.totalorder %v1351, 0
        %vm1384 = vcmp.ne.s32.totalorder %v1352, 0
        %vm1385 = vcmp.ne.s32.totalorder %v1353, 0
        %vm1386 = vcmp.ne.s32.totalorder %v1354, 0
        %vm1387 = vcmp.ne.s32.totalorder %v1355, 0
        %vm1388 = vcmp.ne.s32.totalorder %v1356, 0
        %vm1389 = vcmp.ne.s32.totalorder %v1357, 0
        %vm1390 = vcmp.ne.s32.totalorder %v1358, 0
        %vm1391 = vcmp.ne.s32.totalorder %v1359, 0
        %vm1392 = vcmp.ne.s32.totalorder %v1360, 0
        %vm1393 = vcmp.ne.s32.totalorder %v1361, 0
        %vm1394 = vcmp.ne.s32.totalorder %v1362, 0
        %vm1395 = vcmp.ne.s32.totalorder %v1363, 0
        %vm1396 = vcmp.ne.s32.totalorder %v1364, 0
        %vm1397 = vcmp.ne.s32.totalorder %v1365, 0
        %vm1398 = vcmp.ne.s32.totalorder %v1366, 0
        %vm1399 = vcmp.ne.s32.totalorder %v1367, 0
        %vm1400 = vcmp.ne.s32.totalorder %v1368, 0
        %vm1401 = vcmp.ne.s32.totalorder %v1369, 0
        %vm1402 = vcmp.ne.s32.totalorder %v1370, 0
        %vm1403 = vcmp.ne.s32.totalorder %v1371, 0
        %vm1404 = vcmp.ne.s32.totalorder %v1372, 0
        %vm1405 = vcmp.ne.s32.totalorder %v1373, 0
        %vm1406 = vcmp.ne.s32.totalorder %v1374, 0
        %vm1407 = vcmp.ne.s32.totalorder %v1375, 0
        %vm1408 = vcmp.ne.s32.totalorder %v1376, 0
        %vm1409 = vcmp.ne.s32.totalorder %v1377, 0
        %vm1410 = vcmp.ne.s32.totalorder %v1378, 0
        %vm1411 = vcmp.ne.s32.totalorder %v1379, 0
        %vm1412 = vcmp.ne.s32.totalorder %v1380, 0
        %vm1413 = vcmp.ne.s32.totalorder %v1381, 0
        %vm1414 = vcmp.ne.s32.totalorder %v1350, 15
        %vm1415 = vcmp.ne.s32.totalorder %v1351, 15
        %vm1416 = vcmp.ne.s32.totalorder %v1352, 15
        %vm1417 = vcmp.ne.s32.totalorder %v1353, 15
        %vm1418 = vcmp.ne.s32.totalorder %v1354, 15
        %vm1419 = vcmp.ne.s32.totalorder %v1355, 15
        %vm1420 = vcmp.ne.s32.totalorder %v1356, 15
        %vm1421 = vcmp.ne.s32.totalorder %v1357, 15
        %vm1422 = vcmp.ne.s32.totalorder %v1358, 15
        %vm1423 = vcmp.ne.s32.totalorder %v1359, 15
        %vm1424 = vcmp.ne.s32.totalorder %v1360, 15
        %vm1425 = vcmp.ne.s32.totalorder %v1361, 15
        %vm1426 = vcmp.ne.s32.totalorder %v1362, 15
        %vm1427 = vcmp.ne.s32.totalorder %v1363, 15
        %vm1428 = vcmp.ne.s32.totalorder %v1364, 15
        %vm1429 = vcmp.ne.s32.totalorder %v1365, 15
        %vm1430 = vcmp.ne.s32.totalorder %v1366, 15
        %vm1431 = vcmp.ne.s32.totalorder %v1367, 15
        %vm1432 = vcmp.ne.s32.totalorder %v1368, 15
        %vm1433 = vcmp.ne.s32.totalorder %v1369, 15
        %vm1434 = vcmp.ne.s32.totalorder %v1370, 15
        %vm1435 = vcmp.ne.s32.totalorder %v1371, 15
        %vm1436 = vcmp.ne.s32.totalorder %v1372, 15
        %vm1437 = vcmp.ne.s32.totalorder %v1373, 15
        %vm1438 = vcmp.ne.s32.totalorder %v1374, 15
        %vm1439 = vcmp.ne.s32.totalorder %v1375, 15
        %vm1440 = vcmp.ne.s32.totalorder %v1376, 15
        %vm1441 = vcmp.ne.s32.totalorder %v1377, 15
        %vm1442 = vcmp.ne.s32.totalorder %v1378, 15
        %vm1443 = vcmp.ne.s32.totalorder %v1379, 15
        %vm1444 = vcmp.ne.s32.totalorder %v1380, 15
        %vm1445 = vcmp.ne.s32.totalorder %v1381, 15
        %v1446 = vld [vmem:[#allocation2] sm:$0xf]
        %v1447 = vld [vmem:[#allocation2 + $0x4] sm:$0xf]
        %v1448 = vld [vmem:[#allocation2 + $0x8] sm:$0xf]
        %v1449 = vld [vmem:[#allocation2 + $0xc] sm:$0xf]
        %v1450 = vld [vmem:[#allocation2 + $0x10] sm:$0xf]
        %v1451 = vld [vmem:[#allocation2 + $0x14] sm:$0xf]
        %v1452 = vld [vmem:[#allocation2 + $0x18] sm:$0xf]
        %v1453 = vld [vmem:[#allocation2 + $0x1c] sm:$0xf]
        %v1454 = vld [vmem:[#allocation2 + $0x20] sm:$0xf]
        %v1455 = vld [vmem:[#allocation2 + $0x24] sm:$0xf]
        %v1456 = vld [vmem:[#allocation2 + $0x28] sm:$0xf]
        %v1457 = vld [vmem:[#allocation2 + $0x2c] sm:$0xf]
        %v1458 = vld [vmem:[#allocation2 + $0x30] sm:$0xf]
        %v1459 = vld [vmem:[#allocation2 + $0x34] sm:$0xf]
        %v1460 = vld [vmem:[#allocation2 + $0x38] sm:$0xf]
        %v1461 = vld [vmem:[#allocation2 + $0x3c] sm:$0xf]
        %v1462 = vld [vmem:[#allocation2 + $0x40] sm:$0xf]
        %v1463 = vld [vmem:[#allocation2 + $0x44] sm:$0xf]
        %v1464 = vld [vmem:[#allocation2 + $0x48] sm:$0xf]
        %v1465 = vld [vmem:[#allocation2 + $0x4c] sm:$0xf]
        %v1466 = vld [vmem:[#allocation2 + $0x50] sm:$0xf]
        %v1467 = vld [vmem:[#allocation2 + $0x54] sm:$0xf]
        %v1468 = vld [vmem:[#allocation2 + $0x58] sm:$0xf]
        %v1469 = vld [vmem:[#allocation2 + $0x5c] sm:$0xf]
        %v1470 = vld [vmem:[#allocation2 + $0x60] sm:$0xf]
        %v1471 = vld [vmem:[#allocation2 + $0x64] sm:$0xf]
        %v1472 = vld [vmem:[#allocation2 + $0x68] sm:$0xf]
        %v1473 = vld [vmem:[#allocation2 + $0x6c] sm:$0xf]
        %v1474 = vld [vmem:[#allocation2 + $0x70] sm:$0xf]
        %v1475 = vld [vmem:[#allocation2 + $0x74] sm:$0xf]
        %v1476 = vld [vmem:[#allocation2 + $0x78] sm:$0xf]
        %v1477 = vld [vmem:[#allocation2 + $0x7c] sm:$0xf]
        %vm1478 = vmpackc.low %vm1382, %vm1382
        %vm1479 = vmpackc.low %vm1383, %vm1383
        %vm1480 = vmpackc.low %vm1384, %vm1384
        %vm1481 = vmpackc.low %vm1385, %vm1385
        %vm1482 = vmpackc.low %vm1386, %vm1386
        %vm1483 = vmpackc.low %vm1387, %vm1387
        %vm1484 = vmpackc.low %vm1388, %vm1388
        %vm1485 = vmpackc.low %vm1389, %vm1389
        %vm1486 = vmpackc.low %vm1390, %vm1390
        %vm1487 = vmpackc.low %vm1391, %vm1391
        %vm1488 = vmpackc.low %vm1392, %vm1392
        %vm1489 = vmpackc.low %vm1393, %vm1393
        %vm1490 = vmpackc.low %vm1394, %vm1394
        %vm1491 = vmpackc.low %vm1395, %vm1395
        %vm1492 = vmpackc.low %vm1396, %vm1396
        %vm1493 = vmpackc.low %vm1397, %vm1397
        %vm1494 = vmpackc.low %vm1398, %vm1398
        %vm1495 = vmpackc.low %vm1399, %vm1399
        %vm1496 = vmpackc.low %vm1400, %vm1400
        %vm1497 = vmpackc.low %vm1401, %vm1401
        %vm1498 = vmpackc.low %vm1402, %vm1402
        %vm1499 = vmpackc.low %vm1403, %vm1403
        %vm1500 = vmpackc.low %vm1404, %vm1404
        %vm1501 = vmpackc.low %vm1405, %vm1405
        %vm1502 = vmpackc.low %vm1406, %vm1406
        %vm1503 = vmpackc.low %vm1407, %vm1407
        %vm1504 = vmpackc.low %vm1408, %vm1408
        %vm1505 = vmpackc.low %vm1409, %vm1409
        %vm1506 = vmpackc.low %vm1410, %vm1410
        %vm1507 = vmpackc.low %vm1411, %vm1411
        %vm1508 = vmpackc.low %vm1412, %vm1412
        %vm1509 = vmpackc.low %vm1413, %vm1413
        %v1510 = vsel %vm1478, %v1446, 0
        %v1511 = vsel %vm1479, %v1447, 0
        %v1512 = vsel %vm1480, %v1448, 0
        %v1513 = vsel %vm1481, %v1449, 0
        %v1514 = vsel %vm1482, %v1450, 0
        %v1515 = vsel %vm1483, %v1451, 0
        %v1516 = vsel %vm1484, %v1452, 0
        %v1517 = vsel %vm1485, %v1453, 0
        %v1518 = vsel %vm1486, %v1454, 0
        %v1519 = vsel %vm1487, %v1455, 0
        %v1520 = vsel %vm1488, %v1456, 0
        %v1521 = vsel %vm1489, %v1457, 0
        %v1522 = vsel %vm1490, %v1458, 0
        %v1523 = vsel %vm1491, %v1459, 0
        %v1524 = vsel %vm1492, %v1460, 0
        %v1525 = vsel %vm1493, %v1461, 0
        %v1526 = vsel %vm1494, %v1462, 0
        %v1527 = vsel %vm1495, %v1463, 0
        %v1528 = vsel %vm1496, %v1464, 0
        %v1529 = vsel %vm1497, %v1465, 0
        %v1530 = vsel %vm1498, %v1466, 0
        %v1531 = vsel %vm1499, %v1467, 0
        %v1532 = vsel %vm1500, %v1468, 0
        %v1533 = vsel %vm1501, %v1469, 0
        %v1534 = vsel %vm1502, %v1470, 0
        %v1535 = vsel %vm1503, %v1471, 0
        %v1536 = vsel %vm1504, %v1472, 0
        %v1537 = vsel %vm1505, %v1473, 0
        %v1538 = vsel %vm1506, %v1474, 0
        %v1539 = vsel %vm1507, %v1475, 0
        %v1540 = vsel %vm1508, %v1476, 0
        %v1541 = vsel %vm1509, %v1477, 0
        %v1542 = vld [vmem:[#allocation2 + $0x80] sm:$0x1]
        %v1543 = vld [vmem:[#allocation2] sm:$0xe]
        %vm1544 = vmpackc.low %vm1414, %vm1414
        %vm1545 = vmpackc.low %vm1415, %vm1415
        %vm1546 = vmpackc.low %vm1416, %vm1416
        %vm1547 = vmpackc.low %vm1417, %vm1417
        %vm1548 = vmpackc.low %vm1418, %vm1418
        %vm1549 = vmpackc.low %vm1419, %vm1419
        %vm1550 = vmpackc.low %vm1420, %vm1420
        %vm1551 = vmpackc.low %vm1421, %vm1421
        %vm1552 = vmpackc.low %vm1422, %vm1422
        %vm1553 = vmpackc.low %vm1423, %vm1423
        %vm1554 = vmpackc.low %vm1424, %vm1424
        %vm1555 = vmpackc.low %vm1425, %vm1425
        %vm1556 = vmpackc.low %vm1426, %vm1426
        %vm1557 = vmpackc.low %vm1427, %vm1427
        %vm1558 = vmpackc.low %vm1428, %vm1428
        %vm1559 = vmpackc.low %vm1429, %vm1429
        %vm1560 = vmpackc.low %vm1430, %vm1430
        %vm1561 = vmpackc.low %vm1431, %vm1431
        %vm1562 = vmpackc.low %vm1432, %vm1432
        %vm1563 = vmpackc.low %vm1433, %vm1433
        %vm1564 = vmpackc.low %vm1434, %vm1434
        %vm1565 = vmpackc.low %vm1435, %vm1435
        %vm1566 = vmpackc.low %vm1436, %vm1436
        %vm1567 = vmpackc.low %vm1437, %vm1437
        %vm1568 = vmpackc.low %vm1438, %vm1438
        %vm1569 = vmpackc.low %vm1439, %vm1439
        %vm1570 = vmpackc.low %vm1440, %vm1440
        %vm1571 = vmpackc.low %vm1441, %vm1441
        %vm1572 = vmpackc.low %vm1442, %vm1442
        %vm1573 = vmpackc.low %vm1443, %vm1443
        %vm1574 = vmpackc.low %vm1444, %vm1444
        %vm1575 = vmpackc.low %vm1445, %vm1445
        %v1576 = vsel %vm1544, 65537, 0
        %v1577 = vsel %vm1545, 65537, 0
        %v1578 = vsel %vm1546, 65537, 0
        %v1579 = vsel %vm1547, 65537, 0
        %v1580 = vsel %vm1548, 65537, 0
        %v1581 = vsel %vm1549, 65537, 0
        %v1582 = vsel %vm1550, 65537, 0
        %v1583 = vsel %vm1551, 65537, 0
        %v1584 = vsel %vm1552, 65537, 0
        %v1585 = vsel %vm1553, 65537, 0
        %v1586 = vsel %vm1554, 65537, 0
        %v1587 = vsel %vm1555, 65537, 0
        %v1588 = vsel %vm1556, 65537, 0
        %v1589 = vsel %vm1557, 65537, 0
        %v1590 = vsel %vm1558, 65537, 0
        %v1591 = vsel %vm1559, 65537, 0
        %v1592 = vsel %vm1560, 65537, 0
        %v1593 = vsel %vm1561, 65537, 0
        %v1594 = vsel %vm1562, 65537, 0
        %v1595 = vsel %vm1563, 65537, 0
        %v1596 = vsel %vm1564, 65537, 0
        %v1597 = vsel %vm1565, 65537, 0
        %v1598 = vsel %vm1566, 65537, 0
        %v1599 = vsel %vm1567, 65537, 0
        %v1600 = vsel %vm1568, 65537, 0
        %v1601 = vsel %vm1569, 65537, 0
        %v1602 = vsel %vm1570, 65537, 0
        %v1603 = vsel %vm1571, 65537, 0
        %v1604 = vsel %vm1572, 65537, 0
        %v1605 = vsel %vm1573, 65537, 0
        %v1606 = vsel %vm1574, 65537, 0
        %v1607 = vsel %vm1575, 65537, 0
        %vm1608 = vcmask 1040384
        %vm1609 = vcmask 1044484
        %vm1610 = vmor %vm1608, %vm1609
        %v1611 = vrot.slane %v1576, 7
        %v1612 = vrot.slane %v1611, 4
        %v1613 = vrot.slane %v1577, 7
        %v1614 = vsel %vm1610, %v1612, %v1613
        %v1615 = vrot.slane %v1613, 4
        %v1616 = vrot.slane %v1578, 7
        %v1617 = vsel %vm1610, %v1615, %v1616
        %v1618 = vrot.slane %v1616, 4
        %v1619 = vrot.slane %v1579, 7
        %v1620 = vsel %vm1610, %v1618, %v1619
        %v1621 = vrot.slane %v1619, 4
        %v1622 = vrot.slane %v1580, 7
        %v1623 = vsel %vm1610, %v1621, %v1622
        %v1624 = vrot.slane %v1622, 4
        %v1625 = vrot.slane %v1581, 7
        %v1626 = vsel %vm1610, %v1624, %v1625
        %v1627 = vrot.slane %v1625, 4
        %v1628 = vrot.slane %v1582, 7
        %v1629 = vsel %vm1610, %v1627, %v1628
        %v1630 = vrot.slane %v1628, 4
        %v1631 = vrot.slane %v1583, 7
        %v1632 = vsel %vm1610, %v1630, %v1631
        %v1633 = vrot.slane %v1631, 4
        %v1634 = vrot.slane %v1584, 7
        %v1635 = vsel %vm1610, %v1633, %v1634
        %v1636 = vrot.slane %v1634, 4
        %v1637 = vrot.slane %v1585, 7
        %v1638 = vsel %vm1610, %v1636, %v1637
        %v1639 = vrot.slane %v1637, 4
        %v1640 = vrot.slane %v1586, 7
        %v1641 = vsel %vm1610, %v1639, %v1640
        %v1642 = vrot.slane %v1640, 4
        %v1643 = vrot.slane %v1587, 7
        %v1644 = vsel %vm1610, %v1642, %v1643
        %v1645 = vrot.slane %v1643, 4
        %v1646 = vrot.slane %v1588, 7
        %v1647 = vsel %vm1610, %v1645, %v1646
        %v1648 = vrot.slane %v1646, 4
        %v1649 = vrot.slane %v1589, 7
        %v1650 = vsel %vm1610, %v1648, %v1649
        %v1651 = vrot.slane %v1649, 4
        %v1652 = vrot.slane %v1590, 7
        %v1653 = vsel %vm1610, %v1651, %v1652
        %v1654 = vrot.slane %v1652, 4
        %v1655 = vrot.slane %v1591, 7
        %v1656 = vsel %vm1610, %v1654, %v1655
        %v1657 = vrot.slane %v1655, 4
        %v1658 = vrot.slane %v1592, 7
        %v1659 = vsel %vm1610, %v1657, %v1658
        %v1660 = vrot.slane %v1658, 4
        %v1661 = vrot.slane %v1593, 7
        %v1662 = vsel %vm1610, %v1660, %v1661
        %v1663 = vrot.slane %v1661, 4
        %v1664 = vrot.slane %v1594, 7
        %v1665 = vsel %vm1610, %v1663, %v1664
        %v1666 = vrot.slane %v1664, 4
        %v1667 = vrot.slane %v1595, 7
        %v1668 = vsel %vm1610, %v1666, %v1667
        %v1669 = vrot.slane %v1667, 4
        %v1670 = vrot.slane %v1596, 7
        %v1671 = vsel %vm1610, %v1669, %v1670
        %v1672 = vrot.slane %v1670, 4
        %v1673 = vrot.slane %v1597, 7
        %v1674 = vsel %vm1610, %v1672, %v1673
        %v1675 = vrot.slane %v1673, 4
        %v1676 = vrot.slane %v1598, 7
        %v1677 = vsel %vm1610, %v1675, %v1676
        %v1678 = vrot.slane %v1676, 4
        %v1679 = vrot.slane %v1599, 7
        %v1680 = vsel %vm1610, %v1678, %v1679
        %v1681 = vrot.slane %v1679, 4
        %v1682 = vrot.slane %v1600, 7
        %v1683 = vsel %vm1610, %v1681, %v1682
        %v1684 = vrot.slane %v1682, 4
        %v1685 = vrot.slane %v1601, 7
        %v1686 = vsel %vm1610, %v1684, %v1685
        %v1687 = vrot.slane %v1685, 4
        %v1688 = vrot.slane %v1602, 7
        %v1689 = vsel %vm1610, %v1687, %v1688
        %v1690 = vrot.slane %v1688, 4
        %v1691 = vrot.slane %v1603, 7
        %v1692 = vsel %vm1610, %v1690, %v1691
        %v1693 = vrot.slane %v1691, 4
        %v1694 = vrot.slane %v1604, 7
        %v1695 = vsel %vm1610, %v1693, %v1694
        %v1696 = vrot.slane %v1694, 4
        %v1697 = vrot.slane %v1605, 7
        %v1698 = vsel %vm1610, %v1696, %v1697
        %v1699 = vrot.slane %v1697, 4
        %v1700 = vrot.slane %v1606, 7
        %v1701 = vsel %vm1610, %v1699, %v1700
        %v1702 = vrot.slane %v1700, 4
        %v1703 = vrot.slane %v1607, 7
        %v1704 = vsel %vm1610, %v1702, %v1703
        %v1705 = vrot.slane %v1703, 4
        %v1706 = vunpack.c.l.b16 %v1611
        %v1707 = vunpack.c.h.b16 %v1611
        %v1708 = vunpack.c.l.b16 0
        %v1709 = vunpack.c.h.b16 0
        %vm1710 = vcmp.ne.s32.totalorder %v1706, %v1708
        %vm1711 = vcmp.ne.s32.totalorder %v1707, %v1709
        %vm1712 = vmpackc.low %vm1711, %vm1710
        %v1713 = vunpack.c.l.b16 %v1614
        %v1714 = vunpack.c.h.b16 %v1614
        %v1715 = vunpack.c.l.b16 0
        %v1716 = vunpack.c.h.b16 0
        %vm1717 = vcmp.ne.s32.totalorder %v1713, %v1715
        %vm1718 = vcmp.ne.s32.totalorder %v1714, %v1716
        %vm1719 = vmpackc.low %vm1718, %vm1717
        %v1720 = vunpack.c.l.b16 %v1617
        %v1721 = vunpack.c.h.b16 %v1617
        %v1722 = vunpack.c.l.b16 0
        %v1723 = vunpack.c.h.b16 0
        %vm1724 = vcmp.ne.s32.totalorder %v1720, %v1722
        %vm1725 = vcmp.ne.s32.totalorder %v1721, %v1723
        %vm1726 = vmpackc.low %vm1725, %vm1724
        %v1727 = vunpack.c.l.b16 %v1620
        %v1728 = vunpack.c.h.b16 %v1620
        %v1729 = vunpack.c.l.b16 0
        %v1730 = vunpack.c.h.b16 0
        %vm1731 = vcmp.ne.s32.totalorder %v1727, %v1729
        %vm1732 = vcmp.ne.s32.totalorder %v1728, %v1730
        %vm1733 = vmpackc.low %vm1732, %vm1731
        %v1734 = vunpack.c.l.b16 %v1623
        %v1735 = vunpack.c.h.b16 %v1623
        %v1736 = vunpack.c.l.b16 0
        %v1737 = vunpack.c.h.b16 0
        %vm1738 = vcmp.ne.s32.totalorder %v1734, %v1736
        %vm1739 = vcmp.ne.s32.totalorder %v1735, %v1737
        %vm1740 = vmpackc.low %vm1739, %vm1738
        %v1741 = vunpack.c.l.b16 %v1626
        %v1742 = vunpack.c.h.b16 %v1626
        %v1743 = vunpack.c.l.b16 0
        %v1744 = vunpack.c.h.b16 0
        %vm1745 = vcmp.ne.s32.totalorder %v1741, %v1743
        %vm1746 = vcmp.ne.s32.totalorder %v1742, %v1744
        %vm1747 = vmpackc.low %vm1746, %vm1745
        %v1748 = vunpack.c.l.b16 %v1629
        %v1749 = vunpack.c.h.b16 %v1629
        %v1750 = vunpack.c.l.b16 0
        %v1751 = vunpack.c.h.b16 0
        %vm1752 = vcmp.ne.s32.totalorder %v1748, %v1750
        %vm1753 = vcmp.ne.s32.totalorder %v1749, %v1751
        %vm1754 = vmpackc.low %vm1753, %vm1752
        %v1755 = vunpack.c.l.b16 %v1632
        %v1756 = vunpack.c.h.b16 %v1632
        %v1757 = vunpack.c.l.b16 0
        %v1758 = vunpack.c.h.b16 0
        %vm1759 = vcmp.ne.s32.totalorder %v1755, %v1757
        %vm1760 = vcmp.ne.s32.totalorder %v1756, %v1758
        %vm1761 = vmpackc.low %vm1760, %vm1759
        %v1762 = vunpack.c.l.b16 %v1635
        %v1763 = vunpack.c.h.b16 %v1635
        %v1764 = vunpack.c.l.b16 0
        %v1765 = vunpack.c.h.b16 0
        %vm1766 = vcmp.ne.s32.totalorder %v1762, %v1764
        %vm1767 = vcmp.ne.s32.totalorder %v1763, %v1765
        %vm1768 = vmpackc.low %vm1767, %vm1766
        %v1769 = vunpack.c.l.b16 %v1638
        %v1770 = vunpack.c.h.b16 %v1638
        %v1771 = vunpack.c.l.b16 0
        %v1772 = vunpack.c.h.b16 0
        %vm1773 = vcmp.ne.s32.totalorder %v1769, %v1771
        %vm1774 = vcmp.ne.s32.totalorder %v1770, %v1772
        %vm1775 = vmpackc.low %vm1774, %vm1773
        %v1776 = vunpack.c.l.b16 %v1641
        %v1777 = vunpack.c.h.b16 %v1641
        %v1778 = vunpack.c.l.b16 0
        %v1779 = vunpack.c.h.b16 0
        %vm1780 = vcmp.ne.s32.totalorder %v1776, %v1778
        %vm1781 = vcmp.ne.s32.totalorder %v1777, %v1779
        %vm1782 = vmpackc.low %vm1781, %vm1780
        %v1783 = vunpack.c.l.b16 %v1644
        %v1784 = vunpack.c.h.b16 %v1644
        %v1785 = vunpack.c.l.b16 0
        %v1786 = vunpack.c.h.b16 0
        %vm1787 = vcmp.ne.s32.totalorder %v1783, %v1785
        %vm1788 = vcmp.ne.s32.totalorder %v1784, %v1786
        %vm1789 = vmpackc.low %vm1788, %vm1787
        %v1790 = vunpack.c.l.b16 %v1647
        %v1791 = vunpack.c.h.b16 %v1647
        %v1792 = vunpack.c.l.b16 0
        %v1793 = vunpack.c.h.b16 0
        %vm1794 = vcmp.ne.s32.totalorder %v1790, %v1792
        %vm1795 = vcmp.ne.s32.totalorder %v1791, %v1793
        %vm1796 = vmpackc.low %vm1795, %vm1794
        %v1797 = vunpack.c.l.b16 %v1650
        %v1798 = vunpack.c.h.b16 %v1650
        %v1799 = vunpack.c.l.b16 0
        %v1800 = vunpack.c.h.b16 0
        %vm1801 = vcmp.ne.s32.totalorder %v1797, %v1799
        %vm1802 = vcmp.ne.s32.totalorder %v1798, %v1800
        %vm1803 = vmpackc.low %vm1802, %vm1801
        %v1804 = vunpack.c.l.b16 %v1653
        %v1805 = vunpack.c.h.b16 %v1653
        %v1806 = vunpack.c.l.b16 0
        %v1807 = vunpack.c.h.b16 0
        %vm1808 = vcmp.ne.s32.totalorder %v1804, %v1806
        %vm1809 = vcmp.ne.s32.totalorder %v1805, %v1807
        %vm1810 = vmpackc.low %vm1809, %vm1808
        %v1811 = vunpack.c.l.b16 %v1656
        %v1812 = vunpack.c.h.b16 %v1656
        %v1813 = vunpack.c.l.b16 0
        %v1814 = vunpack.c.h.b16 0
        %vm1815 = vcmp.ne.s32.totalorder %v1811, %v1813
        %vm1816 = vcmp.ne.s32.totalorder %v1812, %v1814
        %vm1817 = vmpackc.low %vm1816, %vm1815
        %v1818 = vunpack.c.l.b16 %v1659
        %v1819 = vunpack.c.h.b16 %v1659
        %v1820 = vunpack.c.l.b16 0
        %v1821 = vunpack.c.h.b16 0
        %vm1822 = vcmp.ne.s32.totalorder %v1818, %v1820
        %vm1823 = vcmp.ne.s32.totalorder %v1819, %v1821
        %vm1824 = vmpackc.low %vm1823, %vm1822
        %v1825 = vunpack.c.l.b16 %v1662
        %v1826 = vunpack.c.h.b16 %v1662
        %v1827 = vunpack.c.l.b16 0
        %v1828 = vunpack.c.h.b16 0
        %vm1829 = vcmp.ne.s32.totalorder %v1825, %v1827
        %vm1830 = vcmp.ne.s32.totalorder %v1826, %v1828
        %vm1831 = vmpackc.low %vm1830, %vm1829
        %v1832 = vunpack.c.l.b16 %v1665
        %v1833 = vunpack.c.h.b16 %v1665
        %v1834 = vunpack.c.l.b16 0
        %v1835 = vunpack.c.h.b16 0
        %vm1836 = vcmp.ne.s32.totalorder %v1832, %v1834
        %vm1837 = vcmp.ne.s32.totalorder %v1833, %v1835
        %vm1838 = vmpackc.low %vm1837, %vm1836
        %v1839 = vunpack.c.l.b16 %v1668
        %v1840 = vunpack.c.h.b16 %v1668
        %v1841 = vunpack.c.l.b16 0
        %v1842 = vunpack.c.h.b16 0
        %vm1843 = vcmp.ne.s32.totalorder %v1839, %v1841
        %vm1844 = vcmp.ne.s32.totalorder %v1840, %v1842
        %vm1845 = vmpackc.low %vm1844, %vm1843
        %v1846 = vunpack.c.l.b16 %v1671
        %v1847 = vunpack.c.h.b16 %v1671
        %v1848 = vunpack.c.l.b16 0
        %v1849 = vunpack.c.h.b16 0
        %vm1850 = vcmp.ne.s32.totalorder %v1846, %v1848
        %vm1851 = vcmp.ne.s32.totalorder %v1847, %v1849
        %vm1852 = vmpackc.low %vm1851, %vm1850
        %v1853 = vunpack.c.l.b16 %v1674
        %v1854 = vunpack.c.h.b16 %v1674
        %v1855 = vunpack.c.l.b16 0
        %v1856 = vunpack.c.h.b16 0
        %vm1857 = vcmp.ne.s32.totalorder %v1853, %v1855
        %vm1858 = vcmp.ne.s32.totalorder %v1854, %v1856
        %vm1859 = vmpackc.low %vm1858, %vm1857
        %v1860 = vunpack.c.l.b16 %v1677
        %v1861 = vunpack.c.h.b16 %v1677
        %v1862 = vunpack.c.l.b16 0
        %v1863 = vunpack.c.h.b16 0
        %vm1864 = vcmp.ne.s32.totalorder %v1860, %v1862
        %vm1865 = vcmp.ne.s32.totalorder %v1861, %v1863
        %vm1866 = vmpackc.low %vm1865, %vm1864
        %v1867 = vunpack.c.l.b16 %v1680
        %v1868 = vunpack.c.h.b16 %v1680
        %v1869 = vunpack.c.l.b16 0
        %v1870 = vunpack.c.h.b16 0
        %vm1871 = vcmp.ne.s32.totalorder %v1867, %v1869
        %vm1872 = vcmp.ne.s32.totalorder %v1868, %v1870
        %vm1873 = vmpackc.low %vm1872, %vm1871
        %v1874 = vunpack.c.l.b16 %v1683
        %v1875 = vunpack.c.h.b16 %v1683
        %v1876 = vunpack.c.l.b16 0
        %v1877 = vunpack.c.h.b16 0
        %vm1878 = vcmp.ne.s32.totalorder %v1874, %v1876
        %vm1879 = vcmp.ne.s32.totalorder %v1875, %v1877
        %vm1880 = vmpackc.low %vm1879, %vm1878
        %v1881 = vunpack.c.l.b16 %v1686
        %v1882 = vunpack.c.h.b16 %v1686
        %v1883 = vunpack.c.l.b16 0
        %v1884 = vunpack.c.h.b16 0
        %vm1885 = vcmp.ne.s32.totalorder %v1881, %v1883
        %vm1886 = vcmp.ne.s32.totalorder %v1882, %v1884
        %vm1887 = vmpackc.low %vm1886, %vm1885
        %v1888 = vunpack.c.l.b16 %v1689
        %v1889 = vunpack.c.h.b16 %v1689
        %v1890 = vunpack.c.l.b16 0
        %v1891 = vunpack.c.h.b16 0
        %vm1892 = vcmp.ne.s32.totalorder %v1888, %v1890
        %vm1893 = vcmp.ne.s32.totalorder %v1889, %v1891
        %vm1894 = vmpackc.low %vm1893, %vm1892
        %v1895 = vunpack.c.l.b16 %v1692
        %v1896 = vunpack.c.h.b16 %v1692
        %v1897 = vunpack.c.l.b16 0
        %v1898 = vunpack.c.h.b16 0
        %vm1899 = vcmp.ne.s32.totalorder %v1895, %v1897
        %vm1900 = vcmp.ne.s32.totalorder %v1896, %v1898
        %vm1901 = vmpackc.low %vm1900, %vm1899
        %v1902 = vunpack.c.l.b16 %v1695
        %v1903 = vunpack.c.h.b16 %v1695
        %v1904 = vunpack.c.l.b16 0
        %v1905 = vunpack.c.h.b16 0
        %vm1906 = vcmp.ne.s32.totalorder %v1902, %v1904
        %vm1907 = vcmp.ne.s32.totalorder %v1903, %v1905
        %vm1908 = vmpackc.low %vm1907, %vm1906
        %v1909 = vunpack.c.l.b16 %v1698
        %v1910 = vunpack.c.h.b16 %v1698
        %v1911 = vunpack.c.l.b16 0
        %v1912 = vunpack.c.h.b16 0
        %vm1913 = vcmp.ne.s32.totalorder %v1909, %v1911
        %vm1914 = vcmp.ne.s32.totalorder %v1910, %v1912
        %vm1915 = vmpackc.low %vm1914, %vm1913
        %v1916 = vunpack.c.l.b16 %v1701
        %v1917 = vunpack.c.h.b16 %v1701
        %v1918 = vunpack.c.l.b16 0
        %v1919 = vunpack.c.h.b16 0
        %vm1920 = vcmp.ne.s32.totalorder %v1916, %v1918
        %vm1921 = vcmp.ne.s32.totalorder %v1917, %v1919
        %vm1922 = vmpackc.low %vm1921, %vm1920
        %v1923 = vunpack.c.l.b16 %v1704
        %v1924 = vunpack.c.h.b16 %v1704
        %v1925 = vunpack.c.l.b16 0
        %v1926 = vunpack.c.h.b16 0
        %vm1927 = vcmp.ne.s32.totalorder %v1923, %v1925
        %vm1928 = vcmp.ne.s32.totalorder %v1924, %v1926
        %vm1929 = vmpackc.low %vm1928, %vm1927
        %v1930 = vunpack.c.l.b16 %v1705
        %v1931 = vunpack.c.h.b16 %v1705
        %v1932 = vunpack.c.l.b16 0
        %v1933 = vunpack.c.h.b16 0
        %vm1934 = vcmp.ne.s32.totalorder %v1930, %v1932
        %vm1935 = vcmp.ne.s32.totalorder %v1931, %v1933
        %vm1936 = vmpackc.low %vm1935, %vm1934
        %v1937 = vsel %vm1712, %v1543, 0
        %v1938 = vsel %vm1719, %v1447, 0
        %v1939 = vsel %vm1726, %v1448, 0
        %v1940 = vsel %vm1733, %v1449, 0
        %v1941 = vsel %vm1740, %v1450, 0
        %v1942 = vsel %vm1747, %v1451, 0
        %v1943 = vsel %vm1754, %v1452, 0
        %v1944 = vsel %vm1761, %v1453, 0
        %v1945 = vsel %vm1768, %v1454, 0
        %v1946 = vsel %vm1775, %v1455, 0
        %v1947 = vsel %vm1782, %v1456, 0
        %v1948 = vsel %vm1789, %v1457, 0
        %v1949 = vsel %vm1796, %v1458, 0
        %v1950 = vsel %vm1803, %v1459, 0
        %v1951 = vsel %vm1810, %v1460, 0
        %v1952 = vsel %vm1817, %v1461, 0
        %v1953 = vsel %vm1824, %v1462, 0
        %v1954 = vsel %vm1831, %v1463, 0
        %v1955 = vsel %vm1838, %v1464, 0
        %v1956 = vsel %vm1845, %v1465, 0
        %v1957 = vsel %vm1852, %v1466, 0
        %v1958 = vsel %vm1859, %v1467, 0
        %v1959 = vsel %vm1866, %v1468, 0
        %v1960 = vsel %vm1873, %v1469, 0
        %v1961 = vsel %vm1880, %v1470, 0
        %v1962 = vsel %vm1887, %v1471, 0
        %v1963 = vsel %vm1894, %v1472, 0
        %v1964 = vsel %vm1901, %v1473, 0
        %v1965 = vsel %vm1908, %v1474, 0
        %v1966 = vsel %vm1915, %v1475, 0
        %v1967 = vsel %vm1922, %v1476, 0
        %v1968 = vsel %vm1929, %v1477, 0
        %v1969 = vsel %vm1936, %v1542, 0
        %v1970 = vld [vmem:[#allocation2 + $0x80] sm:$0xf]
        %v1971 = vld [vmem:[#allocation2 + $0x84] sm:$0xf]
        %v1972 = vsel %vm1478, %v1448, 0
        %v1973 = vsel %vm1479, %v1449, 0
        %v1974 = vsel %vm1480, %v1450, 0
        %v1975 = vsel %vm1481, %v1451, 0
        %v1976 = vsel %vm1482, %v1452, 0
        %v1977 = vsel %vm1483, %v1453, 0
        %v1978 = vsel %vm1484, %v1454, 0
        %v1979 = vsel %vm1485, %v1455, 0
        %v1980 = vsel %vm1486, %v1456, 0
        %v1981 = vsel %vm1487, %v1457, 0
        %v1982 = vsel %vm1488, %v1458, 0
        %v1983 = vsel %vm1489, %v1459, 0
        %v1984 = vsel %vm1490, %v1460, 0
        %v1985 = vsel %vm1491, %v1461, 0
        %v1986 = vsel %vm1492, %v1462, 0
        %v1987 = vsel %vm1493, %v1463, 0
        %v1988 = vsel %vm1494, %v1464, 0
        %v1989 = vsel %vm1495, %v1465, 0
        %v1990 = vsel %vm1496, %v1466, 0
        %v1991 = vsel %vm1497, %v1467, 0
        %v1992 = vsel %vm1498, %v1468, 0
        %v1993 = vsel %vm1499, %v1469, 0
        %v1994 = vsel %vm1500, %v1470, 0
        %v1995 = vsel %vm1501, %v1471, 0
        %v1996 = vsel %vm1502, %v1472, 0
        %v1997 = vsel %vm1503, %v1473, 0
        %v1998 = vsel %vm1504, %v1474, 0
        %v1999 = vsel %vm1505, %v1475, 0
        %v2000 = vsel %vm1506, %v1476, 0
        %v2001 = vsel %vm1507, %v1477, 0
        %v2002 = vsel %vm1508, %v1970, 0
        %v2003 = vsel %vm1509, %v1971, 0
        %v2004 = vld [vmem:[#allocation2 + $0x88] sm:$0x1]
        %v2005 = vld [vmem:[#allocation2 + $0x8] sm:$0xe]
        %v2006 = vsel %vm1712, %v2005, 0
        %v2007 = vsel %vm1719, %v1449, 0
        %v2008 = vsel %vm1726, %v1450, 0
        %v2009 = vsel %vm1733, %v1451, 0
        %v2010 = vsel %vm1740, %v1452, 0
        %v2011 = vsel %vm1747, %v1453, 0
        %v2012 = vsel %vm1754, %v1454, 0
        %v2013 = vsel %vm1761, %v1455, 0
        %v2014 = vsel %vm1768, %v1456, 0
        %v2015 = vsel %vm1775, %v1457, 0
        %v2016 = vsel %vm1782, %v1458, 0
        %v2017 = vsel %vm1789, %v1459, 0
        %v2018 = vsel %vm1796, %v1460, 0
        %v2019 = vsel %vm1803, %v1461, 0
        %v2020 = vsel %vm1810, %v1462, 0
        %v2021 = vsel %vm1817, %v1463, 0
        %v2022 = vsel %vm1824, %v1464, 0
        %v2023 = vsel %vm1831, %v1465, 0
        %v2024 = vsel %vm1838, %v1466, 0
        %v2025 = vsel %vm1845, %v1467, 0
        %v2026 = vsel %vm1852, %v1468, 0
        %v2027 = vsel %vm1859, %v1469, 0
        %v2028 = vsel %vm1866, %v1470, 0
        %v2029 = vsel %vm1873, %v1471, 0
        %v2030 = vsel %vm1880, %v1472, 0
        %v2031 = vsel %vm1887, %v1473, 0
        %v2032 = vsel %vm1894, %v1474, 0
        %v2033 = vsel %vm1901, %v1475, 0
        %v2034 = vsel %vm1908, %v1476, 0
        %v2035 = vsel %vm1915, %v1477, 0
        %v2036 = vsel %vm1922, %v1970, 0
        %v2037 = vsel %vm1929, %v1971, 0
        %v2038 = vsel %vm1936, %v2004, 0
        %v2039 = vld [vmem:[#allocation2 + $0x88] sm:$0xf]
        %v2040 = vld [vmem:[#allocation2 + $0x8c] sm:$0xf]
        %v2041 = vsel %vm1478, %v1450, 0
        %v2042 = vsel %vm1479, %v1451, 0
        %v2043 = vsel %vm1480, %v1452, 0
        %v2044 = vsel %vm1481, %v1453, 0
        %v2045 = vsel %vm1482, %v1454, 0
        %v2046 = vsel %vm1483, %v1455, 0
        %v2047 = vsel %vm1484, %v1456, 0
        %v2048 = vsel %vm1485, %v1457, 0
        %v2049 = vsel %vm1486, %v1458, 0
        %v2050 = vsel %vm1487, %v1459, 0
        %v2051 = vsel %vm1488, %v1460, 0
        %v2052 = vsel %vm1489, %v1461, 0
        %v2053 = vsel %vm1490, %v1462, 0
        %v2054 = vsel %vm1491, %v1463, 0
        %v2055 = vsel %vm1492, %v1464, 0
        %v2056 = vsel %vm1493, %v1465, 0
        %v2057 = vsel %vm1494, %v1466, 0
        %v2058 = vsel %vm1495, %v1467, 0
        %v2059 = vsel %vm1496, %v1468, 0
        %v2060 = vsel %vm1497, %v1469, 0
        %v2061 = vsel %vm1498, %v1470, 0
        %v2062 = vsel %vm1499, %v1471, 0
        %v2063 = vsel %vm1500, %v1472, 0
        %v2064 = vsel %vm1501, %v1473, 0
        %v2065 = vsel %vm1502, %v1474, 0
        %v2066 = vsel %vm1503, %v1475, 0
        %v2067 = vsel %vm1504, %v1476, 0
        %v2068 = vsel %vm1505, %v1477, 0
        %v2069 = vsel %vm1506, %v1970, 0
        %v2070 = vsel %vm1507, %v1971, 0
        %v2071 = vsel %vm1508, %v2039, 0
        %v2072 = vsel %vm1509, %v2040, 0
        %v2073 = vld [vmem:[#allocation2 + $0x90] sm:$0x1]
        %v2074 = vld [vmem:[#allocation2 + $0x10] sm:$0xe]
        %v2075 = vsel %vm1712, %v2074, 0
        %v2076 = vsel %vm1719, %v1451, 0
        %v2077 = vsel %vm1726, %v1452, 0
        %v2078 = vsel %vm1733, %v1453, 0
        %v2079 = vsel %vm1740, %v1454, 0
        %v2080 = vsel %vm1747, %v1455, 0
        %v2081 = vsel %vm1754, %v1456, 0
        %v2082 = vsel %vm1761, %v1457, 0
        %v2083 = vsel %vm1768, %v1458, 0
        %v2084 = vsel %vm1775, %v1459, 0
        %v2085 = vsel %vm1782, %v1460, 0
        %v2086 = vsel %vm1789, %v1461, 0
        %v2087 = vsel %vm1796, %v1462, 0
        %v2088 = vsel %vm1803, %v1463, 0
        %v2089 = vsel %vm1810, %v1464, 0
        %v2090 = vsel %vm1817, %v1465, 0
        %v2091 = vsel %vm1824, %v1466, 0
        %v2092 = vsel %vm1831, %v1467, 0
        %v2093 = vsel %vm1838, %v1468, 0
        %v2094 = vsel %vm1845, %v1469, 0
        %v2095 = vsel %vm1852, %v1470, 0
        %v2096 = vsel %vm1859, %v1471, 0
        %v2097 = vsel %vm1866, %v1472, 0
        %v2098 = vsel %vm1873, %v1473, 0
        %v2099 = vsel %vm1880, %v1474, 0
        %v2100 = vsel %vm1887, %v1475, 0
        %v2101 = vsel %vm1894, %v1476, 0
        %v2102 = vsel %vm1901, %v1477, 0
        %v2103 = vsel %vm1908, %v1970, 0
        %v2104 = vsel %vm1915, %v1971, 0
        %v2105 = vsel %vm1922, %v2039, 0
        %v2106 = vsel %vm1929, %v2040, 0
        %v2107 = vsel %vm1936, %v2073, 0
        %v2140 = vunpack.c.l.b16 %v1510
        %v2141 = vunpack.c.l.b16 %v1511
        %v2142 = vunpack.c.l.b16 %v1512
        %v2143 = vunpack.c.l.b16 %v1513
        %v2144 = vunpack.c.l.b16 %v1514
        %v2145 = vunpack.c.l.b16 %v1515
        %v2146 = vunpack.c.l.b16 %v1516
        %v2147 = vunpack.c.l.b16 %v1517
        %v2148 = vunpack.c.l.b16 %v1518
        %v2149 = vunpack.c.l.b16 %v1519
        %v2150 = vunpack.c.l.b16 %v1520
        %v2151 = vunpack.c.l.b16 %v1521
        %v2152 = vunpack.c.l.b16 %v1522
        %v2153 = vunpack.c.l.b16 %v1523
        %v2154 = vunpack.c.l.b16 %v1524
        %v2155 = vunpack.c.l.b16 %v1525
        %v2156 = vunpack.c.l.b16 %v1526
        %v2157 = vunpack.c.l.b16 %v1527
        %v2158 = vunpack.c.l.b16 %v1528
        %v2159 = vunpack.c.l.b16 %v1529
        %v2160 = vunpack.c.l.b16 %v1530
        %v2161 = vunpack.c.l.b16 %v1531
        %v2162 = vunpack.c.l.b16 %v1532
        %v2163 = vunpack.c.l.b16 %v1533
        %v2164 = vunpack.c.l.b16 %v1534
        %v2165 = vunpack.c.l.b16 %v1535
        %v2166 = vunpack.c.l.b16 %v1536
        %v2167 = vunpack.c.l.b16 %v1537
        %v2168 = vunpack.c.l.b16 %v1538
        %v2169 = vunpack.c.l.b16 %v1539
        %v2170 = vunpack.c.l.b16 %v1540
        %v2171 = vunpack.c.l.b16 %v1541
        %v2172 = vpack.c.b16 %v2141, %v2140
        %v2173 = vpack.c.b16 %v2143, %v2142
        %v2174 = vpack.c.b16 %v2145, %v2144
        %v2175 = vpack.c.b16 %v2147, %v2146
        %v2176 = vpack.c.b16 %v2149, %v2148
        %v2177 = vpack.c.b16 %v2151, %v2150
        %v2178 = vpack.c.b16 %v2153, %v2152
        %v2179 = vpack.c.b16 %v2155, %v2154
        %v2180 = vpack.c.b16 %v2157, %v2156
        %v2181 = vpack.c.b16 %v2159, %v2158
        %v2182 = vpack.c.b16 %v2161, %v2160
        %v2183 = vpack.c.b16 %v2163, %v2162
        %v2184 = vpack.c.b16 %v2165, %v2164
        %v2185 = vpack.c.b16 %v2167, %v2166
        %v2186 = vpack.c.b16 %v2169, %v2168
        %v2187 = vpack.c.b16 %v2171, %v2170
        %v2221 = vunpack.c.l.b16 %v1446
        %v2222 = vunpack.c.l.b16 %v1447
        %v2223 = vunpack.c.l.b16 %v1448
        %v2224 = vunpack.c.l.b16 %v1449
        %v2225 = vunpack.c.l.b16 %v1450
        %v2226 = vunpack.c.l.b16 %v1451
        %v2227 = vunpack.c.l.b16 %v1452
        %v2228 = vunpack.c.l.b16 %v1453
        %v2229 = vunpack.c.l.b16 %v1454
        %v2230 = vunpack.c.l.b16 %v1455
        %v2231 = vunpack.c.l.b16 %v1456
        %v2232 = vunpack.c.l.b16 %v1457
        %v2233 = vunpack.c.l.b16 %v1458
        %v2234 = vunpack.c.l.b16 %v1459
        %v2235 = vunpack.c.l.b16 %v1460
        %v2236 = vunpack.c.l.b16 %v1461
        %v2237 = vunpack.c.l.b16 %v1462
        %v2238 = vunpack.c.l.b16 %v1463
        %v2239 = vunpack.c.l.b16 %v1464
        %v2240 = vunpack.c.l.b16 %v1465
        %v2241 = vunpack.c.l.b16 %v1466
        %v2242 = vunpack.c.l.b16 %v1467
        %v2243 = vunpack.c.l.b16 %v1468
        %v2244 = vunpack.c.l.b16 %v1469
        %v2245 = vunpack.c.l.b16 %v1470
        %v2246 = vunpack.c.l.b16 %v1471
        %v2247 = vunpack.c.l.b16 %v1472
        %v2248 = vunpack.c.l.b16 %v1473
        %v2249 = vunpack.c.l.b16 %v1474
        %v2250 = vunpack.c.l.b16 %v1475
        %v2251 = vunpack.c.l.b16 %v1476
        %v2252 = vunpack.c.l.b16 %v1477
        %v2253 = vunpack.c.l.b16 %v1542
        %v2254 = vpack.c.b16 %v2222, %v2221
        %v2255 = vpack.c.b16 %v2224, %v2223
        %v2256 = vpack.c.b16 %v2226, %v2225
        %v2257 = vpack.c.b16 %v2228, %v2227
        %v2258 = vpack.c.b16 %v2230, %v2229
        %v2259 = vpack.c.b16 %v2232, %v2231
        %v2260 = vpack.c.b16 %v2234, %v2233
        %v2261 = vpack.c.b16 %v2236, %v2235
        %v2262 = vpack.c.b16 %v2238, %v2237
        %v2263 = vpack.c.b16 %v2240, %v2239
        %v2264 = vpack.c.b16 %v2242, %v2241
        %v2265 = vpack.c.b16 %v2244, %v2243
        %v2266 = vpack.c.b16 %v2246, %v2245
        %v2267 = vpack.c.b16 %v2248, %v2247
        %v2268 = vpack.c.b16 %v2250, %v2249
        %v2269 = vpack.c.b16 %v2252, %v2251
        %v2270 = vpack.c.b16 %v2253, %v2253
        %vm2271 = vsmask.f32 7424
        %v2273 = vshrl.u32 %v2254, 16
        %v2275 = vshll.u32 %v2254, 16
        %v2277 = vrot.slane %v2275, 1
        %v2278 = vor.u32 %v2273, %v2277
        %v2280 = vshll.u32 %v2255, 16
        %v2282 = vrot.slane %v2280, 1
        %v2283 = vsel %vm2271, %v2278, %v2282
        %v2284 = vshrl.u32 %v2255, 16
        %v2286 = vor.u32 %v2284, %v2282
        %v2288 = vshll.u32 %v2256, 16
        %v2290 = vrot.slane %v2288, 1
        %v2291 = vsel %vm2271, %v2286, %v2290
        %v2292 = vshrl.u32 %v2256, 16
        %v2294 = vor.u32 %v2292, %v2290
        %v2296 = vshll.u32 %v2257, 16
        %v2298 = vrot.slane %v2296, 1
        %v2299 = vsel %vm2271, %v2294, %v2298
        %v2300 = vshrl.u32 %v2257, 16
        %v2302 = vor.u32 %v2300, %v2298
        %v2304 = vshll.u32 %v2258, 16
        %v2306 = vrot.slane %v2304, 1
        %v2307 = vsel %vm2271, %v2302, %v2306
        %v2308 = vshrl.u32 %v2258, 16
        %v2310 = vor.u32 %v2308, %v2306
        %v2312 = vshll.u32 %v2259, 16
        %v2314 = vrot.slane %v2312, 1
        %v2315 = vsel %vm2271, %v2310, %v2314
        %v2316 = vshrl.u32 %v2259, 16
        %v2318 = vor.u32 %v2316, %v2314
        %v2320 = vshll.u32 %v2260, 16
        %v2322 = vrot.slane %v2320, 1
        %v2323 = vsel %vm2271, %v2318, %v2322
        %v2324 = vshrl.u32 %v2260, 16
        %v2326 = vor.u32 %v2324, %v2322
        %v2328 = vshll.u32 %v2261, 16
        %v2330 = vrot.slane %v2328, 1
        %v2331 = vsel %vm2271, %v2326, %v2330
        %v2332 = vshrl.u32 %v2261, 16
        %v2334 = vor.u32 %v2332, %v2330
        %v2336 = vshll.u32 %v2262, 16
        %v2338 = vrot.slane %v2336, 1
        %v2339 = vsel %vm2271, %v2334, %v2338
        %v2340 = vshrl.u32 %v2262, 16
        %v2342 = vor.u32 %v2340, %v2338
        %v2344 = vshll.u32 %v2263, 16
        %v2346 = vrot.slane %v2344, 1
        %v2347 = vsel %vm2271, %v2342, %v2346
        %v2348 = vshrl.u32 %v2263, 16
        %v2350 = vor.u32 %v2348, %v2346
        %v2352 = vshll.u32 %v2264, 16
        %v2354 = vrot.slane %v2352, 1
        %v2355 = vsel %vm2271, %v2350, %v2354
        %v2356 = vshrl.u32 %v2264, 16
        %v2358 = vor.u32 %v2356, %v2354
        %v2360 = vshll.u32 %v2265, 16
        %v2362 = vrot.slane %v2360, 1
        %v2363 = vsel %vm2271, %v2358, %v2362
        %v2364 = vshrl.u32 %v2265, 16
        %v2366 = vor.u32 %v2364, %v2362
        %v2368 = vshll.u32 %v2266, 16
        %v2370 = vrot.slane %v2368, 1
        %v2371 = vsel %vm2271, %v2366, %v2370
        %v2372 = vshrl.u32 %v2266, 16
        %v2374 = vor.u32 %v2372, %v2370
        %v2376 = vshll.u32 %v2267, 16
        %v2378 = vrot.slane %v2376, 1
        %v2379 = vsel %vm2271, %v2374, %v2378
        %v2380 = vshrl.u32 %v2267, 16
        %v2382 = vor.u32 %v2380, %v2378
        %v2384 = vshll.u32 %v2268, 16
        %v2386 = vrot.slane %v2384, 1
        %v2387 = vsel %vm2271, %v2382, %v2386
        %v2388 = vshrl.u32 %v2268, 16
        %v2390 = vor.u32 %v2388, %v2386
        %v2392 = vshll.u32 %v2269, 16
        %v2394 = vrot.slane %v2392, 1
        %v2395 = vsel %vm2271, %v2390, %v2394
        %v2396 = vshrl.u32 %v2269, 16
        %v2398 = vor.u32 %v2396, %v2394
        %v2400 = vshll.u32 %v2270, 16
        %v2402 = vrot.slane %v2400, 1
        %v2403 = vsel %vm2271, %v2398, %v2402
        %2404 = vrot.lane.b32.xlu0 %v2283, 3
        %v2405 = vpop.permute.xlu0 %2404
        %2406 = vrot.lane.b32.xlu0 %v2291, 3
        %v2407 = vpop.permute.xlu0 %2406
        %2408 = vrot.lane.b32.xlu0 %v2299, 3
        %v2409 = vpop.permute.xlu0 %2408
        %2410 = vrot.lane.b32.xlu0 %v2307, 3
        %v2411 = vpop.permute.xlu0 %2410
        %2412 = vrot.lane.b32.xlu0 %v2315, 3
        %v2413 = vpop.permute.xlu0 %2412
        %2414 = vrot.lane.b32.xlu0 %v2323, 3
        %v2415 = vpop.permute.xlu0 %2414
        %2416 = vrot.lane.b32.xlu0 %v2331, 3
        %v2417 = vpop.permute.xlu0 %2416
        %2418 = vrot.lane.b32.xlu0 %v2339, 3
        %v2419 = vpop.permute.xlu0 %2418
        %2420 = vrot.lane.b32.xlu0 %v2347, 3
        %v2421 = vpop.permute.xlu0 %2420
        %2422 = vrot.lane.b32.xlu0 %v2355, 3
        %v2423 = vpop.permute.xlu0 %2422
        %2424 = vrot.lane.b32.xlu0 %v2363, 3
        %v2425 = vpop.permute.xlu0 %2424
        %2426 = vrot.lane.b32.xlu0 %v2371, 3
        %v2427 = vpop.permute.xlu0 %2426
        %2428 = vrot.lane.b32.xlu0 %v2379, 3
        %v2429 = vpop.permute.xlu0 %2428
        %2430 = vrot.lane.b32.xlu0 %v2387, 3
        %v2431 = vpop.permute.xlu0 %2430
        %2432 = vrot.lane.b32.xlu0 %v2395, 3
        %v2433 = vpop.permute.xlu0 %2432
        %2434 = vrot.lane.b32.xlu0 %v2403, 3
        %v2435 = vpop.permute.xlu0 %2434
        %v2469 = vunpack.c.l.b16 %v1937
        %v2470 = vunpack.c.l.b16 %v1938
        %v2471 = vunpack.c.l.b16 %v1939
        %v2472 = vunpack.c.l.b16 %v1940
        %v2473 = vunpack.c.l.b16 %v1941
        %v2474 = vunpack.c.l.b16 %v1942
        %v2475 = vunpack.c.l.b16 %v1943
        %v2476 = vunpack.c.l.b16 %v1944
        %v2477 = vunpack.c.l.b16 %v1945
        %v2478 = vunpack.c.l.b16 %v1946
        %v2479 = vunpack.c.l.b16 %v1947
        %v2480 = vunpack.c.l.b16 %v1948
        %v2481 = vunpack.c.l.b16 %v1949
        %v2482 = vunpack.c.l.b16 %v1950
        %v2483 = vunpack.c.l.b16 %v1951
        %v2484 = vunpack.c.l.b16 %v1952
        %v2485 = vunpack.c.l.b16 %v1953
        %v2486 = vunpack.c.l.b16 %v1954
        %v2487 = vunpack.c.l.b16 %v1955
        %v2488 = vunpack.c.l.b16 %v1956
        %v2489 = vunpack.c.l.b16 %v1957
        %v2490 = vunpack.c.l.b16 %v1958
        %v2491 = vunpack.c.l.b16 %v1959
        %v2492 = vunpack.c.l.b16 %v1960
        %v2493 = vunpack.c.l.b16 %v1961
        %v2494 = vunpack.c.l.b16 %v1962
        %v2495 = vunpack.c.l.b16 %v1963
        %v2496 = vunpack.c.l.b16 %v1964
        %v2497 = vunpack.c.l.b16 %v1965
        %v2498 = vunpack.c.l.b16 %v1966
        %v2499 = vunpack.c.l.b16 %v1967
        %v2500 = vunpack.c.l.b16 %v1968
        %v2501 = vunpack.c.l.b16 %v1969
        %v2502 = vpack.c.b16 %v2470, %v2469
        %v2503 = vpack.c.b16 %v2472, %v2471
        %v2504 = vpack.c.b16 %v2474, %v2473
        %v2505 = vpack.c.b16 %v2476, %v2475
        %v2506 = vpack.c.b16 %v2478, %v2477
        %v2507 = vpack.c.b16 %v2480, %v2479
        %v2508 = vpack.c.b16 %v2482, %v2481
        %v2509 = vpack.c.b16 %v2484, %v2483
        %v2510 = vpack.c.b16 %v2486, %v2485
        %v2511 = vpack.c.b16 %v2488, %v2487
        %v2512 = vpack.c.b16 %v2490, %v2489
        %v2513 = vpack.c.b16 %v2492, %v2491
        %v2514 = vpack.c.b16 %v2494, %v2493
        %v2515 = vpack.c.b16 %v2496, %v2495
        %v2516 = vpack.c.b16 %v2498, %v2497
        %v2517 = vpack.c.b16 %v2500, %v2499
        %v2518 = vpack.c.b16 %v2501, %v2501
        %vm2519 = vcmask 1046528
        %v2520 = vrot.slane %v2502, 1
        %v2521 = vrot.slane %v2503, 1
        %v2522 = vsel %vm2519, %v2520, %v2521
        %v2523 = vrot.slane %v2504, 1
        %v2524 = vsel %vm2519, %v2521, %v2523
        %v2525 = vrot.slane %v2505, 1
        %v2526 = vsel %vm2519, %v2523, %v2525
        %v2527 = vrot.slane %v2506, 1
        %v2528 = vsel %vm2519, %v2525, %v2527
        %v2529 = vrot.slane %v2507, 1
        %v2530 = vsel %vm2519, %v2527, %v2529
        %v2531 = vrot.slane %v2508, 1
        %v2532 = vsel %vm2519, %v2529, %v2531
        %v2533 = vrot.slane %v2509, 1
        %v2534 = vsel %vm2519, %v2531, %v2533
        %v2535 = vrot.slane %v2510, 1
        %v2536 = vsel %vm2519, %v2533, %v2535
        %v2537 = vrot.slane %v2511, 1
        %v2538 = vsel %vm2519, %v2535, %v2537
        %v2539 = vrot.slane %v2512, 1
        %v2540 = vsel %vm2519, %v2537, %v2539
        %v2541 = vrot.slane %v2513, 1
        %v2542 = vsel %vm2519, %v2539, %v2541
        %v2543 = vrot.slane %v2514, 1
        %v2544 = vsel %vm2519, %v2541, %v2543
        %v2545 = vrot.slane %v2515, 1
        %v2546 = vsel %vm2519, %v2543, %v2545
        %v2547 = vrot.slane %v2516, 1
        %v2548 = vsel %vm2519, %v2545, %v2547
        %v2549 = vrot.slane %v2517, 1
        %v2550 = vsel %vm2519, %v2547, %v2549
        %v2551 = vrot.slane %v2518, 1
        %v2552 = vsel %vm2519, %v2549, %v2551
        %2553 = vrot.lane.b32.xlu0 %v2522, 6
        %v2554 = vpop.permute.xlu0 %2553
        %2555 = vrot.lane.b32.xlu0 %v2524, 6
        %v2556 = vpop.permute.xlu0 %2555
        %2557 = vrot.lane.b32.xlu0 %v2526, 6
        %v2558 = vpop.permute.xlu0 %2557
        %2559 = vrot.lane.b32.xlu0 %v2528, 6
        %v2560 = vpop.permute.xlu0 %2559
        %2561 = vrot.lane.b32.xlu0 %v2530, 6
        %v2562 = vpop.permute.xlu0 %2561
        %2563 = vrot.lane.b32.xlu0 %v2532, 6
        %v2564 = vpop.permute.xlu0 %2563
        %2565 = vrot.lane.b32.xlu0 %v2534, 6
        %v2566 = vpop.permute.xlu0 %2565
        %2567 = vrot.lane.b32.xlu0 %v2536, 6
        %v2568 = vpop.permute.xlu0 %2567
        %2569 = vrot.lane.b32.xlu0 %v2538, 6
        %v2570 = vpop.permute.xlu0 %2569
        %2571 = vrot.lane.b32.xlu0 %v2540, 6
        %v2572 = vpop.permute.xlu0 %2571
        %2573 = vrot.lane.b32.xlu0 %v2542, 6
        %v2574 = vpop.permute.xlu0 %2573
        %2575 = vrot.lane.b32.xlu0 %v2544, 6
        %v2576 = vpop.permute.xlu0 %2575
        %2577 = vrot.lane.b32.xlu0 %v2546, 6
        %v2578 = vpop.permute.xlu0 %2577
        %2579 = vrot.lane.b32.xlu0 %v2548, 6
        %v2580 = vpop.permute.xlu0 %2579
        %2581 = vrot.lane.b32.xlu0 %v2550, 6
        %v2582 = vpop.permute.xlu0 %2581
        %2583 = vrot.lane.b32.xlu0 %v2552, 6
        %v2584 = vpop.permute.xlu0 %2583
        %v2617 = vunpack.c.l.b16 %v1972
        %v2618 = vunpack.c.l.b16 %v1973
        %v2619 = vunpack.c.l.b16 %v1974
        %v2620 = vunpack.c.l.b16 %v1975
        %v2621 = vunpack.c.l.b16 %v1976
        %v2622 = vunpack.c.l.b16 %v1977
        %v2623 = vunpack.c.l.b16 %v1978
        %v2624 = vunpack.c.l.b16 %v1979
        %v2625 = vunpack.c.l.b16 %v1980
        %v2626 = vunpack.c.l.b16 %v1981
        %v2627 = vunpack.c.l.b16 %v1982
        %v2628 = vunpack.c.l.b16 %v1983
        %v2629 = vunpack.c.l.b16 %v1984
        %v2630 = vunpack.c.l.b16 %v1985
        %v2631 = vunpack.c.l.b16 %v1986
        %v2632 = vunpack.c.l.b16 %v1987
        %v2633 = vunpack.c.l.b16 %v1988
        %v2634 = vunpack.c.l.b16 %v1989
        %v2635 = vunpack.c.l.b16 %v1990
        %v2636 = vunpack.c.l.b16 %v1991
        %v2637 = vunpack.c.l.b16 %v1992
        %v2638 = vunpack.c.l.b16 %v1993
        %v2639 = vunpack.c.l.b16 %v1994
        %v2640 = vunpack.c.l.b16 %v1995
        %v2641 = vunpack.c.l.b16 %v1996
        %v2642 = vunpack.c.l.b16 %v1997
        %v2643 = vunpack.c.l.b16 %v1998
        %v2644 = vunpack.c.l.b16 %v1999
        %v2645 = vunpack.c.l.b16 %v2000
        %v2646 = vunpack.c.l.b16 %v2001
        %v2647 = vunpack.c.l.b16 %v2002
        %v2648 = vunpack.c.l.b16 %v2003
        %v2649 = vpack.c.b16 %v2618, %v2617
        %v2650 = vpack.c.b16 %v2620, %v2619
        %v2651 = vpack.c.b16 %v2622, %v2621
        %v2652 = vpack.c.b16 %v2624, %v2623
        %v2653 = vpack.c.b16 %v2626, %v2625
        %v2654 = vpack.c.b16 %v2628, %v2627
        %v2655 = vpack.c.b16 %v2630, %v2629
        %v2656 = vpack.c.b16 %v2632, %v2631
        %v2657 = vpack.c.b16 %v2634, %v2633
        %v2658 = vpack.c.b16 %v2636, %v2635
        %v2659 = vpack.c.b16 %v2638, %v2637
        %v2660 = vpack.c.b16 %v2640, %v2639
        %v2661 = vpack.c.b16 %v2642, %v2641
        %v2662 = vpack.c.b16 %v2644, %v2643
        %v2663 = vpack.c.b16 %v2646, %v2645
        %v2664 = vpack.c.b16 %v2648, %v2647
        %2665 = vrot.lane.b32.xlu0 %v2649, 9
        %v2666 = vpop.permute.xlu0 %2665
        %2667 = vrot.lane.b32.xlu0 %v2650, 9
        %v2668 = vpop.permute.xlu0 %2667
        %2669 = vrot.lane.b32.xlu0 %v2651, 9
        %v2670 = vpop.permute.xlu0 %2669
        %2671 = vrot.lane.b32.xlu0 %v2652, 9
        %v2672 = vpop.permute.xlu0 %2671
        %2673 = vrot.lane.b32.xlu0 %v2653, 9
        %v2674 = vpop.permute.xlu0 %2673
        %2675 = vrot.lane.b32.xlu0 %v2654, 9
        %v2676 = vpop.permute.xlu0 %2675
        %2677 = vrot.lane.b32.xlu0 %v2655, 9
        %v2678 = vpop.permute.xlu0 %2677
        %2679 = vrot.lane.b32.xlu0 %v2656, 9
        %v2680 = vpop.permute.xlu0 %2679
        %2681 = vrot.lane.b32.xlu0 %v2657, 9
        %v2682 = vpop.permute.xlu0 %2681
        %2683 = vrot.lane.b32.xlu0 %v2658, 9
        %v2684 = vpop.permute.xlu0 %2683
        %2685 = vrot.lane.b32.xlu0 %v2659, 9
        %v2686 = vpop.permute.xlu0 %2685
        %2687 = vrot.lane.b32.xlu0 %v2660, 9
        %v2688 = vpop.permute.xlu0 %2687
        %2689 = vrot.lane.b32.xlu0 %v2661, 9
        %v2690 = vpop.permute.xlu0 %2689
        %2691 = vrot.lane.b32.xlu0 %v2662, 9
        %v2692 = vpop.permute.xlu0 %2691
        %2693 = vrot.lane.b32.xlu0 %v2663, 9
        %v2694 = vpop.permute.xlu0 %2693
        %2695 = vrot.lane.b32.xlu0 %v2664, 9
        %v2696 = vpop.permute.xlu0 %2695
        %v2700 = vunpack.c.l.b16 %v1970
        %v2701 = vunpack.c.l.b16 %v1971
        %v2702 = vunpack.c.l.b16 %v2004
        %v2703 = vpack.c.b16 %v2701, %v2700
        %v2704 = vpack.c.b16 %v2702, %v2702
        %v2706 = vshll.u32 %v2703, 16
        %v2708 = vrot.slane %v2706, 1
        %v2709 = vsel %vm2271, %v2398, %v2708
        %v2710 = vshrl.u32 %v2703, 16
        %v2712 = vor.u32 %v2710, %v2708
        %v2714 = vshll.u32 %v2704, 16
        %v2716 = vrot.slane %v2714, 1
        %v2717 = vsel %vm2271, %v2712, %v2716
        %2718 = vrot.lane.b32.xlu0 %v2291, 12
        %v2719 = vpop.permute.xlu0 %2718
        %2720 = vrot.lane.b32.xlu0 %v2299, 12
        %v2721 = vpop.permute.xlu0 %2720
        %2722 = vrot.lane.b32.xlu0 %v2307, 12
        %v2723 = vpop.permute.xlu0 %2722
        %2724 = vrot.lane.b32.xlu0 %v2315, 12
        %v2725 = vpop.permute.xlu0 %2724
        %2726 = vrot.lane.b32.xlu0 %v2323, 12
        %v2727 = vpop.permute.xlu0 %2726
        %2728 = vrot.lane.b32.xlu0 %v2331, 12
        %v2729 = vpop.permute.xlu0 %2728
        %2730 = vrot.lane.b32.xlu0 %v2339, 12
        %v2731 = vpop.permute.xlu0 %2730
        %2732 = vrot.lane.b32.xlu0 %v2347, 12
        %v2733 = vpop.permute.xlu0 %2732
        %2734 = vrot.lane.b32.xlu0 %v2355, 12
        %v2735 = vpop.permute.xlu0 %2734
        %2736 = vrot.lane.b32.xlu0 %v2363, 12
        %v2737 = vpop.permute.xlu0 %2736
        %2738 = vrot.lane.b32.xlu0 %v2371, 12
        %v2739 = vpop.permute.xlu0 %2738
        %2740 = vrot.lane.b32.xlu0 %v2379, 12
        %v2741 = vpop.permute.xlu0 %2740
        %2742 = vrot.lane.b32.xlu0 %v2387, 12
        %v2743 = vpop.permute.xlu0 %2742
        %2744 = vrot.lane.b32.xlu0 %v2395, 12
        %v2745 = vpop.permute.xlu0 %2744
        %2746 = vrot.lane.b32.xlu0 %v2709, 12
        %v2747 = vpop.permute.xlu0 %2746
        %2748 = vrot.lane.b32.xlu0 %v2717, 12
        %v2749 = vpop.permute.xlu0 %2748
        %v2783 = vunpack.c.l.b16 %v2006
        %v2784 = vunpack.c.l.b16 %v2007
        %v2785 = vunpack.c.l.b16 %v2008
        %v2786 = vunpack.c.l.b16 %v2009
        %v2787 = vunpack.c.l.b16 %v2010
        %v2788 = vunpack.c.l.b16 %v2011
        %v2789 = vunpack.c.l.b16 %v2012
        %v2790 = vunpack.c.l.b16 %v2013
        %v2791 = vunpack.c.l.b16 %v2014
        %v2792 = vunpack.c.l.b16 %v2015
        %v2793 = vunpack.c.l.b16 %v2016
        %v2794 = vunpack.c.l.b16 %v2017
        %v2795 = vunpack.c.l.b16 %v2018
        %v2796 = vunpack.c.l.b16 %v2019
        %v2797 = vunpack.c.l.b16 %v2020
        %v2798 = vunpack.c.l.b16 %v2021
        %v2799 = vunpack.c.l.b16 %v2022
        %v2800 = vunpack.c.l.b16 %v2023
        %v2801 = vunpack.c.l.b16 %v2024
        %v2802 = vunpack.c.l.b16 %v2025
        %v2803 = vunpack.c.l.b16 %v2026
        %v2804 = vunpack.c.l.b16 %v2027
        %v2805 = vunpack.c.l.b16 %v2028
        %v2806 = vunpack.c.l.b16 %v2029
        %v2807 = vunpack.c.l.b16 %v2030
        %v2808 = vunpack.c.l.b16 %v2031
        %v2809 = vunpack.c.l.b16 %v2032
        %v2810 = vunpack.c.l.b16 %v2033
        %v2811 = vunpack.c.l.b16 %v2034
        %v2812 = vunpack.c.l.b16 %v2035
        %v2813 = vunpack.c.l.b16 %v2036
        %v2814 = vunpack.c.l.b16 %v2037
        %v2815 = vunpack.c.l.b16 %v2038
        %v2816 = vpack.c.b16 %v2784, %v2783
        %v2817 = vpack.c.b16 %v2786, %v2785
        %v2818 = vpack.c.b16 %v2788, %v2787
        %v2819 = vpack.c.b16 %v2790, %v2789
        %v2820 = vpack.c.b16 %v2792, %v2791
        %v2821 = vpack.c.b16 %v2794, %v2793
        %v2822 = vpack.c.b16 %v2796, %v2795
        %v2823 = vpack.c.b16 %v2798, %v2797
        %v2824 = vpack.c.b16 %v2800, %v2799
        %v2825 = vpack.c.b16 %v2802, %v2801
        %v2826 = vpack.c.b16 %v2804, %v2803
        %v2827 = vpack.c.b16 %v2806, %v2805
        %v2828 = vpack.c.b16 %v2808, %v2807
        %v2829 = vpack.c.b16 %v2810, %v2809
        %v2830 = vpack.c.b16 %v2812, %v2811
        %v2831 = vpack.c.b16 %v2814, %v2813
        %v2832 = vpack.c.b16 %v2815, %v2815
        %v2833 = vrot.slane %v2816, 1
        %v2834 = vrot.slane %v2817, 1
        %v2835 = vsel %vm2519, %v2833, %v2834
        %v2836 = vrot.slane %v2818, 1
        %v2837 = vsel %vm2519, %v2834, %v2836
        %v2838 = vrot.slane %v2819, 1
        %v2839 = vsel %vm2519, %v2836, %v2838
        %v2840 = vrot.slane %v2820, 1
        %v2841 = vsel %vm2519, %v2838, %v2840
        %v2842 = vrot.slane %v2821, 1
        %v2843 = vsel %vm2519, %v2840, %v2842
        %v2844 = vrot.slane %v2822, 1
        %v2845 = vsel %vm2519, %v2842, %v2844
        %v2846 = vrot.slane %v2823, 1
        %v2847 = vsel %vm2519, %v2844, %v2846
        %v2848 = vrot.slane %v2824, 1
        %v2849 = vsel %vm2519, %v2846, %v2848
        %v2850 = vrot.slane %v2825, 1
        %v2851 = vsel %vm2519, %v2848, %v2850
        %v2852 = vrot.slane %v2826, 1
        %v2853 = vsel %vm2519, %v2850, %v2852
        %v2854 = vrot.slane %v2827, 1
        %v2855 = vsel %vm2519, %v2852, %v2854
        %v2856 = vrot.slane %v2828, 1
        %v2857 = vsel %vm2519, %v2854, %v2856
        %v2858 = vrot.slane %v2829, 1
        %v2859 = vsel %vm2519, %v2856, %v2858
        %v2860 = vrot.slane %v2830, 1
        %v2861 = vsel %vm2519, %v2858, %v2860
        %v2862 = vrot.slane %v2831, 1
        %v2863 = vsel %vm2519, %v2860, %v2862
        %v2864 = vrot.slane %v2832, 1
        %v2865 = vsel %vm2519, %v2862, %v2864
        %2866 = vrot.lane.b32.xlu0 %v2835, 15
        %v2867 = vpop.permute.xlu0 %2866
        %2868 = vrot.lane.b32.xlu0 %v2837, 15
        %v2869 = vpop.permute.xlu0 %2868
        %2870 = vrot.lane.b32.xlu0 %v2839, 15
        %v2871 = vpop.permute.xlu0 %2870
        %2872 = vrot.lane.b32.xlu0 %v2841, 15
        %v2873 = vpop.permute.xlu0 %2872
        %2874 = vrot.lane.b32.xlu0 %v2843, 15
        %v2875 = vpop.permute.xlu0 %2874
        %2876 = vrot.lane.b32.xlu0 %v2845, 15
        %v2877 = vpop.permute.xlu0 %2876
        %2878 = vrot.lane.b32.xlu0 %v2847, 15
        %v2879 = vpop.permute.xlu0 %2878
        %2880 = vrot.lane.b32.xlu0 %v2849, 15
        %v2881 = vpop.permute.xlu0 %2880
        %2882 = vrot.lane.b32.xlu0 %v2851, 15
        %v2883 = vpop.permute.xlu0 %2882
        %2884 = vrot.lane.b32.xlu0 %v2853, 15
        %v2885 = vpop.permute.xlu0 %2884
        %2886 = vrot.lane.b32.xlu0 %v2855, 15
        %v2887 = vpop.permute.xlu0 %2886
        %2888 = vrot.lane.b32.xlu0 %v2857, 15
        %v2889 = vpop.permute.xlu0 %2888
        %2890 = vrot.lane.b32.xlu0 %v2859, 15
        %v2891 = vpop.permute.xlu0 %2890
        %2892 = vrot.lane.b32.xlu0 %v2861, 15
        %v2893 = vpop.permute.xlu0 %2892
        %2894 = vrot.lane.b32.xlu0 %v2863, 15
        %v2895 = vpop.permute.xlu0 %2894
        %2896 = vrot.lane.b32.xlu0 %v2865, 15
        %v2897 = vpop.permute.xlu0 %2896
        %v2930 = vunpack.c.l.b16 %v2041
        %v2931 = vunpack.c.l.b16 %v2042
        %v2932 = vunpack.c.l.b16 %v2043
        %v2933 = vunpack.c.l.b16 %v2044
        %v2934 = vunpack.c.l.b16 %v2045
        %v2935 = vunpack.c.l.b16 %v2046
        %v2936 = vunpack.c.l.b16 %v2047
        %v2937 = vunpack.c.l.b16 %v2048
        %v2938 = vunpack.c.l.b16 %v2049
        %v2939 = vunpack.c.l.b16 %v2050
        %v2940 = vunpack.c.l.b16 %v2051
        %v2941 = vunpack.c.l.b16 %v2052
        %v2942 = vunpack.c.l.b16 %v2053
        %v2943 = vunpack.c.l.b16 %v2054
        %v2944 = vunpack.c.l.b16 %v2055
        %v2945 = vunpack.c.l.b16 %v2056
        %v2946 = vunpack.c.l.b16 %v2057
        %v2947 = vunpack.c.l.b16 %v2058
        %v2948 = vunpack.c.l.b16 %v2059
        %v2949 = vunpack.c.l.b16 %v2060
        %v2950 = vunpack.c.l.b16 %v2061
        %v2951 = vunpack.c.l.b16 %v2062
        %v2952 = vunpack.c.l.b16 %v2063
        %v2953 = vunpack.c.l.b16 %v2064
        %v2954 = vunpack.c.l.b16 %v2065
        %v2955 = vunpack.c.l.b16 %v2066
        %v2956 = vunpack.c.l.b16 %v2067
        %v2957 = vunpack.c.l.b16 %v2068
        %v2958 = vunpack.c.l.b16 %v2069
        %v2959 = vunpack.c.l.b16 %v2070
        %v2960 = vunpack.c.l.b16 %v2071
        %v2961 = vunpack.c.l.b16 %v2072
        %v2962 = vpack.c.b16 %v2931, %v2930
        %v2963 = vpack.c.b16 %v2933, %v2932
        %v2964 = vpack.c.b16 %v2935, %v2934
        %v2965 = vpack.c.b16 %v2937, %v2936
        %v2966 = vpack.c.b16 %v2939, %v2938
        %v2967 = vpack.c.b16 %v2941, %v2940
        %v2968 = vpack.c.b16 %v2943, %v2942
        %v2969 = vpack.c.b16 %v2945, %v2944
        %v2970 = vpack.c.b16 %v2947, %v2946
        %v2971 = vpack.c.b16 %v2949, %v2948
        %v2972 = vpack.c.b16 %v2951, %v2950
        %v2973 = vpack.c.b16 %v2953, %v2952
        %v2974 = vpack.c.b16 %v2955, %v2954
        %v2975 = vpack.c.b16 %v2957, %v2956
        %v2976 = vpack.c.b16 %v2959, %v2958
        %v2977 = vpack.c.b16 %v2961, %v2960
        %2978 = vrot.lane.b32.xlu0 %v2962, 18
        %v2979 = vpop.permute.xlu0 %2978
        %2980 = vrot.lane.b32.xlu0 %v2963, 18
        %v2981 = vpop.permute.xlu0 %2980
        %2982 = vrot.lane.b32.xlu0 %v2964, 18
        %v2983 = vpop.permute.xlu0 %2982
        %2984 = vrot.lane.b32.xlu0 %v2965, 18
        %v2985 = vpop.permute.xlu0 %2984
        %2986 = vrot.lane.b32.xlu0 %v2966, 18
        %v2987 = vpop.permute.xlu0 %2986
        %2988 = vrot.lane.b32.xlu0 %v2967, 18
        %v2989 = vpop.permute.xlu0 %2988
        %2990 = vrot.lane.b32.xlu0 %v2968, 18
        %v2991 = vpop.permute.xlu0 %2990
        %2992 = vrot.lane.b32.xlu0 %v2969, 18
        %v2993 = vpop.permute.xlu0 %2992
        %2994 = vrot.lane.b32.xlu0 %v2970, 18
        %v2995 = vpop.permute.xlu0 %2994
        %2996 = vrot.lane.b32.xlu0 %v2971, 18
        %v2997 = vpop.permute.xlu0 %2996
        %2998 = vrot.lane.b32.xlu0 %v2972, 18
        %v2999 = vpop.permute.xlu0 %2998
        %3000 = vrot.lane.b32.xlu0 %v2973, 18
        %v3001 = vpop.permute.xlu0 %3000
        %3002 = vrot.lane.b32.xlu0 %v2974, 18
        %v3003 = vpop.permute.xlu0 %3002
        %3004 = vrot.lane.b32.xlu0 %v2975, 18
        %v3005 = vpop.permute.xlu0 %3004
        %3006 = vrot.lane.b32.xlu0 %v2976, 18
        %v3007 = vpop.permute.xlu0 %3006
        %3008 = vrot.lane.b32.xlu0 %v2977, 18
        %v3009 = vpop.permute.xlu0 %3008
        %v3013 = vunpack.c.l.b16 %v2039
        %v3014 = vunpack.c.l.b16 %v2040
        %v3015 = vunpack.c.l.b16 %v2073
        %v3016 = vpack.c.b16 %v3014, %v3013
        %v3017 = vpack.c.b16 %v3015, %v3015
        %v3019 = vshll.u32 %v3016, 16
        %v3021 = vrot.slane %v3019, 1
        %v3022 = vsel %vm2271, %v2712, %v3021
        %v3023 = vshrl.u32 %v3016, 16
        %v3025 = vor.u32 %v3023, %v3021
        %v3027 = vshll.u32 %v3017, 16
        %v3029 = vrot.slane %v3027, 1
        %v3030 = vsel %vm2271, %v3025, %v3029
        %3031 = vrot.lane.b32.xlu0 %v2299, 21
        %v3032 = vpop.permute.xlu0 %3031
        %3033 = vrot.lane.b32.xlu0 %v2307, 21
        %v3034 = vpop.permute.xlu0 %3033
        %3035 = vrot.lane.b32.xlu0 %v2315, 21
        %v3036 = vpop.permute.xlu0 %3035
        %3037 = vrot.lane.b32.xlu0 %v2323, 21
        %v3038 = vpop.permute.xlu0 %3037
        %3039 = vrot.lane.b32.xlu0 %v2331, 21
        %v3040 = vpop.permute.xlu0 %3039
        %3041 = vrot.lane.b32.xlu0 %v2339, 21
        %v3042 = vpop.permute.xlu0 %3041
        %3043 = vrot.lane.b32.xlu0 %v2347, 21
        %v3044 = vpop.permute.xlu0 %3043
        %3045 = vrot.lane.b32.xlu0 %v2355, 21
        %v3046 = vpop.permute.xlu0 %3045
        %3047 = vrot.lane.b32.xlu0 %v2363, 21
        %v3048 = vpop.permute.xlu0 %3047
        %3049 = vrot.lane.b32.xlu0 %v2371, 21
        %v3050 = vpop.permute.xlu0 %3049
        %3051 = vrot.lane.b32.xlu0 %v2379, 21
        %v3052 = vpop.permute.xlu0 %3051
        %3053 = vrot.lane.b32.xlu0 %v2387, 21
        %v3054 = vpop.permute.xlu0 %3053
        %3055 = vrot.lane.b32.xlu0 %v2395, 21
        %v3056 = vpop.permute.xlu0 %3055
        %3057 = vrot.lane.b32.xlu0 %v2709, 21
        %v3058 = vpop.permute.xlu0 %3057
        %3059 = vrot.lane.b32.xlu0 %v3022, 21
        %v3060 = vpop.permute.xlu0 %3059
        %3061 = vrot.lane.b32.xlu0 %v3030, 21
        %v3062 = vpop.permute.xlu0 %3061
        %v3096 = vunpack.c.l.b16 %v2075
        %v3097 = vunpack.c.l.b16 %v2076
        %v3098 = vunpack.c.l.b16 %v2077
        %v3099 = vunpack.c.l.b16 %v2078
        %v3100 = vunpack.c.l.b16 %v2079
        %v3101 = vunpack.c.l.b16 %v2080
        %v3102 = vunpack.c.l.b16 %v2081
        %v3103 = vunpack.c.l.b16 %v2082
        %v3104 = vunpack.c.l.b16 %v2083
        %v3105 = vunpack.c.l.b16 %v2084
        %v3106 = vunpack.c.l.b16 %v2085
        %v3107 = vunpack.c.l.b16 %v2086
        %v3108 = vunpack.c.l.b16 %v2087
        %v3109 = vunpack.c.l.b16 %v2088
        %v3110 = vunpack.c.l.b16 %v2089
        %v3111 = vunpack.c.l.b16 %v2090
        %v3112 = vunpack.c.l.b16 %v2091
        %v3113 = vunpack.c.l.b16 %v2092
        %v3114 = vunpack.c.l.b16 %v2093
        %v3115 = vunpack.c.l.b16 %v2094
        %v3116 = vunpack.c.l.b16 %v2095
        %v3117 = vunpack.c.l.b16 %v2096
        %v3118 = vunpack.c.l.b16 %v2097
        %v3119 = vunpack.c.l.b16 %v2098
        %v3120 = vunpack.c.l.b16 %v2099
        %v3121 = vunpack.c.l.b16 %v2100
        %v3122 = vunpack.c.l.b16 %v2101
        %v3123 = vunpack.c.l.b16 %v2102
        %v3124 = vunpack.c.l.b16 %v2103
        %v3125 = vunpack.c.l.b16 %v2104
        %v3126 = vunpack.c.l.b16 %v2105
        %v3127 = vunpack.c.l.b16 %v2106
        %v3128 = vunpack.c.l.b16 %v2107
        %v3129 = vpack.c.b16 %v3097, %v3096
        %v3130 = vpack.c.b16 %v3099, %v3098
        %v3131 = vpack.c.b16 %v3101, %v3100
        %v3132 = vpack.c.b16 %v3103, %v3102
        %v3133 = vpack.c.b16 %v3105, %v3104
        %v3134 = vpack.c.b16 %v3107, %v3106
        %v3135 = vpack.c.b16 %v3109, %v3108
        %v3136 = vpack.c.b16 %v3111, %v3110
        %v3137 = vpack.c.b16 %v3113, %v3112
        %v3138 = vpack.c.b16 %v3115, %v3114
        %v3139 = vpack.c.b16 %v3117, %v3116
        %v3140 = vpack.c.b16 %v3119, %v3118
        %v3141 = vpack.c.b16 %v3121, %v3120
        %v3142 = vpack.c.b16 %v3123, %v3122
        %v3143 = vpack.c.b16 %v3125, %v3124
        %v3144 = vpack.c.b16 %v3127, %v3126
        %v3145 = vpack.c.b16 %v3128, %v3128
        %v3146 = vrot.slane %v3129, 1
        %v3147 = vrot.slane %v3130, 1
        %v3148 = vsel %vm2519, %v3146, %v3147
        %v3149 = vrot.slane %v3131, 1
        %v3150 = vsel %vm2519, %v3147, %v3149
        %v3151 = vrot.slane %v3132, 1
        %v3152 = vsel %vm2519, %v3149, %v3151
        %v3153 = vrot.slane %v3133, 1
        %v3154 = vsel %vm2519, %v3151, %v3153
        %v3155 = vrot.slane %v3134, 1
        %v3156 = vsel %vm2519, %v3153, %v3155
        %v3157 = vrot.slane %v3135, 1
        %v3158 = vsel %vm2519, %v3155, %v3157
        %v3159 = vrot.slane %v3136, 1
        %v3160 = vsel %vm2519, %v3157, %v3159
        %v3161 = vrot.slane %v3137, 1
        %v3162 = vsel %vm2519, %v3159, %v3161
        %v3163 = vrot.slane %v3138, 1
        %v3164 = vsel %vm2519, %v3161, %v3163
        %v3165 = vrot.slane %v3139, 1
        %v3166 = vsel %vm2519, %v3163, %v3165
        %v3167 = vrot.slane %v3140, 1
        %v3168 = vsel %vm2519, %v3165, %v3167
        %v3169 = vrot.slane %v3141, 1
        %v3170 = vsel %vm2519, %v3167, %v3169
        %v3171 = vrot.slane %v3142, 1
        %v3172 = vsel %vm2519, %v3169, %v3171
        %v3173 = vrot.slane %v3143, 1
        %v3174 = vsel %vm2519, %v3171, %v3173
        %v3175 = vrot.slane %v3144, 1
        %v3176 = vsel %vm2519, %v3173, %v3175
        %v3177 = vrot.slane %v3145, 1
        %v3178 = vsel %vm2519, %v3175, %v3177
        %3179 = vrot.lane.b32.xlu0 %v3148, 24
        %v3180 = vpop.permute.xlu0 %3179
        %3181 = vrot.lane.b32.xlu0 %v3150, 24
        %v3182 = vpop.permute.xlu0 %3181
        %3183 = vrot.lane.b32.xlu0 %v3152, 24
        %v3184 = vpop.permute.xlu0 %3183
        %3185 = vrot.lane.b32.xlu0 %v3154, 24
        %v3186 = vpop.permute.xlu0 %3185
        %3187 = vrot.lane.b32.xlu0 %v3156, 24
        %v3188 = vpop.permute.xlu0 %3187
        %3189 = vrot.lane.b32.xlu0 %v3158, 24
        %v3190 = vpop.permute.xlu0 %3189
        %3191 = vrot.lane.b32.xlu0 %v3160, 24
        %v3192 = vpop.permute.xlu0 %3191
        %3193 = vrot.lane.b32.xlu0 %v3162, 24
        %v3194 = vpop.permute.xlu0 %3193
        %3195 = vrot.lane.b32.xlu0 %v3164, 24
        %v3196 = vpop.permute.xlu0 %3195
        %3197 = vrot.lane.b32.xlu0 %v3166, 24
        %v3198 = vpop.permute.xlu0 %3197
        %3199 = vrot.lane.b32.xlu0 %v3168, 24
        %v3200 = vpop.permute.xlu0 %3199
        %3201 = vrot.lane.b32.xlu0 %v3170, 24
        %v3202 = vpop.permute.xlu0 %3201
        %3203 = vrot.lane.b32.xlu0 %v3172, 24
        %v3204 = vpop.permute.xlu0 %3203
        %3205 = vrot.lane.b32.xlu0 %v3174, 24
        %v3206 = vpop.permute.xlu0 %3205
        %3207 = vrot.lane.b32.xlu0 %v3176, 24
        %v3208 = vpop.permute.xlu0 %3207
        %3209 = vrot.lane.b32.xlu0 %v3178, 24
        %v3210 = vpop.permute.xlu0 %3209
        %vm3211 = vcmask 23552
        %v3214 = vsel %vm3211, %v2172, %v2405
        %v3217 = vsel %vm3211, %v2173, %v2407
        %v3220 = vsel %vm3211, %v2174, %v2409
        %v3223 = vsel %vm3211, %v2175, %v2411
        %v3226 = vsel %vm3211, %v2176, %v2413
        %v3229 = vsel %vm3211, %v2177, %v2415
        %v3232 = vsel %vm3211, %v2178, %v2417
        %v3235 = vsel %vm3211, %v2179, %v2419
        %v3238 = vsel %vm3211, %v2180, %v2421
        %v3241 = vsel %vm3211, %v2181, %v2423
        %v3244 = vsel %vm3211, %v2182, %v2425
        %v3247 = vsel %vm3211, %v2183, %v2427
        %v3250 = vsel %vm3211, %v2184, %v2429
        %v3253 = vsel %vm3211, %v2185, %v2431
        %v3256 = vsel %vm3211, %v2186, %v2433
        %v3259 = vsel %vm3211, %v2187, %v2435
        %vm3260 = vcmask 48128
        %v3262 = vsel %vm3260, %v3214, %v2554
        %v3264 = vsel %vm3260, %v3217, %v2556
        %v3266 = vsel %vm3260, %v3220, %v2558
        %v3268 = vsel %vm3260, %v3223, %v2560
        %v3270 = vsel %vm3260, %v3226, %v2562
        %v3272 = vsel %vm3260, %v3229, %v2564
        %v3274 = vsel %vm3260, %v3232, %v2566
        %v3276 = vsel %vm3260, %v3235, %v2568
        %v3278 = vsel %vm3260, %v3238, %v2570
        %v3280 = vsel %vm3260, %v3241, %v2572
        %v3282 = vsel %vm3260, %v3244, %v2574
        %v3284 = vsel %vm3260, %v3247, %v2576
        %v3286 = vsel %vm3260, %v3250, %v2578
        %v3288 = vsel %vm3260, %v3253, %v2580
        %v3290 = vsel %vm3260, %v3256, %v2582
        %v3292 = vsel %vm3260, %v3259, %v2584
        %vm3293 = vcmask 72704
        %v3295 = vsel %vm3293, %v3262, %v2666
        %v3297 = vsel %vm3293, %v3264, %v2668
        %v3299 = vsel %vm3293, %v3266, %v2670
        %v3301 = vsel %vm3293, %v3268, %v2672
        %v3303 = vsel %vm3293, %v3270, %v2674
        %v3305 = vsel %vm3293, %v3272, %v2676
        %v3307 = vsel %vm3293, %v3274, %v2678
        %v3309 = vsel %vm3293, %v3276, %v2680
        %v3311 = vsel %vm3293, %v3278, %v2682
        %v3313 = vsel %vm3293, %v3280, %v2684
        %v3315 = vsel %vm3293, %v3282, %v2686
        %v3317 = vsel %vm3293, %v3284, %v2688
        %v3319 = vsel %vm3293, %v3286, %v2690
        %v3321 = vsel %vm3293, %v3288, %v2692
        %v3323 = vsel %vm3293, %v3290, %v2694
        %v3325 = vsel %vm3293, %v3292, %v2696
        %vm3326 = vcmask 97280
        %v3328 = vsel %vm3326, %v3295, %v2719
        %v3330 = vsel %vm3326, %v3297, %v2721
        %v3332 = vsel %vm3326, %v3299, %v2723
        %v3334 = vsel %vm3326, %v3301, %v2725
        %v3336 = vsel %vm3326, %v3303, %v2727
        %v3338 = vsel %vm3326, %v3305, %v2729
        %v3340 = vsel %vm3326, %v3307, %v2731
        %v3342 = vsel %vm3326, %v3309, %v2733
        %v3344 = vsel %vm3326, %v3311, %v2735
        %v3346 = vsel %vm3326, %v3313, %v2737
        %v3348 = vsel %vm3326, %v3315, %v2739
        %v3350 = vsel %vm3326, %v3317, %v2741
        %v3352 = vsel %vm3326, %v3319, %v2743
        %v3354 = vsel %vm3326, %v3321, %v2745
        %v3356 = vsel %vm3326, %v3323, %v2747
        %v3358 = vsel %vm3326, %v3325, %v2749
        %vm3359 = vcmask 121856
        %v3361 = vsel %vm3359, %v3328, %v2867
        %v3363 = vsel %vm3359, %v3330, %v2869
        %v3365 = vsel %vm3359, %v3332, %v2871
        %v3367 = vsel %vm3359, %v3334, %v2873
        %v3369 = vsel %vm3359, %v3336, %v2875
        %v3371 = vsel %vm3359, %v3338, %v2877
        %v3373 = vsel %vm3359, %v3340, %v2879
        %v3375 = vsel %vm3359, %v3342, %v2881
        %v3377 = vsel %vm3359, %v3344, %v2883
        %v3379 = vsel %vm3359, %v3346, %v2885
        %v3381 = vsel %vm3359, %v3348, %v2887
        %v3383 = vsel %vm3359, %v3350, %v2889
        %v3385 = vsel %vm3359, %v3352, %v2891
        %v3387 = vsel %vm3359, %v3354, %v2893
        %v3389 = vsel %vm3359, %v3356, %v2895
        %v3391 = vsel %vm3359, %v3358, %v2897
        %vm3392 = vcmask 146432
        %v3394 = vsel %vm3392, %v3361, %v2979
        %v3396 = vsel %vm3392, %v3363, %v2981
        %v3398 = vsel %vm3392, %v3365, %v2983
        %v3400 = vsel %vm3392, %v3367, %v2985
        %v3402 = vsel %vm3392, %v3369, %v2987
        %v3404 = vsel %vm3392, %v3371, %v2989
        %v3406 = vsel %vm3392, %v3373, %v2991
        %v3408 = vsel %vm3392, %v3375, %v2993
        %v3410 = vsel %vm3392, %v3377, %v2995
        %v3412 = vsel %vm3392, %v3379, %v2997
        %v3414 = vsel %vm3392, %v3381, %v2999
        %v3416 = vsel %vm3392, %v3383, %v3001
        %v3418 = vsel %vm3392, %v3385, %v3003
        %v3420 = vsel %vm3392, %v3387, %v3005
        %v3422 = vsel %vm3392, %v3389, %v3007
        %v3424 = vsel %vm3392, %v3391, %v3009
        %vm3425 = vcmask 171008
        %v3427 = vsel %vm3425, %v3394, %v3032
        %v3429 = vsel %vm3425, %v3396, %v3034
        %v3431 = vsel %vm3425, %v3398, %v3036
        %v3433 = vsel %vm3425, %v3400, %v3038
        %v3435 = vsel %vm3425, %v3402, %v3040
        %v3437 = vsel %vm3425, %v3404, %v3042
        %v3439 = vsel %vm3425, %v3406, %v3044
        %v3441 = vsel %vm3425, %v3408, %v3046
        %v3443 = vsel %vm3425, %v3410, %v3048
        %v3445 = vsel %vm3425, %v3412, %v3050
        %v3447 = vsel %vm3425, %v3414, %v3052
        %v3449 = vsel %vm3425, %v3416, %v3054
        %v3451 = vsel %vm3425, %v3418, %v3056
        %v3453 = vsel %vm3425, %v3420, %v3058
        %v3455 = vsel %vm3425, %v3422, %v3060
        %v3457 = vsel %vm3425, %v3424, %v3062
        %vm3458 = vcmask 195584
        %v3460 = vsel %vm3458, %v3427, %v3180
        %v3462 = vsel %vm3458, %v3429, %v3182
        %v3464 = vsel %vm3458, %v3431, %v3184
        %v3466 = vsel %vm3458, %v3433, %v3186
        %v3468 = vsel %vm3458, %v3435, %v3188
        %v3470 = vsel %vm3458, %v3437, %v3190
        %v3472 = vsel %vm3458, %v3439, %v3192
        %v3474 = vsel %vm3458, %v3441, %v3194
        %v3476 = vsel %vm3458, %v3443, %v3196
        %v3478 = vsel %vm3458, %v3445, %v3198
        %v3480 = vsel %vm3458, %v3447, %v3200
        %v3482 = vsel %vm3458, %v3449, %v3202
        %v3484 = vsel %vm3458, %v3451, %v3204
        %v3486 = vsel %vm3458, %v3453, %v3206
        %v3488 = vsel %vm3458, %v3455, %v3208
        %v3490 = vsel %vm3458, %v3457, %v3210
        %v3491 = vld [vmem:[%s4] sm:$0xf]
        %v3492 = vld [vmem:[%s4 + $0x4] sm:$0xf]
        %v3493 = vld [vmem:[%s4 + $0x8] sm:$0xf]
        %v3494 = vld [vmem:[%s4 + $0xc] sm:$0x3]
        %v3495 = vperm.slane %v555, 0
        %v3500 = vunpack.c.l.b16 %v3491
        %v3501 = vunpack.c.l.b16 %v3492
        %v3502 = vunpack.c.l.b16 %v3493
        %v3503 = vunpack.c.l.b16 %v3494
        %v3504 = vpack.c.b16 %v3501, %v3500
        %v3505 = vpack.c.b16 %v3503, %v3502
        %vm3507 = vcmask 220160
        %v3508 = vsel %vm3507, %v3460, 0
        %v3510 = vsel %vm3507, %v3462, 0
        %v3512 = vsel %vm3507, %v3464, 0
        %v3514 = vsel %vm3507, %v3466, 0
        %v3516 = vsel %vm3507, %v3468, 0
        %v3518 = vsel %vm3507, %v3470, 0
        %v3520 = vsel %vm3507, %v3472, 0
        %v3522 = vsel %vm3507, %v3474, 0
        %v3524 = vsel %vm3507, %v3476, 0
        %v3526 = vsel %vm3507, %v3478, 0
        %v3528 = vsel %vm3507, %v3480, 0
        %v3530 = vsel %vm3507, %v3482, 0
        %v3532 = vsel %vm3507, %v3484, 0
        %v3534 = vsel %vm3507, %v3486, 0
        %v3536 = vsel %vm3507, %v3488, 0
        %v3538 = vsel %vm3507, %v3490, 0
        %vm3540 = vcmask 1044480
        %vm3541 = vcmask 1045504
        %v3542 = vsel %vm3540, 4294967295, 65535
        %v3543 = vsel %vm3541, %v3542, 0
        %v3545 = vand.u32 %v3505, %v3543
        %3547 = vmatpush.bf16.msra.mxu0 0
        %3548 = vmatpush.bf16.msra.mxu0 0
        %3549 = vmatpush.bf16.msra.mxu0 0
        %3550 = vmatpush.bf16.msra.mxu0 0
        %3551 = vmatpush.bf16.msra.mxu0 0
        %3552 = vmatpush.bf16.msra.mxu0 0
        %3553 = vmatpush.bf16.msra.mxu0 %v3545
        %3554 = vmatpush.bf16.msra.mxu0 %v3504
        %3555 = vmatmul.bf16.gmra.mxu0 %v3508
        %v3556 = vpop.f32.mrf.mxu0
        %v3557 = vadd.f32 %v3495, %v3556
        %v3558 = vpop.f32.mrf.mxu0
        %v3559 = vadd.f32 %v3495, %v3558
        %3560 = vmatmul.bf16.gmra.mxu0 %v3510
        %v3561 = vpop.f32.mrf.mxu0
        %v3562 = vadd.f32 %v3495, %v3561
        %v3563 = vpop.f32.mrf.mxu0
        %v3564 = vadd.f32 %v3495, %v3563
        %3565 = vmatmul.bf16.gmra.mxu0 %v3512
        %v3566 = vpop.f32.mrf.mxu0
        %v3567 = vadd.f32 %v3495, %v3566
        %v3568 = vpop.f32.mrf.mxu0
        %v3569 = vadd.f32 %v3495, %v3568
        %3570 = vmatmul.bf16.gmra.mxu0 %v3514
        %v3571 = vpop.f32.mrf.mxu0
        %v3572 = vadd.f32 %v3495, %v3571
        %v3573 = vpop.f32.mrf.mxu0
        %v3574 = vadd.f32 %v3495, %v3573
        %3575 = vmatmul.bf16.gmra.mxu0 %v3516
        %v3576 = vpop.f32.mrf.mxu0
        %v3577 = vadd.f32 %v3495, %v3576
        %v3578 = vpop.f32.mrf.mxu0
        %v3579 = vadd.f32 %v3495, %v3578
        %3580 = vmatmul.bf16.gmra.mxu0 %v3518
        %v3581 = vpop.f32.mrf.mxu0
        %v3582 = vadd.f32 %v3495, %v3581
        %v3583 = vpop.f32.mrf.mxu0
        %v3584 = vadd.f32 %v3495, %v3583
        %3585 = vmatmul.bf16.gmra.mxu0 %v3520
        %v3586 = vpop.f32.mrf.mxu0
        %v3587 = vadd.f32 %v3495, %v3586
        %v3588 = vpop.f32.mrf.mxu0
        %v3589 = vadd.f32 %v3495, %v3588
        %3590 = vmatmul.bf16.gmra.mxu0 %v3522
        %v3591 = vpop.f32.mrf.mxu0
        %v3592 = vadd.f32 %v3495, %v3591
        %v3593 = vpop.f32.mrf.mxu0
        %v3594 = vadd.f32 %v3495, %v3593
        %3595 = vmatmul.bf16.gmra.mxu0 %v3524
        %v3596 = vpop.f32.mrf.mxu0
        %v3597 = vadd.f32 %v3495, %v3596
        %v3598 = vpop.f32.mrf.mxu0
        %v3599 = vadd.f32 %v3495, %v3598
        %3600 = vmatmul.bf16.gmra.mxu0 %v3526
        %v3601 = vpop.f32.mrf.mxu0
        %v3602 = vadd.f32 %v3495, %v3601
        %v3603 = vpop.f32.mrf.mxu0
        %v3604 = vadd.f32 %v3495, %v3603
        %3605 = vmatmul.bf16.gmra.mxu0 %v3528
        %v3606 = vpop.f32.mrf.mxu0
        %v3607 = vadd.f32 %v3495, %v3606
        %v3608 = vpop.f32.mrf.mxu0
        %v3609 = vadd.f32 %v3495, %v3608
        %3610 = vmatmul.bf16.gmra.mxu0 %v3530
        %v3611 = vpop.f32.mrf.mxu0
        %v3612 = vadd.f32 %v3495, %v3611
        %v3613 = vpop.f32.mrf.mxu0
        %v3614 = vadd.f32 %v3495, %v3613
        %3615 = vmatmul.bf16.gmra.mxu0 %v3532
        %v3616 = vpop.f32.mrf.mxu0
        %v3617 = vadd.f32 %v3495, %v3616
        %v3618 = vpop.f32.mrf.mxu0
        %v3619 = vadd.f32 %v3495, %v3618
        %3620 = vmatmul.bf16.gmra.mxu0 %v3534
        %v3621 = vpop.f32.mrf.mxu0
        %v3622 = vadd.f32 %v3495, %v3621
        %v3623 = vpop.f32.mrf.mxu0
        %v3624 = vadd.f32 %v3495, %v3623
        %3625 = vmatmul.bf16.gmra.mxu0 %v3536
        %v3626 = vpop.f32.mrf.mxu0
        %v3627 = vadd.f32 %v3495, %v3626
        %v3628 = vpop.f32.mrf.mxu0
        %v3629 = vadd.f32 %v3495, %v3628
        %3630 = vmatmul.bf16.gmra.mxu0 %v3538
        %v3631 = vpop.f32.mrf.mxu0
        %v3632 = vadd.f32 %v3495, %v3631
        %v3633 = vpop.f32.mrf.mxu0
        %v3634 = vadd.f32 %v3495, %v3633
        %3635 = vdwg.mxu0
        %v3636 = vxor.u32 %v3557, 2147483648
        %v3637 = vxor.u32 %v3559, 2147483648
        %v3638 = vxor.u32 %v3562, 2147483648
        %v3639 = vxor.u32 %v3564, 2147483648
        %v3640 = vxor.u32 %v3567, 2147483648
        %v3641 = vxor.u32 %v3569, 2147483648
        %v3642 = vxor.u32 %v3572, 2147483648
        %v3643 = vxor.u32 %v3574, 2147483648
        %v3644 = vxor.u32 %v3577, 2147483648
        %v3645 = vxor.u32 %v3579, 2147483648
        %v3646 = vxor.u32 %v3582, 2147483648
        %v3647 = vxor.u32 %v3584, 2147483648
        %v3648 = vxor.u32 %v3587, 2147483648
        %v3649 = vxor.u32 %v3589, 2147483648
        %v3650 = vxor.u32 %v3592, 2147483648
        %v3651 = vxor.u32 %v3594, 2147483648
        %v3652 = vxor.u32 %v3597, 2147483648
        %v3653 = vxor.u32 %v3599, 2147483648
        %v3654 = vxor.u32 %v3602, 2147483648
        %v3655 = vxor.u32 %v3604, 2147483648
        %v3656 = vxor.u32 %v3607, 2147483648
        %v3657 = vxor.u32 %v3609, 2147483648
        %v3658 = vxor.u32 %v3612, 2147483648
        %v3659 = vxor.u32 %v3614, 2147483648
        %v3660 = vxor.u32 %v3617, 2147483648
        %v3661 = vxor.u32 %v3619, 2147483648
        %v3662 = vxor.u32 %v3622, 2147483648
        %v3663 = vxor.u32 %v3624, 2147483648
        %v3664 = vxor.u32 %v3627, 2147483648
        %v3665 = vxor.u32 %v3629, 2147483648
        %v3666 = vxor.u32 %v3632, 2147483648
        %v3667 = vxor.u32 %v3634, 2147483648
        %v3668 = vmul.f32 %v3636, 1.442695
        %v3669 = vpow.pop %v3668
        %v3670 = vmul.f32 %v3637, 1.442695
        %v3671 = vpow.pop %v3670
        %v3672 = vmul.f32 %v3638, 1.442695
        %v3673 = vpow.pop %v3672
        %v3674 = vmul.f32 %v3639, 1.442695
        %v3675 = vpow.pop %v3674
        %v3676 = vmul.f32 %v3640, 1.442695
        %v3677 = vpow.pop %v3676
        %v3678 = vmul.f32 %v3641, 1.442695
        %v3679 = vpow.pop %v3678
        %v3680 = vmul.f32 %v3642, 1.442695
        %v3681 = vpow.pop %v3680
        %v3682 = vmul.f32 %v3643, 1.442695
        %v3683 = vpow.pop %v3682
        %v3684 = vmul.f32 %v3644, 1.442695
        %v3685 = vpow.pop %v3684
        %v3686 = vmul.f32 %v3645, 1.442695
        %v3687 = vpow.pop %v3686
        %v3688 = vmul.f32 %v3646, 1.442695
        %v3689 = vpow.pop %v3688
        %v3690 = vmul.f32 %v3647, 1.442695
        %v3691 = vpow.pop %v3690
        %v3692 = vmul.f32 %v3648, 1.442695
        %v3693 = vpow.pop %v3692
        %v3694 = vmul.f32 %v3649, 1.442695
        %v3695 = vpow.pop %v3694
        %v3696 = vmul.f32 %v3650, 1.442695
        %v3697 = vpow.pop %v3696
        %v3698 = vmul.f32 %v3651, 1.442695
        %v3699 = vpow.pop %v3698
        %v3700 = vmul.f32 %v3652, 1.442695
        %v3701 = vpow.pop %v3700
        %v3702 = vmul.f32 %v3653, 1.442695
        %v3703 = vpow.pop %v3702
        %v3704 = vmul.f32 %v3654, 1.442695
        %v3705 = vpow.pop %v3704
        %v3706 = vmul.f32 %v3655, 1.442695
        %v3707 = vpow.pop %v3706
        %v3708 = vmul.f32 %v3656, 1.442695
        %v3709 = vpow.pop %v3708
        %v3710 = vmul.f32 %v3657, 1.442695
        %v3711 = vpow.pop %v3710
        %v3712 = vmul.f32 %v3658, 1.442695
        %v3713 = vpow.pop %v3712
        %v3714 = vmul.f32 %v3659, 1.442695
        %v3715 = vpow.pop %v3714
        %v3716 = vmul.f32 %v3660, 1.442695
        %v3717 = vpow.pop %v3716
        %v3718 = vmul.f32 %v3661, 1.442695
        %v3719 = vpow.pop %v3718
        %v3720 = vmul.f32 %v3662, 1.442695
        %v3721 = vpow.pop %v3720
        %v3722 = vmul.f32 %v3663, 1.442695
        %v3723 = vpow.pop %v3722
        %v3724 = vmul.f32 %v3664, 1.442695
        %v3725 = vpow.pop %v3724
        %v3726 = vmul.f32 %v3665, 1.442695
        %v3727 = vpow.pop %v3726
        %v3728 = vmul.f32 %v3666, 1.442695
        %v3729 = vpow.pop %v3728
        %v3730 = vmul.f32 %v3667, 1.442695
        %v3731 = vpow.pop %v3730
        %v3732 = vadd.f32 %v3669, 1.0
        %v3733 = vadd.f32 %v3671, 1.0
        %v3734 = vadd.f32 %v3673, 1.0
        %v3735 = vadd.f32 %v3675, 1.0
        %v3736 = vadd.f32 %v3677, 1.0
        %v3737 = vadd.f32 %v3679, 1.0
        %v3738 = vadd.f32 %v3681, 1.0
        %v3739 = vadd.f32 %v3683, 1.0
        %v3740 = vadd.f32 %v3685, 1.0
        %v3741 = vadd.f32 %v3687, 1.0
        %v3742 = vadd.f32 %v3689, 1.0
        %v3743 = vadd.f32 %v3691, 1.0
        %v3744 = vadd.f32 %v3693, 1.0
        %v3745 = vadd.f32 %v3695, 1.0
        %v3746 = vadd.f32 %v3697, 1.0
        %v3747 = vadd.f32 %v3699, 1.0
        %v3748 = vadd.f32 %v3701, 1.0
        %v3749 = vadd.f32 %v3703, 1.0
        %v3750 = vadd.f32 %v3705, 1.0
        %v3751 = vadd.f32 %v3707, 1.0
        %v3752 = vadd.f32 %v3709, 1.0
        %v3753 = vadd.f32 %v3711, 1.0
        %v3754 = vadd.f32 %v3713, 1.0
        %v3755 = vadd.f32 %v3715, 1.0
        %v3756 = vadd.f32 %v3717, 1.0
        %v3757 = vadd.f32 %v3719, 1.0
        %v3758 = vadd.f32 %v3721, 1.0
        %v3759 = vadd.f32 %v3723, 1.0
        %v3760 = vadd.f32 %v3725, 1.0
        %v3761 = vadd.f32 %v3727, 1.0
        %v3762 = vadd.f32 %v3729, 1.0
        %v3763 = vadd.f32 %v3731, 1.0
        %v3764 = vrcp.pop %v3732
        %v3765 = vmul.f32 %v3732, %v3764
        %v3766 = vsub.f32 1.0, %v3765
        %v3767 = vmul.f32 %v3764, %v3766
        %v3768 = vadd.f32 %v3764, %v3767
        %vm3769 = vweird.f32 %v3732
        %vm3770 = vweird.f32 %v3764
        %vm3771 = vmor %vm3769, %vm3770
        %v3772 = vsel %vm3771, %v3764, %v3768
        %v3773 = vand.u32 2147483647, %v3732
        %vm3774 = vcmp.eq.f32.partialorder %v3773, 8.507059e+37
        %v3775 = vand.u32 %v3732, 2147483648
        %v3776 = vor.u32 1.1754944e-38, %v3775
        %v3777 = vsel %vm3774, %v3776, %v3772
        %v3778 = vmul.f32 1.0, %v3777
        %v3779 = vrcp.pop %v3733
        %v3780 = vmul.f32 %v3733, %v3779
        %v3781 = vsub.f32 1.0, %v3780
        %v3782 = vmul.f32 %v3779, %v3781
        %v3783 = vadd.f32 %v3779, %v3782
        %vm3784 = vweird.f32 %v3733
        %vm3785 = vweird.f32 %v3779
        %vm3786 = vmor %vm3784, %vm3785
        %v3787 = vsel %vm3786, %v3779, %v3783
        %v3788 = vand.u32 2147483647, %v3733
        %vm3789 = vcmp.eq.f32.partialorder %v3788, 8.507059e+37
        %v3790 = vand.u32 %v3733, 2147483648
        %v3791 = vor.u32 1.1754944e-38, %v3790
        %v3792 = vsel %vm3789, %v3791, %v3787
        %v3793 = vmul.f32 1.0, %v3792
        %v3794 = vrcp.pop %v3734
        %v3795 = vmul.f32 %v3734, %v3794
        %v3796 = vsub.f32 1.0, %v3795
        %v3797 = vmul.f32 %v3794, %v3796
        %v3798 = vadd.f32 %v3794, %v3797
        %vm3799 = vweird.f32 %v3734
        %vm3800 = vweird.f32 %v3794
        %vm3801 = vmor %vm3799, %vm3800
        %v3802 = vsel %vm3801, %v3794, %v3798
        %v3803 = vand.u32 2147483647, %v3734
        %vm3804 = vcmp.eq.f32.partialorder %v3803, 8.507059e+37
        %v3805 = vand.u32 %v3734, 2147483648
        %v3806 = vor.u32 1.1754944e-38, %v3805
        %v3807 = vsel %vm3804, %v3806, %v3802
        %v3808 = vmul.f32 1.0, %v3807
        %v3809 = vrcp.pop %v3735
        %v3810 = vmul.f32 %v3735, %v3809
        %v3811 = vsub.f32 1.0, %v3810
        %v3812 = vmul.f32 %v3809, %v3811
        %v3813 = vadd.f32 %v3809, %v3812
        %vm3814 = vweird.f32 %v3735
        %vm3815 = vweird.f32 %v3809
        %vm3816 = vmor %vm3814, %vm3815
        %v3817 = vsel %vm3816, %v3809, %v3813
        %v3818 = vand.u32 2147483647, %v3735
        %vm3819 = vcmp.eq.f32.partialorder %v3818, 8.507059e+37
        %v3820 = vand.u32 %v3735, 2147483648
        %v3821 = vor.u32 1.1754944e-38, %v3820
        %v3822 = vsel %vm3819, %v3821, %v3817
        %v3823 = vmul.f32 1.0, %v3822
        %v3824 = vrcp.pop %v3736
        %v3825 = vmul.f32 %v3736, %v3824
        %v3826 = vsub.f32 1.0, %v3825
        %v3827 = vmul.f32 %v3824, %v3826
        %v3828 = vadd.f32 %v3824, %v3827
        %vm3829 = vweird.f32 %v3736
        %vm3830 = vweird.f32 %v3824
        %vm3831 = vmor %vm3829, %vm3830
        %v3832 = vsel %vm3831, %v3824, %v3828
        %v3833 = vand.u32 2147483647, %v3736
        %vm3834 = vcmp.eq.f32.partialorder %v3833, 8.507059e+37
        %v3835 = vand.u32 %v3736, 2147483648
        %v3836 = vor.u32 1.1754944e-38, %v3835
        %v3837 = vsel %vm3834, %v3836, %v3832
        %v3838 = vmul.f32 1.0, %v3837
        %v3839 = vrcp.pop %v3737
        %v3840 = vmul.f32 %v3737, %v3839
        %v3841 = vsub.f32 1.0, %v3840
        %v3842 = vmul.f32 %v3839, %v3841
        %v3843 = vadd.f32 %v3839, %v3842
        %vm3844 = vweird.f32 %v3737
        %vm3845 = vweird.f32 %v3839
        %vm3846 = vmor %vm3844, %vm3845
        %v3847 = vsel %vm3846, %v3839, %v3843
        %v3848 = vand.u32 2147483647, %v3737
        %vm3849 = vcmp.eq.f32.partialorder %v3848, 8.507059e+37
        %v3850 = vand.u32 %v3737, 2147483648
        %v3851 = vor.u32 1.1754944e-38, %v3850
        %v3852 = vsel %vm3849, %v3851, %v3847
        %v3853 = vmul.f32 1.0, %v3852
        %v3854 = vrcp.pop %v3738
        %v3855 = vmul.f32 %v3738, %v3854
        %v3856 = vsub.f32 1.0, %v3855
        %v3857 = vmul.f32 %v3854, %v3856
        %v3858 = vadd.f32 %v3854, %v3857
        %vm3859 = vweird.f32 %v3738
        %vm3860 = vweird.f32 %v3854
        %vm3861 = vmor %vm3859, %vm3860
        %v3862 = vsel %vm3861, %v3854, %v3858
        %v3863 = vand.u32 2147483647, %v3738
        %vm3864 = vcmp.eq.f32.partialorder %v3863, 8.507059e+37
        %v3865 = vand.u32 %v3738, 2147483648
        %v3866 = vor.u32 1.1754944e-38, %v3865
        %v3867 = vsel %vm3864, %v3866, %v3862
        %v3868 = vmul.f32 1.0, %v3867
        %v3869 = vrcp.pop %v3739
        %v3870 = vmul.f32 %v3739, %v3869
        %v3871 = vsub.f32 1.0, %v3870
        %v3872 = vmul.f32 %v3869, %v3871
        %v3873 = vadd.f32 %v3869, %v3872
        %vm3874 = vweird.f32 %v3739
        %vm3875 = vweird.f32 %v3869
        %vm3876 = vmor %vm3874, %vm3875
        %v3877 = vsel %vm3876, %v3869, %v3873
        %v3878 = vand.u32 2147483647, %v3739
        %vm3879 = vcmp.eq.f32.partialorder %v3878, 8.507059e+37
        %v3880 = vand.u32 %v3739, 2147483648
        %v3881 = vor.u32 1.1754944e-38, %v3880
        %v3882 = vsel %vm3879, %v3881, %v3877
        %v3883 = vmul.f32 1.0, %v3882
        %v3884 = vrcp.pop %v3740
        %v3885 = vmul.f32 %v3740, %v3884
        %v3886 = vsub.f32 1.0, %v3885
        %v3887 = vmul.f32 %v3884, %v3886
        %v3888 = vadd.f32 %v3884, %v3887
        %vm3889 = vweird.f32 %v3740
        %vm3890 = vweird.f32 %v3884
        %vm3891 = vmor %vm3889, %vm3890
        %v3892 = vsel %vm3891, %v3884, %v3888
        %v3893 = vand.u32 2147483647, %v3740
        %vm3894 = vcmp.eq.f32.partialorder %v3893, 8.507059e+37
        %v3895 = vand.u32 %v3740, 2147483648
        %v3896 = vor.u32 1.1754944e-38, %v3895
        %v3897 = vsel %vm3894, %v3896, %v3892
        %v3898 = vmul.f32 1.0, %v3897
        %v3899 = vrcp.pop %v3741
        %v3900 = vmul.f32 %v3741, %v3899
        %v3901 = vsub.f32 1.0, %v3900
        %v3902 = vmul.f32 %v3899, %v3901
        %v3903 = vadd.f32 %v3899, %v3902
        %vm3904 = vweird.f32 %v3741
        %vm3905 = vweird.f32 %v3899
        %vm3906 = vmor %vm3904, %vm3905
        %v3907 = vsel %vm3906, %v3899, %v3903
        %v3908 = vand.u32 2147483647, %v3741
        %vm3909 = vcmp.eq.f32.partialorder %v3908, 8.507059e+37
        %v3910 = vand.u32 %v3741, 2147483648
        %v3911 = vor.u32 1.1754944e-38, %v3910
        %v3912 = vsel %vm3909, %v3911, %v3907
        %v3913 = vmul.f32 1.0, %v3912
        %v3914 = vrcp.pop %v3742
        %v3915 = vmul.f32 %v3742, %v3914
        %v3916 = vsub.f32 1.0, %v3915
        %v3917 = vmul.f32 %v3914, %v3916
        %v3918 = vadd.f32 %v3914, %v3917
        %vm3919 = vweird.f32 %v3742
        %vm3920 = vweird.f32 %v3914
        %vm3921 = vmor %vm3919, %vm3920
        %v3922 = vsel %vm3921, %v3914, %v3918
        %v3923 = vand.u32 2147483647, %v3742
        %vm3924 = vcmp.eq.f32.partialorder %v3923, 8.507059e+37
        %v3925 = vand.u32 %v3742, 2147483648
        %v3926 = vor.u32 1.1754944e-38, %v3925
        %v3927 = vsel %vm3924, %v3926, %v3922
        %v3928 = vmul.f32 1.0, %v3927
        %v3929 = vrcp.pop %v3743
        %v3930 = vmul.f32 %v3743, %v3929
        %v3931 = vsub.f32 1.0, %v3930
        %v3932 = vmul.f32 %v3929, %v3931
        %v3933 = vadd.f32 %v3929, %v3932
        %vm3934 = vweird.f32 %v3743
        %vm3935 = vweird.f32 %v3929
        %vm3936 = vmor %vm3934, %vm3935
        %v3937 = vsel %vm3936, %v3929, %v3933
        %v3938 = vand.u32 2147483647, %v3743
        %vm3939 = vcmp.eq.f32.partialorder %v3938, 8.507059e+37
        %v3940 = vand.u32 %v3743, 2147483648
        %v3941 = vor.u32 1.1754944e-38, %v3940
        %v3942 = vsel %vm3939, %v3941, %v3937
        %v3943 = vmul.f32 1.0, %v3942
        %v3944 = vrcp.pop %v3744
        %v3945 = vmul.f32 %v3744, %v3944
        %v3946 = vsub.f32 1.0, %v3945
        %v3947 = vmul.f32 %v3944, %v3946
        %v3948 = vadd.f32 %v3944, %v3947
        %vm3949 = vweird.f32 %v3744
        %vm3950 = vweird.f32 %v3944
        %vm3951 = vmor %vm3949, %vm3950
        %v3952 = vsel %vm3951, %v3944, %v3948
        %v3953 = vand.u32 2147483647, %v3744
        %vm3954 = vcmp.eq.f32.partialorder %v3953, 8.507059e+37
        %v3955 = vand.u32 %v3744, 2147483648
        %v3956 = vor.u32 1.1754944e-38, %v3955
        %v3957 = vsel %vm3954, %v3956, %v3952
        %v3958 = vmul.f32 1.0, %v3957
        %v3959 = vrcp.pop %v3745
        %v3960 = vmul.f32 %v3745, %v3959
        %v3961 = vsub.f32 1.0, %v3960
        %v3962 = vmul.f32 %v3959, %v3961
        %v3963 = vadd.f32 %v3959, %v3962
        %vm3964 = vweird.f32 %v3745
        %vm3965 = vweird.f32 %v3959
        %vm3966 = vmor %vm3964, %vm3965
        %v3967 = vsel %vm3966, %v3959, %v3963
        %v3968 = vand.u32 2147483647, %v3745
        %vm3969 = vcmp.eq.f32.partialorder %v3968, 8.507059e+37
        %v3970 = vand.u32 %v3745, 2147483648
        %v3971 = vor.u32 1.1754944e-38, %v3970
        %v3972 = vsel %vm3969, %v3971, %v3967
        %v3973 = vmul.f32 1.0, %v3972
        %v3974 = vrcp.pop %v3746
        %v3975 = vmul.f32 %v3746, %v3974
        %v3976 = vsub.f32 1.0, %v3975
        %v3977 = vmul.f32 %v3974, %v3976
        %v3978 = vadd.f32 %v3974, %v3977
        %vm3979 = vweird.f32 %v3746
        %vm3980 = vweird.f32 %v3974
        %vm3981 = vmor %vm3979, %vm3980
        %v3982 = vsel %vm3981, %v3974, %v3978
        %v3983 = vand.u32 2147483647, %v3746
        %vm3984 = vcmp.eq.f32.partialorder %v3983, 8.507059e+37
        %v3985 = vand.u32 %v3746, 2147483648
        %v3986 = vor.u32 1.1754944e-38, %v3985
        %v3987 = vsel %vm3984, %v3986, %v3982
        %v3988 = vmul.f32 1.0, %v3987
        %v3989 = vrcp.pop %v3747
        %v3990 = vmul.f32 %v3747, %v3989
        %v3991 = vsub.f32 1.0, %v3990
        %v3992 = vmul.f32 %v3989, %v3991
        %v3993 = vadd.f32 %v3989, %v3992
        %vm3994 = vweird.f32 %v3747
        %vm3995 = vweird.f32 %v3989
        %vm3996 = vmor %vm3994, %vm3995
        %v3997 = vsel %vm3996, %v3989, %v3993
        %v3998 = vand.u32 2147483647, %v3747
        %vm3999 = vcmp.eq.f32.partialorder %v3998, 8.507059e+37
        %v4000 = vand.u32 %v3747, 2147483648
        %v4001 = vor.u32 1.1754944e-38, %v4000
        %v4002 = vsel %vm3999, %v4001, %v3997
        %v4003 = vmul.f32 1.0, %v4002
        %v4004 = vrcp.pop %v3748
        %v4005 = vmul.f32 %v3748, %v4004
        %v4006 = vsub.f32 1.0, %v4005
        %v4007 = vmul.f32 %v4004, %v4006
        %v4008 = vadd.f32 %v4004, %v4007
        %vm4009 = vweird.f32 %v3748
        %vm4010 = vweird.f32 %v4004
        %vm4011 = vmor %vm4009, %vm4010
        %v4012 = vsel %vm4011, %v4004, %v4008
        %v4013 = vand.u32 2147483647, %v3748
        %vm4014 = vcmp.eq.f32.partialorder %v4013, 8.507059e+37
        %v4015 = vand.u32 %v3748, 2147483648
        %v4016 = vor.u32 1.1754944e-38, %v4015
        %v4017 = vsel %vm4014, %v4016, %v4012
        %v4018 = vmul.f32 1.0, %v4017
        %v4019 = vrcp.pop %v3749
        %v4020 = vmul.f32 %v3749, %v4019
        %v4021 = vsub.f32 1.0, %v4020
        %v4022 = vmul.f32 %v4019, %v4021
        %v4023 = vadd.f32 %v4019, %v4022
        %vm4024 = vweird.f32 %v3749
        %vm4025 = vweird.f32 %v4019
        %vm4026 = vmor %vm4024, %vm4025
        %v4027 = vsel %vm4026, %v4019, %v4023
        %v4028 = vand.u32 2147483647, %v3749
        %vm4029 = vcmp.eq.f32.partialorder %v4028, 8.507059e+37
        %v4030 = vand.u32 %v3749, 2147483648
        %v4031 = vor.u32 1.1754944e-38, %v4030
        %v4032 = vsel %vm4029, %v4031, %v4027
        %v4033 = vmul.f32 1.0, %v4032
        %v4034 = vrcp.pop %v3750
        %v4035 = vmul.f32 %v3750, %v4034
        %v4036 = vsub.f32 1.0, %v4035
        %v4037 = vmul.f32 %v4034, %v4036
        %v4038 = vadd.f32 %v4034, %v4037
        %vm4039 = vweird.f32 %v3750
        %vm4040 = vweird.f32 %v4034
        %vm4041 = vmor %vm4039, %vm4040
        %v4042 = vsel %vm4041, %v4034, %v4038
        %v4043 = vand.u32 2147483647, %v3750
        %vm4044 = vcmp.eq.f32.partialorder %v4043, 8.507059e+37
        %v4045 = vand.u32 %v3750, 2147483648
        %v4046 = vor.u32 1.1754944e-38, %v4045
        %v4047 = vsel %vm4044, %v4046, %v4042
        %v4048 = vmul.f32 1.0, %v4047
        %v4049 = vrcp.pop %v3751
        %v4050 = vmul.f32 %v3751, %v4049
        %v4051 = vsub.f32 1.0, %v4050
        %v4052 = vmul.f32 %v4049, %v4051
        %v4053 = vadd.f32 %v4049, %v4052
        %vm4054 = vweird.f32 %v3751
        %vm4055 = vweird.f32 %v4049
        %vm4056 = vmor %vm4054, %vm4055
        %v4057 = vsel %vm4056, %v4049, %v4053
        %v4058 = vand.u32 2147483647, %v3751
        %vm4059 = vcmp.eq.f32.partialorder %v4058, 8.507059e+37
        %v4060 = vand.u32 %v3751, 2147483648
        %v4061 = vor.u32 1.1754944e-38, %v4060
        %v4062 = vsel %vm4059, %v4061, %v4057
        %v4063 = vmul.f32 1.0, %v4062
        %v4064 = vrcp.pop %v3752
        %v4065 = vmul.f32 %v3752, %v4064
        %v4066 = vsub.f32 1.0, %v4065
        %v4067 = vmul.f32 %v4064, %v4066
        %v4068 = vadd.f32 %v4064, %v4067
        %vm4069 = vweird.f32 %v3752
        %vm4070 = vweird.f32 %v4064
        %vm4071 = vmor %vm4069, %vm4070
        %v4072 = vsel %vm4071, %v4064, %v4068
        %v4073 = vand.u32 2147483647, %v3752
        %vm4074 = vcmp.eq.f32.partialorder %v4073, 8.507059e+37
        %v4075 = vand.u32 %v3752, 2147483648
        %v4076 = vor.u32 1.1754944e-38, %v4075
        %v4077 = vsel %vm4074, %v4076, %v4072
        %v4078 = vmul.f32 1.0, %v4077
        %v4079 = vrcp.pop %v3753
        %v4080 = vmul.f32 %v3753, %v4079
        %v4081 = vsub.f32 1.0, %v4080
        %v4082 = vmul.f32 %v4079, %v4081
        %v4083 = vadd.f32 %v4079, %v4082
        %vm4084 = vweird.f32 %v3753
        %vm4085 = vweird.f32 %v4079
        %vm4086 = vmor %vm4084, %vm4085
        %v4087 = vsel %vm4086, %v4079, %v4083
        %v4088 = vand.u32 2147483647, %v3753
        %vm4089 = vcmp.eq.f32.partialorder %v4088, 8.507059e+37
        %v4090 = vand.u32 %v3753, 2147483648
        %v4091 = vor.u32 1.1754944e-38, %v4090
        %v4092 = vsel %vm4089, %v4091, %v4087
        %v4093 = vmul.f32 1.0, %v4092
        %v4094 = vrcp.pop %v3754
        %v4095 = vmul.f32 %v3754, %v4094
        %v4096 = vsub.f32 1.0, %v4095
        %v4097 = vmul.f32 %v4094, %v4096
        %v4098 = vadd.f32 %v4094, %v4097
        %vm4099 = vweird.f32 %v3754
        %vm4100 = vweird.f32 %v4094
        %vm4101 = vmor %vm4099, %vm4100
        %v4102 = vsel %vm4101, %v4094, %v4098
        %v4103 = vand.u32 2147483647, %v3754
        %vm4104 = vcmp.eq.f32.partialorder %v4103, 8.507059e+37
        %v4105 = vand.u32 %v3754, 2147483648
        %v4106 = vor.u32 1.1754944e-38, %v4105
        %v4107 = vsel %vm4104, %v4106, %v4102
        %v4108 = vmul.f32 1.0, %v4107
        %v4109 = vrcp.pop %v3755
        %v4110 = vmul.f32 %v3755, %v4109
        %v4111 = vsub.f32 1.0, %v4110
        %v4112 = vmul.f32 %v4109, %v4111
        %v4113 = vadd.f32 %v4109, %v4112
        %vm4114 = vweird.f32 %v3755
        %vm4115 = vweird.f32 %v4109
        %vm4116 = vmor %vm4114, %vm4115
        %v4117 = vsel %vm4116, %v4109, %v4113
        %v4118 = vand.u32 2147483647, %v3755
        %vm4119 = vcmp.eq.f32.partialorder %v4118, 8.507059e+37
        %v4120 = vand.u32 %v3755, 2147483648
        %v4121 = vor.u32 1.1754944e-38, %v4120
        %v4122 = vsel %vm4119, %v4121, %v4117
        %v4123 = vmul.f32 1.0, %v4122
        %v4124 = vrcp.pop %v3756
        %v4125 = vmul.f32 %v3756, %v4124
        %v4126 = vsub.f32 1.0, %v4125
        %v4127 = vmul.f32 %v4124, %v4126
        %v4128 = vadd.f32 %v4124, %v4127
        %vm4129 = vweird.f32 %v3756
        %vm4130 = vweird.f32 %v4124
        %vm4131 = vmor %vm4129, %vm4130
        %v4132 = vsel %vm4131, %v4124, %v4128
        %v4133 = vand.u32 2147483647, %v3756
        %vm4134 = vcmp.eq.f32.partialorder %v4133, 8.507059e+37
        %v4135 = vand.u32 %v3756, 2147483648
        %v4136 = vor.u32 1.1754944e-38, %v4135
        %v4137 = vsel %vm4134, %v4136, %v4132
        %v4138 = vmul.f32 1.0, %v4137
        %v4139 = vrcp.pop %v3757
        %v4140 = vmul.f32 %v3757, %v4139
        %v4141 = vsub.f32 1.0, %v4140
        %v4142 = vmul.f32 %v4139, %v4141
        %v4143 = vadd.f32 %v4139, %v4142
        %vm4144 = vweird.f32 %v3757
        %vm4145 = vweird.f32 %v4139
        %vm4146 = vmor %vm4144, %vm4145
        %v4147 = vsel %vm4146, %v4139, %v4143
        %v4148 = vand.u32 2147483647, %v3757
        %vm4149 = vcmp.eq.f32.partialorder %v4148, 8.507059e+37
        %v4150 = vand.u32 %v3757, 2147483648
        %v4151 = vor.u32 1.1754944e-38, %v4150
        %v4152 = vsel %vm4149, %v4151, %v4147
        %v4153 = vmul.f32 1.0, %v4152
        %v4154 = vrcp.pop %v3758
        %v4155 = vmul.f32 %v3758, %v4154
        %v4156 = vsub.f32 1.0, %v4155
        %v4157 = vmul.f32 %v4154, %v4156
        %v4158 = vadd.f32 %v4154, %v4157
        %vm4159 = vweird.f32 %v3758
        %vm4160 = vweird.f32 %v4154
        %vm4161 = vmor %vm4159, %vm4160
        %v4162 = vsel %vm4161, %v4154, %v4158
        %v4163 = vand.u32 2147483647, %v3758
        %vm4164 = vcmp.eq.f32.partialorder %v4163, 8.507059e+37
        %v4165 = vand.u32 %v3758, 2147483648
        %v4166 = vor.u32 1.1754944e-38, %v4165
        %v4167 = vsel %vm4164, %v4166, %v4162
        %v4168 = vmul.f32 1.0, %v4167
        %v4169 = vrcp.pop %v3759
        %v4170 = vmul.f32 %v3759, %v4169
        %v4171 = vsub.f32 1.0, %v4170
        %v4172 = vmul.f32 %v4169, %v4171
        %v4173 = vadd.f32 %v4169, %v4172
        %vm4174 = vweird.f32 %v3759
        %vm4175 = vweird.f32 %v4169
        %vm4176 = vmor %vm4174, %vm4175
        %v4177 = vsel %vm4176, %v4169, %v4173
        %v4178 = vand.u32 2147483647, %v3759
        %vm4179 = vcmp.eq.f32.partialorder %v4178, 8.507059e+37
        %v4180 = vand.u32 %v3759, 2147483648
        %v4181 = vor.u32 1.1754944e-38, %v4180
        %v4182 = vsel %vm4179, %v4181, %v4177
        %v4183 = vmul.f32 1.0, %v4182
        %v4184 = vrcp.pop %v3760
        %v4185 = vmul.f32 %v3760, %v4184
        %v4186 = vsub.f32 1.0, %v4185
        %v4187 = vmul.f32 %v4184, %v4186
        %v4188 = vadd.f32 %v4184, %v4187
        %vm4189 = vweird.f32 %v3760
        %vm4190 = vweird.f32 %v4184
        %vm4191 = vmor %vm4189, %vm4190
        %v4192 = vsel %vm4191, %v4184, %v4188
        %v4193 = vand.u32 2147483647, %v3760
        %vm4194 = vcmp.eq.f32.partialorder %v4193, 8.507059e+37
        %v4195 = vand.u32 %v3760, 2147483648
        %v4196 = vor.u32 1.1754944e-38, %v4195
        %v4197 = vsel %vm4194, %v4196, %v4192
        %v4198 = vmul.f32 1.0, %v4197
        %v4199 = vrcp.pop %v3761
        %v4200 = vmul.f32 %v3761, %v4199
        %v4201 = vsub.f32 1.0, %v4200
        %v4202 = vmul.f32 %v4199, %v4201
        %v4203 = vadd.f32 %v4199, %v4202
        %vm4204 = vweird.f32 %v3761
        %vm4205 = vweird.f32 %v4199
        %vm4206 = vmor %vm4204, %vm4205
        %v4207 = vsel %vm4206, %v4199, %v4203
        %v4208 = vand.u32 2147483647, %v3761
        %vm4209 = vcmp.eq.f32.partialorder %v4208, 8.507059e+37
        %v4210 = vand.u32 %v3761, 2147483648
        %v4211 = vor.u32 1.1754944e-38, %v4210
        %v4212 = vsel %vm4209, %v4211, %v4207
        %v4213 = vmul.f32 1.0, %v4212
        %v4214 = vrcp.pop %v3762
        %v4215 = vmul.f32 %v3762, %v4214
        %v4216 = vsub.f32 1.0, %v4215
        %v4217 = vmul.f32 %v4214, %v4216
        %v4218 = vadd.f32 %v4214, %v4217
        %vm4219 = vweird.f32 %v3762
        %vm4220 = vweird.f32 %v4214
        %vm4221 = vmor %vm4219, %vm4220
        %v4222 = vsel %vm4221, %v4214, %v4218
        %v4223 = vand.u32 2147483647, %v3762
        %vm4224 = vcmp.eq.f32.partialorder %v4223, 8.507059e+37
        %v4225 = vand.u32 %v3762, 2147483648
        %v4226 = vor.u32 1.1754944e-38, %v4225
        %v4227 = vsel %vm4224, %v4226, %v4222
        %v4228 = vmul.f32 1.0, %v4227
        %v4229 = vrcp.pop %v3763
        %v4230 = vmul.f32 %v3763, %v4229
        %v4231 = vsub.f32 1.0, %v4230
        %v4232 = vmul.f32 %v4229, %v4231
        %v4233 = vadd.f32 %v4229, %v4232
        %vm4234 = vweird.f32 %v3763
        %vm4235 = vweird.f32 %v4229
        %vm4236 = vmor %vm4234, %vm4235
        %v4237 = vsel %vm4236, %v4229, %v4233
        %v4238 = vand.u32 2147483647, %v3763
        %vm4239 = vcmp.eq.f32.partialorder %v4238, 8.507059e+37
        %v4240 = vand.u32 %v3763, 2147483648
        %v4241 = vor.u32 1.1754944e-38, %v4240
        %v4242 = vsel %vm4239, %v4241, %v4237
        %v4243 = vmul.f32 1.0, %v4242
        %v4244 = vmul.f32 %v3557, %v3778
        %v4245 = vmul.f32 %v3559, %v3793
        %v4246 = vmul.f32 %v3562, %v3808
        %v4247 = vmul.f32 %v3564, %v3823
        %v4248 = vmul.f32 %v3567, %v3838
        %v4249 = vmul.f32 %v3569, %v3853
        %v4250 = vmul.f32 %v3572, %v3868
        %v4251 = vmul.f32 %v3574, %v3883
        %v4252 = vmul.f32 %v3577, %v3898
        %v4253 = vmul.f32 %v3579, %v3913
        %v4254 = vmul.f32 %v3582, %v3928
        %v4255 = vmul.f32 %v3584, %v3943
        %v4256 = vmul.f32 %v3587, %v3958
        %v4257 = vmul.f32 %v3589, %v3973
        %v4258 = vmul.f32 %v3592, %v3988
        %v4259 = vmul.f32 %v3594, %v4003
        %v4260 = vmul.f32 %v3597, %v4018
        %v4261 = vmul.f32 %v3599, %v4033
        %v4262 = vmul.f32 %v3602, %v4048
        %v4263 = vmul.f32 %v3604, %v4063
        %v4264 = vmul.f32 %v3607, %v4078
        %v4265 = vmul.f32 %v3609, %v4093
        %v4266 = vmul.f32 %v3612, %v4108
        %v4267 = vmul.f32 %v3614, %v4123
        %v4268 = vmul.f32 %v3617, %v4138
        %v4269 = vmul.f32 %v3619, %v4153
        %v4270 = vmul.f32 %v3622, %v4168
        %v4271 = vmul.f32 %v3624, %v4183
        %v4272 = vmul.f32 %v3627, %v4198
        %v4273 = vmul.f32 %v3629, %v4213
        %v4274 = vmul.f32 %v3632, %v4228
        %v4275 = vmul.f32 %v3634, %v4243
        %vm4276 = vcmask 64512
        %4277 = vst.msk [vmem:[#allocation4] sm:$0xff] %vm4276, %v4244
        %4278 = vst.msk [vmem:[#allocation4 + $0x8] sm:$0xff] %vm4276, %v4245
        %4279 = vst.msk [vmem:[#allocation4 + $0x10] sm:$0xff] %vm4276, %v4246
        %4280 = vst.msk [vmem:[#allocation4 + $0x18] sm:$0xff] %vm4276, %v4247
        %4281 = vst.msk [vmem:[#allocation4 + $0x20] sm:$0xff] %vm4276, %v4248
        %4282 = vst.msk [vmem:[#allocation4 + $0x28] sm:$0xff] %vm4276, %v4249
        %4283 = vst.msk [vmem:[#allocation4 + $0x30] sm:$0xff] %vm4276, %v4250
        %4284 = vst.msk [vmem:[#allocation4 + $0x38] sm:$0xff] %vm4276, %v4251
        %4285 = vst.msk [vmem:[#allocation4 + $0x40] sm:$0xff] %vm4276, %v4252
        %4286 = vst.msk [vmem:[#allocation4 + $0x48] sm:$0xff] %vm4276, %v4253
        %4287 = vst.msk [vmem:[#allocation4 + $0x50] sm:$0xff] %vm4276, %v4254
        %4288 = vst.msk [vmem:[#allocation4 + $0x58] sm:$0xff] %vm4276, %v4255
        %4289 = vst.msk [vmem:[#allocation4 + $0x60] sm:$0xff] %vm4276, %v4256
        %4290 = vst.msk [vmem:[#allocation4 + $0x68] sm:$0xff] %vm4276, %v4257
        %4291 = vst.msk [vmem:[#allocation4 + $0x70] sm:$0xff] %vm4276, %v4258
        %4292 = vst.msk [vmem:[#allocation4 + $0x78] sm:$0xff] %vm4276, %v4259
        %4293 = vst.msk [vmem:[#allocation4 + $0x80] sm:$0xff] %vm4276, %v4260
        %4294 = vst.msk [vmem:[#allocation4 + $0x88] sm:$0xff] %vm4276, %v4261
        %4295 = vst.msk [vmem:[#allocation4 + $0x90] sm:$0xff] %vm4276, %v4262
        %4296 = vst.msk [vmem:[#allocation4 + $0x98] sm:$0xff] %vm4276, %v4263
        %4297 = vst.msk [vmem:[#allocation4 + $0xa0] sm:$0xff] %vm4276, %v4264
        %4298 = vst.msk [vmem:[#allocation4 + $0xa8] sm:$0xff] %vm4276, %v4265
        %4299 = vst.msk [vmem:[#allocation4 + $0xb0] sm:$0xff] %vm4276, %v4266
        %4300 = vst.msk [vmem:[#allocation4 + $0xb8] sm:$0xff] %vm4276, %v4267
        %4301 = vst.msk [vmem:[#allocation4 + $0xc0] sm:$0xff] %vm4276, %v4268
        %4302 = vst.msk [vmem:[#allocation4 + $0xc8] sm:$0xff] %vm4276, %v4269
        %4303 = vst.msk [vmem:[#allocation4 + $0xd0] sm:$0xff] %vm4276, %v4270
        %4304 = vst.msk [vmem:[#allocation4 + $0xd8] sm:$0xff] %vm4276, %v4271
        %4305 = vst.msk [vmem:[#allocation4 + $0xe0] sm:$0xff] %vm4276, %v4272
        %4306 = vst.msk [vmem:[#allocation4 + $0xe8] sm:$0xff] %vm4276, %v4273
        %4307 = vst.msk [vmem:[#allocation4 + $0xf0] sm:$0xff] %vm4276, %v4274
        %4308 = vst.msk [vmem:[#allocation4 + $0xf8] sm:$0xff] %vm4276, %v4275
        %v4309 = vld [vmem:[#allocation4] ss:$2 sm:$0xff]
        %s4310 = scalar_lea.vmem [#allocation4], 32
        %v4311 = vld [vmem:[%s4310] ss:$2 sm:$0xff]
        %s4312 = scalar_lea.vmem [#allocation4], 64
        %v4313 = vld [vmem:[%s4312] ss:$2 sm:$0xff]
        %s4314 = scalar_lea.vmem [#allocation4], 96
        %v4315 = vld [vmem:[%s4314] ss:$2 sm:$0xff]
        %s4316 = scalar_lea.vmem [#allocation4], 128
        %v4317 = vld [vmem:[%s4316] ss:$2 sm:$0xff]
        %s4318 = scalar_lea.vmem [#allocation4], 160
        %v4319 = vld [vmem:[%s4318] ss:$2 sm:$0xff]
        %s4320 = scalar_lea.vmem [#allocation4], 192
        %v4321 = vld [vmem:[%s4320] ss:$2 sm:$0xff]
        %s4322 = scalar_lea.vmem [#allocation4], 224
        %v4323 = vld [vmem:[%s4322] ss:$2 sm:$0xff]
        %v4324 = vld [vmem:[%s7 + $0x1] sm:$0x1]
        %vm4325 = vcmask 60416
        %4326 = vst.msk [vmem:[#allocation2] sm:$0xf] %vm4325, 0
        %vm4327 = vcmask 57344
        %vm4328 = vmand %vm4327, %vm560
        %v4329 = vld [vmem:[#allocation2 + $0x4] sm:$0x1]
        %v4330 = vsel %vm4328, 0, %v4329
        %4331 = vst [vmem:[#allocation2 + $0x4] sm:$0x1] %v4330
        %vm4332 = vcmask 60416
        %vm4333 = vmand %vm4332, %vm566
        %v4334 = vld [vmem:[#allocation2 + $0x24] sm:$0xf]
        %v4335 = vsel %vm4333, 0, %v4334
        %4336 = vst [vmem:[#allocation2 + $0x24] sm:$0xf] %v4335
        %vm4337 = vcmask 57344
        %4338 = vst.msk [vmem:[#allocation2 + $0x28] sm:$0x1] %vm4337, 0
        %v4339 = vpack.c.bf16 %v4309, %v4309
        %v4340 = vpack.c.bf16 %v4311, %v4311
        %v4341 = vpack.c.bf16 %v4313, %v4313
        %v4342 = vpack.c.bf16 %v4315, %v4315
        %v4343 = vpack.c.bf16 %v4317, %v4317
        %v4344 = vpack.c.bf16 %v4319, %v4319
        %v4345 = vpack.c.bf16 %v4321, %v4321
        %v4346 = vpack.c.bf16 %v4323, %v4323
        %v4348 = vshrl.u32 %v4339, 16
        %v4350 = vrot.slane %v4348, 7
        %v4351 = vshll.u32 %v4339, 16
        %v4353 = vor.u32 %v4350, %v4351
        %v4354 = vrot.slane %v4350, 4
        %v4356 = vshrl.u32 %v4340, 16
        %v4358 = vrot.slane %v4356, 7
        %v4359 = vshll.u32 %v4340, 16
        %v4361 = vor.u32 %v4358, %v4359
        %v4362 = vsel %vm607, %v4354, %v4361
        %v4363 = vrot.slane %v4358, 4
        %v4365 = vshrl.u32 %v4341, 16
        %v4367 = vrot.slane %v4365, 7
        %v4368 = vshll.u32 %v4341, 16
        %v4370 = vor.u32 %v4367, %v4368
        %v4371 = vsel %vm607, %v4363, %v4370
        %v4372 = vrot.slane %v4367, 4
        %v4374 = vshrl.u32 %v4342, 16
        %v4376 = vrot.slane %v4374, 7
        %v4377 = vshll.u32 %v4342, 16
        %v4379 = vor.u32 %v4376, %v4377
        %v4380 = vsel %vm607, %v4372, %v4379
        %v4381 = vrot.slane %v4376, 4
        %v4383 = vshrl.u32 %v4343, 16
        %v4385 = vrot.slane %v4383, 7
        %v4386 = vshll.u32 %v4343, 16
        %v4388 = vor.u32 %v4385, %v4386
        %v4389 = vsel %vm607, %v4381, %v4388
        %v4390 = vrot.slane %v4385, 4
        %v4392 = vshrl.u32 %v4344, 16
        %v4394 = vrot.slane %v4392, 7
        %v4395 = vshll.u32 %v4344, 16
        %v4397 = vor.u32 %v4394, %v4395
        %v4398 = vsel %vm607, %v4390, %v4397
        %v4399 = vrot.slane %v4394, 4
        %v4401 = vshrl.u32 %v4345, 16
        %v4403 = vrot.slane %v4401, 7
        %v4404 = vshll.u32 %v4345, 16
        %v4406 = vor.u32 %v4403, %v4404
        %v4407 = vsel %vm607, %v4399, %v4406
        %v4408 = vrot.slane %v4403, 4
        %v4410 = vshrl.u32 %v4346, 16
        %v4412 = vrot.slane %v4410, 7
        %v4413 = vshll.u32 %v4346, 16
        %v4415 = vor.u32 %v4412, %v4413
        %v4416 = vsel %vm607, %v4408, %v4415
        %v4417 = vrot.slane %v4412, 4
        %v4427 = vld [vmem:[#allocation2 + $0x4] sm:$0xf]
        %v4428 = vsel %vm4333, %v4353, %v4427
        %4429 = vst [vmem:[#allocation2 + $0x4] sm:$0xf] %v4428
        %4430 = vst.msk [vmem:[#allocation2 + $0x8] sm:$0xf] %vm4325, %v4362
        %4431 = vst.msk [vmem:[#allocation2 + $0xc] sm:$0xf] %vm4325, %v4371
        %4432 = vst.msk [vmem:[#allocation2 + $0x10] sm:$0xf] %vm4325, %v4380
        %4433 = vst.msk [vmem:[#allocation2 + $0x14] sm:$0xf] %vm4325, %v4389
        %4434 = vst.msk [vmem:[#allocation2 + $0x18] sm:$0xf] %vm4325, %v4398
        %4435 = vst.msk [vmem:[#allocation2 + $0x1c] sm:$0xf] %vm4325, %v4407
        %4436 = vst.msk [vmem:[#allocation2 + $0x20] sm:$0xf] %vm4325, %v4416
        %v4437 = vld [vmem:[#allocation2 + $0x24] sm:$0x1]
        %v4438 = vsel %vm4328, %v4417, %v4437
        %4439 = vst [vmem:[#allocation2 + $0x24] sm:$0x1] %v4438
        %vm4440 = vcmp.lt.s32.totalorder %v966, 0
        %v4441 = vsub.s32 0, %v966
        %v4442 = vsel %vm4440, %v4441, %v966
        %v4443 = vshrl.u32 %v4442, 3
        %v4444 = vand.u32 %v4442, 7
        %v4445 = vsub.s32 0, %v4444
        %v4446 = vsel %vm4440, %v4445, %v4444
        %vm4447 = vcmp.lt.s32.totalorder %v967, 0
        %v4448 = vsub.s32 0, %v967
        %v4449 = vsel %vm4447, %v4448, %v967
        %v4450 = vshrl.u32 %v4449, 3
        %v4451 = vand.u32 %v4449, 7
        %v4452 = vsub.s32 0, %v4451
        %v4453 = vsel %vm4447, %v4452, %v4451
        %vm4454 = vcmp.lt.s32.totalorder %v968, 0
        %v4455 = vsub.s32 0, %v968
        %v4456 = vsel %vm4454, %v4455, %v968
        %v4457 = vshrl.u32 %v4456, 3
        %v4458 = vand.u32 %v4456, 7
        %v4459 = vsub.s32 0, %v4458
        %v4460 = vsel %vm4454, %v4459, %v4458
        %vm4461 = vcmp.lt.s32.totalorder %v969, 0
        %v4462 = vsub.s32 0, %v969
        %v4463 = vsel %vm4461, %v4462, %v969
        %v4464 = vshrl.u32 %v4463, 3
        %v4465 = vand.u32 %v4463, 7
        %v4466 = vsub.s32 0, %v4465
        %v4467 = vsel %vm4461, %v4466, %v4465
        %vm4468 = vcmp.lt.s32.totalorder %v970, 0
        %v4469 = vsub.s32 0, %v970
        %v4470 = vsel %vm4468, %v4469, %v970
        %v4471 = vshrl.u32 %v4470, 3
        %v4472 = vand.u32 %v4470, 7
        %v4473 = vsub.s32 0, %v4472
        %v4474 = vsel %vm4468, %v4473, %v4472
        %vm4475 = vcmp.lt.s32.totalorder %v971, 0
        %v4476 = vsub.s32 0, %v971
        %v4477 = vsel %vm4475, %v4476, %v971
        %v4478 = vshrl.u32 %v4477, 3
        %v4479 = vand.u32 %v4477, 7
        %v4480 = vsub.s32 0, %v4479
        %v4481 = vsel %vm4475, %v4480, %v4479
        %vm4482 = vcmp.lt.s32.totalorder %v972, 0
        %v4483 = vsub.s32 0, %v972
        %v4484 = vsel %vm4482, %v4483, %v972
        %v4485 = vshrl.u32 %v4484, 3
        %v4486 = vand.u32 %v4484, 7
        %v4487 = vsub.s32 0, %v4486
        %v4488 = vsel %vm4482, %v4487, %v4486
        %vm4489 = vcmp.lt.s32.totalorder %v973, 0
        %v4490 = vsub.s32 0, %v973
        %v4491 = vsel %vm4489, %v4490, %v973
        %v4492 = vshrl.u32 %v4491, 3
        %v4493 = vand.u32 %v4491, 7
        %v4494 = vsub.s32 0, %v4493
        %v4495 = vsel %vm4489, %v4494, %v4493
        %vm4496 = vcmp.ne.s32.totalorder %v4446, 0
        %vm4497 = vcmp.ne.s32.totalorder %v4453, 0
        %vm4498 = vcmp.ne.s32.totalorder %v4460, 0
        %vm4499 = vcmp.ne.s32.totalorder %v4467, 0
        %vm4500 = vcmp.ne.s32.totalorder %v4474, 0
        %vm4501 = vcmp.ne.s32.totalorder %v4481, 0
        %vm4502 = vcmp.ne.s32.totalorder %v4488, 0
        %vm4503 = vcmp.ne.s32.totalorder %v4495, 0
        %vm4504 = vcmp.lt.s32.totalorder %v4446, 0
        %vm4505 = vcmp.lt.s32.totalorder %v4453, 0
        %vm4506 = vcmp.lt.s32.totalorder %v4460, 0
        %vm4507 = vcmp.lt.s32.totalorder %v4467, 0
        %vm4508 = vcmp.lt.s32.totalorder %v4474, 0
        %vm4509 = vcmp.lt.s32.totalorder %v4481, 0
        %vm4510 = vcmp.lt.s32.totalorder %v4488, 0
        %vm4511 = vcmp.lt.s32.totalorder %v4495, 0
        %vm4512 = vmand %vm4504, %vm4496
        %vm4513 = vmand %vm4505, %vm4497
        %vm4514 = vmand %vm4506, %vm4498
        %vm4515 = vmand %vm4507, %vm4499
        %vm4516 = vmand %vm4508, %vm4500
        %vm4517 = vmand %vm4509, %vm4501
        %vm4518 = vmand %vm4510, %vm4502
        %vm4519 = vmand %vm4511, %vm4503
        %v4520 = vadd.s32 %v4446, 8
        %v4521 = vadd.s32 %v4453, 8
        %v4522 = vadd.s32 %v4460, 8
        %v4523 = vadd.s32 %v4467, 8
        %v4524 = vadd.s32 %v4474, 8
        %v4525 = vadd.s32 %v4481, 8
        %v4526 = vadd.s32 %v4488, 8
        %v4527 = vadd.s32 %v4495, 8
        %v4528 = vsel %vm4512, %v4520, %v4446
        %v4529 = vsel %vm4513, %v4521, %v4453
        %v4530 = vsel %vm4514, %v4522, %v4460
        %v4531 = vsel %vm4515, %v4523, %v4467
        %v4532 = vsel %vm4516, %v4524, %v4474
        %v4533 = vsel %vm4517, %v4525, %v4481
        %v4534 = vsel %vm4518, %v4526, %v4488
        %v4535 = vsel %vm4519, %v4527, %v4495
        %vm4536 = vcmp.ne.s32.totalorder %v4528, 0
        %vm4537 = vcmp.ne.s32.totalorder %v4529, 0
        %vm4538 = vcmp.ne.s32.totalorder %v4530, 0
        %vm4539 = vcmp.ne.s32.totalorder %v4531, 0
        %vm4540 = vcmp.ne.s32.totalorder %v4532, 0
        %vm4541 = vcmp.ne.s32.totalorder %v4533, 0
        %vm4542 = vcmp.ne.s32.totalorder %v4534, 0
        %vm4543 = vcmp.ne.s32.totalorder %v4535, 0
        %vm4544 = vcmp.ne.s32.totalorder %v4528, 7
        %vm4545 = vcmp.ne.s32.totalorder %v4529, 7
        %vm4546 = vcmp.ne.s32.totalorder %v4530, 7
        %vm4547 = vcmp.ne.s32.totalorder %v4531, 7
        %vm4548 = vcmp.ne.s32.totalorder %v4532, 7
        %vm4549 = vcmp.ne.s32.totalorder %v4533, 7
        %vm4550 = vcmp.ne.s32.totalorder %v4534, 7
        %vm4551 = vcmp.ne.s32.totalorder %v4535, 7
        %v4552 = vld [vmem:[#allocation2] sm:$0xf]
        %v4553 = vld [vmem:[#allocation2 + $0x4] sm:$0xf]
        %v4554 = vld [vmem:[#allocation2 + $0x8] sm:$0xf]
        %v4555 = vld [vmem:[#allocation2 + $0xc] sm:$0xf]
        %v4556 = vld [vmem:[#allocation2 + $0x10] sm:$0xf]
        %v4557 = vld [vmem:[#allocation2 + $0x14] sm:$0xf]
        %v4558 = vld [vmem:[#allocation2 + $0x18] sm:$0xf]
        %v4559 = vld [vmem:[#allocation2 + $0x1c] sm:$0xf]
        %vm4560 = vmpackc.low %vm4536, %vm4536
        %vm4561 = vmpackc.low %vm4537, %vm4537
        %vm4562 = vmpackc.low %vm4538, %vm4538
        %vm4563 = vmpackc.low %vm4539, %vm4539
        %vm4564 = vmpackc.low %vm4540, %vm4540
        %vm4565 = vmpackc.low %vm4541, %vm4541
        %vm4566 = vmpackc.low %vm4542, %vm4542
        %vm4567 = vmpackc.low %vm4543, %vm4543
        %v4568 = vsel %vm4560, %v4552, 0
        %v4569 = vsel %vm4561, %v4553, 0
        %v4570 = vsel %vm4562, %v4554, 0
        %v4571 = vsel %vm4563, %v4555, 0
        %v4572 = vsel %vm4564, %v4556, 0
        %v4573 = vsel %vm4565, %v4557, 0
        %v4574 = vsel %vm4566, %v4558, 0
        %v4575 = vsel %vm4567, %v4559, 0
        %v4576 = vld [vmem:[#allocation2 + $0x20] sm:$0x1]
        %v4577 = vld [vmem:[#allocation2] sm:$0xe]
        %vm4578 = vmpackc.low %vm4544, %vm4544
        %vm4579 = vmpackc.low %vm4545, %vm4545
        %vm4580 = vmpackc.low %vm4546, %vm4546
        %vm4581 = vmpackc.low %vm4547, %vm4547
        %vm4582 = vmpackc.low %vm4548, %vm4548
        %vm4583 = vmpackc.low %vm4549, %vm4549
        %vm4584 = vmpackc.low %vm4550, %vm4550
        %vm4585 = vmpackc.low %vm4551, %vm4551
        %v4586 = vsel %vm4578, 65537, 0
        %v4587 = vsel %vm4579, 65537, 0
        %v4588 = vsel %vm4580, 65537, 0
        %v4589 = vsel %vm4581, 65537, 0
        %v4590 = vsel %vm4582, 65537, 0
        %v4591 = vsel %vm4583, 65537, 0
        %v4592 = vsel %vm4584, 65537, 0
        %v4593 = vsel %vm4585, 65537, 0
        %v4594 = vrot.slane %v4586, 7
        %v4595 = vrot.slane %v4594, 4
        %v4596 = vrot.slane %v4587, 7
        %v4597 = vsel %vm1610, %v4595, %v4596
        %v4598 = vrot.slane %v4596, 4
        %v4599 = vrot.slane %v4588, 7
        %v4600 = vsel %vm1610, %v4598, %v4599
        %v4601 = vrot.slane %v4599, 4
        %v4602 = vrot.slane %v4589, 7
        %v4603 = vsel %vm1610, %v4601, %v4602
        %v4604 = vrot.slane %v4602, 4
        %v4605 = vrot.slane %v4590, 7
        %v4606 = vsel %vm1610, %v4604, %v4605
        %v4607 = vrot.slane %v4605, 4
        %v4608 = vrot.slane %v4591, 7
        %v4609 = vsel %vm1610, %v4607, %v4608
        %v4610 = vrot.slane %v4608, 4
        %v4611 = vrot.slane %v4592, 7
        %v4612 = vsel %vm1610, %v4610, %v4611
        %v4613 = vrot.slane %v4611, 4
        %v4614 = vrot.slane %v4593, 7
        %v4615 = vsel %vm1610, %v4613, %v4614
        %v4616 = vrot.slane %v4614, 4
        %v4617 = vunpack.c.l.b16 %v4594
        %v4618 = vunpack.c.h.b16 %v4594
        %v4619 = vunpack.c.l.b16 0
        %v4620 = vunpack.c.h.b16 0
        %vm4621 = vcmp.ne.s32.totalorder %v4617, %v4619
        %vm4622 = vcmp.ne.s32.totalorder %v4618, %v4620
        %vm4623 = vmpackc.low %vm4622, %vm4621
        %v4624 = vunpack.c.l.b16 %v4597
        %v4625 = vunpack.c.h.b16 %v4597
        %v4626 = vunpack.c.l.b16 0
        %v4627 = vunpack.c.h.b16 0
        %vm4628 = vcmp.ne.s32.totalorder %v4624, %v4626
        %vm4629 = vcmp.ne.s32.totalorder %v4625, %v4627
        %vm4630 = vmpackc.low %vm4629, %vm4628
        %v4631 = vunpack.c.l.b16 %v4600
        %v4632 = vunpack.c.h.b16 %v4600
        %v4633 = vunpack.c.l.b16 0
        %v4634 = vunpack.c.h.b16 0
        %vm4635 = vcmp.ne.s32.totalorder %v4631, %v4633
        %vm4636 = vcmp.ne.s32.totalorder %v4632, %v4634
        %vm4637 = vmpackc.low %vm4636, %vm4635
        %v4638 = vunpack.c.l.b16 %v4603
        %v4639 = vunpack.c.h.b16 %v4603
        %v4640 = vunpack.c.l.b16 0
        %v4641 = vunpack.c.h.b16 0
        %vm4642 = vcmp.ne.s32.totalorder %v4638, %v4640
        %vm4643 = vcmp.ne.s32.totalorder %v4639, %v4641
        %vm4644 = vmpackc.low %vm4643, %vm4642
        %v4645 = vunpack.c.l.b16 %v4606
        %v4646 = vunpack.c.h.b16 %v4606
        %v4647 = vunpack.c.l.b16 0
        %v4648 = vunpack.c.h.b16 0
        %vm4649 = vcmp.ne.s32.totalorder %v4645, %v4647
        %vm4650 = vcmp.ne.s32.totalorder %v4646, %v4648
        %vm4651 = vmpackc.low %vm4650, %vm4649
        %v4652 = vunpack.c.l.b16 %v4609
        %v4653 = vunpack.c.h.b16 %v4609
        %v4654 = vunpack.c.l.b16 0
        %v4655 = vunpack.c.h.b16 0
        %vm4656 = vcmp.ne.s32.totalorder %v4652, %v4654
        %vm4657 = vcmp.ne.s32.totalorder %v4653, %v4655
        %vm4658 = vmpackc.low %vm4657, %vm4656
        %v4659 = vunpack.c.l.b16 %v4612
        %v4660 = vunpack.c.h.b16 %v4612
        %v4661 = vunpack.c.l.b16 0
        %v4662 = vunpack.c.h.b16 0
        %vm4663 = vcmp.ne.s32.totalorder %v4659, %v4661
        %vm4664 = vcmp.ne.s32.totalorder %v4660, %v4662
        %vm4665 = vmpackc.low %vm4664, %vm4663
        %v4666 = vunpack.c.l.b16 %v4615
        %v4667 = vunpack.c.h.b16 %v4615
        %v4668 = vunpack.c.l.b16 0
        %v4669 = vunpack.c.h.b16 0
        %vm4670 = vcmp.ne.s32.totalorder %v4666, %v4668
        %vm4671 = vcmp.ne.s32.totalorder %v4667, %v4669
        %vm4672 = vmpackc.low %vm4671, %vm4670
        %v4673 = vunpack.c.l.b16 %v4616
        %v4674 = vunpack.c.h.b16 %v4616
        %v4675 = vunpack.c.l.b16 0
        %v4676 = vunpack.c.h.b16 0
        %vm4677 = vcmp.ne.s32.totalorder %v4673, %v4675
        %vm4678 = vcmp.ne.s32.totalorder %v4674, %v4676
        %vm4679 = vmpackc.low %vm4678, %vm4677
        %v4680 = vsel %vm4623, %v4577, 0
        %v4681 = vsel %vm4630, %v4553, 0
        %v4682 = vsel %vm4637, %v4554, 0
        %v4683 = vsel %vm4644, %v4555, 0
        %v4684 = vsel %vm4651, %v4556, 0
        %v4685 = vsel %vm4658, %v4557, 0
        %v4686 = vsel %vm4665, %v4558, 0
        %v4687 = vsel %vm4672, %v4559, 0
        %v4688 = vsel %vm4679, %v4576, 0
        %v4689 = vld [vmem:[#allocation2 + $0x20] sm:$0xf]
        %v4690 = vsel %vm4560, %v4553, 0
        %v4691 = vsel %vm4561, %v4554, 0
        %v4692 = vsel %vm4562, %v4555, 0
        %v4693 = vsel %vm4563, %v4556, 0
        %v4694 = vsel %vm4564, %v4557, 0
        %v4695 = vsel %vm4565, %v4558, 0
        %v4696 = vsel %vm4566, %v4559, 0
        %v4697 = vsel %vm4567, %v4689, 0
        %v4698 = vld [vmem:[#allocation2 + $0x24] sm:$0x1]
        %v4699 = vld [vmem:[#allocation2 + $0x4] sm:$0xe]
        %v4700 = vsel %vm4623, %v4699, 0
        %v4701 = vsel %vm4630, %v4554, 0
        %v4702 = vsel %vm4637, %v4555, 0
        %v4703 = vsel %vm4644, %v4556, 0
        %v4704 = vsel %vm4651, %v4557, 0
        %v4705 = vsel %vm4658, %v4558, 0
        %v4706 = vsel %vm4665, %v4559, 0
        %v4707 = vsel %vm4672, %v4689, 0
        %v4708 = vsel %vm4679, %v4698, 0
        %v4709 = vld [vmem:[#allocation2 + $0x24] sm:$0xf]
        %v4710 = vsel %vm4560, %v4554, 0
        %v4711 = vsel %vm4561, %v4555, 0
        %v4712 = vsel %vm4562, %v4556, 0
        %v4713 = vsel %vm4563, %v4557, 0
        %v4714 = vsel %vm4564, %v4558, 0
        %v4715 = vsel %vm4565, %v4559, 0
        %v4716 = vsel %vm4566, %v4689, 0
        %v4717 = vsel %vm4567, %v4709, 0
        %v4718 = vld [vmem:[#allocation2 + $0x28] sm:$0x1]
        %v4719 = vld [vmem:[#allocation2 + $0x8] sm:$0xe]
        %v4720 = vsel %vm4623, %v4719, 0
        %v4721 = vsel %vm4630, %v4555, 0
        %v4722 = vsel %vm4637, %v4556, 0
        %v4723 = vsel %vm4644, %v4557, 0
        %v4724 = vsel %vm4651, %v4558, 0
        %v4725 = vsel %vm4658, %v4559, 0
        %v4726 = vsel %vm4665, %v4689, 0
        %v4727 = vsel %vm4672, %v4709, 0
        %v4728 = vsel %vm4679, %v4718, 0
        %v4737 = vunpack.c.l.b16 %v4568
        %v4738 = vunpack.c.l.b16 %v4569
        %v4739 = vunpack.c.l.b16 %v4570
        %v4740 = vunpack.c.l.b16 %v4571
        %v4741 = vunpack.c.l.b16 %v4572
        %v4742 = vunpack.c.l.b16 %v4573
        %v4743 = vunpack.c.l.b16 %v4574
        %v4744 = vunpack.c.l.b16 %v4575
        %v4745 = vpack.c.b16 %v4738, %v4737
        %v4746 = vpack.c.b16 %v4740, %v4739
        %v4747 = vpack.c.b16 %v4742, %v4741
        %v4748 = vpack.c.b16 %v4744, %v4743
        %v4758 = vunpack.c.l.b16 %v4552
        %v4759 = vunpack.c.l.b16 %v4553
        %v4760 = vunpack.c.l.b16 %v4554
        %v4761 = vunpack.c.l.b16 %v4555
        %v4762 = vunpack.c.l.b16 %v4556
        %v4763 = vunpack.c.l.b16 %v4557
        %v4764 = vunpack.c.l.b16 %v4558
        %v4765 = vunpack.c.l.b16 %v4559
        %v4766 = vunpack.c.l.b16 %v4576
        %v4767 = vpack.c.b16 %v4759, %v4758
        %v4768 = vpack.c.b16 %v4761, %v4760
        %v4769 = vpack.c.b16 %v4763, %v4762
        %v4770 = vpack.c.b16 %v4765, %v4764
        %v4771 = vpack.c.b16 %v4766, %v4766
        %v4773 = vshrl.u32 %v4767, 16
        %v4775 = vshll.u32 %v4767, 16
        %v4777 = vrot.slane %v4775, 1
        %v4778 = vor.u32 %v4773, %v4777
        %v4780 = vshll.u32 %v4768, 16
        %v4782 = vrot.slane %v4780, 1
        %v4783 = vsel %vm2271, %v4778, %v4782
        %v4784 = vshrl.u32 %v4768, 16
        %v4786 = vor.u32 %v4784, %v4782
        %v4788 = vshll.u32 %v4769, 16
        %v4790 = vrot.slane %v4788, 1
        %v4791 = vsel %vm2271, %v4786, %v4790
        %v4792 = vshrl.u32 %v4769, 16
        %v4794 = vor.u32 %v4792, %v4790
        %v4796 = vshll.u32 %v4770, 16
        %v4798 = vrot.slane %v4796, 1
        %v4799 = vsel %vm2271, %v4794, %v4798
        %v4800 = vshrl.u32 %v4770, 16
        %v4802 = vor.u32 %v4800, %v4798
        %v4804 = vshll.u32 %v4771, 16
        %v4806 = vrot.slane %v4804, 1
        %v4807 = vsel %vm2271, %v4802, %v4806
        %4808 = vrot.lane.b32.xlu0 %v4783, 8
        %v4809 = vpop.permute.xlu0 %4808
        %4810 = vrot.lane.b32.xlu0 %v4791, 8
        %v4811 = vpop.permute.xlu0 %4810
        %4812 = vrot.lane.b32.xlu0 %v4799, 8
        %v4813 = vpop.permute.xlu0 %4812
        %4814 = vrot.lane.b32.xlu0 %v4807, 8
        %v4815 = vpop.permute.xlu0 %4814
        %v4825 = vunpack.c.l.b16 %v4680
        %v4826 = vunpack.c.l.b16 %v4681
        %v4827 = vunpack.c.l.b16 %v4682
        %v4828 = vunpack.c.l.b16 %v4683
        %v4829 = vunpack.c.l.b16 %v4684
        %v4830 = vunpack.c.l.b16 %v4685
        %v4831 = vunpack.c.l.b16 %v4686
        %v4832 = vunpack.c.l.b16 %v4687
        %v4833 = vunpack.c.l.b16 %v4688
        %v4834 = vpack.c.b16 %v4826, %v4825
        %v4835 = vpack.c.b16 %v4828, %v4827
        %v4836 = vpack.c.b16 %v4830, %v4829
        %v4837 = vpack.c.b16 %v4832, %v4831
        %v4838 = vpack.c.b16 %v4833, %v4833
        %v4839 = vrot.slane %v4834, 1
        %v4840 = vrot.slane %v4835, 1
        %v4841 = vsel %vm2519, %v4839, %v4840
        %v4842 = vrot.slane %v4836, 1
        %v4843 = vsel %vm2519, %v4840, %v4842
        %v4844 = vrot.slane %v4837, 1
        %v4845 = vsel %vm2519, %v4842, %v4844
        %v4846 = vrot.slane %v4838, 1
        %v4847 = vsel %vm2519, %v4844, %v4846
        %4848 = vrot.lane.b32.xlu0 %v4841, 16
        %v4849 = vpop.permute.xlu0 %4848
        %4850 = vrot.lane.b32.xlu0 %v4843, 16
        %v4851 = vpop.permute.xlu0 %4850
        %4852 = vrot.lane.b32.xlu0 %v4845, 16
        %v4853 = vpop.permute.xlu0 %4852
        %4854 = vrot.lane.b32.xlu0 %v4847, 16
        %v4855 = vpop.permute.xlu0 %4854
        %v4864 = vunpack.c.l.b16 %v4690
        %v4865 = vunpack.c.l.b16 %v4691
        %v4866 = vunpack.c.l.b16 %v4692
        %v4867 = vunpack.c.l.b16 %v4693
        %v4868 = vunpack.c.l.b16 %v4694
        %v4869 = vunpack.c.l.b16 %v4695
        %v4870 = vunpack.c.l.b16 %v4696
        %v4871 = vunpack.c.l.b16 %v4697
        %v4872 = vpack.c.b16 %v4865, %v4864
        %v4873 = vpack.c.b16 %v4867, %v4866
        %v4874 = vpack.c.b16 %v4869, %v4868
        %v4875 = vpack.c.b16 %v4871, %v4870
        %4876 = vrot.lane.b32.xlu0 %v4872, 24
        %v4877 = vpop.permute.xlu0 %4876
        %4878 = vrot.lane.b32.xlu0 %v4873, 24
        %v4879 = vpop.permute.xlu0 %4878
        %4880 = vrot.lane.b32.xlu0 %v4874, 24
        %v4881 = vpop.permute.xlu0 %4880
        %4882 = vrot.lane.b32.xlu0 %v4875, 24
        %v4883 = vpop.permute.xlu0 %4882
        %v4886 = vunpack.c.l.b16 %v4689
        %v4887 = vunpack.c.l.b16 %v4698
        %v4888 = vpack.c.b16 %v4760, %v4759
        %v4889 = vpack.c.b16 %v4762, %v4761
        %v4890 = vpack.c.b16 %v4764, %v4763
        %v4891 = vpack.c.b16 %v4886, %v4765
        %v4892 = vpack.c.b16 %v4887, %v4887
        %v4894 = vshrl.u32 %v4888, 16
        %v4896 = vshll.u32 %v4888, 16
        %v4898 = vrot.slane %v4896, 1
        %v4899 = vor.u32 %v4894, %v4898
        %v4901 = vshll.u32 %v4889, 16
        %v4903 = vrot.slane %v4901, 1
        %v4904 = vsel %vm2271, %v4899, %v4903
        %v4905 = vshrl.u32 %v4889, 16
        %v4907 = vor.u32 %v4905, %v4903
        %v4909 = vshll.u32 %v4890, 16
        %v4911 = vrot.slane %v4909, 1
        %v4912 = vsel %vm2271, %v4907, %v4911
        %v4913 = vshrl.u32 %v4890, 16
        %v4915 = vor.u32 %v4913, %v4911
        %v4917 = vshll.u32 %v4891, 16
        %v4919 = vrot.slane %v4917, 1
        %v4920 = vsel %vm2271, %v4915, %v4919
        %v4921 = vshrl.u32 %v4891, 16
        %v4923 = vor.u32 %v4921, %v4919
        %v4925 = vshll.u32 %v4892, 16
        %v4927 = vrot.slane %v4925, 1
        %v4928 = vsel %vm2271, %v4923, %v4927
        %4929 = vrot.lane.b32.xlu0 %v4904, 32
        %v4930 = vpop.permute.xlu0 %4929
        %4931 = vrot.lane.b32.xlu0 %v4912, 32
        %v4932 = vpop.permute.xlu0 %4931
        %4933 = vrot.lane.b32.xlu0 %v4920, 32
        %v4934 = vpop.permute.xlu0 %4933
        %4935 = vrot.lane.b32.xlu0 %v4928, 32
        %v4936 = vpop.permute.xlu0 %4935
        %v4946 = vunpack.c.l.b16 %v4700
        %v4947 = vunpack.c.l.b16 %v4701
        %v4948 = vunpack.c.l.b16 %v4702
        %v4949 = vunpack.c.l.b16 %v4703
        %v4950 = vunpack.c.l.b16 %v4704
        %v4951 = vunpack.c.l.b16 %v4705
        %v4952 = vunpack.c.l.b16 %v4706
        %v4953 = vunpack.c.l.b16 %v4707
        %v4954 = vunpack.c.l.b16 %v4708
        %v4955 = vpack.c.b16 %v4947, %v4946
        %v4956 = vpack.c.b16 %v4949, %v4948
        %v4957 = vpack.c.b16 %v4951, %v4950
        %v4958 = vpack.c.b16 %v4953, %v4952
        %v4959 = vpack.c.b16 %v4954, %v4954
        %v4960 = vrot.slane %v4955, 1
        %v4961 = vrot.slane %v4956, 1
        %v4962 = vsel %vm2519, %v4960, %v4961
        %v4963 = vrot.slane %v4957, 1
        %v4964 = vsel %vm2519, %v4961, %v4963
        %v4965 = vrot.slane %v4958, 1
        %v4966 = vsel %vm2519, %v4963, %v4965
        %v4967 = vrot.slane %v4959, 1
        %v4968 = vsel %vm2519, %v4965, %v4967
        %4969 = vrot.lane.b32.xlu0 %v4962, 40
        %v4970 = vpop.permute.xlu0 %4969
        %4971 = vrot.lane.b32.xlu0 %v4964, 40
        %v4972 = vpop.permute.xlu0 %4971
        %4973 = vrot.lane.b32.xlu0 %v4966, 40
        %v4974 = vpop.permute.xlu0 %4973
        %4975 = vrot.lane.b32.xlu0 %v4968, 40
        %v4976 = vpop.permute.xlu0 %4975
        %v4985 = vunpack.c.l.b16 %v4710
        %v4986 = vunpack.c.l.b16 %v4711
        %v4987 = vunpack.c.l.b16 %v4712
        %v4988 = vunpack.c.l.b16 %v4713
        %v4989 = vunpack.c.l.b16 %v4714
        %v4990 = vunpack.c.l.b16 %v4715
        %v4991 = vunpack.c.l.b16 %v4716
        %v4992 = vunpack.c.l.b16 %v4717
        %v4993 = vpack.c.b16 %v4986, %v4985
        %v4994 = vpack.c.b16 %v4988, %v4987
        %v4995 = vpack.c.b16 %v4990, %v4989
        %v4996 = vpack.c.b16 %v4992, %v4991
        %4997 = vrot.lane.b32.xlu0 %v4993, 48
        %v4998 = vpop.permute.xlu0 %4997
        %4999 = vrot.lane.b32.xlu0 %v4994, 48
        %v5000 = vpop.permute.xlu0 %4999
        %5001 = vrot.lane.b32.xlu0 %v4995, 48
        %v5002 = vpop.permute.xlu0 %5001
        %5003 = vrot.lane.b32.xlu0 %v4996, 48
        %v5004 = vpop.permute.xlu0 %5003
        %v5007 = vunpack.c.l.b16 %v4709
        %v5008 = vunpack.c.l.b16 %v4718
        %v5009 = vpack.c.b16 %v5007, %v4886
        %v5010 = vpack.c.b16 %v5008, %v5008
        %v5012 = vshll.u32 %v5009, 16
        %v5014 = vrot.slane %v5012, 1
        %v5015 = vsel %vm2271, %v4802, %v5014
        %v5016 = vshrl.u32 %v5009, 16
        %v5018 = vor.u32 %v5016, %v5014
        %v5020 = vshll.u32 %v5010, 16
        %v5022 = vrot.slane %v5020, 1
        %v5023 = vsel %vm2271, %v5018, %v5022
        %5024 = vrot.lane.b32.xlu0 %v4791, 56
        %v5025 = vpop.permute.xlu0 %5024
        %5026 = vrot.lane.b32.xlu0 %v4799, 56
        %v5027 = vpop.permute.xlu0 %5026
        %5028 = vrot.lane.b32.xlu0 %v5015, 56
        %v5029 = vpop.permute.xlu0 %5028
        %5030 = vrot.lane.b32.xlu0 %v5023, 56
        %v5031 = vpop.permute.xlu0 %5030
        %v5041 = vunpack.c.l.b16 %v4720
        %v5042 = vunpack.c.l.b16 %v4721
        %v5043 = vunpack.c.l.b16 %v4722
        %v5044 = vunpack.c.l.b16 %v4723
        %v5045 = vunpack.c.l.b16 %v4724
        %v5046 = vunpack.c.l.b16 %v4725
        %v5047 = vunpack.c.l.b16 %v4726
        %v5048 = vunpack.c.l.b16 %v4727
        %v5049 = vunpack.c.l.b16 %v4728
        %v5050 = vpack.c.b16 %v5042, %v5041
        %v5051 = vpack.c.b16 %v5044, %v5043
        %v5052 = vpack.c.b16 %v5046, %v5045
        %v5053 = vpack.c.b16 %v5048, %v5047
        %v5054 = vpack.c.b16 %v5049, %v5049
        %v5055 = vrot.slane %v5050, 1
        %v5056 = vrot.slane %v5051, 1
        %v5057 = vsel %vm2519, %v5055, %v5056
        %v5058 = vrot.slane %v5052, 1
        %v5059 = vsel %vm2519, %v5056, %v5058
        %v5060 = vrot.slane %v5053, 1
        %v5061 = vsel %vm2519, %v5058, %v5060
        %v5062 = vrot.slane %v5054, 1
        %v5063 = vsel %vm2519, %v5060, %v5062
        %5064 = vrot.lane.b32.xlu0 %v5057, 64
        %v5065 = vpop.permute.xlu0 %5064
        %5066 = vrot.lane.b32.xlu0 %v5059, 64
        %v5067 = vpop.permute.xlu0 %5066
        %5068 = vrot.lane.b32.xlu0 %v5061, 64
        %v5069 = vpop.permute.xlu0 %5068
        %5070 = vrot.lane.b32.xlu0 %v5063, 64
        %v5071 = vpop.permute.xlu0 %5070
        %v5074 = vsel %vm4276, %v4745, %v4809
        %v5077 = vsel %vm4276, %v4746, %v4811
        %v5080 = vsel %vm4276, %v4747, %v4813
        %v5083 = vsel %vm4276, %v4748, %v4815
        %vm5084 = vcmask 130048
        %v5086 = vsel %vm5084, %v5074, %v4849
        %v5088 = vsel %vm5084, %v5077, %v4851
        %v5090 = vsel %vm5084, %v5080, %v4853
        %v5092 = vsel %vm5084, %v5083, %v4855
        %v5094 = vsel %vm3458, %v5086, %v4877
        %v5096 = vsel %vm3458, %v5088, %v4879
        %v5098 = vsel %vm3458, %v5090, %v4881
        %v5100 = vsel %vm3458, %v5092, %v4883
        %vm5101 = vcmask 261120
        %v5103 = vsel %vm5101, %v5094, %v4930
        %v5105 = vsel %vm5101, %v5096, %v4932
        %v5107 = vsel %vm5101, %v5098, %v4934
        %v5109 = vsel %vm5101, %v5100, %v4936
        %vm5110 = vcmask 326656
        %v5112 = vsel %vm5110, %v5103, %v4970
        %v5114 = vsel %vm5110, %v5105, %v4972
        %v5116 = vsel %vm5110, %v5107, %v4974
        %v5118 = vsel %vm5110, %v5109, %v4976
        %vm5119 = vcmask 392192
        %v5121 = vsel %vm5119, %v5112, %v4998
        %v5123 = vsel %vm5119, %v5114, %v5000
        %v5125 = vsel %vm5119, %v5116, %v5002
        %v5127 = vsel %vm5119, %v5118, %v5004
        %vm5128 = vcmask 457728
        %v5130 = vsel %vm5128, %v5121, %v5025
        %v5132 = vsel %vm5128, %v5123, %v5027
        %v5134 = vsel %vm5128, %v5125, %v5029
        %v5136 = vsel %vm5128, %v5127, %v5031
        %vm5137 = vcmask 523264
        %v5139 = vsel %vm5137, %v5130, %v5065
        %v5141 = vsel %vm5137, %v5132, %v5067
        %v5143 = vsel %vm5137, %v5134, %v5069
        %v5145 = vsel %vm5137, %v5136, %v5071
        %v5146 = vld [vmem:[%s5] sm:$0xf]
        %v5147 = vld [vmem:[%s5 + $0x4] sm:$0xf]
        %v5148 = vld [vmem:[%s5 + $0x8] sm:$0xf]
        %v5149 = vld [vmem:[%s5 + $0xc] sm:$0xf]
        %v5150 = vld [vmem:[%s5 + $0x10] sm:$0xf]
        %v5151 = vld [vmem:[%s5 + $0x14] sm:$0xf]
        %v5152 = vld [vmem:[%s5 + $0x18] sm:$0xf]
        %v5153 = vld [vmem:[%s5 + $0x1c] sm:$0xf]
        %v5154 = vld [vmem:[%s5 + $0x20] sm:$0xf]
        %v5155 = vperm.slane %v4324, 0
        %v5165 = vunpack.c.l.b16 %v5146
        %v5166 = vunpack.c.l.b16 %v5147
        %v5167 = vunpack.c.l.b16 %v5148
        %v5168 = vunpack.c.l.b16 %v5149
        %v5169 = vunpack.c.l.b16 %v5150
        %v5170 = vunpack.c.l.b16 %v5151
        %v5171 = vunpack.c.l.b16 %v5152
        %v5172 = vunpack.c.l.b16 %v5153
        %v5173 = vunpack.c.l.b16 %v5154
        %v5174 = vpack.c.b16 %v5166, %v5165
        %v5175 = vpack.c.b16 %v5168, %v5167
        %v5176 = vpack.c.b16 %v5170, %v5169
        %v5177 = vpack.c.b16 %v5172, %v5171
        %v5178 = vpack.c.b16 %v5173, %v5173
        %vm5183 = vcmask 588800
        %v5184 = vsel %vm5183, %v5139, 0
        %v5186 = vsel %vm5183, %v5141, 0
        %v5188 = vsel %vm5183, %v5143, 0
        %v5190 = vsel %vm5183, %v5145, 0
        %vm5192 = vcmask 1043456
        %v5194 = vsel %vm5192, %v5178, 0
        %5196 = vmatpush.bf16.msra.mxu0 0
        %5197 = vmatpush.bf16.msra.mxu0 0
        %5198 = vmatpush.bf16.msra.mxu0 0
        %5199 = vmatpush.bf16.msra.mxu0 %v5194
        %5200 = vmatpush.bf16.msra.mxu0 %v5177
        %5201 = vmatpush.bf16.msra.mxu0 %v5176
        %5202 = vmatpush.bf16.msra.mxu0 %v5175
        %5203 = vmatpush.bf16.msra.mxu0 %v5174
        %5204 = vmatmul.bf16.gmra.mxu0 %v5184
        %v5205 = vpop.f32.mrf.mxu0
        %v5206 = vadd.f32 %v5155, %v5205
        %v5207 = vpop.f32.mrf.mxu0
        %v5208 = vadd.f32 %v5155, %v5207
        %5209 = vmatmul.bf16.gmra.mxu0 %v5186
        %v5210 = vpop.f32.mrf.mxu0
        %v5211 = vadd.f32 %v5155, %v5210
        %v5212 = vpop.f32.mrf.mxu0
        %v5213 = vadd.f32 %v5155, %v5212
        %5214 = vmatmul.bf16.gmra.mxu0 %v5188
        %v5215 = vpop.f32.mrf.mxu0
        %v5216 = vadd.f32 %v5155, %v5215
        %v5217 = vpop.f32.mrf.mxu0
        %v5218 = vadd.f32 %v5155, %v5217
        %5219 = vmatmul.bf16.gmra.mxu0 %v5190
        %v5220 = vpop.f32.mrf.mxu0
        %v5221 = vadd.f32 %v5155, %v5220
        %v5222 = vpop.f32.mrf.mxu0
        %v5223 = vadd.f32 %v5155, %v5222
        %5224 = vdwg.mxu0
        %5225 = vst.msk [vmem:[#allocation4] sm:$0xff] %vm4276, %v5206
        %5226 = vst.msk [vmem:[#allocation4 + $0x8] sm:$0xff] %vm4276, %v5208
        %5227 = vst.msk [vmem:[#allocation4 + $0x10] sm:$0xff] %vm4276, %v5211
        %5228 = vst.msk [vmem:[#allocation4 + $0x18] sm:$0xff] %vm4276, %v5213
        %5229 = vst.msk [vmem:[#allocation4 + $0x20] sm:$0xff] %vm4276, %v5216
        %5230 = vst.msk [vmem:[#allocation4 + $0x28] sm:$0xff] %vm4276, %v5218
        %5231 = vst.msk [vmem:[#allocation4 + $0x30] sm:$0xff] %vm4276, %v5221
        %5232 = vst.msk [vmem:[#allocation4 + $0x38] sm:$0xff] %vm4276, %v5223
        %v5233 = vld [vmem:[#allocation4] ss:$2 sm:$0xf]
        %s5234 = scalar_lea.vmem [#allocation4], 16
        %v5235 = vld [vmem:[%s5234] ss:$2 sm:$0xf]
        %v5236 = vld [vmem:[%s4310] ss:$2 sm:$0xf]
        %s5237 = scalar_lea.vmem [#allocation4], 48
        %v5238 = vld [vmem:[%s5237] ss:$2 sm:$0xf]
        %v5240 = vrot.slane %v5235, 4
        %v5243 = vrot.slane %v5238, 4
        %v5245 = vsel %vm5192, %v5233, %v5240
        %v5246 = vsel %vm5192, %v5236, %v5243
        %v5247 = vpack.c.bf16 %v5246, %v5245
        %v5248 = vld [vmem:[%s6] sm:$0xf]
        %v5249 = vld [vmem:[%s7 + $0x2] sm:$0x1]
        %v5250 = vperm.slane %v5249, 0
        %v5252 = vsel %vm4276, %v5247, 0
        %v5255 = vsel %vm5192, %v5248, 0
        %5257 = vmatpush.bf16.msra.mxu0 0
        %5258 = vmatpush.bf16.msra.mxu0 0
        %5259 = vmatpush.bf16.msra.mxu0 0
        %5260 = vmatpush.bf16.msra.mxu0 0
        %5261 = vmatpush.bf16.msra.mxu0 0
        %5262 = vmatpush.bf16.msra.mxu0 0
        %5263 = vmatpush.bf16.msra.mxu0 0
        %5264 = vmatpush.bf16.msra.mxu0 %v5255
        %5265 = vmatmul.bf16.gmra.mxu0 %v5252
        %v5266 = vpop.f32.mrf.mxu0
        %v5267 = vadd.f32 %v5250, %v5266
        %v5268 = vpop.f32.mrf.mxu0
        %v5269 = vadd.f32 %v5250, %v5268
        %5270 = vdwg.mxu0
        %v5271 = vmul.f32 %v5267, 0.18215
        %v5272 = vmul.f32 %v5269, 0.18215
        %v5273 = vld [vmem:[%s13] sm:$0x1]
        %vm5274 = vcmask 26624
        %vm5275 = vsmask.f32 2304
        %vm5276 = vmand %vm5274, %vm5275
        %v5277 = vld [vmem:[#allocation3] sm:$0x7]
        %v5278 = vsel %vm5276, 0, %v5277
        %5279 = vst [vmem:[#allocation3] sm:$0x7] %v5278
        %vm5280 = vcmask 27650
        %vm5281 = vsmask.f32 7946
        %vm5282 = vmand %vm5280, %vm5281
        %v5283 = vld [vmem:[#allocation3 + $0x8] sm:$0xc]
        %v5284 = vsel %vm5282, 0, %v5283
        %5285 = vst [vmem:[#allocation3 + $0x8] sm:$0xc] %v5284
        %vm5286 = vcmask 24576
        %5287 = vst.msk [vmem:[#allocation3 + $0xc] sm:$0x1] %vm5286, 0
        %v5288 = vpack.c.bf16 %v5271, %v5271
        %v5289 = vpack.c.bf16 %v5272, %v5272
        %vm5290 = vsmask.f32 6416
        %vm5291 = vmor %vm5275, %vm5290
        %v5293 = vshrl.u32 %v5288, 16
        %v5295 = vrot.slane %v5293, 5
        %v5296 = vshll.u32 %v5288, 16
        %v5298 = vrot.slane %v5296, 6
        %v5299 = vor.u32 %v5295, %v5298
        %v5300 = vrot.slane %v5299, 4
        %v5302 = vshrl.u32 %v5289, 16
        %v5304 = vrot.slane %v5302, 5
        %v5305 = vshll.u32 %v5289, 16
        %v5307 = vrot.slane %v5305, 6
        %v5308 = vor.u32 %v5304, %v5307
        %v5309 = vsel %vm5291, %v5300, %v5308
        %v5310 = vrot.slane %v5308, 4
        %v5314 = vld [vmem:[#allocation3] sm:$0xc]
        %v5315 = vsel %vm5282, %v5299, %v5314
        %5316 = vst [vmem:[#allocation3] sm:$0xc] %v5315
        %vm5317 = vcmask 27648
        %5318 = vst.msk [vmem:[#allocation3 + $0x4] sm:$0xf] %vm5317, %v5309
        %v5319 = vld [vmem:[#allocation3 + $0x8] sm:$0x7]
        %v5320 = vsel %vm5276, %v5310, %v5319
        %5321 = vst [vmem:[#allocation3 + $0x8] sm:$0x7] %v5320
        %vm5322 = vcmp.lt.s32.totalorder %v966, 0
        %v5323 = vsub.s32 0, %v966
        %v5324 = vsel %vm5322, %v5323, %v966
        %v5325 = vshrl.u32 %v5324, 2
        %v5326 = vand.u32 %v5324, 3
        %v5327 = vsub.s32 0, %v5326
        %v5328 = vsel %vm5322, %v5327, %v5326
        %vm5329 = vcmp.lt.s32.totalorder %v967, 0
        %v5330 = vsub.s32 0, %v967
        %v5331 = vsel %vm5329, %v5330, %v967
        %v5332 = vshrl.u32 %v5331, 2
        %v5333 = vand.u32 %v5331, 3
        %v5334 = vsub.s32 0, %v5333
        %v5335 = vsel %vm5329, %v5334, %v5333
        %vm5336 = vcmp.ne.s32.totalorder %v5328, 0
        %vm5337 = vcmp.ne.s32.totalorder %v5335, 0
        %vm5338 = vcmp.lt.s32.totalorder %v5328, 0
        %vm5339 = vcmp.lt.s32.totalorder %v5335, 0
        %vm5340 = vmand %vm5338, %vm5336
        %vm5341 = vmand %vm5339, %vm5337
        %v5342 = vadd.s32 %v5328, 4
        %v5343 = vadd.s32 %v5335, 4
        %v5344 = vsel %vm5340, %v5342, %v5328
        %v5345 = vsel %vm5341, %v5343, %v5335
        %vm5346 = vcmp.ne.s32.totalorder %v5344, 0
        %vm5347 = vcmp.ne.s32.totalorder %v5345, 0
        %vm5348 = vcmp.ne.s32.totalorder %v5344, 3
        %vm5349 = vcmp.ne.s32.totalorder %v5345, 3
        %v5350 = vld [vmem:[#allocation3] sm:$0xf]
        %v5351 = vld [vmem:[#allocation3 + $0x4] sm:$0xf]
        %vm5352 = vmpackc.low %vm5346, %vm5346
        %vm5353 = vmpackc.low %vm5347, %vm5347
        %v5354 = vsel %vm5352, %v5350, 0
        %v5355 = vsel %vm5353, %v5351, 0
        %v5356 = vld [vmem:[#allocation3 + $0x8] sm:$0x1]
        %v5357 = vld [vmem:[#allocation3] sm:$0xe]
        %vm5358 = vmpackc.low %vm5348, %vm5348
        %vm5359 = vmpackc.low %vm5349, %vm5349
        %v5360 = vsel %vm5358, 65537, 0
        %v5361 = vsel %vm5359, 65537, 0
        %v5362 = vrot.slane %v5360, 7
        %v5363 = vrot.slane %v5362, 4
        %v5364 = vrot.slane %v5361, 7
        %v5365 = vsel %vm1610, %v5363, %v5364
        %v5366 = vrot.slane %v5364, 4
        %v5367 = vunpack.c.l.b16 %v5362
        %v5368 = vunpack.c.h.b16 %v5362
        %v5369 = vunpack.c.l.b16 0
        %v5370 = vunpack.c.h.b16 0
        %vm5371 = vcmp.ne.s32.totalorder %v5367, %v5369
        %vm5372 = vcmp.ne.s32.totalorder %v5368, %v5370
        %vm5373 = vmpackc.low %vm5372, %vm5371
        %v5374 = vunpack.c.l.b16 %v5365
        %v5375 = vunpack.c.h.b16 %v5365
        %v5376 = vunpack.c.l.b16 0
        %v5377 = vunpack.c.h.b16 0
        %vm5378 = vcmp.ne.s32.totalorder %v5374, %v5376
        %vm5379 = vcmp.ne.s32.totalorder %v5375, %v5377
        %vm5380 = vmpackc.low %vm5379, %vm5378
        %v5381 = vunpack.c.l.b16 %v5366
        %v5382 = vunpack.c.h.b16 %v5366
        %v5383 = vunpack.c.l.b16 0
        %v5384 = vunpack.c.h.b16 0
        %vm5385 = vcmp.ne.s32.totalorder %v5381, %v5383
        %vm5386 = vcmp.ne.s32.totalorder %v5382, %v5384
        %vm5387 = vmpackc.low %vm5386, %vm5385
        %v5388 = vsel %vm5373, %v5357, 0
        %v5389 = vsel %vm5380, %v5351, 0
        %v5390 = vsel %vm5387, %v5356, 0
        %v5391 = vld [vmem:[#allocation3] sm:$0xc]
        %v5392 = vld [vmem:[#allocation3 + $0x8] sm:$0x3]
        %v5393 = vsel %vm5352, 65537, 0
        %v5394 = vsel %vm5353, 65537, 0
        %vm5395 = vcmask 1041408
        %vm5396 = vcmask 1045508
        %vm5397 = vmor %vm5395, %vm5396
        %v5398 = vrot.slane %v5393, 6
        %v5399 = vrot.slane %v5398, 4
        %v5400 = vrot.slane %v5394, 6
        %v5401 = vsel %vm5397, %v5399, %v5400
        %v5402 = vrot.slane %v5400, 4
        %v5403 = vunpack.c.l.b16 %v5398
        %v5404 = vunpack.c.h.b16 %v5398
        %v5405 = vunpack.c.l.b16 0
        %v5406 = vunpack.c.h.b16 0
        %vm5407 = vcmp.ne.s32.totalorder %v5403, %v5405
        %vm5408 = vcmp.ne.s32.totalorder %v5404, %v5406
        %vm5409 = vmpackc.low %vm5408, %vm5407
        %v5410 = vunpack.c.l.b16 %v5401
        %v5411 = vunpack.c.h.b16 %v5401
        %v5412 = vunpack.c.l.b16 0
        %v5413 = vunpack.c.h.b16 0
        %vm5414 = vcmp.ne.s32.totalorder %v5410, %v5412
        %vm5415 = vcmp.ne.s32.totalorder %v5411, %v5413
        %vm5416 = vmpackc.low %vm5415, %vm5414
        %v5417 = vunpack.c.l.b16 %v5402
        %v5418 = vunpack.c.h.b16 %v5402
        %v5419 = vunpack.c.l.b16 0
        %v5420 = vunpack.c.h.b16 0
        %vm5421 = vcmp.ne.s32.totalorder %v5417, %v5419
        %vm5422 = vcmp.ne.s32.totalorder %v5418, %v5420
        %vm5423 = vmpackc.low %vm5422, %vm5421
        %v5424 = vsel %vm5409, %v5391, 0
        %v5425 = vsel %vm5416, %v5351, 0
        %v5426 = vsel %vm5423, %v5392, 0
        %v5427 = vld [vmem:[#allocation3 + $0x8] sm:$0x7]
        %v5428 = vld [vmem:[#allocation3] sm:$0x8]
        %vm5429 = vcmask 1042432
        %vm5430 = vcmask 1046532
        %vm5431 = vmor %vm5429, %vm5430
        %v5432 = vrot.slane %v5360, 5
        %v5433 = vrot.slane %v5432, 4
        %v5434 = vrot.slane %v5361, 5
        %v5435 = vsel %vm5431, %v5433, %v5434
        %v5436 = vrot.slane %v5434, 4
        %v5437 = vunpack.c.l.b16 %v5432
        %v5438 = vunpack.c.h.b16 %v5432
        %v5439 = vunpack.c.l.b16 0
        %v5440 = vunpack.c.h.b16 0
        %vm5441 = vcmp.ne.s32.totalorder %v5437, %v5439
        %vm5442 = vcmp.ne.s32.totalorder %v5438, %v5440
        %vm5443 = vmpackc.low %vm5442, %vm5441
        %v5444 = vunpack.c.l.b16 %v5435
        %v5445 = vunpack.c.h.b16 %v5435
        %v5446 = vunpack.c.l.b16 0
        %v5447 = vunpack.c.h.b16 0
        %vm5448 = vcmp.ne.s32.totalorder %v5444, %v5446
        %vm5449 = vcmp.ne.s32.totalorder %v5445, %v5447
        %vm5450 = vmpackc.low %vm5449, %vm5448
        %v5451 = vunpack.c.l.b16 %v5436
        %v5452 = vunpack.c.h.b16 %v5436
        %v5453 = vunpack.c.l.b16 0
        %v5454 = vunpack.c.h.b16 0
        %vm5455 = vcmp.ne.s32.totalorder %v5451, %v5453
        %vm5456 = vcmp.ne.s32.totalorder %v5452, %v5454
        %vm5457 = vmpackc.low %vm5456, %vm5455
        %v5458 = vsel %vm5443, %v5428, 0
        %v5459 = vsel %vm5450, %v5351, 0
        %v5460 = vsel %vm5457, %v5427, 0
        %v5461 = vld [vmem:[#allocation3 + $0x8] sm:$0xf]
        %v5462 = vsel %vm5352, %v5351, 0
        %v5463 = vsel %vm5353, %v5461, 0
        %v5464 = vld [vmem:[#allocation3 + $0xc] sm:$0x1]
        %v5465 = vld [vmem:[#allocation3 + $0x4] sm:$0xe]
        %v5466 = vsel %vm5373, %v5465, 0
        %v5467 = vsel %vm5380, %v5461, 0
        %v5468 = vsel %vm5387, %v5464, 0
        %v5471 = vunpack.c.l.b16 %v5354
        %v5472 = vunpack.c.l.b16 %v5355
        %v5473 = vpack.c.b16 %v5472, %v5471
        %v5477 = vunpack.c.l.b16 %v5350
        %v5478 = vunpack.c.l.b16 %v5351
        %v5479 = vunpack.c.l.b16 %v5356
        %v5480 = vpack.c.b16 %v5478, %v5477
        %v5481 = vpack.c.b16 %v5479, %v5479
        %v5483 = vshrl.u32 %v5480, 16
        %v5485 = vshll.u32 %v5480, 16
        %v5487 = vrot.slane %v5485, 1
        %v5488 = vor.u32 %v5483, %v5487
        %v5490 = vshll.u32 %v5481, 16
        %v5492 = vrot.slane %v5490, 1
        %v5493 = vsel %vm2271, %v5488, %v5492
        %5494 = vrot.lane.b32.xlu0 %v5493, 4
        %v5495 = vpop.permute.xlu0 %5494
        %v5499 = vunpack.c.l.b16 %v5388
        %v5500 = vunpack.c.l.b16 %v5389
        %v5501 = vunpack.c.l.b16 %v5390
        %v5502 = vpack.c.b16 %v5500, %v5499
        %v5503 = vpack.c.b16 %v5501, %v5501
        %v5504 = vrot.slane %v5502, 1
        %v5505 = vrot.slane %v5503, 1
        %v5506 = vsel %vm2519, %v5504, %v5505
        %5507 = vrot.lane.b32.xlu0 %v5506, 8
        %v5508 = vpop.permute.xlu0 %5507
        %v5512 = vunpack.c.l.b16 %v5424
        %v5513 = vunpack.c.l.b16 %v5425
        %v5514 = vunpack.c.l.b16 %v5426
        %v5515 = vpack.c.b16 %v5513, %v5512
        %v5516 = vpack.c.b16 %v5514, %v5514
        %vm5517 = vcmask 1045504
        %v5518 = vrot.slane %v5515, 2
        %v5519 = vrot.slane %v5516, 2
        %v5520 = vsel %vm5517, %v5518, %v5519
        %5521 = vrot.lane.b32.xlu0 %v5520, 12
        %v5522 = vpop.permute.xlu0 %5521
        %v5525 = vunpack.c.l.b16 %v5391
        %v5526 = vunpack.c.l.b16 %v5427
        %v5527 = vpack.c.b16 %v5478, %v5525
        %v5528 = vpack.c.b16 %v5526, %v5526
        %vm5529 = vsmask.f32 5376
        %v5531 = vshrl.u32 %v5527, 16
        %v5533 = vrot.slane %v5531, 2
        %v5534 = vshll.u32 %v5527, 16
        %v5536 = vrot.slane %v5534, 3
        %v5537 = vor.u32 %v5533, %v5536
        %v5539 = vshrl.u32 %v5528, 16
        %v5541 = vrot.slane %v5539, 2
        %v5542 = vshll.u32 %v5528, 16
        %v5544 = vrot.slane %v5542, 3
        %v5545 = vor.u32 %v5541, %v5544
        %v5546 = vsel %vm5529, %v5537, %v5545
        %5547 = vrot.lane.b32.xlu0 %v5546, 16
        %v5548 = vpop.permute.xlu0 %5547
        %v5552 = vunpack.c.l.b16 %v5458
        %v5553 = vunpack.c.l.b16 %v5459
        %v5554 = vunpack.c.l.b16 %v5460
        %v5555 = vpack.c.b16 %v5553, %v5552
        %v5556 = vpack.c.b16 %v5554, %v5554
        %vm5557 = vcmask 1044480
        %v5558 = vrot.slane %v5555, 3
        %v5559 = vrot.slane %v5556, 3
        %v5560 = vsel %vm5557, %v5558, %v5559
        %5561 = vrot.lane.b32.xlu0 %v5560, 20
        %v5562 = vpop.permute.xlu0 %5561
        %v5565 = vunpack.c.l.b16 %v5462
        %v5566 = vunpack.c.l.b16 %v5463
        %v5567 = vpack.c.b16 %v5566, %v5565
        %5568 = vrot.lane.b32.xlu0 %v5567, 24
        %v5569 = vpop.permute.xlu0 %5568
        %v5572 = vunpack.c.l.b16 %v5461
        %v5573 = vunpack.c.l.b16 %v5464
        %v5574 = vpack.c.b16 %v5572, %v5478
        %v5575 = vpack.c.b16 %v5573, %v5573
        %v5577 = vshrl.u32 %v5574, 16
        %v5579 = vshll.u32 %v5574, 16
        %v5581 = vrot.slane %v5579, 1
        %v5582 = vor.u32 %v5577, %v5581
        %v5584 = vshll.u32 %v5575, 16
        %v5586 = vrot.slane %v5584, 1
        %v5587 = vsel %vm2271, %v5582, %v5586
        %5588 = vrot.lane.b32.xlu0 %v5587, 28
        %v5589 = vpop.permute.xlu0 %5588
        %v5593 = vunpack.c.l.b16 %v5466
        %v5594 = vunpack.c.l.b16 %v5467
        %v5595 = vunpack.c.l.b16 %v5468
        %v5596 = vpack.c.b16 %v5594, %v5593
        %v5597 = vpack.c.b16 %v5595, %v5595
        %v5598 = vrot.slane %v5596, 1
        %v5599 = vrot.slane %v5597, 1
        %v5600 = vsel %vm2519, %v5598, %v5599
        %5601 = vrot.lane.b32.xlu0 %v5600, 32
        %v5602 = vpop.permute.xlu0 %5601
        %vm5603 = vcmask 31744
        %v5606 = vsel %vm5603, %v5473, %v5495
        %v5608 = vsel %vm4276, %v5606, %v5508
        %v5610 = vsel %vm3326, %v5608, %v5522
        %v5612 = vsel %vm5084, %v5610, %v5548
        %vm5613 = vcmask 162816
        %v5615 = vsel %vm5613, %v5612, %v5562
        %v5617 = vsel %vm3458, %v5615, %v5569
        %vm5618 = vcmask 228352
        %v5620 = vsel %vm5618, %v5617, %v5589
        %v5622 = vsel %vm5101, %v5620, %v5602
        %v5623 = vld [vmem:[%s8] sm:$0xf]
        %v5624 = vld [vmem:[%s8 + $0x4] sm:$0xf]
        %v5625 = vld [vmem:[%s8 + $0x8] sm:$0xf]
        %v5626 = vld [vmem:[%s8 + $0xc] sm:$0xf]
        %v5627 = vld [vmem:[%s8 + $0x10] sm:$0x3]
        %v5628 = vperm.slane %v5273, 0
        %v5634 = vunpack.c.l.b16 %v5623
        %v5635 = vunpack.c.l.b16 %v5624
        %v5636 = vunpack.c.l.b16 %v5625
        %v5637 = vunpack.c.l.b16 %v5626
        %v5638 = vunpack.c.l.b16 %v5627
        %v5639 = vpack.c.b16 %v5635, %v5634
        %v5640 = vpack.c.b16 %v5637, %v5636
        %v5641 = vpack.c.b16 %v5638, %v5638
        %vm5644 = vcmask 293888
        %v5645 = vsel %vm5644, %v5622, 0
        %vm5647 = vcmask 1041408
        %v5649 = vsel %vm5647, %v5641, 0
        %5651 = vmatpush.bf16.msra.mxu0 0
        %5652 = vmatpush.bf16.msra.mxu0 0
        %5653 = vmatpush.bf16.msra.mxu0 0
        %5654 = vmatpush.bf16.msra.mxu0 0
        %5655 = vmatpush.bf16.msra.mxu0 0
        %5656 = vmatpush.bf16.msra.mxu0 %v5649
        %5657 = vmatpush.bf16.msra.mxu0 %v5640
        %5658 = vmatpush.bf16.msra.mxu0 %v5639
        %5659 = vmatmul.bf16.gmra.mxu0 %v5645
        %v5660 = vpop.f32.mrf.mxu0
        %v5661 = vadd.f32 %v5628, %v5660
        %v5662 = vpop.f32.mrf.mxu0
        %v5663 = vadd.f32 %v5628, %v5662
        %5664 = vdwg.mxu0
        %v5665 = vxor.u32 %v5661, 2147483648
        %v5666 = vxor.u32 %v5663, 2147483648
        %v5667 = vmul.f32 %v5665, 1.442695
        %v5668 = vpow.pop %v5667
        %v5669 = vmul.f32 %v5666, 1.442695
        %v5670 = vpow.pop %v5669
        %v5671 = vadd.f32 %v5668, 1.0
        %v5672 = vadd.f32 %v5670, 1.0
        %v5673 = vrcp.pop %v5671
        %v5674 = vmul.f32 %v5671, %v5673
        %v5675 = vsub.f32 1.0, %v5674
        %v5676 = vmul.f32 %v5673, %v5675
        %v5677 = vadd.f32 %v5673, %v5676
        %vm5678 = vweird.f32 %v5671
        %vm5679 = vweird.f32 %v5673
        %vm5680 = vmor %vm5678, %vm5679
        %v5681 = vsel %vm5680, %v5673, %v5677
        %v5682 = vand.u32 2147483647, %v5671
        %vm5683 = vcmp.eq.f32.partialorder %v5682, 8.507059e+37
        %v5684 = vand.u32 %v5671, 2147483648
        %v5685 = vor.u32 1.1754944e-38, %v5684
        %v5686 = vsel %vm5683, %v5685, %v5681
        %v5687 = vmul.f32 1.0, %v5686
        %v5688 = vrcp.pop %v5672
        %v5689 = vmul.f32 %v5672, %v5688
        %v5690 = vsub.f32 1.0, %v5689
        %v5691 = vmul.f32 %v5688, %v5690
        %v5692 = vadd.f32 %v5688, %v5691
        %vm5693 = vweird.f32 %v5672
        %vm5694 = vweird.f32 %v5688
        %vm5695 = vmor %vm5693, %vm5694
        %v5696 = vsel %vm5695, %v5688, %v5692
        %v5697 = vand.u32 2147483647, %v5672
        %vm5698 = vcmp.eq.f32.partialorder %v5697, 8.507059e+37
        %v5699 = vand.u32 %v5672, 2147483648
        %v5700 = vor.u32 1.1754944e-38, %v5699
        %v5701 = vsel %vm5698, %v5700, %v5696
        %v5702 = vmul.f32 1.0, %v5701
        %v5703 = vmul.f32 %v5661, %v5687
        %v5704 = vmul.f32 %v5663, %v5702
        %v5705 = vld [vmem:[%s13 + $0x1] sm:$0x1]
        %vm5706 = vcmask 256000
        %vm5707 = vmand %vm5706, %vm5275
        %v5708 = vld [vmem:[#allocation3] sm:$0x7]
        %v5709 = vsel %vm5707, 0, %v5708
        %5710 = vst [vmem:[#allocation3] sm:$0x7] %v5709
        %vm5711 = vcmask 257026
        %vm5712 = vmand %vm5711, %vm5281
        %v5713 = vld [vmem:[#allocation3 + $0x8] sm:$0xc]
        %v5714 = vsel %vm5712, 0, %v5713
        %5715 = vst [vmem:[#allocation3 + $0x8] sm:$0xc] %v5714
        %vm5716 = vcmask 253952
        %5717 = vst.msk [vmem:[#allocation3 + $0xc] sm:$0x1] %vm5716, 0
        %v5718 = vpack.c.bf16 %v5703, %v5703
        %v5719 = vpack.c.bf16 %v5704, %v5704
        %v5721 = vshrl.u32 %v5718, 16
        %v5723 = vrot.slane %v5721, 5
        %v5724 = vshll.u32 %v5718, 16
        %v5726 = vrot.slane %v5724, 6
        %v5727 = vor.u32 %v5723, %v5726
        %v5728 = vrot.slane %v5727, 4
        %v5730 = vshrl.u32 %v5719, 16
        %v5732 = vrot.slane %v5730, 5
        %v5733 = vshll.u32 %v5719, 16
        %v5735 = vrot.slane %v5733, 6
        %v5736 = vor.u32 %v5732, %v5735
        %v5737 = vsel %vm5291, %v5728, %v5736
        %v5738 = vrot.slane %v5736, 4
        %v5742 = vld [vmem:[#allocation3] sm:$0xc]
        %v5743 = vsel %vm5712, %v5727, %v5742
        %5744 = vst [vmem:[#allocation3] sm:$0xc] %v5743
        %vm5745 = vcmask 257024
        %5746 = vst.msk [vmem:[#allocation3 + $0x4] sm:$0xf] %vm5745, %v5737
        %v5747 = vld [vmem:[#allocation3 + $0x8] sm:$0x7]
        %v5748 = vsel %vm5707, %v5738, %v5747
        %5749 = vst [vmem:[#allocation3 + $0x8] sm:$0x7] %v5748
        %v5750 = vld [vmem:[#allocation3] sm:$0xf]
        %v5751 = vld [vmem:[#allocation3 + $0x4] sm:$0xf]
        %v5752 = vsel %vm5352, %v5750, 0
        %v5753 = vsel %vm5353, %v5751, 0
        %v5754 = vld [vmem:[#allocation3 + $0x8] sm:$0x1]
        %v5755 = vld [vmem:[#allocation3] sm:$0xe]
        %v5756 = vsel %vm5373, %v5755, 0
        %v5757 = vsel %vm5380, %v5751, 0
        %v5758 = vsel %vm5387, %v5754, 0
        %v5759 = vld [vmem:[#allocation3] sm:$0xc]
        %v5760 = vld [vmem:[#allocation3 + $0x8] sm:$0x3]
        %v5761 = vsel %vm5409, %v5759, 0
        %v5762 = vsel %vm5416, %v5751, 0
        %v5763 = vsel %vm5423, %v5760, 0
        %v5764 = vld [vmem:[#allocation3 + $0x8] sm:$0x7]
        %v5765 = vld [vmem:[#allocation3] sm:$0x8]
        %v5766 = vsel %vm5443, %v5765, 0
        %v5767 = vsel %vm5450, %v5751, 0
        %v5768 = vsel %vm5457, %v5764, 0
        %v5769 = vld [vmem:[#allocation3 + $0x8] sm:$0xf]
        %v5770 = vsel %vm5352, %v5751, 0
        %v5771 = vsel %vm5353, %v5769, 0
        %v5772 = vld [vmem:[#allocation3 + $0xc] sm:$0x1]
        %v5773 = vld [vmem:[#allocation3 + $0x4] sm:$0xe]
        %v5774 = vsel %vm5373, %v5773, 0
        %v5775 = vsel %vm5380, %v5769, 0
        %v5776 = vsel %vm5387, %v5772, 0
        %v5779 = vunpack.c.l.b16 %v5752
        %v5780 = vunpack.c.l.b16 %v5753
        %v5781 = vpack.c.b16 %v5780, %v5779
        %v5785 = vunpack.c.l.b16 %v5750
        %v5786 = vunpack.c.l.b16 %v5751
        %v5787 = vunpack.c.l.b16 %v5754
        %v5788 = vpack.c.b16 %v5786, %v5785
        %v5789 = vpack.c.b16 %v5787, %v5787
        %v5791 = vshrl.u32 %v5788, 16
        %v5793 = vshll.u32 %v5788, 16
        %v5795 = vrot.slane %v5793, 1
        %v5796 = vor.u32 %v5791, %v5795
        %v5798 = vshll.u32 %v5789, 16
        %v5800 = vrot.slane %v5798, 1
        %v5801 = vsel %vm2271, %v5796, %v5800
        %5802 = vrot.lane.b32.xlu0 %v5801, 32
        %v5803 = vpop.permute.xlu0 %5802
        %v5807 = vunpack.c.l.b16 %v5756
        %v5808 = vunpack.c.l.b16 %v5757
        %v5809 = vunpack.c.l.b16 %v5758
        %v5810 = vpack.c.b16 %v5808, %v5807
        %v5811 = vpack.c.b16 %v5809, %v5809
        %v5812 = vrot.slane %v5810, 1
        %v5813 = vrot.slane %v5811, 1
        %v5814 = vsel %vm2519, %v5812, %v5813
        %5815 = vrot.lane.b32.xlu0 %v5814, 64
        %v5816 = vpop.permute.xlu0 %5815
        %v5820 = vunpack.c.l.b16 %v5761
        %v5821 = vunpack.c.l.b16 %v5762
        %v5822 = vunpack.c.l.b16 %v5763
        %v5823 = vpack.c.b16 %v5821, %v5820
        %v5824 = vpack.c.b16 %v5822, %v5822
        %v5825 = vrot.slane %v5823, 2
        %v5826 = vrot.slane %v5824, 2
        %v5827 = vsel %vm5517, %v5825, %v5826
        %5828 = vrot.lane.b32.xlu0 %v5827, 96
        %v5829 = vpop.permute.xlu0 %5828
        %v5832 = vunpack.c.l.b16 %v5759
        %v5833 = vunpack.c.l.b16 %v5764
        %v5834 = vpack.c.b16 %v5786, %v5832
        %v5835 = vpack.c.b16 %v5833, %v5833
        %v5837 = vshrl.u32 %v5834, 16
        %v5839 = vrot.slane %v5837, 2
        %v5840 = vshll.u32 %v5834, 16
        %v5842 = vrot.slane %v5840, 3
        %v5843 = vor.u32 %v5839, %v5842
        %v5845 = vshrl.u32 %v5835, 16
        %v5847 = vrot.slane %v5845, 2
        %v5848 = vshll.u32 %v5835, 16
        %v5850 = vrot.slane %v5848, 3
        %v5851 = vor.u32 %v5847, %v5850
        %v5852 = vsel %vm5529, %v5843, %v5851
        %v5856 = vunpack.c.l.b16 %v5766
        %v5857 = vunpack.c.l.b16 %v5767
        %v5858 = vunpack.c.l.b16 %v5768
        %v5859 = vpack.c.b16 %v5857, %v5856
        %v5860 = vpack.c.b16 %v5858, %v5858
        %v5861 = vrot.slane %v5859, 3
        %v5862 = vrot.slane %v5860, 3
        %v5863 = vsel %vm5557, %v5861, %v5862
        %5864 = vrot.lane.b32.xlu0 %v5863, 32
        %v5865 = vpop.permute.xlu0 %5864
        %v5868 = vunpack.c.l.b16 %v5770
        %v5869 = vunpack.c.l.b16 %v5771
        %v5870 = vpack.c.b16 %v5869, %v5868
        %5871 = vrot.lane.b32.xlu0 %v5870, 64
        %v5872 = vpop.permute.xlu0 %5871
        %v5875 = vunpack.c.l.b16 %v5769
        %v5876 = vunpack.c.l.b16 %v5772
        %v5877 = vpack.c.b16 %v5875, %v5786
        %v5878 = vpack.c.b16 %v5876, %v5876
        %v5880 = vshrl.u32 %v5877, 16
        %v5882 = vshll.u32 %v5877, 16
        %v5884 = vrot.slane %v5882, 1
        %v5885 = vor.u32 %v5880, %v5884
        %v5887 = vshll.u32 %v5878, 16
        %v5889 = vrot.slane %v5887, 1
        %v5890 = vsel %vm2271, %v5885, %v5889
        %5891 = vrot.lane.b32.xlu0 %v5890, 96
        %v5892 = vpop.permute.xlu0 %5891
        %v5896 = vunpack.c.l.b16 %v5774
        %v5897 = vunpack.c.l.b16 %v5775
        %v5898 = vunpack.c.l.b16 %v5776
        %v5899 = vpack.c.b16 %v5897, %v5896
        %v5900 = vpack.c.b16 %v5898, %v5898
        %v5901 = vrot.slane %v5899, 1
        %v5902 = vrot.slane %v5900, 1
        %v5903 = vsel %vm2519, %v5901, %v5902
        %v5906 = vsel %vm5101, %v5781, %v5803
        %v5908 = vsel %vm5137, %v5906, %v5816
        %vm5909 = vcmask 785408
        %v5911 = vsel %vm5909, %v5908, %v5829
        %v5915 = vsel %vm5101, %v5852, %v5865
        %v5917 = vsel %vm5137, %v5915, %v5872
        %v5919 = vsel %vm5909, %v5917, %v5892
        %v5921 = vld [vmem:[%s9] sm:$0xf]
        %v5922 = vld [vmem:[%s9 + $0x4] sm:$0xf]
        %v5923 = vld [vmem:[%s9 + $0x8] sm:$0xf]
        %v5924 = vld [vmem:[%s9 + $0xc] sm:$0xf]
        %v5925 = vld [vmem:[%s9 + $0x10] sm:$0xf]
        %v5926 = vld [vmem:[%s9 + $0x14] sm:$0xf]
        %v5927 = vld [vmem:[%s9 + $0x18] sm:$0xf]
        %v5928 = vld [vmem:[%s9 + $0x1c] sm:$0xf]
        %v5929 = vld [vmem:[%s9 + $0x20] sm:$0xf]
        %v5930 = vld [vmem:[%s9 + $0x24] sm:$0xf]
        %v5931 = vld [vmem:[%s9 + $0x28] sm:$0xf]
        %v5932 = vld [vmem:[%s9 + $0x2c] sm:$0xf]
        %v5933 = vld [vmem:[%s9 + $0x30] sm:$0xf]
        %v5934 = vld [vmem:[%s9 + $0x34] sm:$0xf]
        %v5935 = vld [vmem:[%s9 + $0x38] sm:$0xf]
        %v5936 = vld [vmem:[%s9 + $0x3c] sm:$0xf]
        %v5937 = vld [vmem:[%s9 + $0x40] sm:$0xf]
        %v5938 = vld [vmem:[%s9 + $0x44] sm:$0xf]
        %v5939 = vld [vmem:[%s9 + $0x48] sm:$0xf]
        %v5940 = vld [vmem:[%s9 + $0x4c] sm:$0xf]
        %v5941 = vld [vmem:[%s9 + $0x50] sm:$0xf]
        %v5942 = vld [vmem:[%s9 + $0x54] sm:$0xf]
        %v5943 = vld [vmem:[%s9 + $0x58] sm:$0xf]
        %v5944 = vld [vmem:[%s9 + $0x5c] sm:$0xf]
        %v5945 = vld [vmem:[%s9 + $0x60] sm:$0xf]
        %v5946 = vld [vmem:[%s9 + $0x64] sm:$0xf]
        %v5947 = vld [vmem:[%s9 + $0x68] sm:$0xf]
        %v5948 = vld [vmem:[%s9 + $0x6c] sm:$0xf]
        %v5949 = vld [vmem:[%s9 + $0x70] sm:$0xf]
        %v5950 = vld [vmem:[%s9 + $0x74] sm:$0xf]
        %v5951 = vld [vmem:[%s9 + $0x78] sm:$0xf]
        %v5952 = vld [vmem:[%s9 + $0x7c] sm:$0xf]
        %v5953 = vld [vmem:[%s9 + $0x80] sm:$0xf]
        %v5954 = vld [vmem:[%s9 + $0x84] sm:$0xf]
        %v5955 = vld [vmem:[%s9 + $0x88] sm:$0xf]
        %v5956 = vld [vmem:[%s9 + $0x8c] sm:$0xf]
        %v5957 = vperm.slane %v5705, 0
        %v5994 = vunpack.c.l.b16 %v5921
        %v5995 = vunpack.c.l.b16 %v5922
        %v5996 = vunpack.c.l.b16 %v5923
        %v5997 = vunpack.c.l.b16 %v5924
        %v5998 = vunpack.c.l.b16 %v5925
        %v5999 = vunpack.c.l.b16 %v5926
        %v6000 = vunpack.c.l.b16 %v5927
        %v6001 = vunpack.c.l.b16 %v5928
        %v6002 = vunpack.c.l.b16 %v5929
        %v6003 = vunpack.c.l.b16 %v5930
        %v6004 = vunpack.c.l.b16 %v5931
        %v6005 = vunpack.c.l.b16 %v5932
        %v6006 = vunpack.c.l.b16 %v5933
        %v6007 = vunpack.c.l.b16 %v5934
        %v6008 = vunpack.c.l.b16 %v5935
        %v6009 = vunpack.c.l.b16 %v5936
        %v6010 = vunpack.c.l.b16 %v5937
        %v6011 = vunpack.c.l.b16 %v5938
        %v6012 = vunpack.c.l.b16 %v5939
        %v6013 = vunpack.c.l.b16 %v5940
        %v6014 = vunpack.c.l.b16 %v5941
        %v6015 = vunpack.c.l.b16 %v5942
        %v6016 = vunpack.c.l.b16 %v5943
        %v6017 = vunpack.c.l.b16 %v5944
        %v6018 = vunpack.c.l.b16 %v5945
        %v6019 = vunpack.c.l.b16 %v5946
        %v6020 = vunpack.c.l.b16 %v5947
        %v6021 = vunpack.c.l.b16 %v5948
        %v6022 = vunpack.c.l.b16 %v5949
        %v6023 = vunpack.c.l.b16 %v5950
        %v6024 = vunpack.c.l.b16 %v5951
        %v6025 = vunpack.c.l.b16 %v5952
        %v6026 = vunpack.c.l.b16 %v5953
        %v6027 = vunpack.c.l.b16 %v5954
        %v6028 = vunpack.c.l.b16 %v5955
        %v6029 = vunpack.c.l.b16 %v5956
        %v6030 = vpack.c.b16 %v5995, %v5994
        %v6031 = vpack.c.b16 %v5997, %v5996
        %v6032 = vpack.c.b16 %v5999, %v5998
        %v6033 = vpack.c.b16 %v6001, %v6000
        %v6034 = vpack.c.b16 %v6003, %v6002
        %v6035 = vpack.c.b16 %v6005, %v6004
        %v6036 = vpack.c.b16 %v6007, %v6006
        %v6037 = vpack.c.b16 %v6009, %v6008
        %v6038 = vpack.c.b16 %v6011, %v6010
        %v6039 = vpack.c.b16 %v6013, %v6012
        %v6040 = vpack.c.b16 %v6015, %v6014
        %v6041 = vpack.c.b16 %v6017, %v6016
        %v6042 = vpack.c.b16 %v6019, %v6018
        %v6043 = vpack.c.b16 %v6021, %v6020
        %v6044 = vpack.c.b16 %v6023, %v6022
        %v6045 = vpack.c.b16 %v6025, %v6024
        %v6046 = vpack.c.b16 %v6027, %v6026
        %v6047 = vpack.c.b16 %v6029, %v6028
        %v6067 = vsel %vm5101, %v5903, 0
        %6069 = vmatpush.bf16.msra.mxu0 %v6037
        %6070 = vmatpush.bf16.msra.mxu0 %v6036
        %6071 = vmatpush.bf16.msra.mxu0 %v6035
        %6072 = vmatpush.bf16.msra.mxu0 %v6034
        %6073 = vmatpush.bf16.msra.mxu0 %v6033
        %6074 = vmatpush.bf16.msra.mxu0 %v6032
        %6075 = vmatpush.bf16.msra.mxu0 %v6031
        %6076 = vmatpush.bf16.msra.mxu0 %v6030
        %6077 = vmatmul.bf16.gmra.mxu0 %v5911
        %v6078 = vpop.f32.mrf.mxu0
        %v6079 = vadd.f32 %v5957, %v6078
        %v6080 = vpop.f32.mrf.mxu0
        %v6081 = vadd.f32 %v5957, %v6080
        %6082 = vdwg.mxu0
        %6083 = vmatpush.bf16.msra.mxu0 %v6045
        %6084 = vmatpush.bf16.msra.mxu0 %v6044
        %6085 = vmatpush.bf16.msra.mxu0 %v6043
        %6086 = vmatpush.bf16.msra.mxu0 %v6042
        %6087 = vmatpush.bf16.msra.mxu0 %v6041
        %6088 = vmatpush.bf16.msra.mxu0 %v6040
        %6089 = vmatpush.bf16.msra.mxu0 %v6039
        %6090 = vmatpush.bf16.msra.mxu0 %v6038
        %6091 = vmatmul.bf16.gmra.mxu0 %v5919
        %v6092 = vpop.f32.mrf.mxu0
        %v6093 = vadd.f32 %v6079, %v6092
        %v6094 = vpop.f32.mrf.mxu0
        %v6095 = vadd.f32 %v6081, %v6094
        %6096 = vdwg.mxu0
        %6097 = vmatpush.bf16.msra.mxu0 0
        %6098 = vmatpush.bf16.msra.mxu0 0
        %6099 = vmatpush.bf16.msra.mxu0 0
        %6100 = vmatpush.bf16.msra.mxu0 0
        %6101 = vmatpush.bf16.msra.mxu0 0
        %6102 = vmatpush.bf16.msra.mxu0 0
        %6103 = vmatpush.bf16.msra.mxu0 %v6047
        %6104 = vmatpush.bf16.msra.mxu0 %v6046
        %6105 = vmatmul.bf16.gmra.mxu0 %v6067
        %v6106 = vpop.f32.mrf.mxu0
        %v6107 = vadd.f32 %v6093, %v6106
        %v6108 = vpop.f32.mrf.mxu0
        %v6109 = vadd.f32 %v6095, %v6108
        %6110 = vdwg.mxu0
        %v6111 = vld [vmem:[%s1] sm:$0x1]
        %v6113 = vperm.slane %v6111, 0
        %v6115 = vadd.f32 %v6107, %v6113
        %v6116 = vadd.f32 %v6109, %v6113
        %v6117 = vxor.u32 %v6115, 2147483648
        %v6118 = vxor.u32 %v6116, 2147483648
        %v6119 = vmul.f32 %v6117, 1.442695
        %v6120 = vpow.pop %v6119
        %v6121 = vmul.f32 %v6118, 1.442695
        %v6122 = vpow.pop %v6121
        %v6123 = vadd.f32 %v6120, 1.0
        %v6124 = vadd.f32 %v6122, 1.0
        %v6125 = vrcp.pop %v6123
        %v6126 = vmul.f32 %v6123, %v6125
        %v6127 = vsub.f32 1.0, %v6126
        %v6128 = vmul.f32 %v6125, %v6127
        %v6129 = vadd.f32 %v6125, %v6128
        %vm6130 = vweird.f32 %v6123
        %vm6131 = vweird.f32 %v6125
        %vm6132 = vmor %vm6130, %vm6131
        %v6133 = vsel %vm6132, %v6125, %v6129
        %v6134 = vand.u32 2147483647, %v6123
        %vm6135 = vcmp.eq.f32.partialorder %v6134, 8.507059e+37
        %v6136 = vand.u32 %v6123, 2147483648
        %v6137 = vor.u32 1.1754944e-38, %v6136
        %v6138 = vsel %vm6135, %v6137, %v6133
        %v6139 = vmul.f32 1.0, %v6138
        %v6140 = vrcp.pop %v6124
        %v6141 = vmul.f32 %v6124, %v6140
        %v6142 = vsub.f32 1.0, %v6141
        %v6143 = vmul.f32 %v6140, %v6142
        %v6144 = vadd.f32 %v6140, %v6143
        %vm6145 = vweird.f32 %v6124
        %vm6146 = vweird.f32 %v6140
        %vm6147 = vmor %vm6145, %vm6146
        %v6148 = vsel %vm6147, %v6140, %v6144
        %v6149 = vand.u32 2147483647, %v6124
        %vm6150 = vcmp.eq.f32.partialorder %v6149, 8.507059e+37
        %v6151 = vand.u32 %v6124, 2147483648
        %v6152 = vor.u32 1.1754944e-38, %v6151
        %v6153 = vsel %vm6150, %v6152, %v6148
        %v6154 = vmul.f32 1.0, %v6153
        %v6155 = vmul.f32 %v6115, %v6139
        %v6156 = vmul.f32 %v6116, %v6154
        %v6157 = vld [vmem:[%s13 + $0x2] sm:$0x1]
        %v6158 = vld [vmem:[#allocation3] sm:$0x7]
        %v6159 = vsel %vm5707, 0, %v6158
        %6160 = vst [vmem:[#allocation3] sm:$0x7] %v6159
        %v6161 = vld [vmem:[#allocation3 + $0x8] sm:$0xc]
        %v6162 = vsel %vm5712, 0, %v6161
        %6163 = vst [vmem:[#allocation3 + $0x8] sm:$0xc] %v6162
        %6164 = vst.msk [vmem:[#allocation3 + $0xc] sm:$0x1] %vm5716, 0
        %v6165 = vpack.c.bf16 %v6155, %v6155
        %v6166 = vpack.c.bf16 %v6156, %v6156
        %v6168 = vshrl.u32 %v6165, 16
        %v6170 = vrot.slane %v6168, 5
        %v6171 = vshll.u32 %v6165, 16
        %v6173 = vrot.slane %v6171, 6
        %v6174 = vor.u32 %v6170, %v6173
        %v6175 = vrot.slane %v6174, 4
        %v6177 = vshrl.u32 %v6166, 16
        %v6179 = vrot.slane %v6177, 5
        %v6180 = vshll.u32 %v6166, 16
        %v6182 = vrot.slane %v6180, 6
        %v6183 = vor.u32 %v6179, %v6182
        %v6184 = vsel %vm5291, %v6175, %v6183
        %v6185 = vrot.slane %v6183, 4
        %v6189 = vld [vmem:[#allocation3] sm:$0xc]
        %v6190 = vsel %vm5712, %v6174, %v6189
        %6191 = vst [vmem:[#allocation3] sm:$0xc] %v6190
        %6192 = vst.msk [vmem:[#allocation3 + $0x4] sm:$0xf] %vm5745, %v6184
        %v6193 = vld [vmem:[#allocation3 + $0x8] sm:$0x7]
        %v6194 = vsel %vm5707, %v6185, %v6193
        %6195 = vst [vmem:[#allocation3 + $0x8] sm:$0x7] %v6194
        %v6196 = vld [vmem:[#allocation3] sm:$0xf]
        %v6197 = vld [vmem:[#allocation3 + $0x4] sm:$0xf]
        %v6198 = vsel %vm5352, %v6196, 0
        %v6199 = vsel %vm5353, %v6197, 0
        %v6200 = vld [vmem:[#allocation3 + $0x8] sm:$0x1]
        %v6201 = vld [vmem:[#allocation3] sm:$0xe]
        %v6202 = vsel %vm5373, %v6201, 0
        %v6203 = vsel %vm5380, %v6197, 0
        %v6204 = vsel %vm5387, %v6200, 0
        %v6205 = vld [vmem:[#allocation3] sm:$0xc]
        %v6206 = vld [vmem:[#allocation3 + $0x8] sm:$0x3]
        %v6207 = vsel %vm5409, %v6205, 0
        %v6208 = vsel %vm5416, %v6197, 0
        %v6209 = vsel %vm5423, %v6206, 0
        %v6210 = vld [vmem:[#allocation3 + $0x8] sm:$0x7]
        %v6211 = vld [vmem:[#allocation3] sm:$0x8]
        %v6212 = vsel %vm5443, %v6211, 0
        %v6213 = vsel %vm5450, %v6197, 0
        %v6214 = vsel %vm5457, %v6210, 0
        %v6215 = vld [vmem:[#allocation3 + $0x8] sm:$0xf]
        %v6216 = vsel %vm5352, %v6197, 0
        %v6217 = vsel %vm5353, %v6215, 0
        %v6218 = vld [vmem:[#allocation3 + $0xc] sm:$0x1]
        %v6219 = vld [vmem:[#allocation3 + $0x4] sm:$0xe]
        %v6220 = vsel %vm5373, %v6219, 0
        %v6221 = vsel %vm5380, %v6215, 0
        %v6222 = vsel %vm5387, %v6218, 0
        %v6225 = vunpack.c.l.b16 %v6198
        %v6226 = vunpack.c.l.b16 %v6199
        %v6227 = vpack.c.b16 %v6226, %v6225
        %v6231 = vunpack.c.l.b16 %v6196
        %v6232 = vunpack.c.l.b16 %v6197
        %v6233 = vunpack.c.l.b16 %v6200
        %v6234 = vpack.c.b16 %v6232, %v6231
        %v6235 = vpack.c.b16 %v6233, %v6233
        %v6237 = vshrl.u32 %v6234, 16
        %v6239 = vshll.u32 %v6234, 16
        %v6241 = vrot.slane %v6239, 1
        %v6242 = vor.u32 %v6237, %v6241
        %v6244 = vshll.u32 %v6235, 16
        %v6246 = vrot.slane %v6244, 1
        %v6247 = vsel %vm2271, %v6242, %v6246
        %6248 = vrot.lane.b32.xlu0 %v6247, 32
        %v6249 = vpop.permute.xlu0 %6248
        %v6253 = vunpack.c.l.b16 %v6202
        %v6254 = vunpack.c.l.b16 %v6203
        %v6255 = vunpack.c.l.b16 %v6204
        %v6256 = vpack.c.b16 %v6254, %v6253
        %v6257 = vpack.c.b16 %v6255, %v6255
        %v6258 = vrot.slane %v6256, 1
        %v6259 = vrot.slane %v6257, 1
        %v6260 = vsel %vm2519, %v6258, %v6259
        %6261 = vrot.lane.b32.xlu0 %v6260, 64
        %v6262 = vpop.permute.xlu0 %6261
        %v6266 = vunpack.c.l.b16 %v6207
        %v6267 = vunpack.c.l.b16 %v6208
        %v6268 = vunpack.c.l.b16 %v6209
        %v6269 = vpack.c.b16 %v6267, %v6266
        %v6270 = vpack.c.b16 %v6268, %v6268
        %v6271 = vrot.slane %v6269, 2
        %v6272 = vrot.slane %v6270, 2
        %v6273 = vsel %vm5517, %v6271, %v6272
        %6274 = vrot.lane.b32.xlu0 %v6273, 96
        %v6275 = vpop.permute.xlu0 %6274
        %v6278 = vunpack.c.l.b16 %v6205
        %v6279 = vunpack.c.l.b16 %v6210
        %v6280 = vpack.c.b16 %v6232, %v6278
        %v6281 = vpack.c.b16 %v6279, %v6279
        %v6283 = vshrl.u32 %v6280, 16
        %v6285 = vrot.slane %v6283, 2
        %v6286 = vshll.u32 %v6280, 16
        %v6288 = vrot.slane %v6286, 3
        %v6289 = vor.u32 %v6285, %v6288
        %v6291 = vshrl.u32 %v6281, 16
        %v6293 = vrot.slane %v6291, 2
        %v6294 = vshll.u32 %v6281, 16
        %v6296 = vrot.slane %v6294, 3
        %v6297 = vor.u32 %v6293, %v6296
        %v6298 = vsel %vm5529, %v6289, %v6297
        %v6302 = vunpack.c.l.b16 %v6212
        %v6303 = vunpack.c.l.b16 %v6213
        %v6304 = vunpack.c.l.b16 %v6214
        %v6305 = vpack.c.b16 %v6303, %v6302
        %v6306 = vpack.c.b16 %v6304, %v6304
        %v6307 = vrot.slane %v6305, 3
        %v6308 = vrot.slane %v6306, 3
        %v6309 = vsel %vm5557, %v6307, %v6308
        %6310 = vrot.lane.b32.xlu0 %v6309, 32
        %v6311 = vpop.permute.xlu0 %6310
        %v6314 = vunpack.c.l.b16 %v6216
        %v6315 = vunpack.c.l.b16 %v6217
        %v6316 = vpack.c.b16 %v6315, %v6314
        %6317 = vrot.lane.b32.xlu0 %v6316, 64
        %v6318 = vpop.permute.xlu0 %6317
        %v6321 = vunpack.c.l.b16 %v6215
        %v6322 = vunpack.c.l.b16 %v6218
        %v6323 = vpack.c.b16 %v6321, %v6232
        %v6324 = vpack.c.b16 %v6322, %v6322
        %v6326 = vshrl.u32 %v6323, 16
        %v6328 = vshll.u32 %v6323, 16
        %v6330 = vrot.slane %v6328, 1
        %v6331 = vor.u32 %v6326, %v6330
        %v6333 = vshll.u32 %v6324, 16
        %v6335 = vrot.slane %v6333, 1
        %v6336 = vsel %vm2271, %v6331, %v6335
        %6337 = vrot.lane.b32.xlu0 %v6336, 96
        %v6338 = vpop.permute.xlu0 %6337
        %v6342 = vunpack.c.l.b16 %v6220
        %v6343 = vunpack.c.l.b16 %v6221
        %v6344 = vunpack.c.l.b16 %v6222
        %v6345 = vpack.c.b16 %v6343, %v6342
        %v6346 = vpack.c.b16 %v6344, %v6344
        %v6347 = vrot.slane %v6345, 1
        %v6348 = vrot.slane %v6346, 1
        %v6349 = vsel %vm2519, %v6347, %v6348
        %v6352 = vsel %vm5101, %v6227, %v6249
        %v6354 = vsel %vm5137, %v6352, %v6262
        %v6356 = vsel %vm5909, %v6354, %v6275
        %v6360 = vsel %vm5101, %v6298, %v6311
        %v6362 = vsel %vm5137, %v6360, %v6318
        %v6364 = vsel %vm5909, %v6362, %v6338
        %v6366 = vld [vmem:[%s10] sm:$0xf]
        %v6367 = vld [vmem:[%s10 + $0x4] sm:$0xf]
        %v6368 = vld [vmem:[%s10 + $0x8] sm:$0xf]
        %v6369 = vld [vmem:[%s10 + $0xc] sm:$0xf]
        %v6370 = vld [vmem:[%s10 + $0x10] sm:$0xf]
        %v6371 = vld [vmem:[%s10 + $0x14] sm:$0xf]
        %v6372 = vld [vmem:[%s10 + $0x18] sm:$0xf]
        %v6373 = vld [vmem:[%s10 + $0x1c] sm:$0xf]
        %v6374 = vld [vmem:[%s10 + $0x20] sm:$0xf]
        %v6375 = vld [vmem:[%s10 + $0x24] sm:$0xf]
        %v6376 = vld [vmem:[%s10 + $0x28] sm:$0xf]
        %v6377 = vld [vmem:[%s10 + $0x2c] sm:$0xf]
        %v6378 = vld [vmem:[%s10 + $0x30] sm:$0xf]
        %v6379 = vld [vmem:[%s10 + $0x34] sm:$0xf]
        %v6380 = vld [vmem:[%s10 + $0x38] sm:$0xf]
        %v6381 = vld [vmem:[%s10 + $0x3c] sm:$0xf]
        %v6382 = vld [vmem:[%s10 + $0x40] sm:$0xf]
        %v6383 = vld [vmem:[%s10 + $0x44] sm:$0xf]
        %v6384 = vld [vmem:[%s10 + $0x48] sm:$0xf]
        %v6385 = vld [vmem:[%s10 + $0x4c] sm:$0xf]
        %v6386 = vld [vmem:[%s10 + $0x50] sm:$0xf]
        %v6387 = vld [vmem:[%s10 + $0x54] sm:$0xf]
        %v6388 = vld [vmem:[%s10 + $0x58] sm:$0xf]
        %v6389 = vld [vmem:[%s10 + $0x5c] sm:$0xf]
        %v6390 = vld [vmem:[%s10 + $0x60] sm:$0xf]
        %v6391 = vld [vmem:[%s10 + $0x64] sm:$0xf]
        %v6392 = vld [vmem:[%s10 + $0x68] sm:$0xf]
        %v6393 = vld [vmem:[%s10 + $0x6c] sm:$0xf]
        %v6394 = vld [vmem:[%s10 + $0x70] sm:$0xf]
        %v6395 = vld [vmem:[%s10 + $0x74] sm:$0xf]
        %v6396 = vld [vmem:[%s10 + $0x78] sm:$0xf]
        %v6397 = vld [vmem:[%s10 + $0x7c] sm:$0xf]
        %v6398 = vld [vmem:[%s10 + $0x80] sm:$0xf]
        %v6399 = vld [vmem:[%s10 + $0x84] sm:$0xf]
        %v6400 = vld [vmem:[%s10 + $0x88] sm:$0xf]
        %v6401 = vld [vmem:[%s10 + $0x8c] sm:$0xf]
        %v6402 = vperm.slane %v6157, 0
        %v6439 = vunpack.c.l.b16 %v6366
        %v6440 = vunpack.c.l.b16 %v6367
        %v6441 = vunpack.c.l.b16 %v6368
        %v6442 = vunpack.c.l.b16 %v6369
        %v6443 = vunpack.c.l.b16 %v6370
        %v6444 = vunpack.c.l.b16 %v6371
        %v6445 = vunpack.c.l.b16 %v6372
        %v6446 = vunpack.c.l.b16 %v6373
        %v6447 = vunpack.c.l.b16 %v6374
        %v6448 = vunpack.c.l.b16 %v6375
        %v6449 = vunpack.c.l.b16 %v6376
        %v6450 = vunpack.c.l.b16 %v6377
        %v6451 = vunpack.c.l.b16 %v6378
        %v6452 = vunpack.c.l.b16 %v6379
        %v6453 = vunpack.c.l.b16 %v6380
        %v6454 = vunpack.c.l.b16 %v6381
        %v6455 = vunpack.c.l.b16 %v6382
        %v6456 = vunpack.c.l.b16 %v6383
        %v6457 = vunpack.c.l.b16 %v6384
        %v6458 = vunpack.c.l.b16 %v6385
        %v6459 = vunpack.c.l.b16 %v6386
        %v6460 = vunpack.c.l.b16 %v6387
        %v6461 = vunpack.c.l.b16 %v6388
        %v6462 = vunpack.c.l.b16 %v6389
        %v6463 = vunpack.c.l.b16 %v6390
        %v6464 = vunpack.c.l.b16 %v6391
        %v6465 = vunpack.c.l.b16 %v6392
        %v6466 = vunpack.c.l.b16 %v6393
        %v6467 = vunpack.c.l.b16 %v6394
        %v6468 = vunpack.c.l.b16 %v6395
        %v6469 = vunpack.c.l.b16 %v6396
        %v6470 = vunpack.c.l.b16 %v6397
        %v6471 = vunpack.c.l.b16 %v6398
        %v6472 = vunpack.c.l.b16 %v6399
        %v6473 = vunpack.c.l.b16 %v6400
        %v6474 = vunpack.c.l.b16 %v6401
        %v6475 = vpack.c.b16 %v6440, %v6439
        %v6476 = vpack.c.b16 %v6442, %v6441
        %v6477 = vpack.c.b16 %v6444, %v6443
        %v6478 = vpack.c.b16 %v6446, %v6445
        %v6479 = vpack.c.b16 %v6448, %v6447
        %v6480 = vpack.c.b16 %v6450, %v6449
        %v6481 = vpack.c.b16 %v6452, %v6451
        %v6482 = vpack.c.b16 %v6454, %v6453
        %v6483 = vpack.c.b16 %v6456, %v6455
        %v6484 = vpack.c.b16 %v6458, %v6457
        %v6485 = vpack.c.b16 %v6460, %v6459
        %v6486 = vpack.c.b16 %v6462, %v6461
        %v6487 = vpack.c.b16 %v6464, %v6463
        %v6488 = vpack.c.b16 %v6466, %v6465
        %v6489 = vpack.c.b16 %v6468, %v6467
        %v6490 = vpack.c.b16 %v6470, %v6469
        %v6491 = vpack.c.b16 %v6472, %v6471
        %v6492 = vpack.c.b16 %v6474, %v6473
        %v6512 = vsel %vm5101, %v6349, 0
        %6514 = vmatpush.bf16.msra.mxu0 %v6482
        %6515 = vmatpush.bf16.msra.mxu0 %v6481
        %6516 = vmatpush.bf16.msra.mxu0 %v6480
        %6517 = vmatpush.bf16.msra.mxu0 %v6479
        %6518 = vmatpush.bf16.msra.mxu0 %v6478
        %6519 = vmatpush.bf16.msra.mxu0 %v6477
        %6520 = vmatpush.bf16.msra.mxu0 %v6476
        %6521 = vmatpush.bf16.msra.mxu0 %v6475
        %6522 = vmatmul.bf16.gmra.mxu0 %v6356
        %v6523 = vpop.f32.mrf.mxu0
        %v6524 = vadd.f32 %v6402, %v6523
        %v6525 = vpop.f32.mrf.mxu0
        %v6526 = vadd.f32 %v6402, %v6525
        %6527 = vdwg.mxu0
        %6528 = vmatpush.bf16.msra.mxu0 %v6490
        %6529 = vmatpush.bf16.msra.mxu0 %v6489
        %6530 = vmatpush.bf16.msra.mxu0 %v6488
        %6531 = vmatpush.bf16.msra.mxu0 %v6487
        %6532 = vmatpush.bf16.msra.mxu0 %v6486
        %6533 = vmatpush.bf16.msra.mxu0 %v6485
        %6534 = vmatpush.bf16.msra.mxu0 %v6484
        %6535 = vmatpush.bf16.msra.mxu0 %v6483
        %6536 = vmatmul.bf16.gmra.mxu0 %v6364
        %v6537 = vpop.f32.mrf.mxu0
        %v6538 = vadd.f32 %v6524, %v6537
        %v6539 = vpop.f32.mrf.mxu0
        %v6540 = vadd.f32 %v6526, %v6539
        %6541 = vdwg.mxu0
        %6542 = vmatpush.bf16.msra.mxu0 0
        %6543 = vmatpush.bf16.msra.mxu0 0
        %6544 = vmatpush.bf16.msra.mxu0 0
        %6545 = vmatpush.bf16.msra.mxu0 0
        %6546 = vmatpush.bf16.msra.mxu0 0
        %6547 = vmatpush.bf16.msra.mxu0 0
        %6548 = vmatpush.bf16.msra.mxu0 %v6492
        %6549 = vmatpush.bf16.msra.mxu0 %v6491
        %6550 = vmatmul.bf16.gmra.mxu0 %v6512
        %v6551 = vpop.f32.mrf.mxu0
        %v6552 = vadd.f32 %v6538, %v6551
        %v6553 = vpop.f32.mrf.mxu0
        %v6554 = vadd.f32 %v6540, %v6553
        %6555 = vdwg.mxu0
        %v6556 = vadd.f32 %v5661, %v6552
        %v6557 = vadd.f32 %v5663, %v6554
        %v6558 = vpack.c.bf16 %v6557, %v6556
        %v6559 = vld [vmem:[%s11] sm:$0xf]
        %v6560 = vld [vmem:[%s11 + $0x4] sm:$0xf]
        %v6561 = vld [vmem:[%s11 + $0x8] sm:$0xf]
        %v6562 = vld [vmem:[%s11 + $0xc] sm:$0xf]
        %v6563 = vld [vmem:[%s13 + $0x3] sm:$0x1]
        %v6564 = vperm.slane %v6563, 0
        %v6569 = vunpack.c.l.b16 %v6559
        %v6570 = vunpack.c.l.b16 %v6560
        %v6571 = vunpack.c.l.b16 %v6561
        %v6572 = vunpack.c.l.b16 %v6562
        %v6573 = vpack.c.b16 %v6570, %v6569
        %v6574 = vpack.c.b16 %v6572, %v6571
        %v6578 = vsel %vm5101, %v6558, 0
        %6580 = vmatpush.bf16.msra.mxu0 0
        %6581 = vmatpush.bf16.msra.mxu0 0
        %6582 = vmatpush.bf16.msra.mxu0 0
        %6583 = vmatpush.bf16.msra.mxu0 0
        %6584 = vmatpush.bf16.msra.mxu0 0
        %6585 = vmatpush.bf16.msra.mxu0 0
        %6586 = vmatpush.bf16.msra.mxu0 %v6574
        %6587 = vmatpush.bf16.msra.mxu0 %v6573
        %6588 = vmatmul.bf16.gmra.mxu0 %v6578
        %v6589 = vpop.f32.mrf.mxu0
        %v6590 = vadd.f32 %v6564, %v6589
        %v6591 = vpop.f32.mrf.mxu0
        %v6592 = vadd.f32 %v6564, %v6591
        %6593 = vdwg.mxu0
        %v6594 = vpack.c.bf16 %v6592, %v6590
        %v6595 = vld [vmem:[%s2] sm:$0xf]
        %v6597 = vsel %vm5101, %v6594, 0
        %v6600 = vsel %vm5101, %v6595, 0
        %6602 = vmatpush.bf16.xpose.msra.mxu0 0
        %6603 = vmatpush.bf16.xpose.msra.mxu0 0
        %6604 = vmatpush.bf16.xpose.msra.mxu0 0
        %6605 = vmatpush.bf16.xpose.msra.mxu0 0
        %6606 = vmatpush.bf16.xpose.msra.mxu0 0
        %6607 = vmatpush.bf16.xpose.msra.mxu0 0
        %6608 = vmatpush.bf16.xpose.msra.mxu0 0
        %6609 = vmatpush.bf16.xpose.msra.mxu0 %v6600
        %6610 = vmatmul.bf16.gmra.mxu0 %v6597
        %v6611 = vpop.f32.mrf.mxu0
        %v6612 = vadd.f32 0.0, %v6611
        %v6613 = vpop.f32.mrf.mxu0
        %v6614 = vadd.f32 0.0, %v6613
        %6615 = vdwg.mxu0
        %v6616 = vsel %vm4276, %v6612, -inf
        %6617 = vmax.xlane.f32.xlu0 %v6616
        %v6618 = vpop.xlane.xlu0 %6617
        %v6619 = vsel %vm4276, %v6614, -inf
        %6620 = vmax.xlane.f32.xlu0 %v6619
        %v6621 = vpop.xlane.xlu0 %6620
        %v6622 = vsub.f32 %v6612, %v6618
        %v6623 = vsub.f32 %v6614, %v6621
        %v6624 = vmul.f32 %v6622, 1.442695
        %v6625 = vpow.pop %v6624
        %v6626 = vmul.f32 %v6623, 1.442695
        %v6627 = vpow.pop %v6626
        %v6628 = vsel %vm4276, %v6625, 0.0
        %6629 = vadd.xlane.f32.xlu0 %v6628
        %v6630 = vpop.xlane.xlu0 %6629
        %v6631 = vsel %vm4276, %v6627, 0.0
        %6632 = vadd.xlane.f32.xlu0 %v6631
        %v6633 = vpop.xlane.xlu0 %6632
        %v6634 = vrcp.pop %v6630
        %v6635 = vrcp.pop %v6633
        %v6636 = vmul.f32 %v6625, %v6634
        %v6637 = vmul.f32 %v6627, %v6635
        %v6638 = vpack.c.bf16 %v6637, %v6636
        %v6639 = vld [vmem:[%s3] sm:$0xf]
        %v6641 = vsel %vm4276, %v6638, 0
        %v6644 = vsel %vm5192, %v6639, 0
        %6646 = vmatpush.bf16.msra.mxu0 0
        %6647 = vmatpush.bf16.msra.mxu0 0
        %6648 = vmatpush.bf16.msra.mxu0 0
        %6649 = vmatpush.bf16.msra.mxu0 0
        %6650 = vmatpush.bf16.msra.mxu0 0
        %6651 = vmatpush.bf16.msra.mxu0 0
        %6652 = vmatpush.bf16.msra.mxu0 0
        %6653 = vmatpush.bf16.msra.mxu0 %v6644
        %6654 = vmatmul.bf16.gmra.mxu0 %v6641
        %v6655 = vpop.f32.mrf.mxu0
        %v6656 = vadd.f32 0.0, %v6655
        %v6657 = vpop.f32.mrf.mxu0
        %v6658 = vadd.f32 0.0, %v6657
        %6659 = vdwg.mxu0
        %v6660 = vpack.c.bf16 %v6658, %v6656
        %v6661 = vld [vmem:[%s12] sm:$0xf]
        %v6662 = vld [vmem:[%s12 + $0x4] sm:$0xf]
        %v6663 = vld [vmem:[%s12 + $0x8] sm:$0xf]
        %v6664 = vld [vmem:[%s12 + $0xc] sm:$0xf]
        %v6669 = vunpack.c.l.b16 %v6661
        %v6670 = vunpack.c.l.b16 %v6662
        %v6671 = vunpack.c.l.b16 %v6663
        %v6672 = vunpack.c.l.b16 %v6664
        %v6673 = vpack.c.b16 %v6670, %v6669
        %v6674 = vpack.c.b16 %v6672, %v6671
        %v6678 = vsel %vm5101, %v6660, 0
        %6680 = vmatpush.bf16.msra.mxu0 0
        %6681 = vmatpush.bf16.msra.mxu0 0
        %6682 = vmatpush.bf16.msra.mxu0 0
        %6683 = vmatpush.bf16.msra.mxu0 0
        %6684 = vmatpush.bf16.msra.mxu0 0
        %6685 = vmatpush.bf16.msra.mxu0 0
        %6686 = vmatpush.bf16.msra.mxu0 %v6674
        %6687 = vmatpush.bf16.msra.mxu0 %v6673
        %6688 = vmatmul.bf16.gmra.mxu0 %v6678
        %v6689 = vpop.f32.mrf.mxu0
        %v6690 = vadd.f32 0.0, %v6689
        %v6691 = vpop.f32.mrf.mxu0
        %v6692 = vadd.f32 0.0, %v6691
        %6693 = vdwg.mxu0
        %v6694 = vadd.f32 %v6556, %v6690
        %v6695 = vadd.f32 %v6557, %v6692
        %v6696 = vld [vmem:[%s13 + $0x4] sm:$0x1]
        %v6697 = vperm.slane %v6696, 0
        %v6698 = vadd.f32 %v6694, %v6697
        %v6699 = vadd.f32 %v6695, %v6697
        %v6700 = vld [vmem:[%s15] sm:$0x1]
        %v6701 = vld [vmem:[#allocation3] sm:$0x7]
        %v6702 = vsel %vm5707, 0, %v6701
        %6703 = vst [vmem:[#allocation3] sm:$0x7] %v6702
        %v6704 = vld [vmem:[#allocation3 + $0x8] sm:$0xc]
        %v6705 = vsel %vm5712, 0, %v6704
        %6706 = vst [vmem:[#allocation3 + $0x8] sm:$0xc] %v6705
        %6707 = vst.msk [vmem:[#allocation3 + $0xc] sm:$0x1] %vm5716, 0
        %v6708 = vpack.c.bf16 %v6698, %v6698
        %v6709 = vpack.c.bf16 %v6699, %v6699
        %v6711 = vshrl.u32 %v6708, 16
        %v6713 = vrot.slane %v6711, 5
        %v6714 = vshll.u32 %v6708, 16
        %v6716 = vrot.slane %v6714, 6
        %v6717 = vor.u32 %v6713, %v6716
        %v6718 = vrot.slane %v6717, 4
        %v6720 = vshrl.u32 %v6709, 16
        %v6722 = vrot.slane %v6720, 5
        %v6723 = vshll.u32 %v6709, 16
        %v6725 = vrot.slane %v6723, 6
        %v6726 = vor.u32 %v6722, %v6725
        %v6727 = vsel %vm5291, %v6718, %v6726
        %v6728 = vrot.slane %v6726, 4
        %v6732 = vld [vmem:[#allocation3] sm:$0xc]
        %v6733 = vsel %vm5712, %v6717, %v6732
        %6734 = vst [vmem:[#allocation3] sm:$0xc] %v6733
        %6735 = vst.msk [vmem:[#allocation3 + $0x4] sm:$0xf] %vm5745, %v6727
        %v6736 = vld [vmem:[#allocation3 + $0x8] sm:$0x7]
        %v6737 = vsel %vm5707, %v6728, %v6736
        %6738 = vst [vmem:[#allocation3 + $0x8] sm:$0x7] %v6737
        %v6739 = vld [vmem:[#allocation3] sm:$0xf]
        %v6740 = vld [vmem:[#allocation3 + $0x4] sm:$0xf]
        %v6741 = vsel %vm5352, %v6739, 0
        %v6742 = vsel %vm5353, %v6740, 0
        %v6743 = vld [vmem:[#allocation3 + $0x8] sm:$0x1]
        %v6744 = vld [vmem:[#allocation3] sm:$0xe]
        %v6745 = vsel %vm5373, %v6744, 0
        %v6746 = vsel %vm5380, %v6740, 0
        %v6747 = vsel %vm5387, %v6743, 0
        %v6748 = vld [vmem:[#allocation3] sm:$0xc]
        %v6749 = vld [vmem:[#allocation3 + $0x8] sm:$0x3]
        %v6750 = vsel %vm5409, %v6748, 0
        %v6751 = vsel %vm5416, %v6740, 0
        %v6752 = vsel %vm5423, %v6749, 0
        %v6753 = vld [vmem:[#allocation3 + $0x8] sm:$0x7]
        %v6754 = vld [vmem:[#allocation3] sm:$0x8]
        %v6755 = vsel %vm5443, %v6754, 0
        %v6756 = vsel %vm5450, %v6740, 0
        %v6757 = vsel %vm5457, %v6753, 0
        %v6758 = vld [vmem:[#allocation3 + $0x8] sm:$0xf]
        %v6759 = vsel %vm5352, %v6740, 0
        %v6760 = vsel %vm5353, %v6758, 0
        %v6761 = vld [vmem:[#allocation3 + $0xc] sm:$0x1]
        %v6762 = vld [vmem:[#allocation3 + $0x4] sm:$0xe]
        %v6763 = vsel %vm5373, %v6762, 0
        %v6764 = vsel %vm5380, %v6758, 0
        %v6765 = vsel %vm5387, %v6761, 0
        %v6768 = vunpack.c.l.b16 %v6741
        %v6769 = vunpack.c.l.b16 %v6742
        %v6770 = vpack.c.b16 %v6769, %v6768
        %v6774 = vunpack.c.l.b16 %v6739
        %v6775 = vunpack.c.l.b16 %v6740
        %v6776 = vunpack.c.l.b16 %v6743
        %v6777 = vpack.c.b16 %v6775, %v6774
        %v6778 = vpack.c.b16 %v6776, %v6776
        %v6780 = vshrl.u32 %v6777, 16
        %v6782 = vshll.u32 %v6777, 16
        %v6784 = vrot.slane %v6782, 1
        %v6785 = vor.u32 %v6780, %v6784
        %v6787 = vshll.u32 %v6778, 16
        %v6789 = vrot.slane %v6787, 1
        %v6790 = vsel %vm2271, %v6785, %v6789
        %6791 = vrot.lane.b32.xlu0 %v6790, 32
        %v6792 = vpop.permute.xlu0 %6791
        %v6796 = vunpack.c.l.b16 %v6745
        %v6797 = vunpack.c.l.b16 %v6746
        %v6798 = vunpack.c.l.b16 %v6747
        %v6799 = vpack.c.b16 %v6797, %v6796
        %v6800 = vpack.c.b16 %v6798, %v6798
        %v6801 = vrot.slane %v6799, 1
        %v6802 = vrot.slane %v6800, 1
        %v6803 = vsel %vm2519, %v6801, %v6802
        %6804 = vrot.lane.b32.xlu0 %v6803, 64
        %v6805 = vpop.permute.xlu0 %6804
        %v6809 = vunpack.c.l.b16 %v6750
        %v6810 = vunpack.c.l.b16 %v6751
        %v6811 = vunpack.c.l.b16 %v6752
        %v6812 = vpack.c.b16 %v6810, %v6809
        %v6813 = vpack.c.b16 %v6811, %v6811
        %v6814 = vrot.slane %v6812, 2
        %v6815 = vrot.slane %v6813, 2
        %v6816 = vsel %vm5517, %v6814, %v6815
        %6817 = vrot.lane.b32.xlu0 %v6816, 96
        %v6818 = vpop.permute.xlu0 %6817
        %v6821 = vunpack.c.l.b16 %v6748
        %v6822 = vunpack.c.l.b16 %v6753
        %v6823 = vpack.c.b16 %v6775, %v6821
        %v6824 = vpack.c.b16 %v6822, %v6822
        %v6826 = vshrl.u32 %v6823, 16
        %v6828 = vrot.slane %v6826, 2
        %v6829 = vshll.u32 %v6823, 16
        %v6831 = vrot.slane %v6829, 3
        %v6832 = vor.u32 %v6828, %v6831
        %v6834 = vshrl.u32 %v6824, 16
        %v6836 = vrot.slane %v6834, 2
        %v6837 = vshll.u32 %v6824, 16
        %v6839 = vrot.slane %v6837, 3
        %v6840 = vor.u32 %v6836, %v6839
        %v6841 = vsel %vm5529, %v6832, %v6840
        %v6845 = vunpack.c.l.b16 %v6755
        %v6846 = vunpack.c.l.b16 %v6756
        %v6847 = vunpack.c.l.b16 %v6757
        %v6848 = vpack.c.b16 %v6846, %v6845
        %v6849 = vpack.c.b16 %v6847, %v6847
        %v6850 = vrot.slane %v6848, 3
        %v6851 = vrot.slane %v6849, 3
        %v6852 = vsel %vm5557, %v6850, %v6851
        %6853 = vrot.lane.b32.xlu0 %v6852, 32
        %v6854 = vpop.permute.xlu0 %6853
        %v6857 = vunpack.c.l.b16 %v6759
        %v6858 = vunpack.c.l.b16 %v6760
        %v6859 = vpack.c.b16 %v6858, %v6857
        %6860 = vrot.lane.b32.xlu0 %v6859, 64
        %v6861 = vpop.permute.xlu0 %6860
        %v6864 = vunpack.c.l.b16 %v6758
        %v6865 = vunpack.c.l.b16 %v6761
        %v6866 = vpack.c.b16 %v6864, %v6775
        %v6867 = vpack.c.b16 %v6865, %v6865
        %v6869 = vshrl.u32 %v6866, 16
        %v6871 = vshll.u32 %v6866, 16
        %v6873 = vrot.slane %v6871, 1
        %v6874 = vor.u32 %v6869, %v6873
        %v6876 = vshll.u32 %v6867, 16
        %v6878 = vrot.slane %v6876, 1
        %v6879 = vsel %vm2271, %v6874, %v6878
        %6880 = vrot.lane.b32.xlu0 %v6879, 96
        %v6881 = vpop.permute.xlu0 %6880
        %v6885 = vunpack.c.l.b16 %v6763
        %v6886 = vunpack.c.l.b16 %v6764
        %v6887 = vunpack.c.l.b16 %v6765
        %v6888 = vpack.c.b16 %v6886, %v6885
        %v6889 = vpack.c.b16 %v6887, %v6887
        %v6890 = vrot.slane %v6888, 1
        %v6891 = vrot.slane %v6889, 1
        %v6892 = vsel %vm2519, %v6890, %v6891
        %v6895 = vsel %vm5101, %v6770, %v6792
        %v6897 = vsel %vm5137, %v6895, %v6805
        %v6899 = vsel %vm5909, %v6897, %v6818
        %v6903 = vsel %vm5101, %v6841, %v6854
        %v6905 = vsel %vm5137, %v6903, %v6861
        %v6907 = vsel %vm5909, %v6905, %v6881
        %v6909 = vld [vmem:[%s14] sm:$0xf]
        %v6910 = vld [vmem:[%s14 + $0x4] sm:$0xf]
        %v6911 = vld [vmem:[%s14 + $0x8] sm:$0xf]
        %v6912 = vld [vmem:[%s14 + $0xc] sm:$0xf]
        %v6913 = vld [vmem:[%s14 + $0x10] sm:$0xf]
        %v6914 = vld [vmem:[%s14 + $0x14] sm:$0xf]
        %v6915 = vld [vmem:[%s14 + $0x18] sm:$0xf]
        %v6916 = vld [vmem:[%s14 + $0x1c] sm:$0xf]
        %v6917 = vld [vmem:[%s14 + $0x20] sm:$0xf]
        %v6918 = vld [vmem:[%s14 + $0x24] sm:$0xf]
        %v6919 = vld [vmem:[%s14 + $0x28] sm:$0xf]
        %v6920 = vld [vmem:[%s14 + $0x2c] sm:$0xf]
        %v6921 = vld [vmem:[%s14 + $0x30] sm:$0xf]
        %v6922 = vld [vmem:[%s14 + $0x34] sm:$0xf]
        %v6923 = vld [vmem:[%s14 + $0x38] sm:$0xf]
        %v6924 = vld [vmem:[%s14 + $0x3c] sm:$0xf]
        %v6925 = vld [vmem:[%s14 + $0x40] sm:$0xf]
        %v6926 = vld [vmem:[%s14 + $0x44] sm:$0xf]
        %v6927 = vld [vmem:[%s14 + $0x48] sm:$0xf]
        %v6928 = vld [vmem:[%s14 + $0x4c] sm:$0xf]
        %v6929 = vld [vmem:[%s14 + $0x50] sm:$0xf]
        %v6930 = vld [vmem:[%s14 + $0x54] sm:$0xf]
        %v6931 = vld [vmem:[%s14 + $0x58] sm:$0xf]
        %v6932 = vld [vmem:[%s14 + $0x5c] sm:$0xf]
        %v6933 = vld [vmem:[%s14 + $0x60] sm:$0xf]
        %v6934 = vld [vmem:[%s14 + $0x64] sm:$0xf]
        %v6935 = vld [vmem:[%s14 + $0x68] sm:$0xf]
        %v6936 = vld [vmem:[%s14 + $0x6c] sm:$0xf]
        %v6937 = vld [vmem:[%s14 + $0x70] sm:$0xf]
        %v6938 = vld [vmem:[%s14 + $0x74] sm:$0xf]
        %v6939 = vld [vmem:[%s14 + $0x78] sm:$0xf]
        %v6940 = vld [vmem:[%s14 + $0x7c] sm:$0xf]
        %v6941 = vld [vmem:[%s14 + $0x80] sm:$0xf]
        %v6942 = vld [vmem:[%s14 + $0x84] sm:$0xf]
        %v6943 = vld [vmem:[%s14 + $0x88] sm:$0xf]
        %v6944 = vld [vmem:[%s14 + $0x8c] sm:$0xf]
        %v6946 = vperm.slane %v6700, 0
        %v6984 = vunpack.c.l.b16 %v6909
        %v6985 = vunpack.c.l.b16 %v6910
        %v6986 = vunpack.c.l.b16 %v6911
        %v6987 = vunpack.c.l.b16 %v6912
        %v6988 = vunpack.c.l.b16 %v6913
        %v6989 = vunpack.c.l.b16 %v6914
        %v6990 = vunpack.c.l.b16 %v6915
        %v6991 = vunpack.c.l.b16 %v6916
        %v6992 = vunpack.c.l.b16 %v6917
        %v6993 = vunpack.c.l.b16 %v6918
        %v6994 = vunpack.c.l.b16 %v6919
        %v6995 = vunpack.c.l.b16 %v6920
        %v6996 = vunpack.c.l.b16 %v6921
        %v6997 = vunpack.c.l.b16 %v6922
        %v6998 = vunpack.c.l.b16 %v6923
        %v6999 = vunpack.c.l.b16 %v6924
        %v7000 = vunpack.c.l.b16 %v6925
        %v7001 = vunpack.c.l.b16 %v6926
        %v7002 = vunpack.c.l.b16 %v6927
        %v7003 = vunpack.c.l.b16 %v6928
        %v7004 = vunpack.c.l.b16 %v6929
        %v7005 = vunpack.c.l.b16 %v6930
        %v7006 = vunpack.c.l.b16 %v6931
        %v7007 = vunpack.c.l.b16 %v6932
        %v7008 = vunpack.c.l.b16 %v6933
        %v7009 = vunpack.c.l.b16 %v6934
        %v7010 = vunpack.c.l.b16 %v6935
        %v7011 = vunpack.c.l.b16 %v6936
        %v7012 = vunpack.c.l.b16 %v6937
        %v7013 = vunpack.c.l.b16 %v6938
        %v7014 = vunpack.c.l.b16 %v6939
        %v7015 = vunpack.c.l.b16 %v6940
        %v7016 = vunpack.c.l.b16 %v6941
        %v7017 = vunpack.c.l.b16 %v6942
        %v7018 = vunpack.c.l.b16 %v6943
        %v7019 = vunpack.c.l.b16 %v6944
        %v7020 = vpack.c.b16 %v6985, %v6984
        %v7021 = vpack.c.b16 %v6987, %v6986
        %v7022 = vpack.c.b16 %v6989, %v6988
        %v7023 = vpack.c.b16 %v6991, %v6990
        %v7024 = vpack.c.b16 %v6993, %v6992
        %v7025 = vpack.c.b16 %v6995, %v6994
        %v7026 = vpack.c.b16 %v6997, %v6996
        %v7027 = vpack.c.b16 %v6999, %v6998
        %v7028 = vpack.c.b16 %v7001, %v7000
        %v7029 = vpack.c.b16 %v7003, %v7002
        %v7030 = vpack.c.b16 %v7005, %v7004
        %v7031 = vpack.c.b16 %v7007, %v7006
        %v7032 = vpack.c.b16 %v7009, %v7008
        %v7033 = vpack.c.b16 %v7011, %v7010
        %v7034 = vpack.c.b16 %v7013, %v7012
        %v7035 = vpack.c.b16 %v7015, %v7014
        %v7036 = vpack.c.b16 %v7017, %v7016
        %v7037 = vpack.c.b16 %v7019, %v7018
        %v7057 = vsel %vm5101, %v6892, 0
        %7059 = vmatpush.bf16.msra.mxu0 %v7027
        %7060 = vmatpush.bf16.msra.mxu0 %v7026
        %7061 = vmatpush.bf16.msra.mxu0 %v7025
        %7062 = vmatpush.bf16.msra.mxu0 %v7024
        %7063 = vmatpush.bf16.msra.mxu0 %v7023
        %7064 = vmatpush.bf16.msra.mxu0 %v7022
        %7065 = vmatpush.bf16.msra.mxu0 %v7021
        %7066 = vmatpush.bf16.msra.mxu0 %v7020
        %7067 = vmatmul.bf16.gmra.mxu0 %v6899
        %v7068 = vpop.f32.mrf.mxu0
        %v7069 = vadd.f32 %v6946, %v7068
        %v7070 = vpop.f32.mrf.mxu0
        %v7071 = vadd.f32 %v6946, %v7070
        %7072 = vdwg.mxu0
        %7073 = vmatpush.bf16.msra.mxu0 %v7035
        %7074 = vmatpush.bf16.msra.mxu0 %v7034
        %7075 = vmatpush.bf16.msra.mxu0 %v7033
        %7076 = vmatpush.bf16.msra.mxu0 %v7032
        %7077 = vmatpush.bf16.msra.mxu0 %v7031
        %7078 = vmatpush.bf16.msra.mxu0 %v7030
        %7079 = vmatpush.bf16.msra.mxu0 %v7029
        %7080 = vmatpush.bf16.msra.mxu0 %v7028
        %7081 = vmatmul.bf16.gmra.mxu0 %v6907
        %v7082 = vpop.f32.mrf.mxu0
        %v7083 = vadd.f32 %v7069, %v7082
        %v7084 = vpop.f32.mrf.mxu0
        %v7085 = vadd.f32 %v7071, %v7084
        %7086 = vdwg.mxu0
        %7087 = vmatpush.bf16.msra.mxu0 0
        %7088 = vmatpush.bf16.msra.mxu0 0
        %7089 = vmatpush.bf16.msra.mxu0 0
        %7090 = vmatpush.bf16.msra.mxu0 0
        %7091 = vmatpush.bf16.msra.mxu0 0
        %7092 = vmatpush.bf16.msra.mxu0 0
        %7093 = vmatpush.bf16.msra.mxu0 %v7037
        %7094 = vmatpush.bf16.msra.mxu0 %v7036
        %7095 = vmatmul.bf16.gmra.mxu0 %v7057
        %v7096 = vpop.f32.mrf.mxu0
        %v7097 = vadd.f32 %v7083, %v7096
        %v7098 = vpop.f32.mrf.mxu0
        %v7099 = vadd.f32 %v7085, %v7098
        %7100 = vdwg.mxu0
        %v7101 = vmul.f32 %v7097, 5.4899807
        %v7102 = vmul.f32 %v7099, 5.4899807
        %7103 = vst.msk [vmem:[%s514] sm:$0xff] %vm5084, %v7101
        %7104 = vst.msk [vmem:[%s514 + $0x8] sm:$0xff] %vm5084, %v7102
        %s7105 = sand.u32 %s379, 1
        %s7106 = scalar_lea.sflag [#allocation6], %s7105
        %s7107 = sand.u32 %s379, 1
        %s7108 = smul.addr %s7107, 16
        %s7109 = scalar_lea.vmem [#allocation5], %s7108
        // Predicated region
        $region85: #{e2e_forward.1} parent=83 // pred_check
          %p7110 = pneg %p389
        $region86: #{e2e_forward.1} parent=83 // pred_check_branch
          %7112 = sbr.rel (%p7110) target = $region88
        $region87: #{e2e_forward.1} parent=83 // pred_region
          %7114 = vsyncadd %s7106, 0
          %s7115 = smul.addr %s30, 2
          %s7116 = smul.addr %s7115, 8
          %s7117 = scalar_lea.hbm %s16, %s7116
          %s7118 = sshll.u32 %s7109, 4
          %s7119 = int_to_ptr.vmem [resolvable:$true] %s7118
          %s7120 = sshll.u32 %s7117, 4
          %s7121 = int_to_ptr.hbm [resolvable:$true] %s7120
          %7126 = dma.vmem_to_hbm [thread:$0]  %s7119, 256, %s7121, %s7106, 128, 128, 8
        $region88: #{e2e_forward.1} parent=83 // pred_fallthru
          _
      $region84: #{e2e_forward.1} parent=5 // pred_fallthru
        _
      %p7127 = scmp.le.s32.totalorder 2, %s25
      // Predicated region
      $region89: #{e2e_forward.1} parent=5 // pred_check
        %p7128 = pneg %p7127
      $region90: #{e2e_forward.1} parent=5 // pred_check_branch
        %7130 = sbr.rel (%p7128) target = $region92
      $region91: #{e2e_forward.1} parent=5 // pred_region
        %s7131 = ssub.s32 %s25, 2
        // Predicated region
        $region93: #{e2e_forward.1} parent=91 // pred_check
          %p7132 = pneg %p395
        $region94: #{e2e_forward.1} parent=91 // pred_check_branch
          %7134 = sbr.rel (%p7132) target = $region96
        $region95: #{e2e_forward.1} parent=91 // pred_region
          %s7135 = sand.u32 %s380, 1
          %s7136 = scalar_lea.sflag [#allocation6], %s7135
          %s7137 = sand.u32 %s380, 1
          %s7138 = smul.addr %s7137, 16
          %s7139 = scalar_lea.vmem [#allocation5], %s7138
          %7141 = dma.done %s7136, 256
        $region96: #{e2e_forward.1} parent=91 // pred_fallthru
          _
      $region92: #{e2e_forward.1} parent=5 // pred_fallthru
        _
    $region6: #{e2e_forward.1} parent=1 // loop_footer
      %s29 = sadd.s32 1, %s25
    $region7: #{e2e_forward.1} parent=1 // loop_footer_branch
      %24 = sbr.rel target = $region3
    $region8: #{e2e_forward.1} parent=1 // loop_exit
      _
    %7142 = vsyncpa [#allocation6], 1
    %s7143 = scalar_lea.sflag [#allocation6], 1
    %7144 = vsyncpa %s7143, 1

</llo_original>
